<compile_context>
chip_gen: v7x
topology: tpu7x:2x2x1
jax: 0.10.0
libtpu: 0.0.40
codegen_flags: <defaults>
</compile_context>

<pallas_src>
import functools

import jax
import jax.numpy as jnp
from jax import lax
from jax.experimental import pallas as pl
from jax.experimental.pallas import tpu as pltpu


def _round_up(x, m):
    return (x + m - 1) // m * m


def _encoder_kernel(num_layers, seq_len, hidden_p, unroll,
                    gin0_ref, w_ih_rest_ref, w_hh_ref, b_ref,
                    h_out_ref, c_out_ref,
                    gin_ref, seq_ref, h_ref, c_ref):
    """One grid step = one batch tile, all layers, all timesteps.

    gin0_ref:      (S, bb, 4Hp) f32  layer-0 gates (emb gather + proj + bias, from wrapper)
    w_ih_rest_ref: (max(L-1,1), Hp, 4Hp) bf16
    w_hh_ref:      (L, Hp, 4Hp) bf16
    b_ref:         (L, 1, 4Hp)  f32  combined bias, i/f/o columns pre-scaled by 0.5
    h_out_ref:     (L, bb, Hp)  f32  final hidden state per layer
    c_out_ref:     (L, bb, Hp)  f32  final cell state per layer
    gin_ref:       (S, bb, 4Hp) f32  hoisted input-side gate projections (layers >= 1)
    seq_ref:       (S, bb, Hp)  bf16 current layer's output sequence
    h_ref, c_ref:  (bb, Hp)     f32  running hidden / cell state
    """
    S = seq_len
    Hp = hidden_p
    Gp = 4 * Hp
    bb = h_ref.shape[0]

    for layer in range(num_layers):          # static Python loop (L is static)
        w_hh = w_hh_ref[layer]               # (Hp, 4Hp) bf16, hoisted out of the time loop
        if layer == 0:
            gsrc = gin0_ref                  # wrapper already folded gather/proj/bias
        else:
            # Hoisted input projection: ONE matmul covers all S timesteps.
            # (S, bb, Hp) -> (S*bb, Hp) is layout-preserving because bb % 8 == 0.
            w_ih = w_ih_rest_ref[layer - 1]  # (Hp, 4Hp) bf16
            x_all = seq_ref[...].reshape(S * bb, Hp)
            gin = jnp.dot(x_all, w_ih, preferred_element_type=jnp.float32)
            gin_ref[...] = gin.reshape(S, bb, Gp) + b_ref[layer]
            gsrc = gin_ref

        h_ref[...] = jnp.zeros_like(h_ref)
        c_ref[...] = jnp.zeros_like(c_ref)

        def step(t, carry, w_hh=w_hh, gsrc=gsrc):
            h_prev = h_ref[...]
            c_prev = c_ref[...]
            # Serial path: only the hidden-side projection + VPU/EUP gate math.
            # TODO(synk): hold w_hh in MXU staging registers across the loop
            # (pltpu.matmul_push_rhs / matmul_acc_lhs) to drop the per-step RHS push.
            gates = gsrc[t] + jnp.dot(h_prev.astype(jnp.bfloat16), w_hh,
                                      preferred_element_type=jnp.float32)   # (bb, 4Hp)

            # i/f/o columns were pre-scaled by 0.5 in the wrapper, so
            # sigmoid(x) == 0.5 * tanh(0.5 * x) + 0.5 with no extra multiply here.
            i_g = 0.5 * jnp.tanh(gates[:, 0 * Hp:1 * Hp]) + 0.5
            f_g = 0.5 * jnp.tanh(gates[:, 1 * Hp:2 * Hp]) + 0.5
            g_g = jnp.tanh(gates[:, 2 * Hp:3 * Hp])
            o_g = 0.5 * jnp.tanh(gates[:, 3 * Hp:4 * Hp]) + 0.5

            c_new = f_g * c_prev + i_g * g_g
            h_new = o_g * jnp.tanh(c_new)

            h_ref[...] = h_new
            c_ref[...] = c_new
            seq_ref[t] = h_new.astype(jnp.bfloat16)   # input sequence for next layer
            return carry

        # Short static S: full unroll gives the scheduler cross-step visibility;
        # at larger S keep a partial unroll to bound instruction count.
        lax.fori_loop(0, S, step, 0, unroll=unroll)

        h_out_ref[layer] = h_ref[...]
        c_out_ref[layer] = c_ref[...]


def encoder_forward(tokens, params, *, hidden_size, num_layers, batch_block=None):
    """tokens: (B, S) int token ids. Returns (hidden, cell), each (L, B, H)."""
    B, S = tokens.shape
    emb = params["embedding"].astype(jnp.float32)
    V, E = emb.shape
    H = hidden_size
    L = num_layers

    Hp = _round_up(H, 128)     # lane-align each gate slice
    Gp = 4 * Hp
    Bp = _round_up(B, 8)       # sublane-align the batch tile

    def scale_ifo(w):
        # Pre-scale i/f/o gate columns by 0.5 so the kernel's sigmoid is
        # 0.5*tanh(y)+0.5 (saves one VALU multiply per gate per timestep).
        w4 = w.reshape(w.shape[:-1] + (4, H))
        s = jnp.array([0.5, 0.5, 1.0, 0.5], w.dtype).reshape((4, 1))
        return (w4 * s).reshape(w.shape)

    def pad_gate_cols(w):
        # Zero-pad each of the 4 gate blocks along the last axis from H to Hp.
        # Zero weights/bias in the padded columns keep the padded h/c exactly 0.
        w4 = w.reshape(w.shape[:-1] + (4, H))
        w4 = jnp.pad(w4, [(0, 0)] * (w4.ndim - 1) + [(0, Hp - H)])
        return w4.reshape(w.shape[:-1] + (Gp,))

    w_ih0 = pad_gate_cols(scale_ifo(params["w_ih0"].astype(jnp.float32)))        # (E, Gp)
    bias = pad_gate_cols(scale_ifo(params["b"].astype(jnp.float32)))             # (L, 1, Gp)
    w_ih_rest = pad_gate_cols(scale_ifo(params["w_ih_rest"].astype(jnp.float32)))
    w_ih_rest = jnp.pad(w_ih_rest, ((0, 0), (0, Hp - H), (0, 0))).astype(jnp.bfloat16)
    w_hh = pad_gate_cols(scale_ifo(params["w_hh"].astype(jnp.float32)))
    w_hh = jnp.pad(w_hh, ((0, 0), (0, Hp - H), (0, 0))).astype(jnp.bfloat16)

    # Embedding gather + layer-0 input projection + layer-0 bias folded OUTSIDE
    # the kernel: one (V, E) @ (E, 4Hp) matmul, then an O(B*S) row gather.
    # NOTE: out-of-range token ids are clipped by jnp.take (torch would raise).
    emb_proj = jnp.dot(emb, w_ih0, preferred_element_type=jnp.float32)           # (V, Gp)
    toks = jnp.pad(tokens.astype(jnp.int32), ((0, Bp - B), (0, 0)))              # (Bp, S)
    gin0 = jnp.take(emb_proj, toks, axis=0) + bias[0]                            # (Bp, S, Gp)
    gin0 = jnp.transpose(gin0, (1, 0, 2))                                        # (S, Bp, Gp)

    # Batch tiling: default a single tile (grid of 1) — splitting only adds
    # per-grid-step overhead on single-TensorCore chips unless VMEM forces it.
    # TODO(synk): on v7x, pass batch_block=Bp//2 with CORE_PARALLEL semantics to
    # split the recurrence across the 2 TensorCores (re-derive the 64 MiB budget).
    bb = Bp if batch_block is None else batch_block
    assert Bp % bb == 0 and bb % 8 == 0, "batch_block must divide padded B and be a multiple of 8"
    nb = Bp // bb

    unroll = True if S <= 32 else 8
    kernel = functools.partial(_encoder_kernel, L, S, Hp, unroll)

    # Rough VMEM budget (weights single-buffered, gin0/outputs double-buffered).
    w_bytes = (max(L - 1, 1) * Hp * Gp + L * Hp * Gp) * 2 + L * Gp * 4
    io_bytes = 2 * S * bb * Gp * 4 + 2 * 2 * L * bb * Hp * 4
    sc_bytes = S * bb * Gp * 4 + S * bb * Hp * 2 + 2 * bb * Hp * 4
    vmem_limit = int(min(64 << 20, max(16 << 20, 2 * (w_bytes + io_bytes + sc_bytes))))

    def call(single_buffer_weights):
        def const_spec(shape):
            # Weight blocks never change across the grid: single-buffer them to
            # halve their VMEM reservation.
            kw = {"pipeline_mode": pl.Buffered(1)} if single_buffer_weights else {}
            return pl.BlockSpec(shape, lambda i: (0,) * len(shape), **kw)

        return pl.pallas_call(
            kernel,
            out_shape=(jax.ShapeDtypeStruct((L, Bp, Hp), jnp.float32),
                       jax.ShapeDtypeStruct((L, Bp, Hp), jnp.float32)),
            grid=(nb,),
            in_specs=[
                pl.BlockSpec((S, bb, Gp), lambda i: (0, i, 0)),         # layer-0 gates
                const_spec((max(L - 1, 1), Hp, Gp)),                    # w_ih layers 1..L-1
                const_spec((L, Hp, Gp)),                                # w_hh
                const_spec((L, 1, Gp)),                                 # bias
            ],
            out_specs=(pl.BlockSpec((L, bb, Hp), lambda i: (0, i, 0)),
                       pl.BlockSpec((L, bb, Hp), lambda i: (0, i, 0))),
            scratch_shapes=[
                pltpu.VMEM((S, bb, Gp), jnp.float32),   # hoisted input-gate projections
                pltpu.VMEM((S, bb, Hp), jnp.bfloat16),  # per-layer sequence buffer
                pltpu.VMEM((bb, Hp), jnp.float32),      # running hidden state
                pltpu.VMEM((bb, Hp), jnp.float32),      # running cell state
            ],
            compiler_params=pltpu.CompilerParams(
                dimension_semantics=(("arbitrary",) if nb == 1 else ("parallel",)),
                vmem_limit_bytes=vmem_limit),
        )(gin0, w_ih_rest, w_hh, bias)

    try:
        h_n, c_n = call(True)
    except Exception:
        # pipeline_mode=pl.Buffered(1) not supported on this JAX build — retry
        # with default double-buffered weight blocks (correctness unaffected).
        h_n, c_n = call(False)

    return h_n[:, :B, :H], c_n[:, :B, :H]


def encoder_reference(tokens, params, *, hidden_size, num_layers):
    """Pure-JAX reference with identical semantics (for verification)."""
    emb = params["embedding"]
    x = jnp.take(emb, tokens, axis=0)  # (B, S, E)
    B, S, _ = x.shape
    H = hidden_size
    h_list, c_list = [], []
    layer_in = x
    for layer in range(num_layers):
        w_ih = params["w_ih0"] if layer == 0 else params["w_ih_rest"][layer - 1]
        w_hh = params["w_hh"][layer]
        bias = params["b"][layer]

        def step(carry, x_t, w_ih=w_ih, w_hh=w_hh, bias=bias):
            h, c = carry
            gates = x_t @ w_ih + h @ w_hh + bias
            i = jax.nn.sigmoid(gates[:, 0 * H:1 * H])
            f = jax.nn.sigmoid(gates[:, 1 * H:2 * H])
            g = jnp.tanh(gates[:, 2 * H:3 * H])
            o = jax.nn.sigmoid(gates[:, 3 * H:4 * H])
            c = f * c + i * g
            h = o * jnp.tanh(c)
            return (h, c), h

        init = (jnp.zeros((B, H), jnp.float32), jnp.zeros((B, H), jnp.float32))
        (h, c), outs = lax.scan(step, init, jnp.swapaxes(layer_in, 0, 1))
        layer_in = jnp.swapaxes(outs, 0, 1)
        h_list.append(h)
        c_list.append(c)
    return jnp.stack(h_list), jnp.stack(c_list)


if __name__ == "__main__":
    # Small shapes consistent with the module's forward pass.
    vocab_size, embed_size, hidden_size, num_layers = 64, 32, 32, 2
    batch, seq = 2, 8

    key = jax.random.PRNGKey(0)
    k0, k1, k2, k3, k4, k5 = jax.random.split(key, 6)
    params = {
        "embedding": 0.1 * jax.random.normal(k0, (vocab_size, embed_size), jnp.float32),
        "w_ih0": 0.1 * jax.random.normal(k1, (embed_size, 4 * hidden_size), jnp.float32),
        "w_ih_rest": 0.1 * jax.random.normal(
            k2, (max(num_layers - 1, 1), hidden_size, 4 * hidden_size), jnp.float32),
        "w_hh": 0.1 * jax.random.normal(
            k3, (num_layers, hidden_size, 4 * hidden_size), jnp.float32),
        "b": 0.1 * jax.random.normal(k4, (num_layers, 1, 4 * hidden_size), jnp.float32),
    }
    tokens = jax.random.randint(k5, (batch, seq), 0, vocab_size, dtype=jnp.int32)

    h_n, c_n = encoder_forward(tokens, params,
                               hidden_size=hidden_size, num_layers=num_layers)
    jax.block_until_ready((h_n, c_n))

    h_ref, c_ref = encoder_reference(tokens, params,
                                     hidden_size=hidden_size, num_layers=num_layers)
    assert h_n.shape == (num_layers, batch, hidden_size)
    assert c_n.shape == (num_layers, batch, hidden_size)
    assert jnp.allclose(h_n, h_ref, atol=3e-3, rtol=3e-3)
    assert jnp.allclose(c_n, c_ref, atol=3e-3, rtol=3e-3)

    print("KERNEL_OK")
</pallas_src>

<mosaic_0001>
module attributes {stable_mosaic.version = 11 : i64} {
  func.func @_encoder_kernel(%arg0: i32, %arg1: memref<8x8x512xf32, #tpu.memory_space<vmem>>, %arg2: memref<1x128x512xbf16, #tpu.memory_space<vmem>>, %arg3: memref<2x128x512xbf16, #tpu.memory_space<vmem>>, %arg4: memref<2x1x512xf32, #tpu.memory_space<vmem>>, %arg5: memref<2x8x128xf32, #tpu.memory_space<vmem>>, %arg6: memref<2x8x128xf32, #tpu.memory_space<vmem>>, %arg7: memref<8x8x512xf32, #tpu.memory_space<vmem>>, %arg8: memref<8x8x128xbf16, #tpu.memory_space<vmem>>, %arg9: memref<8x128xf32, #tpu.memory_space<vmem>>, %arg10: memref<8x128xf32, #tpu.memory_space<vmem>>) attributes {dimension_semantics = [#tpu.dimension_semantics<arbitrary>], iteration_bounds = array<i64: 1>, scalar_prefetch = 0 : i64, scratch_operands = 4 : i64, tpu.core_type = #tpu.core_type<tc>, window_params = [{transform_indices = @transform_0, window_bounds = array<i64: 8, 8, 512>}, {pipeline_mode = #tpu.pipeline_mode<synchronous>, transform_indices = @transform_1, window_bounds = array<i64: 1, 128, 512>}, {pipeline_mode = #tpu.pipeline_mode<synchronous>, transform_indices = @transform_2, window_bounds = array<i64: 2, 128, 512>}, {pipeline_mode = #tpu.pipeline_mode<synchronous>, transform_indices = @transform_3, window_bounds = array<i64: 2, 1, 512>}, {transform_indices = @transform_4, window_bounds = array<i64: 2, 8, 128>}, {transform_indices = @transform_5, window_bounds = array<i64: 2, 8, 128>}]} {
    %c0 = arith.constant 0 : index
    %c0_0 = arith.constant 0 : index
    %c0_1 = arith.constant 0 : index
    %0 = vector.load %arg3[%c0, %c0_0, %c0_1] : memref<2x128x512xbf16, #tpu.memory_space<vmem>>, vector<1x128x512xbf16>
    %1 = vector.shape_cast %0 : vector<1x128x512xbf16> to vector<128x512xbf16>
    %cst = arith.constant 0.000000e+00 : f32
    %2 = vector.broadcast %cst : f32 to vector<8x128xf32>
    %c0_2 = arith.constant 0 : index
    %c0_3 = arith.constant 0 : index
    %3 = vector.load %arg9[%c0_2, %c0_3] : memref<8x128xf32, #tpu.memory_space<vmem>>, vector<8x128xf32>
    tpu.vector_store %arg9[%c0_2, %c0_3], %2 {strides = array<i32>} : memref<8x128xf32, #tpu.memory_space<vmem>>, vector<8x128xf32>,
    %cst_4 = arith.constant 0.000000e+00 : f32
    %4 = vector.broadcast %cst_4 : f32 to vector<8x128xf32>
    %c0_5 = arith.constant 0 : index
    %c0_6 = arith.constant 0 : index
    %5 = vector.load %arg10[%c0_5, %c0_6] : memref<8x128xf32, #tpu.memory_space<vmem>>, vector<8x128xf32>
    tpu.vector_store %arg10[%c0_5, %c0_6], %4 {strides = array<i32>} : memref<8x128xf32, #tpu.memory_space<vmem>>, vector<8x128xf32>,
    %c0_i32 = arith.constant 0 : i32
    %c0_7 = arith.constant 0 : index
    %c0_8 = arith.constant 0 : index
    %6 = vector.load %arg9[%c0_7, %c0_8] : memref<8x128xf32, #tpu.memory_space<vmem>>, vector<8x128xf32>
    %c0_9 = arith.constant 0 : index
    %c0_10 = arith.constant 0 : index
    %7 = vector.load %arg10[%c0_9, %c0_10] : memref<8x128xf32, #tpu.memory_space<vmem>>, vector<8x128xf32>
    %8 = arith.index_cast %c0_i32 : i32 to index
    %c0_11 = arith.constant 0 : index
    %c0_12 = arith.constant 0 : index
    %9 = vector.load %arg1[%8, %c0_11, %c0_12] : memref<8x8x512xf32, #tpu.memory_space<vmem>>, vector<1x8x512xf32>
    %10 = vector.shape_cast %9 : vector<1x8x512xf32> to vector<8x512xf32>
    %11 = arith.truncf %6 : vector<8x128xf32> to vector<8x128xbf16>
    %cst_13 = arith.constant dense<0.000000e+00> : vector<8x512xf32>
    %12 = tpu.matmul %11, %1, %cst_13 {dimension_numbers = #tpu.dot_dimension_numbers<[1], [0], [0], [1], [0, 0, 1, 1], [], []>} : vector<8x128xbf16>, vector<128x512xbf16>, vector<8x512xf32> -> vector<8x512xf32>
    %13 = arith.addf %10, %12 : vector<8x512xf32>
    %14 = vector.extract_strided_slice %13 {offsets = [0, 0], sizes = [8, 128], strides = [1, 1]} : vector<8x512xf32> to vector<8x128xf32>
    %15 = math.tanh %14 : vector<8x128xf32>
    %cst_14 = arith.constant 5.000000e-01 : f32
    %16 = vector.broadcast %cst_14 : f32 to vector<8x128xf32>
    %17 = arith.mulf %16, %15 : vector<8x128xf32>
    %cst_15 = arith.constant 5.000000e-01 : f32
    %18 = vector.broadcast %cst_15 : f32 to vector<8x128xf32>
    %19 = arith.addf %17, %18 : vector<8x128xf32>
    %20 = vector.extract_strided_slice %13 {offsets = [0, 128], sizes = [8, 128], strides = [1, 1]} : vector<8x512xf32> to vector<8x128xf32>
    %21 = math.tanh %20 : vector<8x128xf32>
    %cst_16 = arith.constant 5.000000e-01 : f32
    %22 = vector.broadcast %cst_16 : f32 to vector<8x128xf32>
    %23 = arith.mulf %22, %21 : vector<8x128xf32>
    %cst_17 = arith.constant 5.000000e-01 : f32
    %24 = vector.broadcast %cst_17 : f32 to vector<8x128xf32>
    %25 = arith.addf %23, %24 : vector<8x128xf32>
    %26 = vector.extract_strided_slice %13 {offsets = [0, 256], sizes = [8, 128], strides = [1, 1]} : vector<8x512xf32> to vector<8x128xf32>
    %27 = math.tanh %26 : vector<8x128xf32>
    %28 = vector.extract_strided_slice %13 {offsets = [0, 384], sizes = [8, 128], strides = [1, 1]} : vector<8x512xf32> to vector<8x128xf32>
    %29 = math.tanh %28 : vector<8x128xf32>
    %cst_18 = arith.constant 5.000000e-01 : f32
    %30 = vector.broadcast %cst_18 : f32 to vector<8x128xf32>
    %31 = arith.mulf %30, %29 : vector<8x128xf32>
    %cst_19 = arith.constant 5.000000e-01 : f32
    %32 = vector.broadcast %cst_19 : f32 to vector<8x128xf32>
    %33 = arith.addf %31, %32 : vector<8x128xf32>
    %34 = arith.mulf %25, %7 : vector<8x128xf32>
    %35 = arith.mulf %19, %27 : vector<8x128xf32>
    %36 = arith.addf %34, %35 : vector<8x128xf32>
    %37 = math.tanh %36 : vector<8x128xf32>
    %38 = arith.mulf %33, %37 : vector<8x128xf32>
    %c0_20 = arith.constant 0 : index
    %c0_21 = arith.constant 0 : index
    %39 = vector.load %arg9[%c0_20, %c0_21] : memref<8x128xf32, #tpu.memory_space<vmem>>, vector<8x128xf32>
    tpu.vector_store %arg9[%c0_20, %c0_21], %38 {strides = array<i32>} : memref<8x128xf32, #tpu.memory_space<vmem>>, vector<8x128xf32>,
    %c0_22 = arith.constant 0 : index
    %c0_23 = arith.constant 0 : index
    %40 = vector.load %arg10[%c0_22, %c0_23] : memref<8x128xf32, #tpu.memory_space<vmem>>, vector<8x128xf32>
    tpu.vector_store %arg10[%c0_22, %c0_23], %36 {strides = array<i32>} : memref<8x128xf32, #tpu.memory_space<vmem>>, vector<8x128xf32>,
    %41 = arith.truncf %38 : vector<8x128xf32> to vector<8x128xbf16>
    %42 = arith.index_cast %c0_i32 : i32 to index
    %c0_24 = arith.constant 0 : index
    %c0_25 = arith.constant 0 : index
    %43 = vector.load %arg8[%42, %c0_24, %c0_25] : memref<8x8x128xbf16, #tpu.memory_space<vmem>>, vector<1x8x128xbf16>
    %44 = vector.shape_cast %43 : vector<1x8x128xbf16> to vector<8x128xbf16>
    %45 = vector.shape_cast %41 : vector<8x128xbf16> to vector<1x8x128xbf16>
    tpu.vector_store %arg8[%42, %c0_24, %c0_25], %45 {strides = array<i32>} : memref<8x8x128xbf16, #tpu.memory_space<vmem>>, vector<1x8x128xbf16>,
    %c1_i32 = arith.constant 1 : i32
    %c0_26 = arith.constant 0 : index
    %c0_27 = arith.constant 0 : index
    %46 = vector.load %arg9[%c0_26, %c0_27] : memref<8x128xf32, #tpu.memory_space<vmem>>, vector<8x128xf32>
    %c0_28 = arith.constant 0 : index
    %c0_29 = arith.constant 0 : index
    %47 = vector.load %arg10[%c0_28, %c0_29] : memref<8x128xf32, #tpu.memory_space<vmem>>, vector<8x128xf32>
    %48 = arith.index_cast %c1_i32 : i32 to index
    %c0_30 = arith.constant 0 : index
    %c0_31 = arith.constant 0 : index
    %49 = vector.load %arg1[%48, %c0_30, %c0_31] : memref<8x8x512xf32, #tpu.memory_space<vmem>>, vector<1x8x512xf32>
    %50 = vector.shape_cast %49 : vector<1x8x512xf32> to vector<8x512xf32>
    %51 = arith.truncf %46 : vector<8x128xf32> to vector<8x128xbf16>
    %cst_32 = arith.constant dense<0.000000e+00> : vector<8x512xf32>
    %52 = tpu.matmul %51, %1, %cst_32 {dimension_numbers = #tpu.dot_dimension_numbers<[1], [0], [0], [1], [0, 0, 1, 1], [], []>} : vector<8x128xbf16>, vector<128x512xbf16>, vector<8x512xf32> -> vector<8x512xf32>
    %53 = arith.addf %50, %52 : vector<8x512xf32>
    %54 = vector.extract_strided_slice %53 {offsets = [0, 0], sizes = [8, 128], strides = [1, 1]} : vector<8x512xf32> to vector<8x128xf32>
    %55 = math.tanh %54 : vector<8x128xf32>
    %cst_33 = arith.constant 5.000000e-01 : f32
    %56 = vector.broadcast %cst_33 : f32 to vector<8x128xf32>
    %57 = arith.mulf %56, %55 : vector<8x128xf32>
    %cst_34 = arith.constant 5.000000e-01 : f32
    %58 = vector.broadcast %cst_34 : f32 to vector<8x128xf32>
    %59 = arith.addf %57, %58 : vector<8x128xf32>
    %60 = vector.extract_strided_slice %53 {offsets = [0, 128], sizes = [8, 128], strides = [1, 1]} : vector<8x512xf32> to vector<8x128xf32>
    %61 = math.tanh %60 : vector<8x128xf32>
    %cst_35 = arith.constant 5.000000e-01 : f32
    %62 = vector.broadcast %cst_35 : f32 to vector<8x128xf32>
    %63 = arith.mulf %62, %61 : vector<8x128xf32>
    %cst_36 = arith.constant 5.000000e-01 : f32
    %64 = vector.broadcast %cst_36 : f32 to vector<8x128xf32>
    %65 = arith.addf %63, %64 : vector<8x128xf32>
    %66 = vector.extract_strided_slice %53 {offsets = [0, 256], sizes = [8, 128], strides = [1, 1]} : vector<8x512xf32> to vector<8x128xf32>
    %67 = math.tanh %66 : vector<8x128xf32>
    %68 = vector.extract_strided_slice %53 {offsets = [0, 384], sizes = [8, 128], strides = [1, 1]} : vector<8x512xf32> to vector<8x128xf32>
    %69 = math.tanh %68 : vector<8x128xf32>
    %cst_37 = arith.constant 5.000000e-01 : f32
    %70 = vector.broadcast %cst_37 : f32 to vector<8x128xf32>
    %71 = arith.mulf %70, %69 : vector<8x128xf32>
    %cst_38 = arith.constant 5.000000e-01 : f32
    %72 = vector.broadcast %cst_38 : f32 to vector<8x128xf32>
    %73 = arith.addf %71, %72 : vector<8x128xf32>
    %74 = arith.mulf %65, %47 : vector<8x128xf32>
    %75 = arith.mulf %59, %67 : vector<8x128xf32>
    %76 = arith.addf %74, %75 : vector<8x128xf32>
    %77 = math.tanh %76 : vector<8x128xf32>
    %78 = arith.mulf %73, %77 : vector<8x128xf32>
    %c0_39 = arith.constant 0 : index
    %c0_40 = arith.constant 0 : index
    %79 = vector.load %arg9[%c0_39, %c0_40] : memref<8x128xf32, #tpu.memory_space<vmem>>, vector<8x128xf32>
    tpu.vector_store %arg9[%c0_39, %c0_40], %78 {strides = array<i32>} : memref<8x128xf32, #tpu.memory_space<vmem>>, vector<8x128xf32>,
    %c0_41 = arith.constant 0 : index
    %c0_42 = arith.constant 0 : index
    %80 = vector.load %arg10[%c0_41, %c0_42] : memref<8x128xf32, #tpu.memory_space<vmem>>, vector<8x128xf32>
    tpu.vector_store %arg10[%c0_41, %c0_42], %76 {strides = array<i32>} : memref<8x128xf32, #tpu.memory_space<vmem>>, vector<8x128xf32>,
    %81 = arith.truncf %78 : vector<8x128xf32> to vector<8x128xbf16>
    %82 = arith.index_cast %c1_i32 : i32 to index
    %c0_43 = arith.constant 0 : index
    %c0_44 = arith.constant 0 : index
    %83 = vector.load %arg8[%82, %c0_43, %c0_44] : memref<8x8x128xbf16, #tpu.memory_space<vmem>>, vector<1x8x128xbf16>
    %84 = vector.shape_cast %83 : vector<1x8x128xbf16> to vector<8x128xbf16>
    %85 = vector.shape_cast %81 : vector<8x128xbf16> to vector<1x8x128xbf16>
    tpu.vector_store %arg8[%82, %c0_43, %c0_44], %85 {strides = array<i32>} : memref<8x8x128xbf16, #tpu.memory_space<vmem>>, vector<1x8x128xbf16>,
    %c2_i32 = arith.constant 2 : i32
    %c0_45 = arith.constant 0 : index
    %c0_46 = arith.constant 0 : index
    %86 = vector.load %arg9[%c0_45, %c0_46] : memref<8x128xf32, #tpu.memory_space<vmem>>, vector<8x128xf32>
    %c0_47 = arith.constant 0 : index
    %c0_48 = arith.constant 0 : index
    %87 = vector.load %arg10[%c0_47, %c0_48] : memref<8x128xf32, #tpu.memory_space<vmem>>, vector<8x128xf32>
    %88 = arith.index_cast %c2_i32 : i32 to index
    %c0_49 = arith.constant 0 : index
    %c0_50 = arith.constant 0 : index
    %89 = vector.load %arg1[%88, %c0_49, %c0_50] : memref<8x8x512xf32, #tpu.memory_space<vmem>>, vector<1x8x512xf32>
    %90 = vector.shape_cast %89 : vector<1x8x512xf32> to vector<8x512xf32>
    %91 = arith.truncf %86 : vector<8x128xf32> to vector<8x128xbf16>
    %cst_51 = arith.constant dense<0.000000e+00> : vector<8x512xf32>
    %92 = tpu.matmul %91, %1, %cst_51 {dimension_numbers = #tpu.dot_dimension_numbers<[1], [0], [0], [1], [0, 0, 1, 1], [], []>} : vector<8x128xbf16>, vector<128x512xbf16>, vector<8x512xf32> -> vector<8x512xf32>
    %93 = arith.addf %90, %92 : vector<8x512xf32>
    %94 = vector.extract_strided_slice %93 {offsets = [0, 0], sizes = [8, 128], strides = [1, 1]} : vector<8x512xf32> to vector<8x128xf32>
    %95 = math.tanh %94 : vector<8x128xf32>
    %cst_52 = arith.constant 5.000000e-01 : f32
    %96 = vector.broadcast %cst_52 : f32 to vector<8x128xf32>
    %97 = arith.mulf %96, %95 : vector<8x128xf32>
    %cst_53 = arith.constant 5.000000e-01 : f32
    %98 = vector.broadcast %cst_53 : f32 to vector<8x128xf32>
    %99 = arith.addf %97, %98 : vector<8x128xf32>
    %100 = vector.extract_strided_slice %93 {offsets = [0, 128], sizes = [8, 128], strides = [1, 1]} : vector<8x512xf32> to vector<8x128xf32>
    %101 = math.tanh %100 : vector<8x128xf32>
    %cst_54 = arith.constant 5.000000e-01 : f32
    %102 = vector.broadcast %cst_54 : f32 to vector<8x128xf32>
    %103 = arith.mulf %102, %101 : vector<8x128xf32>
    %cst_55 = arith.constant 5.000000e-01 : f32
    %104 = vector.broadcast %cst_55 : f32 to vector<8x128xf32>
    %105 = arith.addf %103, %104 : vector<8x128xf32>
    %106 = vector.extract_strided_slice %93 {offsets = [0, 256], sizes = [8, 128], strides = [1, 1]} : vector<8x512xf32> to vector<8x128xf32>
    %107 = math.tanh %106 : vector<8x128xf32>
    %108 = vector.extract_strided_slice %93 {offsets = [0, 384], sizes = [8, 128], strides = [1, 1]} : vector<8x512xf32> to vector<8x128xf32>
    %109 = math.tanh %108 : vector<8x128xf32>
    %cst_56 = arith.constant 5.000000e-01 : f32
    %110 = vector.broadcast %cst_56 : f32 to vector<8x128xf32>
    %111 = arith.mulf %110, %109 : vector<8x128xf32>
    %cst_57 = arith.constant 5.000000e-01 : f32
    %112 = vector.broadcast %cst_57 : f32 to vector<8x128xf32>
    %113 = arith.addf %111, %112 : vector<8x128xf32>
    %114 = arith.mulf %105, %87 : vector<8x128xf32>
    %115 = arith.mulf %99, %107 : vector<8x128xf32>
    %116 = arith.addf %114, %115 : vector<8x128xf32>
    %117 = math.tanh %116 : vector<8x128xf32>
    %118 = arith.mulf %113, %117 : vector<8x128xf32>
    %c0_58 = arith.constant 0 : index
    %c0_59 = arith.constant 0 : index
    %119 = vector.load %arg9[%c0_58, %c0_59] : memref<8x128xf32, #tpu.memory_space<vmem>>, vector<8x128xf32>
    tpu.vector_store %arg9[%c0_58, %c0_59], %118 {strides = array<i32>} : memref<8x128xf32, #tpu.memory_space<vmem>>, vector<8x128xf32>,
    %c0_60 = arith.constant 0 : index
    %c0_61 = arith.constant 0 : index
    %120 = vector.load %arg10[%c0_60, %c0_61] : memref<8x128xf32, #tpu.memory_space<vmem>>, vector<8x128xf32>
    tpu.vector_store %arg10[%c0_60, %c0_61], %116 {strides = array<i32>} : memref<8x128xf32, #tpu.memory_space<vmem>>, vector<8x128xf32>,
    %121 = arith.truncf %118 : vector<8x128xf32> to vector<8x128xbf16>
    %122 = arith.index_cast %c2_i32 : i32 to index
    %c0_62 = arith.constant 0 : index
    %c0_63 = arith.constant 0 : index
    %123 = vector.load %arg8[%122, %c0_62, %c0_63] : memref<8x8x128xbf16, #tpu.memory_space<vmem>>, vector<1x8x128xbf16>
    %124 = vector.shape_cast %123 : vector<1x8x128xbf16> to vector<8x128xbf16>
    %125 = vector.shape_cast %121 : vector<8x128xbf16> to vector<1x8x128xbf16>
    tpu.vector_store %arg8[%122, %c0_62, %c0_63], %125 {strides = array<i32>} : memref<8x8x128xbf16, #tpu.memory_space<vmem>>, vector<1x8x128xbf16>,
    %c3_i32 = arith.constant 3 : i32
    %c0_64 = arith.constant 0 : index
    %c0_65 = arith.constant 0 : index
    %126 = vector.load %arg9[%c0_64, %c0_65] : memref<8x128xf32, #tpu.memory_space<vmem>>, vector<8x128xf32>
    %c0_66 = arith.constant 0 : index
    %c0_67 = arith.constant 0 : index
    %127 = vector.load %arg10[%c0_66, %c0_67] : memref<8x128xf32, #tpu.memory_space<vmem>>, vector<8x128xf32>
    %128 = arith.index_cast %c3_i32 : i32 to index
    %c0_68 = arith.constant 0 : index
    %c0_69 = arith.constant 0 : index
    %129 = vector.load %arg1[%128, %c0_68, %c0_69] : memref<8x8x512xf32, #tpu.memory_space<vmem>>, vector<1x8x512xf32>
    %130 = vector.shape_cast %129 : vector<1x8x512xf32> to vector<8x512xf32>
    %131 = arith.truncf %126 : vector<8x128xf32> to vector<8x128xbf16>
    %cst_70 = arith.constant dense<0.000000e+00> : vector<8x512xf32>
    %132 = tpu.matmul %131, %1, %cst_70 {dimension_numbers = #tpu.dot_dimension_numbers<[1], [0], [0], [1], [0, 0, 1, 1], [], []>} : vector<8x128xbf16>, vector<128x512xbf16>, vector<8x512xf32> -> vector<8x512xf32>
    %133 = arith.addf %130, %132 : vector<8x512xf32>
    %134 = vector.extract_strided_slice %133 {offsets = [0, 0], sizes = [8, 128], strides = [1, 1]} : vector<8x512xf32> to vector<8x128xf32>
    %135 = math.tanh %134 : vector<8x128xf32>
    %cst_71 = arith.constant 5.000000e-01 : f32
    %136 = vector.broadcast %cst_71 : f32 to vector<8x128xf32>
    %137 = arith.mulf %136, %135 : vector<8x128xf32>
    %cst_72 = arith.constant 5.000000e-01 : f32
    %138 = vector.broadcast %cst_72 : f32 to vector<8x128xf32>
    %139 = arith.addf %137, %138 : vector<8x128xf32>
    %140 = vector.extract_strided_slice %133 {offsets = [0, 128], sizes = [8, 128], strides = [1, 1]} : vector<8x512xf32> to vector<8x128xf32>
    %141 = math.tanh %140 : vector<8x128xf32>
    %cst_73 = arith.constant 5.000000e-01 : f32
    %142 = vector.broadcast %cst_73 : f32 to vector<8x128xf32>
    %143 = arith.mulf %142, %141 : vector<8x128xf32>
    %cst_74 = arith.constant 5.000000e-01 : f32
    %144 = vector.broadcast %cst_74 : f32 to vector<8x128xf32>
    %145 = arith.addf %143, %144 : vector<8x128xf32>
    %146 = vector.extract_strided_slice %133 {offsets = [0, 256], sizes = [8, 128], strides = [1, 1]} : vector<8x512xf32> to vector<8x128xf32>
    %147 = math.tanh %146 : vector<8x128xf32>
    %148 = vector.extract_strided_slice %133 {offsets = [0, 384], sizes = [8, 128], strides = [1, 1]} : vector<8x512xf32> to vector<8x128xf32>
    %149 = math.tanh %148 : vector<8x128xf32>
    %cst_75 = arith.constant 5.000000e-01 : f32
    %150 = vector.broadcast %cst_75 : f32 to vector<8x128xf32>
    %151 = arith.mulf %150, %149 : vector<8x128xf32>
    %cst_76 = arith.constant 5.000000e-01 : f32
    %152 = vector.broadcast %cst_76 : f32 to vector<8x128xf32>
    %153 = arith.addf %151, %152 : vector<8x128xf32>
    %154 = arith.mulf %145, %127 : vector<8x128xf32>
    %155 = arith.mulf %139, %147 : vector<8x128xf32>
    %156 = arith.addf %154, %155 : vector<8x128xf32>
    %157 = math.tanh %156 : vector<8x128xf32>
    %158 = arith.mulf %153, %157 : vector<8x128xf32>
    %c0_77 = arith.constant 0 : index
    %c0_78 = arith.constant 0 : index
    %159 = vector.load %arg9[%c0_77, %c0_78] : memref<8x128xf32, #tpu.memory_space<vmem>>, vector<8x128xf32>
    tpu.vector_store %arg9[%c0_77, %c0_78], %158 {strides = array<i32>} : memref<8x128xf32, #tpu.memory_space<vmem>>, vector<8x128xf32>,
    %c0_79 = arith.constant 0 : index
    %c0_80 = arith.constant 0 : index
    %160 = vector.load %arg10[%c0_79, %c0_80] : memref<8x128xf32, #tpu.memory_space<vmem>>, vector<8x128xf32>
    tpu.vector_store %arg10[%c0_79, %c0_80], %156 {strides = array<i32>} : memref<8x128xf32, #tpu.memory_space<vmem>>, vector<8x128xf32>,
    %161 = arith.truncf %158 : vector<8x128xf32> to vector<8x128xbf16>
    %162 = arith.index_cast %c3_i32 : i32 to index
    %c0_81 = arith.constant 0 : index
    %c0_82 = arith.constant 0 : index
    %163 = vector.load %arg8[%162, %c0_81, %c0_82] : memref<8x8x128xbf16, #tpu.memory_space<vmem>>, vector<1x8x128xbf16>
    %164 = vector.shape_cast %163 : vector<1x8x128xbf16> to vector<8x128xbf16>
    %165 = vector.shape_cast %161 : vector<8x128xbf16> to vector<1x8x128xbf16>
    tpu.vector_store %arg8[%162, %c0_81, %c0_82], %165 {strides = array<i32>} : memref<8x8x128xbf16, #tpu.memory_space<vmem>>, vector<1x8x128xbf16>,
    %c4_i32 = arith.constant 4 : i32
    %c0_83 = arith.constant 0 : index
    %c0_84 = arith.constant 0 : index
    %166 = vector.load %arg9[%c0_83, %c0_84] : memref<8x128xf32, #tpu.memory_space<vmem>>, vector<8x128xf32>
    %c0_85 = arith.constant 0 : index
    %c0_86 = arith.constant 0 : index
    %167 = vector.load %arg10[%c0_85, %c0_86] : memref<8x128xf32, #tpu.memory_space<vmem>>, vector<8x128xf32>
    %168 = arith.index_cast %c4_i32 : i32 to index
    %c0_87 = arith.constant 0 : index
    %c0_88 = arith.constant 0 : index
    %169 = vector.load %arg1[%168, %c0_87, %c0_88] : memref<8x8x512xf32, #tpu.memory_space<vmem>>, vector<1x8x512xf32>
    %170 = vector.shape_cast %169 : vector<1x8x512xf32> to vector<8x512xf32>
    %171 = arith.truncf %166 : vector<8x128xf32> to vector<8x128xbf16>
    %cst_89 = arith.constant dense<0.000000e+00> : vector<8x512xf32>
    %172 = tpu.matmul %171, %1, %cst_89 {dimension_numbers = #tpu.dot_dimension_numbers<[1], [0], [0], [1], [0, 0, 1, 1], [], []>} : vector<8x128xbf16>, vector<128x512xbf16>, vector<8x512xf32> -> vector<8x512xf32>
    %173 = arith.addf %170, %172 : vector<8x512xf32>
    %174 = vector.extract_strided_slice %173 {offsets = [0, 0], sizes = [8, 128], strides = [1, 1]} : vector<8x512xf32> to vector<8x128xf32>
    %175 = math.tanh %174 : vector<8x128xf32>
    %cst_90 = arith.constant 5.000000e-01 : f32
    %176 = vector.broadcast %cst_90 : f32 to vector<8x128xf32>
    %177 = arith.mulf %176, %175 : vector<8x128xf32>
    %cst_91 = arith.constant 5.000000e-01 : f32
    %178 = vector.broadcast %cst_91 : f32 to vector<8x128xf32>
    %179 = arith.addf %177, %178 : vector<8x128xf32>
    %180 = vector.extract_strided_slice %173 {offsets = [0, 128], sizes = [8, 128], strides = [1, 1]} : vector<8x512xf32> to vector<8x128xf32>
    %181 = math.tanh %180 : vector<8x128xf32>
    %cst_92 = arith.constant 5.000000e-01 : f32
    %182 = vector.broadcast %cst_92 : f32 to vector<8x128xf32>
    %183 = arith.mulf %182, %181 : vector<8x128xf32>
    %cst_93 = arith.constant 5.000000e-01 : f32
    %184 = vector.broadcast %cst_93 : f32 to vector<8x128xf32>
    %185 = arith.addf %183, %184 : vector<8x128xf32>
    %186 = vector.extract_strided_slice %173 {offsets = [0, 256], sizes = [8, 128], strides = [1, 1]} : vector<8x512xf32> to vector<8x128xf32>
    %187 = math.tanh %186 : vector<8x128xf32>
    %188 = vector.extract_strided_slice %173 {offsets = [0, 384], sizes = [8, 128], strides = [1, 1]} : vector<8x512xf32> to vector<8x128xf32>
    %189 = math.tanh %188 : vector<8x128xf32>
    %cst_94 = arith.constant 5.000000e-01 : f32
    %190 = vector.broadcast %cst_94 : f32 to vector<8x128xf32>
    %191 = arith.mulf %190, %189 : vector<8x128xf32>
    %cst_95 = arith.constant 5.000000e-01 : f32
    %192 = vector.broadcast %cst_95 : f32 to vector<8x128xf32>
    %193 = arith.addf %191, %192 : vector<8x128xf32>
    %194 = arith.mulf %185, %167 : vector<8x128xf32>
    %195 = arith.mulf %179, %187 : vector<8x128xf32>
    %196 = arith.addf %194, %195 : vector<8x128xf32>
    %197 = math.tanh %196 : vector<8x128xf32>
    %198 = arith.mulf %193, %197 : vector<8x128xf32>
    %c0_96 = arith.constant 0 : index
    %c0_97 = arith.constant 0 : index
    %199 = vector.load %arg9[%c0_96, %c0_97] : memref<8x128xf32, #tpu.memory_space<vmem>>, vector<8x128xf32>
    tpu.vector_store %arg9[%c0_96, %c0_97], %198 {strides = array<i32>} : memref<8x128xf32, #tpu.memory_space<vmem>>, vector<8x128xf32>,
    %c0_98 = arith.constant 0 : index
    %c0_99 = arith.constant 0 : index
    %200 = vector.load %arg10[%c0_98, %c0_99] : memref<8x128xf32, #tpu.memory_space<vmem>>, vector<8x128xf32>
    tpu.vector_store %arg10[%c0_98, %c0_99], %196 {strides = array<i32>} : memref<8x128xf32, #tpu.memory_space<vmem>>, vector<8x128xf32>,
    %201 = arith.truncf %198 : vector<8x128xf32> to vector<8x128xbf16>
    %202 = arith.index_cast %c4_i32 : i32 to index
    %c0_100 = arith.constant 0 : index
    %c0_101 = arith.constant 0 : index
    %203 = vector.load %arg8[%202, %c0_100, %c0_101] : memref<8x8x128xbf16, #tpu.memory_space<vmem>>, vector<1x8x128xbf16>
    %204 = vector.shape_cast %203 : vector<1x8x128xbf16> to vector<8x128xbf16>
    %205 = vector.shape_cast %201 : vector<8x128xbf16> to vector<1x8x128xbf16>
    tpu.vector_store %arg8[%202, %c0_100, %c0_101], %205 {strides = array<i32>} : memref<8x8x128xbf16, #tpu.memory_space<vmem>>, vector<1x8x128xbf16>,
    %c5_i32 = arith.constant 5 : i32
    %c0_102 = arith.constant 0 : index
    %c0_103 = arith.constant 0 : index
    %206 = vector.load %arg9[%c0_102, %c0_103] : memref<8x128xf32, #tpu.memory_space<vmem>>, vector<8x128xf32>
    %c0_104 = arith.constant 0 : index
    %c0_105 = arith.constant 0 : index
    %207 = vector.load %arg10[%c0_104, %c0_105] : memref<8x128xf32, #tpu.memory_space<vmem>>, vector<8x128xf32>
    %208 = arith.index_cast %c5_i32 : i32 to index
    %c0_106 = arith.constant 0 : index
    %c0_107 = arith.constant 0 : index
    %209 = vector.load %arg1[%208, %c0_106, %c0_107] : memref<8x8x512xf32, #tpu.memory_space<vmem>>, vector<1x8x512xf32>
    %210 = vector.shape_cast %209 : vector<1x8x512xf32> to vector<8x512xf32>
    %211 = arith.truncf %206 : vector<8x128xf32> to vector<8x128xbf16>
    %cst_108 = arith.constant dense<0.000000e+00> : vector<8x512xf32>
    %212 = tpu.matmul %211, %1, %cst_108 {dimension_numbers = #tpu.dot_dimension_numbers<[1], [0], [0], [1], [0, 0, 1, 1], [], []>} : vector<8x128xbf16>, vector<128x512xbf16>, vector<8x512xf32> -> vector<8x512xf32>
    %213 = arith.addf %210, %212 : vector<8x512xf32>
    %214 = vector.extract_strided_slice %213 {offsets = [0, 0], sizes = [8, 128], strides = [1, 1]} : vector<8x512xf32> to vector<8x128xf32>
    %215 = math.tanh %214 : vector<8x128xf32>
    %cst_109 = arith.constant 5.000000e-01 : f32
    %216 = vector.broadcast %cst_109 : f32 to vector<8x128xf32>
    %217 = arith.mulf %216, %215 : vector<8x128xf32>
    %cst_110 = arith.constant 5.000000e-01 : f32
    %218 = vector.broadcast %cst_110 : f32 to vector<8x128xf32>
    %219 = arith.addf %217, %218 : vector<8x128xf32>
    %220 = vector.extract_strided_slice %213 {offsets = [0, 128], sizes = [8, 128], strides = [1, 1]} : vector<8x512xf32> to vector<8x128xf32>
    %221 = math.tanh %220 : vector<8x128xf32>
    %cst_111 = arith.constant 5.000000e-01 : f32
    %222 = vector.broadcast %cst_111 : f32 to vector<8x128xf32>
    %223 = arith.mulf %222, %221 : vector<8x128xf32>
    %cst_112 = arith.constant 5.000000e-01 : f32
    %224 = vector.broadcast %cst_112 : f32 to vector<8x128xf32>
    %225 = arith.addf %223, %224 : vector<8x128xf32>
    %226 = vector.extract_strided_slice %213 {offsets = [0, 256], sizes = [8, 128], strides = [1, 1]} : vector<8x512xf32> to vector<8x128xf32>
    %227 = math.tanh %226 : vector<8x128xf32>
    %228 = vector.extract_strided_slice %213 {offsets = [0, 384], sizes = [8, 128], strides = [1, 1]} : vector<8x512xf32> to vector<8x128xf32>
    %229 = math.tanh %228 : vector<8x128xf32>
    %cst_113 = arith.constant 5.000000e-01 : f32
    %230 = vector.broadcast %cst_113 : f32 to vector<8x128xf32>
    %231 = arith.mulf %230, %229 : vector<8x128xf32>
    %cst_114 = arith.constant 5.000000e-01 : f32
    %232 = vector.broadcast %cst_114 : f32 to vector<8x128xf32>
    %233 = arith.addf %231, %232 : vector<8x128xf32>
    %234 = arith.mulf %225, %207 : vector<8x128xf32>
    %235 = arith.mulf %219, %227 : vector<8x128xf32>
    %236 = arith.addf %234, %235 : vector<8x128xf32>
    %237 = math.tanh %236 : vector<8x128xf32>
    %238 = arith.mulf %233, %237 : vector<8x128xf32>
    %c0_115 = arith.constant 0 : index
    %c0_116 = arith.constant 0 : index
    %239 = vector.load %arg9[%c0_115, %c0_116] : memref<8x128xf32, #tpu.memory_space<vmem>>, vector<8x128xf32>
    tpu.vector_store %arg9[%c0_115, %c0_116], %238 {strides = array<i32>} : memref<8x128xf32, #tpu.memory_space<vmem>>, vector<8x128xf32>,
    %c0_117 = arith.constant 0 : index
    %c0_118 = arith.constant 0 : index
    %240 = vector.load %arg10[%c0_117, %c0_118] : memref<8x128xf32, #tpu.memory_space<vmem>>, vector<8x128xf32>
    tpu.vector_store %arg10[%c0_117, %c0_118], %236 {strides = array<i32>} : memref<8x128xf32, #tpu.memory_space<vmem>>, vector<8x128xf32>,
    %241 = arith.truncf %238 : vector<8x128xf32> to vector<8x128xbf16>
    %242 = arith.index_cast %c5_i32 : i32 to index
    %c0_119 = arith.constant 0 : index
    %c0_120 = arith.constant 0 : index
    %243 = vector.load %arg8[%242, %c0_119, %c0_120] : memref<8x8x128xbf16, #tpu.memory_space<vmem>>, vector<1x8x128xbf16>
    %244 = vector.shape_cast %243 : vector<1x8x128xbf16> to vector<8x128xbf16>
    %245 = vector.shape_cast %241 : vector<8x128xbf16> to vector<1x8x128xbf16>
    tpu.vector_store %arg8[%242, %c0_119, %c0_120], %245 {strides = array<i32>} : memref<8x8x128xbf16, #tpu.memory_space<vmem>>, vector<1x8x128xbf16>,
    %c6_i32 = arith.constant 6 : i32
    %c0_121 = arith.constant 0 : index
    %c0_122 = arith.constant 0 : index
    %246 = vector.load %arg9[%c0_121, %c0_122] : memref<8x128xf32, #tpu.memory_space<vmem>>, vector<8x128xf32>
    %c0_123 = arith.constant 0 : index
    %c0_124 = arith.constant 0 : index
    %247 = vector.load %arg10[%c0_123, %c0_124] : memref<8x128xf32, #tpu.memory_space<vmem>>, vector<8x128xf32>
    %248 = arith.index_cast %c6_i32 : i32 to index
    %c0_125 = arith.constant 0 : index
    %c0_126 = arith.constant 0 : index
    %249 = vector.load %arg1[%248, %c0_125, %c0_126] : memref<8x8x512xf32, #tpu.memory_space<vmem>>, vector<1x8x512xf32>
    %250 = vector.shape_cast %249 : vector<1x8x512xf32> to vector<8x512xf32>
    %251 = arith.truncf %246 : vector<8x128xf32> to vector<8x128xbf16>
    %cst_127 = arith.constant dense<0.000000e+00> : vector<8x512xf32>
    %252 = tpu.matmul %251, %1, %cst_127 {dimension_numbers = #tpu.dot_dimension_numbers<[1], [0], [0], [1], [0, 0, 1, 1], [], []>} : vector<8x128xbf16>, vector<128x512xbf16>, vector<8x512xf32> -> vector<8x512xf32>
    %253 = arith.addf %250, %252 : vector<8x512xf32>
    %254 = vector.extract_strided_slice %253 {offsets = [0, 0], sizes = [8, 128], strides = [1, 1]} : vector<8x512xf32> to vector<8x128xf32>
    %255 = math.tanh %254 : vector<8x128xf32>
    %cst_128 = arith.constant 5.000000e-01 : f32
    %256 = vector.broadcast %cst_128 : f32 to vector<8x128xf32>
    %257 = arith.mulf %256, %255 : vector<8x128xf32>
    %cst_129 = arith.constant 5.000000e-01 : f32
    %258 = vector.broadcast %cst_129 : f32 to vector<8x128xf32>
    %259 = arith.addf %257, %258 : vector<8x128xf32>
    %260 = vector.extract_strided_slice %253 {offsets = [0, 128], sizes = [8, 128], strides = [1, 1]} : vector<8x512xf32> to vector<8x128xf32>
    %261 = math.tanh %260 : vector<8x128xf32>
    %cst_130 = arith.constant 5.000000e-01 : f32
    %262 = vector.broadcast %cst_130 : f32 to vector<8x128xf32>
    %263 = arith.mulf %262, %261 : vector<8x128xf32>
    %cst_131 = arith.constant 5.000000e-01 : f32
    %264 = vector.broadcast %cst_131 : f32 to vector<8x128xf32>
    %265 = arith.addf %263, %264 : vector<8x128xf32>
    %266 = vector.extract_strided_slice %253 {offsets = [0, 256], sizes = [8, 128], strides = [1, 1]} : vector<8x512xf32> to vector<8x128xf32>
    %267 = math.tanh %266 : vector<8x128xf32>
    %268 = vector.extract_strided_slice %253 {offsets = [0, 384], sizes = [8, 128], strides = [1, 1]} : vector<8x512xf32> to vector<8x128xf32>
    %269 = math.tanh %268 : vector<8x128xf32>
    %cst_132 = arith.constant 5.000000e-01 : f32
    %270 = vector.broadcast %cst_132 : f32 to vector<8x128xf32>
    %271 = arith.mulf %270, %269 : vector<8x128xf32>
    %cst_133 = arith.constant 5.000000e-01 : f32
    %272 = vector.broadcast %cst_133 : f32 to vector<8x128xf32>
    %273 = arith.addf %271, %272 : vector<8x128xf32>
    %274 = arith.mulf %265, %247 : vector<8x128xf32>
    %275 = arith.mulf %259, %267 : vector<8x128xf32>
    %276 = arith.addf %274, %275 : vector<8x128xf32>
    %277 = math.tanh %276 : vector<8x128xf32>
    %278 = arith.mulf %273, %277 : vector<8x128xf32>
    %c0_134 = arith.constant 0 : index
    %c0_135 = arith.constant 0 : index
    %279 = vector.load %arg9[%c0_134, %c0_135] : memref<8x128xf32, #tpu.memory_space<vmem>>, vector<8x128xf32>
    tpu.vector_store %arg9[%c0_134, %c0_135], %278 {strides = array<i32>} : memref<8x128xf32, #tpu.memory_space<vmem>>, vector<8x128xf32>,
    %c0_136 = arith.constant 0 : index
    %c0_137 = arith.constant 0 : index
    %280 = vector.load %arg10[%c0_136, %c0_137] : memref<8x128xf32, #tpu.memory_space<vmem>>, vector<8x128xf32>
    tpu.vector_store %arg10[%c0_136, %c0_137], %276 {strides = array<i32>} : memref<8x128xf32, #tpu.memory_space<vmem>>, vector<8x128xf32>,
    %281 = arith.truncf %278 : vector<8x128xf32> to vector<8x128xbf16>
    %282 = arith.index_cast %c6_i32 : i32 to index
    %c0_138 = arith.constant 0 : index
    %c0_139 = arith.constant 0 : index
    %283 = vector.load %arg8[%282, %c0_138, %c0_139] : memref<8x8x128xbf16, #tpu.memory_space<vmem>>, vector<1x8x128xbf16>
    %284 = vector.shape_cast %283 : vector<1x8x128xbf16> to vector<8x128xbf16>
    %285 = vector.shape_cast %281 : vector<8x128xbf16> to vector<1x8x128xbf16>
    tpu.vector_store %arg8[%282, %c0_138, %c0_139], %285 {strides = array<i32>} : memref<8x8x128xbf16, #tpu.memory_space<vmem>>, vector<1x8x128xbf16>,
    %c7_i32 = arith.constant 7 : i32
    %c0_140 = arith.constant 0 : index
    %c0_141 = arith.constant 0 : index
    %286 = vector.load %arg9[%c0_140, %c0_141] : memref<8x128xf32, #tpu.memory_space<vmem>>, vector<8x128xf32>
    %c0_142 = arith.constant 0 : index
    %c0_143 = arith.constant 0 : index
    %287 = vector.load %arg10[%c0_142, %c0_143] : memref<8x128xf32, #tpu.memory_space<vmem>>, vector<8x128xf32>
    %288 = arith.index_cast %c7_i32 : i32 to index
    %c0_144 = arith.constant 0 : index
    %c0_145 = arith.constant 0 : index
    %289 = vector.load %arg1[%288, %c0_144, %c0_145] : memref<8x8x512xf32, #tpu.memory_space<vmem>>, vector<1x8x512xf32>
    %290 = vector.shape_cast %289 : vector<1x8x512xf32> to vector<8x512xf32>
    %291 = arith.truncf %286 : vector<8x128xf32> to vector<8x128xbf16>
    %cst_146 = arith.constant dense<0.000000e+00> : vector<8x512xf32>
    %292 = tpu.matmul %291, %1, %cst_146 {dimension_numbers = #tpu.dot_dimension_numbers<[1], [0], [0], [1], [0, 0, 1, 1], [], []>} : vector<8x128xbf16>, vector<128x512xbf16>, vector<8x512xf32> -> vector<8x512xf32>
    %293 = arith.addf %290, %292 : vector<8x512xf32>
    %294 = vector.extract_strided_slice %293 {offsets = [0, 0], sizes = [8, 128], strides = [1, 1]} : vector<8x512xf32> to vector<8x128xf32>
    %295 = math.tanh %294 : vector<8x128xf32>
    %cst_147 = arith.constant 5.000000e-01 : f32
    %296 = vector.broadcast %cst_147 : f32 to vector<8x128xf32>
    %297 = arith.mulf %296, %295 : vector<8x128xf32>
    %cst_148 = arith.constant 5.000000e-01 : f32
    %298 = vector.broadcast %cst_148 : f32 to vector<8x128xf32>
    %299 = arith.addf %297, %298 : vector<8x128xf32>
    %300 = vector.extract_strided_slice %293 {offsets = [0, 128], sizes = [8, 128], strides = [1, 1]} : vector<8x512xf32> to vector<8x128xf32>
    %301 = math.tanh %300 : vector<8x128xf32>
    %cst_149 = arith.constant 5.000000e-01 : f32
    %302 = vector.broadcast %cst_149 : f32 to vector<8x128xf32>
    %303 = arith.mulf %302, %301 : vector<8x128xf32>
    %cst_150 = arith.constant 5.000000e-01 : f32
    %304 = vector.broadcast %cst_150 : f32 to vector<8x128xf32>
    %305 = arith.addf %303, %304 : vector<8x128xf32>
    %306 = vector.extract_strided_slice %293 {offsets = [0, 256], sizes = [8, 128], strides = [1, 1]} : vector<8x512xf32> to vector<8x128xf32>
    %307 = math.tanh %306 : vector<8x128xf32>
    %308 = vector.extract_strided_slice %293 {offsets = [0, 384], sizes = [8, 128], strides = [1, 1]} : vector<8x512xf32> to vector<8x128xf32>
    %309 = math.tanh %308 : vector<8x128xf32>
    %cst_151 = arith.constant 5.000000e-01 : f32
    %310 = vector.broadcast %cst_151 : f32 to vector<8x128xf32>
    %311 = arith.mulf %310, %309 : vector<8x128xf32>
    %cst_152 = arith.constant 5.000000e-01 : f32
    %312 = vector.broadcast %cst_152 : f32 to vector<8x128xf32>
    %313 = arith.addf %311, %312 : vector<8x128xf32>
    %314 = arith.mulf %305, %287 : vector<8x128xf32>
    %315 = arith.mulf %299, %307 : vector<8x128xf32>
    %316 = arith.addf %314, %315 : vector<8x128xf32>
    %317 = math.tanh %316 : vector<8x128xf32>
    %318 = arith.mulf %313, %317 : vector<8x128xf32>
    %c0_153 = arith.constant 0 : index
    %c0_154 = arith.constant 0 : index
    %319 = vector.load %arg9[%c0_153, %c0_154] : memref<8x128xf32, #tpu.memory_space<vmem>>, vector<8x128xf32>
    tpu.vector_store %arg9[%c0_153, %c0_154], %318 {strides = array<i32>} : memref<8x128xf32, #tpu.memory_space<vmem>>, vector<8x128xf32>,
    %c0_155 = arith.constant 0 : index
    %c0_156 = arith.constant 0 : index
    %320 = vector.load %arg10[%c0_155, %c0_156] : memref<8x128xf32, #tpu.memory_space<vmem>>, vector<8x128xf32>
    tpu.vector_store %arg10[%c0_155, %c0_156], %316 {strides = array<i32>} : memref<8x128xf32, #tpu.memory_space<vmem>>, vector<8x128xf32>,
    %321 = arith.truncf %318 : vector<8x128xf32> to vector<8x128xbf16>
    %322 = arith.index_cast %c7_i32 : i32 to index
    %c0_157 = arith.constant 0 : index
    %c0_158 = arith.constant 0 : index
    %323 = vector.load %arg8[%322, %c0_157, %c0_158] : memref<8x8x128xbf16, #tpu.memory_space<vmem>>, vector<1x8x128xbf16>
    %324 = vector.shape_cast %323 : vector<1x8x128xbf16> to vector<8x128xbf16>
    %325 = vector.shape_cast %321 : vector<8x128xbf16> to vector<1x8x128xbf16>
    tpu.vector_store %arg8[%322, %c0_157, %c0_158], %325 {strides = array<i32>} : memref<8x8x128xbf16, #tpu.memory_space<vmem>>, vector<1x8x128xbf16>,
    %c8_i32 = arith.constant 8 : i32
    %c0_159 = arith.constant 0 : index
    %c0_160 = arith.constant 0 : index
    %326 = vector.load %arg9[%c0_159, %c0_160] : memref<8x128xf32, #tpu.memory_space<vmem>>, vector<8x128xf32>
    %c0_161 = arith.constant 0 : index
    %c0_162 = arith.constant 0 : index
    %c0_163 = arith.constant 0 : index
    %327 = vector.load %arg5[%c0_161, %c0_162, %c0_163] : memref<2x8x128xf32, #tpu.memory_space<vmem>>, vector<1x8x128xf32>
    %328 = vector.shape_cast %327 : vector<1x8x128xf32> to vector<8x128xf32>
    %329 = vector.shape_cast %326 : vector<8x128xf32> to vector<1x8x128xf32>
    tpu.vector_store %arg5[%c0_161, %c0_162, %c0_163], %329 {strides = array<i32>} : memref<2x8x128xf32, #tpu.memory_space<vmem>>, vector<1x8x128xf32>,
    %c0_164 = arith.constant 0 : index
    %c0_165 = arith.constant 0 : index
    %330 = vector.load %arg10[%c0_164, %c0_165] : memref<8x128xf32, #tpu.memory_space<vmem>>, vector<8x128xf32>
    %c0_166 = arith.constant 0 : index
    %c0_167 = arith.constant 0 : index
    %c0_168 = arith.constant 0 : index
    %331 = vector.load %arg6[%c0_166, %c0_167, %c0_168] : memref<2x8x128xf32, #tpu.memory_space<vmem>>, vector<1x8x128xf32>
    %332 = vector.shape_cast %331 : vector<1x8x128xf32> to vector<8x128xf32>
    %333 = vector.shape_cast %330 : vector<8x128xf32> to vector<1x8x128xf32>
    tpu.vector_store %arg6[%c0_166, %c0_167, %c0_168], %333 {strides = array<i32>} : memref<2x8x128xf32, #tpu.memory_space<vmem>>, vector<1x8x128xf32>,
    %c1 = arith.constant 1 : index
    %c0_169 = arith.constant 0 : index
    %c0_170 = arith.constant 0 : index
    %334 = vector.load %arg3[%c1, %c0_169, %c0_170] : memref<2x128x512xbf16, #tpu.memory_space<vmem>>, vector<1x128x512xbf16>
    %335 = vector.shape_cast %334 : vector<1x128x512xbf16> to vector<128x512xbf16>
    %c0_171 = arith.constant 0 : index
    %c0_172 = arith.constant 0 : index
    %c0_173 = arith.constant 0 : index
    %336 = vector.load %arg2[%c0_171, %c0_172, %c0_173] : memref<1x128x512xbf16, #tpu.memory_space<vmem>>, vector<1x128x512xbf16>
    %337 = vector.shape_cast %336 : vector<1x128x512xbf16> to vector<128x512xbf16>
    %c0_174 = arith.constant 0 : index
    %c0_175 = arith.constant 0 : index
    %c0_176 = arith.constant 0 : index
    %338 = vector.load %arg8[%c0_174, %c0_175, %c0_176] : memref<8x8x128xbf16, #tpu.memory_space<vmem>>, vector<8x8x128xbf16>
    %339 = vector.shape_cast %338 : vector<8x8x128xbf16> to vector<64x128xbf16>
    %cst_177 = arith.constant dense<0.000000e+00> : vector<64x512xf32>
    %340 = tpu.matmul %339, %337, %cst_177 {dimension_numbers = #tpu.dot_dimension_numbers<[1], [0], [0], [1], [0, 0, 1, 1], [], []>} : vector<64x128xbf16>, vector<128x512xbf16>, vector<64x512xf32> -> vector<64x512xf32>
    %341 = vector.shape_cast %340 : vector<64x512xf32> to vector<8x8x512xf32>
    %c1_178 = arith.constant 1 : index
    %c0_179 = arith.constant 0 : index
    %c0_180 = arith.constant 0 : index
    %342 = vector.load %arg4[%c1_178, %c0_179, %c0_180] : memref<2x1x512xf32, #tpu.memory_space<vmem>>, vector<1x1x512xf32>
    %343 = vector.shape_cast %342 : vector<1x1x512xf32> to vector<1x512xf32>
    %344 = vector.shape_cast %343 : vector<1x512xf32> to vector<1x1x512xf32>
    %345 = vector.broadcast %344 : vector<1x1x512xf32> to vector<8x8x512xf32>
    %346 = arith.addf %341, %345 : vector<8x8x512xf32>
    %c0_181 = arith.constant 0 : index
    %c0_182 = arith.constant 0 : index
    %c0_183 = arith.constant 0 : index
    %347 = vector.load %arg7[%c0_181, %c0_182, %c0_183] : memref<8x8x512xf32, #tpu.memory_space<vmem>>, vector<8x8x512xf32>
    tpu.vector_store %arg7[%c0_181, %c0_182, %c0_183], %346 {strides = array<i32>} : memref<8x8x512xf32, #tpu.memory_space<vmem>>, vector<8x8x512xf32>,
    %cst_184 = arith.constant 0.000000e+00 : f32
    %348 = vector.broadcast %cst_184 : f32 to vector<8x128xf32>
    %c0_185 = arith.constant 0 : index
    %c0_186 = arith.constant 0 : index
    %349 = vector.load %arg9[%c0_185, %c0_186] : memref<8x128xf32, #tpu.memory_space<vmem>>, vector<8x128xf32>
    tpu.vector_store %arg9[%c0_185, %c0_186], %348 {strides = array<i32>} : memref<8x128xf32, #tpu.memory_space<vmem>>, vector<8x128xf32>,
    %cst_187 = arith.constant 0.000000e+00 : f32
    %350 = vector.broadcast %cst_187 : f32 to vector<8x128xf32>
    %c0_188 = arith.constant 0 : index
    %c0_189 = arith.constant 0 : index
    %351 = vector.load %arg10[%c0_188, %c0_189] : memref<8x128xf32, #tpu.memory_space<vmem>>, vector<8x128xf32>
    tpu.vector_store %arg10[%c0_188, %c0_189], %350 {strides = array<i32>} : memref<8x128xf32, #tpu.memory_space<vmem>>, vector<8x128xf32>,
    %c0_i32_190 = arith.constant 0 : i32
    %c0_191 = arith.constant 0 : index
    %c0_192 = arith.constant 0 : index
    %352 = vector.load %arg9[%c0_191, %c0_192] : memref<8x128xf32, #tpu.memory_space<vmem>>, vector<8x128xf32>
    %c0_193 = arith.constant 0 : index
    %c0_194 = arith.constant 0 : index
    %353 = vector.load %arg10[%c0_193, %c0_194] : memref<8x128xf32, #tpu.memory_space<vmem>>, vector<8x128xf32>
    %354 = arith.index_cast %c0_i32_190 : i32 to index
    %c0_195 = arith.constant 0 : index
    %c0_196 = arith.constant 0 : index
    %355 = vector.load %arg7[%354, %c0_195, %c0_196] : memref<8x8x512xf32, #tpu.memory_space<vmem>>, vector<1x8x512xf32>
    %356 = vector.shape_cast %355 : vector<1x8x512xf32> to vector<8x512xf32>
    %357 = arith.truncf %352 : vector<8x128xf32> to vector<8x128xbf16>
    %cst_197 = arith.constant dense<0.000000e+00> : vector<8x512xf32>
    %358 = tpu.matmul %357, %335, %cst_197 {dimension_numbers = #tpu.dot_dimension_numbers<[1], [0], [0], [1], [0, 0, 1, 1], [], []>} : vector<8x128xbf16>, vector<128x512xbf16>, vector<8x512xf32> -> vector<8x512xf32>
    %359 = arith.addf %356, %358 : vector<8x512xf32>
    %360 = vector.extract_strided_slice %359 {offsets = [0, 0], sizes = [8, 128], strides = [1, 1]} : vector<8x512xf32> to vector<8x128xf32>
    %361 = math.tanh %360 : vector<8x128xf32>
    %cst_198 = arith.constant 5.000000e-01 : f32
    %362 = vector.broadcast %cst_198 : f32 to vector<8x128xf32>
    %363 = arith.mulf %362, %361 : vector<8x128xf32>
    %cst_199 = arith.constant 5.000000e-01 : f32
    %364 = vector.broadcast %cst_199 : f32 to vector<8x128xf32>
    %365 = arith.addf %363, %364 : vector<8x128xf32>
    %366 = vector.extract_strided_slice %359 {offsets = [0, 128], sizes = [8, 128], strides = [1, 1]} : vector<8x512xf32> to vector<8x128xf32>
    %367 = math.tanh %366 : vector<8x128xf32>
    %cst_200 = arith.constant 5.000000e-01 : f32
    %368 = vector.broadcast %cst_200 : f32 to vector<8x128xf32>
    %369 = arith.mulf %368, %367 : vector<8x128xf32>
    %cst_201 = arith.constant 5.000000e-01 : f32
    %370 = vector.broadcast %cst_201 : f32 to vector<8x128xf32>
    %371 = arith.addf %369, %370 : vector<8x128xf32>
    %372 = vector.extract_strided_slice %359 {offsets = [0, 256], sizes = [8, 128], strides = [1, 1]} : vector<8x512xf32> to vector<8x128xf32>
    %373 = math.tanh %372 : vector<8x128xf32>
    %374 = vector.extract_strided_slice %359 {offsets = [0, 384], sizes = [8, 128], strides = [1, 1]} : vector<8x512xf32> to vector<8x128xf32>
    %375 = math.tanh %374 : vector<8x128xf32>
    %cst_202 = arith.constant 5.000000e-01 : f32
    %376 = vector.broadcast %cst_202 : f32 to vector<8x128xf32>
    %377 = arith.mulf %376, %375 : vector<8x128xf32>
    %cst_203 = arith.constant 5.000000e-01 : f32
    %378 = vector.broadcast %cst_203 : f32 to vector<8x128xf32>
    %379 = arith.addf %377, %378 : vector<8x128xf32>
    %380 = arith.mulf %371, %353 : vector<8x128xf32>
    %381 = arith.mulf %365, %373 : vector<8x128xf32>
    %382 = arith.addf %380, %381 : vector<8x128xf32>
    %383 = math.tanh %382 : vector<8x128xf32>
    %384 = arith.mulf %379, %383 : vector<8x128xf32>
    %c0_204 = arith.constant 0 : index
    %c0_205 = arith.constant 0 : index
    %385 = vector.load %arg9[%c0_204, %c0_205] : memref<8x128xf32, #tpu.memory_space<vmem>>, vector<8x128xf32>
    tpu.vector_store %arg9[%c0_204, %c0_205], %384 {strides = array<i32>} : memref<8x128xf32, #tpu.memory_space<vmem>>, vector<8x128xf32>,
    %c0_206 = arith.constant 0 : index
    %c0_207 = arith.constant 0 : index
    %386 = vector.load %arg10[%c0_206, %c0_207] : memref<8x128xf32, #tpu.memory_space<vmem>>, vector<8x128xf32>
    tpu.vector_store %arg10[%c0_206, %c0_207], %382 {strides = array<i32>} : memref<8x128xf32, #tpu.memory_space<vmem>>, vector<8x128xf32>,
    %387 = arith.truncf %384 : vector<8x128xf32> to vector<8x128xbf16>
    %388 = arith.index_cast %c0_i32_190 : i32 to index
    %c0_208 = arith.constant 0 : index
    %c0_209 = arith.constant 0 : index
    %389 = vector.load %arg8[%388, %c0_208, %c0_209] : memref<8x8x128xbf16, #tpu.memory_space<vmem>>, vector<1x8x128xbf16>
    %390 = vector.shape_cast %389 : vector<1x8x128xbf16> to vector<8x128xbf16>
    %391 = vector.shape_cast %387 : vector<8x128xbf16> to vector<1x8x128xbf16>
    tpu.vector_store %arg8[%388, %c0_208, %c0_209], %391 {strides = array<i32>} : memref<8x8x128xbf16, #tpu.memory_space<vmem>>, vector<1x8x128xbf16>,
    %c1_i32_210 = arith.constant 1 : i32
    %c0_211 = arith.constant 0 : index
    %c0_212 = arith.constant 0 : index
    %392 = vector.load %arg9[%c0_211, %c0_212] : memref<8x128xf32, #tpu.memory_space<vmem>>, vector<8x128xf32>
    %c0_213 = arith.constant 0 : index
    %c0_214 = arith.constant 0 : index
    %393 = vector.load %arg10[%c0_213, %c0_214] : memref<8x128xf32, #tpu.memory_space<vmem>>, vector<8x128xf32>
    %394 = arith.index_cast %c1_i32_210 : i32 to index
    %c0_215 = arith.constant 0 : index
    %c0_216 = arith.constant 0 : index
    %395 = vector.load %arg7[%394, %c0_215, %c0_216] : memref<8x8x512xf32, #tpu.memory_space<vmem>>, vector<1x8x512xf32>
    %396 = vector.shape_cast %395 : vector<1x8x512xf32> to vector<8x512xf32>
    %397 = arith.truncf %392 : vector<8x128xf32> to vector<8x128xbf16>
    %cst_217 = arith.constant dense<0.000000e+00> : vector<8x512xf32>
    %398 = tpu.matmul %397, %335, %cst_217 {dimension_numbers = #tpu.dot_dimension_numbers<[1], [0], [0], [1], [0, 0, 1, 1], [], []>} : vector<8x128xbf16>, vector<128x512xbf16>, vector<8x512xf32> -> vector<8x512xf32>
    %399 = arith.addf %396, %398 : vector<8x512xf32>
    %400 = vector.extract_strided_slice %399 {offsets = [0, 0], sizes = [8, 128], strides = [1, 1]} : vector<8x512xf32> to vector<8x128xf32>
    %401 = math.tanh %400 : vector<8x128xf32>
    %cst_218 = arith.constant 5.000000e-01 : f32
    %402 = vector.broadcast %cst_218 : f32 to vector<8x128xf32>
    %403 = arith.mulf %402, %401 : vector<8x128xf32>
    %cst_219 = arith.constant 5.000000e-01 : f32
    %404 = vector.broadcast %cst_219 : f32 to vector<8x128xf32>
    %405 = arith.addf %403, %404 : vector<8x128xf32>
    %406 = vector.extract_strided_slice %399 {offsets = [0, 128], sizes = [8, 128], strides = [1, 1]} : vector<8x512xf32> to vector<8x128xf32>
    %407 = math.tanh %406 : vector<8x128xf32>
    %cst_220 = arith.constant 5.000000e-01 : f32
    %408 = vector.broadcast %cst_220 : f32 to vector<8x128xf32>
    %409 = arith.mulf %408, %407 : vector<8x128xf32>
    %cst_221 = arith.constant 5.000000e-01 : f32
    %410 = vector.broadcast %cst_221 : f32 to vector<8x128xf32>
    %411 = arith.addf %409, %410 : vector<8x128xf32>
    %412 = vector.extract_strided_slice %399 {offsets = [0, 256], sizes = [8, 128], strides = [1, 1]} : vector<8x512xf32> to vector<8x128xf32>
    %413 = math.tanh %412 : vector<8x128xf32>
    %414 = vector.extract_strided_slice %399 {offsets = [0, 384], sizes = [8, 128], strides = [1, 1]} : vector<8x512xf32> to vector<8x128xf32>
    %415 = math.tanh %414 : vector<8x128xf32>
    %cst_222 = arith.constant 5.000000e-01 : f32
    %416 = vector.broadcast %cst_222 : f32 to vector<8x128xf32>
    %417 = arith.mulf %416, %415 : vector<8x128xf32>
    %cst_223 = arith.constant 5.000000e-01 : f32
    %418 = vector.broadcast %cst_223 : f32 to vector<8x128xf32>
    %419 = arith.addf %417, %418 : vector<8x128xf32>
    %420 = arith.mulf %411, %393 : vector<8x128xf32>
    %421 = arith.mulf %405, %413 : vector<8x128xf32>
    %422 = arith.addf %420, %421 : vector<8x128xf32>
    %423 = math.tanh %422 : vector<8x128xf32>
    %424 = arith.mulf %419, %423 : vector<8x128xf32>
    %c0_224 = arith.constant 0 : index
    %c0_225 = arith.constant 0 : index
    %425 = vector.load %arg9[%c0_224, %c0_225] : memref<8x128xf32, #tpu.memory_space<vmem>>, vector<8x128xf32>
    tpu.vector_store %arg9[%c0_224, %c0_225], %424 {strides = array<i32>} : memref<8x128xf32, #tpu.memory_space<vmem>>, vector<8x128xf32>,
    %c0_226 = arith.constant 0 : index
    %c0_227 = arith.constant 0 : index
    %426 = vector.load %arg10[%c0_226, %c0_227] : memref<8x128xf32, #tpu.memory_space<vmem>>, vector<8x128xf32>
    tpu.vector_store %arg10[%c0_226, %c0_227], %422 {strides = array<i32>} : memref<8x128xf32, #tpu.memory_space<vmem>>, vector<8x128xf32>,
    %427 = arith.truncf %424 : vector<8x128xf32> to vector<8x128xbf16>
    %428 = arith.index_cast %c1_i32_210 : i32 to index
    %c0_228 = arith.constant 0 : index
    %c0_229 = arith.constant 0 : index
    %429 = vector.load %arg8[%428, %c0_228, %c0_229] : memref<8x8x128xbf16, #tpu.memory_space<vmem>>, vector<1x8x128xbf16>
    %430 = vector.shape_cast %429 : vector<1x8x128xbf16> to vector<8x128xbf16>
    %431 = vector.shape_cast %427 : vector<8x128xbf16> to vector<1x8x128xbf16>
    tpu.vector_store %arg8[%428, %c0_228, %c0_229], %431 {strides = array<i32>} : memref<8x8x128xbf16, #tpu.memory_space<vmem>>, vector<1x8x128xbf16>,
    %c2_i32_230 = arith.constant 2 : i32
    %c0_231 = arith.constant 0 : index
    %c0_232 = arith.constant 0 : index
    %432 = vector.load %arg9[%c0_231, %c0_232] : memref<8x128xf32, #tpu.memory_space<vmem>>, vector<8x128xf32>
    %c0_233 = arith.constant 0 : index
    %c0_234 = arith.constant 0 : index
    %433 = vector.load %arg10[%c0_233, %c0_234] : memref<8x128xf32, #tpu.memory_space<vmem>>, vector<8x128xf32>
    %434 = arith.index_cast %c2_i32_230 : i32 to index
    %c0_235 = arith.constant 0 : index
    %c0_236 = arith.constant 0 : index
    %435 = vector.load %arg7[%434, %c0_235, %c0_236] : memref<8x8x512xf32, #tpu.memory_space<vmem>>, vector<1x8x512xf32>
    %436 = vector.shape_cast %435 : vector<1x8x512xf32> to vector<8x512xf32>
    %437 = arith.truncf %432 : vector<8x128xf32> to vector<8x128xbf16>
    %cst_237 = arith.constant dense<0.000000e+00> : vector<8x512xf32>
    %438 = tpu.matmul %437, %335, %cst_237 {dimension_numbers = #tpu.dot_dimension_numbers<[1], [0], [0], [1], [0, 0, 1, 1], [], []>} : vector<8x128xbf16>, vector<128x512xbf16>, vector<8x512xf32> -> vector<8x512xf32>
    %439 = arith.addf %436, %438 : vector<8x512xf32>
    %440 = vector.extract_strided_slice %439 {offsets = [0, 0], sizes = [8, 128], strides = [1, 1]} : vector<8x512xf32> to vector<8x128xf32>
    %441 = math.tanh %440 : vector<8x128xf32>
    %cst_238 = arith.constant 5.000000e-01 : f32
    %442 = vector.broadcast %cst_238 : f32 to vector<8x128xf32>
    %443 = arith.mulf %442, %441 : vector<8x128xf32>
    %cst_239 = arith.constant 5.000000e-01 : f32
    %444 = vector.broadcast %cst_239 : f32 to vector<8x128xf32>
    %445 = arith.addf %443, %444 : vector<8x128xf32>
    %446 = vector.extract_strided_slice %439 {offsets = [0, 128], sizes = [8, 128], strides = [1, 1]} : vector<8x512xf32> to vector<8x128xf32>
    %447 = math.tanh %446 : vector<8x128xf32>
    %cst_240 = arith.constant 5.000000e-01 : f32
    %448 = vector.broadcast %cst_240 : f32 to vector<8x128xf32>
    %449 = arith.mulf %448, %447 : vector<8x128xf32>
    %cst_241 = arith.constant 5.000000e-01 : f32
    %450 = vector.broadcast %cst_241 : f32 to vector<8x128xf32>
    %451 = arith.addf %449, %450 : vector<8x128xf32>
    %452 = vector.extract_strided_slice %439 {offsets = [0, 256], sizes = [8, 128], strides = [1, 1]} : vector<8x512xf32> to vector<8x128xf32>
    %453 = math.tanh %452 : vector<8x128xf32>
    %454 = vector.extract_strided_slice %439 {offsets = [0, 384], sizes = [8, 128], strides = [1, 1]} : vector<8x512xf32> to vector<8x128xf32>
    %455 = math.tanh %454 : vector<8x128xf32>
    %cst_242 = arith.constant 5.000000e-01 : f32
    %456 = vector.broadcast %cst_242 : f32 to vector<8x128xf32>
    %457 = arith.mulf %456, %455 : vector<8x128xf32>
    %cst_243 = arith.constant 5.000000e-01 : f32
    %458 = vector.broadcast %cst_243 : f32 to vector<8x128xf32>
    %459 = arith.addf %457, %458 : vector<8x128xf32>
    %460 = arith.mulf %451, %433 : vector<8x128xf32>
    %461 = arith.mulf %445, %453 : vector<8x128xf32>
    %462 = arith.addf %460, %461 : vector<8x128xf32>
    %463 = math.tanh %462 : vector<8x128xf32>
    %464 = arith.mulf %459, %463 : vector<8x128xf32>
    %c0_244 = arith.constant 0 : index
    %c0_245 = arith.constant 0 : index
    %465 = vector.load %arg9[%c0_244, %c0_245] : memref<8x128xf32, #tpu.memory_space<vmem>>, vector<8x128xf32>
    tpu.vector_store %arg9[%c0_244, %c0_245], %464 {strides = array<i32>} : memref<8x128xf32, #tpu.memory_space<vmem>>, vector<8x128xf32>,
    %c0_246 = arith.constant 0 : index
    %c0_247 = arith.constant 0 : index
    %466 = vector.load %arg10[%c0_246, %c0_247] : memref<8x128xf32, #tpu.memory_space<vmem>>, vector<8x128xf32>
    tpu.vector_store %arg10[%c0_246, %c0_247], %462 {strides = array<i32>} : memref<8x128xf32, #tpu.memory_space<vmem>>, vector<8x128xf32>,
    %467 = arith.truncf %464 : vector<8x128xf32> to vector<8x128xbf16>
    %468 = arith.index_cast %c2_i32_230 : i32 to index
    %c0_248 = arith.constant 0 : index
    %c0_249 = arith.constant 0 : index
    %469 = vector.load %arg8[%468, %c0_248, %c0_249] : memref<8x8x128xbf16, #tpu.memory_space<vmem>>, vector<1x8x128xbf16>
    %470 = vector.shape_cast %469 : vector<1x8x128xbf16> to vector<8x128xbf16>
    %471 = vector.shape_cast %467 : vector<8x128xbf16> to vector<1x8x128xbf16>
    tpu.vector_store %arg8[%468, %c0_248, %c0_249], %471 {strides = array<i32>} : memref<8x8x128xbf16, #tpu.memory_space<vmem>>, vector<1x8x128xbf16>,
    %c3_i32_250 = arith.constant 3 : i32
    %c0_251 = arith.constant 0 : index
    %c0_252 = arith.constant 0 : index
    %472 = vector.load %arg9[%c0_251, %c0_252] : memref<8x128xf32, #tpu.memory_space<vmem>>, vector<8x128xf32>
    %c0_253 = arith.constant 0 : index
    %c0_254 = arith.constant 0 : index
    %473 = vector.load %arg10[%c0_253, %c0_254] : memref<8x128xf32, #tpu.memory_space<vmem>>, vector<8x128xf32>
    %474 = arith.index_cast %c3_i32_250 : i32 to index
    %c0_255 = arith.constant 0 : index
    %c0_256 = arith.constant 0 : index
    %475 = vector.load %arg7[%474, %c0_255, %c0_256] : memref<8x8x512xf32, #tpu.memory_space<vmem>>, vector<1x8x512xf32>
    %476 = vector.shape_cast %475 : vector<1x8x512xf32> to vector<8x512xf32>
    %477 = arith.truncf %472 : vector<8x128xf32> to vector<8x128xbf16>
    %cst_257 = arith.constant dense<0.000000e+00> : vector<8x512xf32>
    %478 = tpu.matmul %477, %335, %cst_257 {dimension_numbers = #tpu.dot_dimension_numbers<[1], [0], [0], [1], [0, 0, 1, 1], [], []>} : vector<8x128xbf16>, vector<128x512xbf16>, vector<8x512xf32> -> vector<8x512xf32>
    %479 = arith.addf %476, %478 : vector<8x512xf32>
    %480 = vector.extract_strided_slice %479 {offsets = [0, 0], sizes = [8, 128], strides = [1, 1]} : vector<8x512xf32> to vector<8x128xf32>
    %481 = math.tanh %480 : vector<8x128xf32>
    %cst_258 = arith.constant 5.000000e-01 : f32
    %482 = vector.broadcast %cst_258 : f32 to vector<8x128xf32>
    %483 = arith.mulf %482, %481 : vector<8x128xf32>
    %cst_259 = arith.constant 5.000000e-01 : f32
    %484 = vector.broadcast %cst_259 : f32 to vector<8x128xf32>
    %485 = arith.addf %483, %484 : vector<8x128xf32>
    %486 = vector.extract_strided_slice %479 {offsets = [0, 128], sizes = [8, 128], strides = [1, 1]} : vector<8x512xf32> to vector<8x128xf32>
    %487 = math.tanh %486 : vector<8x128xf32>
    %cst_260 = arith.constant 5.000000e-01 : f32
    %488 = vector.broadcast %cst_260 : f32 to vector<8x128xf32>
    %489 = arith.mulf %488, %487 : vector<8x128xf32>
    %cst_261 = arith.constant 5.000000e-01 : f32
    %490 = vector.broadcast %cst_261 : f32 to vector<8x128xf32>
    %491 = arith.addf %489, %490 : vector<8x128xf32>
    %492 = vector.extract_strided_slice %479 {offsets = [0, 256], sizes = [8, 128], strides = [1, 1]} : vector<8x512xf32> to vector<8x128xf32>
    %493 = math.tanh %492 : vector<8x128xf32>
    %494 = vector.extract_strided_slice %479 {offsets = [0, 384], sizes = [8, 128], strides = [1, 1]} : vector<8x512xf32> to vector<8x128xf32>
    %495 = math.tanh %494 : vector<8x128xf32>
    %cst_262 = arith.constant 5.000000e-01 : f32
    %496 = vector.broadcast %cst_262 : f32 to vector<8x128xf32>
    %497 = arith.mulf %496, %495 : vector<8x128xf32>
    %cst_263 = arith.constant 5.000000e-01 : f32
    %498 = vector.broadcast %cst_263 : f32 to vector<8x128xf32>
    %499 = arith.addf %497, %498 : vector<8x128xf32>
    %500 = arith.mulf %491, %473 : vector<8x128xf32>
    %501 = arith.mulf %485, %493 : vector<8x128xf32>
    %502 = arith.addf %500, %501 : vector<8x128xf32>
    %503 = math.tanh %502 : vector<8x128xf32>
    %504 = arith.mulf %499, %503 : vector<8x128xf32>
    %c0_264 = arith.constant 0 : index
    %c0_265 = arith.constant 0 : index
    %505 = vector.load %arg9[%c0_264, %c0_265] : memref<8x128xf32, #tpu.memory_space<vmem>>, vector<8x128xf32>
    tpu.vector_store %arg9[%c0_264, %c0_265], %504 {strides = array<i32>} : memref<8x128xf32, #tpu.memory_space<vmem>>, vector<8x128xf32>,
    %c0_266 = arith.constant 0 : index
    %c0_267 = arith.constant 0 : index
    %506 = vector.load %arg10[%c0_266, %c0_267] : memref<8x128xf32, #tpu.memory_space<vmem>>, vector<8x128xf32>
    tpu.vector_store %arg10[%c0_266, %c0_267], %502 {strides = array<i32>} : memref<8x128xf32, #tpu.memory_space<vmem>>, vector<8x128xf32>,
    %507 = arith.truncf %504 : vector<8x128xf32> to vector<8x128xbf16>
    %508 = arith.index_cast %c3_i32_250 : i32 to index
    %c0_268 = arith.constant 0 : index
    %c0_269 = arith.constant 0 : index
    %509 = vector.load %arg8[%508, %c0_268, %c0_269] : memref<8x8x128xbf16, #tpu.memory_space<vmem>>, vector<1x8x128xbf16>
    %510 = vector.shape_cast %509 : vector<1x8x128xbf16> to vector<8x128xbf16>
    %511 = vector.shape_cast %507 : vector<8x128xbf16> to vector<1x8x128xbf16>
    tpu.vector_store %arg8[%508, %c0_268, %c0_269], %511 {strides = array<i32>} : memref<8x8x128xbf16, #tpu.memory_space<vmem>>, vector<1x8x128xbf16>,
    %c4_i32_270 = arith.constant 4 : i32
    %c0_271 = arith.constant 0 : index
    %c0_272 = arith.constant 0 : index
    %512 = vector.load %arg9[%c0_271, %c0_272] : memref<8x128xf32, #tpu.memory_space<vmem>>, vector<8x128xf32>
    %c0_273 = arith.constant 0 : index
    %c0_274 = arith.constant 0 : index
    %513 = vector.load %arg10[%c0_273, %c0_274] : memref<8x128xf32, #tpu.memory_space<vmem>>, vector<8x128xf32>
    %514 = arith.index_cast %c4_i32_270 : i32 to index
    %c0_275 = arith.constant 0 : index
    %c0_276 = arith.constant 0 : index
    %515 = vector.load %arg7[%514, %c0_275, %c0_276] : memref<8x8x512xf32, #tpu.memory_space<vmem>>, vector<1x8x512xf32>
    %516 = vector.shape_cast %515 : vector<1x8x512xf32> to vector<8x512xf32>
    %517 = arith.truncf %512 : vector<8x128xf32> to vector<8x128xbf16>
    %cst_277 = arith.constant dense<0.000000e+00> : vector<8x512xf32>
    %518 = tpu.matmul %517, %335, %cst_277 {dimension_numbers = #tpu.dot_dimension_numbers<[1], [0], [0], [1], [0, 0, 1, 1], [], []>} : vector<8x128xbf16>, vector<128x512xbf16>, vector<8x512xf32> -> vector<8x512xf32>
    %519 = arith.addf %516, %518 : vector<8x512xf32>
    %520 = vector.extract_strided_slice %519 {offsets = [0, 0], sizes = [8, 128], strides = [1, 1]} : vector<8x512xf32> to vector<8x128xf32>
    %521 = math.tanh %520 : vector<8x128xf32>
    %cst_278 = arith.constant 5.000000e-01 : f32
    %522 = vector.broadcast %cst_278 : f32 to vector<8x128xf32>
    %523 = arith.mulf %522, %521 : vector<8x128xf32>
    %cst_279 = arith.constant 5.000000e-01 : f32
    %524 = vector.broadcast %cst_279 : f32 to vector<8x128xf32>
    %525 = arith.addf %523, %524 : vector<8x128xf32>
    %526 = vector.extract_strided_slice %519 {offsets = [0, 128], sizes = [8, 128], strides = [1, 1]} : vector<8x512xf32> to vector<8x128xf32>
    %527 = math.tanh %526 : vector<8x128xf32>
    %cst_280 = arith.constant 5.000000e-01 : f32
    %528 = vector.broadcast %cst_280 : f32 to vector<8x128xf32>
    %529 = arith.mulf %528, %527 : vector<8x128xf32>
    %cst_281 = arith.constant 5.000000e-01 : f32
    %530 = vector.broadcast %cst_281 : f32 to vector<8x128xf32>
    %531 = arith.addf %529, %530 : vector<8x128xf32>
    %532 = vector.extract_strided_slice %519 {offsets = [0, 256], sizes = [8, 128], strides = [1, 1]} : vector<8x512xf32> to vector<8x128xf32>
    %533 = math.tanh %532 : vector<8x128xf32>
    %534 = vector.extract_strided_slice %519 {offsets = [0, 384], sizes = [8, 128], strides = [1, 1]} : vector<8x512xf32> to vector<8x128xf32>
    %535 = math.tanh %534 : vector<8x128xf32>
    %cst_282 = arith.constant 5.000000e-01 : f32
    %536 = vector.broadcast %cst_282 : f32 to vector<8x128xf32>
    %537 = arith.mulf %536, %535 : vector<8x128xf32>
    %cst_283 = arith.constant 5.000000e-01 : f32
    %538 = vector.broadcast %cst_283 : f32 to vector<8x128xf32>
    %539 = arith.addf %537, %538 : vector<8x128xf32>
    %540 = arith.mulf %531, %513 : vector<8x128xf32>
    %541 = arith.mulf %525, %533 : vector<8x128xf32>
    %542 = arith.addf %540, %541 : vector<8x128xf32>
    %543 = math.tanh %542 : vector<8x128xf32>
    %544 = arith.mulf %539, %543 : vector<8x128xf32>
    %c0_284 = arith.constant 0 : index
    %c0_285 = arith.constant 0 : index
    %545 = vector.load %arg9[%c0_284, %c0_285] : memref<8x128xf32, #tpu.memory_space<vmem>>, vector<8x128xf32>
    tpu.vector_store %arg9[%c0_284, %c0_285], %544 {strides = array<i32>} : memref<8x128xf32, #tpu.memory_space<vmem>>, vector<8x128xf32>,
    %c0_286 = arith.constant 0 : index
    %c0_287 = arith.constant 0 : index
    %546 = vector.load %arg10[%c0_286, %c0_287] : memref<8x128xf32, #tpu.memory_space<vmem>>, vector<8x128xf32>
    tpu.vector_store %arg10[%c0_286, %c0_287], %542 {strides = array<i32>} : memref<8x128xf32, #tpu.memory_space<vmem>>, vector<8x128xf32>,
    %547 = arith.truncf %544 : vector<8x128xf32> to vector<8x128xbf16>
    %548 = arith.index_cast %c4_i32_270 : i32 to index
    %c0_288 = arith.constant 0 : index
    %c0_289 = arith.constant 0 : index
    %549 = vector.load %arg8[%548, %c0_288, %c0_289] : memref<8x8x128xbf16, #tpu.memory_space<vmem>>, vector<1x8x128xbf16>
    %550 = vector.shape_cast %549 : vector<1x8x128xbf16> to vector<8x128xbf16>
    %551 = vector.shape_cast %547 : vector<8x128xbf16> to vector<1x8x128xbf16>
    tpu.vector_store %arg8[%548, %c0_288, %c0_289], %551 {strides = array<i32>} : memref<8x8x128xbf16, #tpu.memory_space<vmem>>, vector<1x8x128xbf16>,
    %c5_i32_290 = arith.constant 5 : i32
    %c0_291 = arith.constant 0 : index
    %c0_292 = arith.constant 0 : index
    %552 = vector.load %arg9[%c0_291, %c0_292] : memref<8x128xf32, #tpu.memory_space<vmem>>, vector<8x128xf32>
    %c0_293 = arith.constant 0 : index
    %c0_294 = arith.constant 0 : index
    %553 = vector.load %arg10[%c0_293, %c0_294] : memref<8x128xf32, #tpu.memory_space<vmem>>, vector<8x128xf32>
    %554 = arith.index_cast %c5_i32_290 : i32 to index
    %c0_295 = arith.constant 0 : index
    %c0_296 = arith.constant 0 : index
    %555 = vector.load %arg7[%554, %c0_295, %c0_296] : memref<8x8x512xf32, #tpu.memory_space<vmem>>, vector<1x8x512xf32>
    %556 = vector.shape_cast %555 : vector<1x8x512xf32> to vector<8x512xf32>
    %557 = arith.truncf %552 : vector<8x128xf32> to vector<8x128xbf16>
    %cst_297 = arith.constant dense<0.000000e+00> : vector<8x512xf32>
    %558 = tpu.matmul %557, %335, %cst_297 {dimension_numbers = #tpu.dot_dimension_numbers<[1], [0], [0], [1], [0, 0, 1, 1], [], []>} : vector<8x128xbf16>, vector<128x512xbf16>, vector<8x512xf32> -> vector<8x512xf32>
    %559 = arith.addf %556, %558 : vector<8x512xf32>
    %560 = vector.extract_strided_slice %559 {offsets = [0, 0], sizes = [8, 128], strides = [1, 1]} : vector<8x512xf32> to vector<8x128xf32>
    %561 = math.tanh %560 : vector<8x128xf32>
    %cst_298 = arith.constant 5.000000e-01 : f32
    %562 = vector.broadcast %cst_298 : f32 to vector<8x128xf32>
    %563 = arith.mulf %562, %561 : vector<8x128xf32>
    %cst_299 = arith.constant 5.000000e-01 : f32
    %564 = vector.broadcast %cst_299 : f32 to vector<8x128xf32>
    %565 = arith.addf %563, %564 : vector<8x128xf32>
    %566 = vector.extract_strided_slice %559 {offsets = [0, 128], sizes = [8, 128], strides = [1, 1]} : vector<8x512xf32> to vector<8x128xf32>
    %567 = math.tanh %566 : vector<8x128xf32>
    %cst_300 = arith.constant 5.000000e-01 : f32
    %568 = vector.broadcast %cst_300 : f32 to vector<8x128xf32>
    %569 = arith.mulf %568, %567 : vector<8x128xf32>
    %cst_301 = arith.constant 5.000000e-01 : f32
    %570 = vector.broadcast %cst_301 : f32 to vector<8x128xf32>
    %571 = arith.addf %569, %570 : vector<8x128xf32>
    %572 = vector.extract_strided_slice %559 {offsets = [0, 256], sizes = [8, 128], strides = [1, 1]} : vector<8x512xf32> to vector<8x128xf32>
    %573 = math.tanh %572 : vector<8x128xf32>
    %574 = vector.extract_strided_slice %559 {offsets = [0, 384], sizes = [8, 128], strides = [1, 1]} : vector<8x512xf32> to vector<8x128xf32>
    %575 = math.tanh %574 : vector<8x128xf32>
    %cst_302 = arith.constant 5.000000e-01 : f32
    %576 = vector.broadcast %cst_302 : f32 to vector<8x128xf32>
    %577 = arith.mulf %576, %575 : vector<8x128xf32>
    %cst_303 = arith.constant 5.000000e-01 : f32
    %578 = vector.broadcast %cst_303 : f32 to vector<8x128xf32>
    %579 = arith.addf %577, %578 : vector<8x128xf32>
    %580 = arith.mulf %571, %553 : vector<8x128xf32>
    %581 = arith.mulf %565, %573 : vector<8x128xf32>
    %582 = arith.addf %580, %581 : vector<8x128xf32>
    %583 = math.tanh %582 : vector<8x128xf32>
    %584 = arith.mulf %579, %583 : vector<8x128xf32>
    %c0_304 = arith.constant 0 : index
    %c0_305 = arith.constant 0 : index
    %585 = vector.load %arg9[%c0_304, %c0_305] : memref<8x128xf32, #tpu.memory_space<vmem>>, vector<8x128xf32>
    tpu.vector_store %arg9[%c0_304, %c0_305], %584 {strides = array<i32>} : memref<8x128xf32, #tpu.memory_space<vmem>>, vector<8x128xf32>,
    %c0_306 = arith.constant 0 : index
    %c0_307 = arith.constant 0 : index
    %586 = vector.load %arg10[%c0_306, %c0_307] : memref<8x128xf32, #tpu.memory_space<vmem>>, vector<8x128xf32>
    tpu.vector_store %arg10[%c0_306, %c0_307], %582 {strides = array<i32>} : memref<8x128xf32, #tpu.memory_space<vmem>>, vector<8x128xf32>,
    %587 = arith.truncf %584 : vector<8x128xf32> to vector<8x128xbf16>
    %588 = arith.index_cast %c5_i32_290 : i32 to index
    %c0_308 = arith.constant 0 : index
    %c0_309 = arith.constant 0 : index
    %589 = vector.load %arg8[%588, %c0_308, %c0_309] : memref<8x8x128xbf16, #tpu.memory_space<vmem>>, vector<1x8x128xbf16>
    %590 = vector.shape_cast %589 : vector<1x8x128xbf16> to vector<8x128xbf16>
    %591 = vector.shape_cast %587 : vector<8x128xbf16> to vector<1x8x128xbf16>
    tpu.vector_store %arg8[%588, %c0_308, %c0_309], %591 {strides = array<i32>} : memref<8x8x128xbf16, #tpu.memory_space<vmem>>, vector<1x8x128xbf16>,
    %c6_i32_310 = arith.constant 6 : i32
    %c0_311 = arith.constant 0 : index
    %c0_312 = arith.constant 0 : index
    %592 = vector.load %arg9[%c0_311, %c0_312] : memref<8x128xf32, #tpu.memory_space<vmem>>, vector<8x128xf32>
    %c0_313 = arith.constant 0 : index
    %c0_314 = arith.constant 0 : index
    %593 = vector.load %arg10[%c0_313, %c0_314] : memref<8x128xf32, #tpu.memory_space<vmem>>, vector<8x128xf32>
    %594 = arith.index_cast %c6_i32_310 : i32 to index
    %c0_315 = arith.constant 0 : index
    %c0_316 = arith.constant 0 : index
    %595 = vector.load %arg7[%594, %c0_315, %c0_316] : memref<8x8x512xf32, #tpu.memory_space<vmem>>, vector<1x8x512xf32>
    %596 = vector.shape_cast %595 : vector<1x8x512xf32> to vector<8x512xf32>
    %597 = arith.truncf %592 : vector<8x128xf32> to vector<8x128xbf16>
    %cst_317 = arith.constant dense<0.000000e+00> : vector<8x512xf32>
    %598 = tpu.matmul %597, %335, %cst_317 {dimension_numbers = #tpu.dot_dimension_numbers<[1], [0], [0], [1], [0, 0, 1, 1], [], []>} : vector<8x128xbf16>, vector<128x512xbf16>, vector<8x512xf32> -> vector<8x512xf32>
    %599 = arith.addf %596, %598 : vector<8x512xf32>
    %600 = vector.extract_strided_slice %599 {offsets = [0, 0], sizes = [8, 128], strides = [1, 1]} : vector<8x512xf32> to vector<8x128xf32>
    %601 = math.tanh %600 : vector<8x128xf32>
    %cst_318 = arith.constant 5.000000e-01 : f32
    %602 = vector.broadcast %cst_318 : f32 to vector<8x128xf32>
    %603 = arith.mulf %602, %601 : vector<8x128xf32>
    %cst_319 = arith.constant 5.000000e-01 : f32
    %604 = vector.broadcast %cst_319 : f32 to vector<8x128xf32>
    %605 = arith.addf %603, %604 : vector<8x128xf32>
    %606 = vector.extract_strided_slice %599 {offsets = [0, 128], sizes = [8, 128], strides = [1, 1]} : vector<8x512xf32> to vector<8x128xf32>
    %607 = math.tanh %606 : vector<8x128xf32>
    %cst_320 = arith.constant 5.000000e-01 : f32
    %608 = vector.broadcast %cst_320 : f32 to vector<8x128xf32>
    %609 = arith.mulf %608, %607 : vector<8x128xf32>
    %cst_321 = arith.constant 5.000000e-01 : f32
    %610 = vector.broadcast %cst_321 : f32 to vector<8x128xf32>
    %611 = arith.addf %609, %610 : vector<8x128xf32>
    %612 = vector.extract_strided_slice %599 {offsets = [0, 256], sizes = [8, 128], strides = [1, 1]} : vector<8x512xf32> to vector<8x128xf32>
    %613 = math.tanh %612 : vector<8x128xf32>
    %614 = vector.extract_strided_slice %599 {offsets = [0, 384], sizes = [8, 128], strides = [1, 1]} : vector<8x512xf32> to vector<8x128xf32>
    %615 = math.tanh %614 : vector<8x128xf32>
    %cst_322 = arith.constant 5.000000e-01 : f32
    %616 = vector.broadcast %cst_322 : f32 to vector<8x128xf32>
    %617 = arith.mulf %616, %615 : vector<8x128xf32>
    %cst_323 = arith.constant 5.000000e-01 : f32
    %618 = vector.broadcast %cst_323 : f32 to vector<8x128xf32>
    %619 = arith.addf %617, %618 : vector<8x128xf32>
    %620 = arith.mulf %611, %593 : vector<8x128xf32>
    %621 = arith.mulf %605, %613 : vector<8x128xf32>
    %622 = arith.addf %620, %621 : vector<8x128xf32>
    %623 = math.tanh %622 : vector<8x128xf32>
    %624 = arith.mulf %619, %623 : vector<8x128xf32>
    %c0_324 = arith.constant 0 : index
    %c0_325 = arith.constant 0 : index
    %625 = vector.load %arg9[%c0_324, %c0_325] : memref<8x128xf32, #tpu.memory_space<vmem>>, vector<8x128xf32>
    tpu.vector_store %arg9[%c0_324, %c0_325], %624 {strides = array<i32>} : memref<8x128xf32, #tpu.memory_space<vmem>>, vector<8x128xf32>,
    %c0_326 = arith.constant 0 : index
    %c0_327 = arith.constant 0 : index
    %626 = vector.load %arg10[%c0_326, %c0_327] : memref<8x128xf32, #tpu.memory_space<vmem>>, vector<8x128xf32>
    tpu.vector_store %arg10[%c0_326, %c0_327], %622 {strides = array<i32>} : memref<8x128xf32, #tpu.memory_space<vmem>>, vector<8x128xf32>,
    %627 = arith.truncf %624 : vector<8x128xf32> to vector<8x128xbf16>
    %628 = arith.index_cast %c6_i32_310 : i32 to index
    %c0_328 = arith.constant 0 : index
    %c0_329 = arith.constant 0 : index
    %629 = vector.load %arg8[%628, %c0_328, %c0_329] : memref<8x8x128xbf16, #tpu.memory_space<vmem>>, vector<1x8x128xbf16>
    %630 = vector.shape_cast %629 : vector<1x8x128xbf16> to vector<8x128xbf16>
    %631 = vector.shape_cast %627 : vector<8x128xbf16> to vector<1x8x128xbf16>
    tpu.vector_store %arg8[%628, %c0_328, %c0_329], %631 {strides = array<i32>} : memref<8x8x128xbf16, #tpu.memory_space<vmem>>, vector<1x8x128xbf16>,
    %c7_i32_330 = arith.constant 7 : i32
    %c0_331 = arith.constant 0 : index
    %c0_332 = arith.constant 0 : index
    %632 = vector.load %arg9[%c0_331, %c0_332] : memref<8x128xf32, #tpu.memory_space<vmem>>, vector<8x128xf32>
    %c0_333 = arith.constant 0 : index
    %c0_334 = arith.constant 0 : index
    %633 = vector.load %arg10[%c0_333, %c0_334] : memref<8x128xf32, #tpu.memory_space<vmem>>, vector<8x128xf32>
    %634 = arith.index_cast %c7_i32_330 : i32 to index
    %c0_335 = arith.constant 0 : index
    %c0_336 = arith.constant 0 : index
    %635 = vector.load %arg7[%634, %c0_335, %c0_336] : memref<8x8x512xf32, #tpu.memory_space<vmem>>, vector<1x8x512xf32>
    %636 = vector.shape_cast %635 : vector<1x8x512xf32> to vector<8x512xf32>
    %637 = arith.truncf %632 : vector<8x128xf32> to vector<8x128xbf16>
    %cst_337 = arith.constant dense<0.000000e+00> : vector<8x512xf32>
    %638 = tpu.matmul %637, %335, %cst_337 {dimension_numbers = #tpu.dot_dimension_numbers<[1], [0], [0], [1], [0, 0, 1, 1], [], []>} : vector<8x128xbf16>, vector<128x512xbf16>, vector<8x512xf32> -> vector<8x512xf32>
    %639 = arith.addf %636, %638 : vector<8x512xf32>
    %640 = vector.extract_strided_slice %639 {offsets = [0, 0], sizes = [8, 128], strides = [1, 1]} : vector<8x512xf32> to vector<8x128xf32>
    %641 = math.tanh %640 : vector<8x128xf32>
    %cst_338 = arith.constant 5.000000e-01 : f32
    %642 = vector.broadcast %cst_338 : f32 to vector<8x128xf32>
    %643 = arith.mulf %642, %641 : vector<8x128xf32>
    %cst_339 = arith.constant 5.000000e-01 : f32
    %644 = vector.broadcast %cst_339 : f32 to vector<8x128xf32>
    %645 = arith.addf %643, %644 : vector<8x128xf32>
    %646 = vector.extract_strided_slice %639 {offsets = [0, 128], sizes = [8, 128], strides = [1, 1]} : vector<8x512xf32> to vector<8x128xf32>
    %647 = math.tanh %646 : vector<8x128xf32>
    %cst_340 = arith.constant 5.000000e-01 : f32
    %648 = vector.broadcast %cst_340 : f32 to vector<8x128xf32>
    %649 = arith.mulf %648, %647 : vector<8x128xf32>
    %cst_341 = arith.constant 5.000000e-01 : f32
    %650 = vector.broadcast %cst_341 : f32 to vector<8x128xf32>
    %651 = arith.addf %649, %650 : vector<8x128xf32>
    %652 = vector.extract_strided_slice %639 {offsets = [0, 256], sizes = [8, 128], strides = [1, 1]} : vector<8x512xf32> to vector<8x128xf32>
    %653 = math.tanh %652 : vector<8x128xf32>
    %654 = vector.extract_strided_slice %639 {offsets = [0, 384], sizes = [8, 128], strides = [1, 1]} : vector<8x512xf32> to vector<8x128xf32>
    %655 = math.tanh %654 : vector<8x128xf32>
    %cst_342 = arith.constant 5.000000e-01 : f32
    %656 = vector.broadcast %cst_342 : f32 to vector<8x128xf32>
    %657 = arith.mulf %656, %655 : vector<8x128xf32>
    %cst_343 = arith.constant 5.000000e-01 : f32
    %658 = vector.broadcast %cst_343 : f32 to vector<8x128xf32>
    %659 = arith.addf %657, %658 : vector<8x128xf32>
    %660 = arith.mulf %651, %633 : vector<8x128xf32>
    %661 = arith.mulf %645, %653 : vector<8x128xf32>
    %662 = arith.addf %660, %661 : vector<8x128xf32>
    %663 = math.tanh %662 : vector<8x128xf32>
    %664 = arith.mulf %659, %663 : vector<8x128xf32>
    %c0_344 = arith.constant 0 : index
    %c0_345 = arith.constant 0 : index
    %665 = vector.load %arg9[%c0_344, %c0_345] : memref<8x128xf32, #tpu.memory_space<vmem>>, vector<8x128xf32>
    tpu.vector_store %arg9[%c0_344, %c0_345], %664 {strides = array<i32>} : memref<8x128xf32, #tpu.memory_space<vmem>>, vector<8x128xf32>,
    %c0_346 = arith.constant 0 : index
    %c0_347 = arith.constant 0 : index
    %666 = vector.load %arg10[%c0_346, %c0_347] : memref<8x128xf32, #tpu.memory_space<vmem>>, vector<8x128xf32>
    tpu.vector_store %arg10[%c0_346, %c0_347], %662 {strides = array<i32>} : memref<8x128xf32, #tpu.memory_space<vmem>>, vector<8x128xf32>,
    %667 = arith.truncf %664 : vector<8x128xf32> to vector<8x128xbf16>
    %668 = arith.index_cast %c7_i32_330 : i32 to index
    %c0_348 = arith.constant 0 : index
    %c0_349 = arith.constant 0 : index
    %669 = vector.load %arg8[%668, %c0_348, %c0_349] : memref<8x8x128xbf16, #tpu.memory_space<vmem>>, vector<1x8x128xbf16>
    %670 = vector.shape_cast %669 : vector<1x8x128xbf16> to vector<8x128xbf16>
    %671 = vector.shape_cast %667 : vector<8x128xbf16> to vector<1x8x128xbf16>
    tpu.vector_store %arg8[%668, %c0_348, %c0_349], %671 {strides = array<i32>} : memref<8x8x128xbf16, #tpu.memory_space<vmem>>, vector<1x8x128xbf16>,
    %c8_i32_350 = arith.constant 8 : i32
    %c0_351 = arith.constant 0 : index
    %c0_352 = arith.constant 0 : index
    %672 = vector.load %arg9[%c0_351, %c0_352] : memref<8x128xf32, #tpu.memory_space<vmem>>, vector<8x128xf32>
    %c1_353 = arith.constant 1 : index
    %c0_354 = arith.constant 0 : index
    %c0_355 = arith.constant 0 : index
    %673 = vector.load %arg5[%c1_353, %c0_354, %c0_355] : memref<2x8x128xf32, #tpu.memory_space<vmem>>, vector<1x8x128xf32>
    %674 = vector.shape_cast %673 : vector<1x8x128xf32> to vector<8x128xf32>
    %675 = vector.shape_cast %672 : vector<8x128xf32> to vector<1x8x128xf32>
    tpu.vector_store %arg5[%c1_353, %c0_354, %c0_355], %675 {strides = array<i32>} : memref<2x8x128xf32, #tpu.memory_space<vmem>>, vector<1x8x128xf32>,
    %c0_356 = arith.constant 0 : index
    %c0_357 = arith.constant 0 : index
    %676 = vector.load %arg10[%c0_356, %c0_357] : memref<8x128xf32, #tpu.memory_space<vmem>>, vector<8x128xf32>
    %c1_358 = arith.constant 1 : index
    %c0_359 = arith.constant 0 : index
    %c0_360 = arith.constant 0 : index
    %677 = vector.load %arg6[%c1_358, %c0_359, %c0_360] : memref<2x8x128xf32, #tpu.memory_space<vmem>>, vector<1x8x128xf32>
    %678 = vector.shape_cast %677 : vector<1x8x128xf32> to vector<8x128xf32>
    %679 = vector.shape_cast %676 : vector<8x128xf32> to vector<1x8x128xf32>
    tpu.vector_store %arg6[%c1_358, %c0_359, %c0_360], %679 {strides = array<i32>} : memref<2x8x128xf32, #tpu.memory_space<vmem>>, vector<1x8x128xf32>,
    return
  }
  func.func @transform_0(%arg0: i32) -> (i32, i32, i32) {
    %c0_i32 = arith.constant 0 : i32
    %c0_i32_0 = arith.constant 0 : i32
    %c0_i32_1 = arith.constant 0 : i32
    return %c0_i32, %arg0, %c0_i32_0 : i32, i32, i32
  }
  func.func @transform_1(%arg0: i32) -> (i32, i32, i32) {
    %c0_i32 = arith.constant 0 : i32
    %c0_i32_0 = arith.constant 0 : i32
    %c0_i32_1 = arith.constant 0 : i32
    %c0_i32_2 = arith.constant 0 : i32
    return %c0_i32, %c0_i32_0, %c0_i32_1 : i32, i32, i32
  }
  func.func @transform_2(%arg0: i32) -> (i32, i32, i32) {
    %c0_i32 = arith.constant 0 : i32
    %c0_i32_0 = arith.constant 0 : i32
    %c0_i32_1 = arith.constant 0 : i32
    %c0_i32_2 = arith.constant 0 : i32
    return %c0_i32, %c0_i32_0, %c0_i32_1 : i32, i32, i32
  }
  func.func @transform_3(%arg0: i32) -> (i32, i32, i32) {
    %c0_i32 = arith.constant 0 : i32
    %c0_i32_0 = arith.constant 0 : i32
    %c0_i32_1 = arith.constant 0 : i32
    %c0_i32_2 = arith.constant 0 : i32
    return %c0_i32, %c0_i32_0, %c0_i32_1 : i32, i32, i32
  }
  func.func @transform_4(%arg0: i32) -> (i32, i32, i32) {
    %c0_i32 = arith.constant 0 : i32
    %c0_i32_0 = arith.constant 0 : i32
    %c0_i32_1 = arith.constant 0 : i32
    return %c0_i32, %arg0, %c0_i32_0 : i32, i32, i32
  }
  func.func @transform_5(%arg0: i32) -> (i32, i32, i32) {
    %c0_i32 = arith.constant 0 : i32
    %c0_i32_0 = arith.constant 0 : i32
    %c0_i32_1 = arith.constant 0 : i32
    return %c0_i32, %arg0, %c0_i32_0 : i32, i32, i32
  }
}

module attributes {stable_mosaic.version = 11 : i64} {
  func.func @_encoder_kernel(%arg0: i32, %arg1: memref<8x8x512xf32, #tpu.memory_space<vmem>>, %arg2: memref<1x128x512xbf16, #tpu.memory_space<vmem>>, %arg3: memref<2x128x512xbf16, #tpu.memory_space<vmem>>, %arg4: memref<2x1x512xf32, #tpu.memory_space<vmem>>, %arg5: memref<2x8x128xf32, #tpu.memory_space<vmem>>, %arg6: memref<2x8x128xf32, #tpu.memory_space<vmem>>, %arg7: memref<8x8x512xf32, #tpu.memory_space<vmem>>, %arg8: memref<8x8x128xbf16, #tpu.memory_space<vmem>>, %arg9: memref<8x128xf32, #tpu.memory_space<vmem>>, %arg10: memref<8x128xf32, #tpu.memory_space<vmem>>) attributes {dimension_semantics = [#tpu.dimension_semantics<arbitrary>], iteration_bounds = array<i64: 1>, scalar_prefetch = 0 : i64, scratch_operands = 4 : i64, tpu.core_type = #tpu.core_type<tc>, window_params = [{transform_indices = @transform_0, window_bounds = array<i64: 8, 8, 512>}, {pipeline_mode = #tpu.pipeline_mode<synchronous>, transform_indices = @transform_1, window_bounds = array<i64: 1, 128, 512>}, {pipeline_mode = #tpu.pipeline_mode<synchronous>, transform_indices = @transform_2, window_bounds = array<i64: 2, 128, 512>}, {pipeline_mode = #tpu.pipeline_mode<synchronous>, transform_indices = @transform_3, window_bounds = array<i64: 2, 1, 512>}, {transform_indices = @transform_4, window_bounds = array<i64: 2, 8, 128>}, {transform_indices = @transform_5, window_bounds = array<i64: 2, 8, 128>}]} {
    %c0 = arith.constant 0 : index
    %c0_0 = arith.constant 0 : index
    %c0_1 = arith.constant 0 : index
    %0 = vector.load %arg3[%c0, %c0_0, %c0_1] : memref<2x128x512xbf16, #tpu.memory_space<vmem>>, vector<1x128x512xbf16>
    %1 = vector.shape_cast %0 : vector<1x128x512xbf16> to vector<128x512xbf16>
    %cst = arith.constant 0.000000e+00 : f32
    %2 = vector.broadcast %cst : f32 to vector<8x128xf32>
    %c0_2 = arith.constant 0 : index
    %c0_3 = arith.constant 0 : index
    %3 = vector.load %arg9[%c0_2, %c0_3] : memref<8x128xf32, #tpu.memory_space<vmem>>, vector<8x128xf32>
    tpu.vector_store %arg9[%c0_2, %c0_3], %2 {strides = array<i32>} : memref<8x128xf32, #tpu.memory_space<vmem>>, vector<8x128xf32>,
    %cst_4 = arith.constant 0.000000e+00 : f32
    %4 = vector.broadcast %cst_4 : f32 to vector<8x128xf32>
    %c0_5 = arith.constant 0 : index
    %c0_6 = arith.constant 0 : index
    %5 = vector.load %arg10[%c0_5, %c0_6] : memref<8x128xf32, #tpu.memory_space<vmem>>, vector<8x128xf32>
    tpu.vector_store %arg10[%c0_5, %c0_6], %4 {strides = array<i32>} : memref<8x128xf32, #tpu.memory_space<vmem>>, vector<8x128xf32>,
    %c0_i32 = arith.constant 0 : i32
    %c0_7 = arith.constant 0 : index
    %c0_8 = arith.constant 0 : index
    %6 = vector.load %arg9[%c0_7, %c0_8] : memref<8x128xf32, #tpu.memory_space<vmem>>, vector<8x128xf32>
    %c0_9 = arith.constant 0 : index
    %c0_10 = arith.constant 0 : index
    %7 = vector.load %arg10[%c0_9, %c0_10] : memref<8x128xf32, #tpu.memory_space<vmem>>, vector<8x128xf32>
    %8 = arith.index_cast %c0_i32 : i32 to index
    %c0_11 = arith.constant 0 : index
    %c0_12 = arith.constant 0 : index
    %9 = vector.load %arg1[%8, %c0_11, %c0_12] : memref<8x8x512xf32, #tpu.memory_space<vmem>>, vector<1x8x512xf32>
    %10 = vector.shape_cast %9 : vector<1x8x512xf32> to vector<8x512xf32>
    %11 = arith.truncf %6 : vector<8x128xf32> to vector<8x128xbf16>
    %cst_13 = arith.constant dense<0.000000e+00> : vector<8x512xf32>
    %12 = tpu.matmul %11, %1, %cst_13 {dimension_numbers = #tpu.dot_dimension_numbers<[1], [0], [0], [1], [0, 0, 1, 1], [], []>} : vector<8x128xbf16>, vector<128x512xbf16>, vector<8x512xf32> -> vector<8x512xf32>
    %13 = arith.addf %10, %12 : vector<8x512xf32>
    %14 = vector.extract_strided_slice %13 {offsets = [0, 0], sizes = [8, 128], strides = [1, 1]} : vector<8x512xf32> to vector<8x128xf32>
    %15 = math.tanh %14 : vector<8x128xf32>
    %cst_14 = arith.constant 5.000000e-01 : f32
    %16 = vector.broadcast %cst_14 : f32 to vector<8x128xf32>
    %17 = arith.mulf %16, %15 : vector<8x128xf32>
    %cst_15 = arith.constant 5.000000e-01 : f32
    %18 = vector.broadcast %cst_15 : f32 to vector<8x128xf32>
    %19 = arith.addf %17, %18 : vector<8x128xf32>
    %20 = vector.extract_strided_slice %13 {offsets = [0, 128], sizes = [8, 128], strides = [1, 1]} : vector<8x512xf32> to vector<8x128xf32>
    %21 = math.tanh %20 : vector<8x128xf32>
    %cst_16 = arith.constant 5.000000e-01 : f32
    %22 = vector.broadcast %cst_16 : f32 to vector<8x128xf32>
    %23 = arith.mulf %22, %21 : vector<8x128xf32>
    %cst_17 = arith.constant 5.000000e-01 : f32
    %24 = vector.broadcast %cst_17 : f32 to vector<8x128xf32>
    %25 = arith.addf %23, %24 : vector<8x128xf32>
    %26 = vector.extract_strided_slice %13 {offsets = [0, 256], sizes = [8, 128], strides = [1, 1]} : vector<8x512xf32> to vector<8x128xf32>
    %27 = math.tanh %26 : vector<8x128xf32>
    %28 = vector.extract_strided_slice %13 {offsets = [0, 384], sizes = [8, 128], strides = [1, 1]} : vector<8x512xf32> to vector<8x128xf32>
    %29 = math.tanh %28 : vector<8x128xf32>
    %cst_18 = arith.constant 5.000000e-01 : f32
    %30 = vector.broadcast %cst_18 : f32 to vector<8x128xf32>
    %31 = arith.mulf %30, %29 : vector<8x128xf32>
    %cst_19 = arith.constant 5.000000e-01 : f32
    %32 = vector.broadcast %cst_19 : f32 to vector<8x128xf32>
    %33 = arith.addf %31, %32 : vector<8x128xf32>
    %34 = arith.mulf %25, %7 : vector<8x128xf32>
    %35 = arith.mulf %19, %27 : vector<8x128xf32>
    %36 = arith.addf %34, %35 : vector<8x128xf32>
    %37 = math.tanh %36 : vector<8x128xf32>
    %38 = arith.mulf %33, %37 : vector<8x128xf32>
    %c0_20 = arith.constant 0 : index
    %c0_21 = arith.constant 0 : index
    %39 = vector.load %arg9[%c0_20, %c0_21] : memref<8x128xf32, #tpu.memory_space<vmem>>, vector<8x128xf32>
    tpu.vector_store %arg9[%c0_20, %c0_21], %38 {strides = array<i32>} : memref<8x128xf32, #tpu.memory_space<vmem>>, vector<8x128xf32>,
    %c0_22 = arith.constant 0 : index
    %c0_23 = arith.constant 0 : index
    %40 = vector.load %arg10[%c0_22, %c0_23] : memref<8x128xf32, #tpu.memory_space<vmem>>, vector<8x128xf32>
    tpu.vector_store %arg10[%c0_22, %c0_23], %36 {strides = array<i32>} : memref<8x128xf32, #tpu.memory_space<vmem>>, vector<8x128xf32>,
    %41 = arith.truncf %38 : vector<8x128xf32> to vector<8x128xbf16>
    %42 = arith.index_cast %c0_i32 : i32 to index
    %c0_24 = arith.constant 0 : index
    %c0_25 = arith.constant 0 : index
    %43 = vector.load %arg8[%42, %c0_24, %c0_25] : memref<8x8x128xbf16, #tpu.memory_space<vmem>>, vector<1x8x128xbf16>
    %44 = vector.shape_cast %43 : vector<1x8x128xbf16> to vector<8x128xbf16>
    %45 = vector.shape_cast %41 : vector<8x128xbf16> to vector<1x8x128xbf16>
    tpu.vector_store %arg8[%42, %c0_24, %c0_25], %45 {strides = array<i32>} : memref<8x8x128xbf16, #tpu.memory_space<vmem>>, vector<1x8x128xbf16>,
    %c1_i32 = arith.constant 1 : i32
    %c0_26 = arith.constant 0 : index
    %c0_27 = arith.constant 0 : index
    %46 = vector.load %arg9[%c0_26, %c0_27] : memref<8x128xf32, #tpu.memory_space<vmem>>, vector<8x128xf32>
    %c0_28 = arith.constant 0 : index
    %c0_29 = arith.constant 0 : index
    %47 = vector.load %arg10[%c0_28, %c0_29] : memref<8x128xf32, #tpu.memory_space<vmem>>, vector<8x128xf32>
    %48 = arith.index_cast %c1_i32 : i32 to index
    %c0_30 = arith.constant 0 : index
    %c0_31 = arith.constant 0 : index
    %49 = vector.load %arg1[%48, %c0_30, %c0_31] : memref<8x8x512xf32, #tpu.memory_space<vmem>>, vector<1x8x512xf32>
    %50 = vector.shape_cast %49 : vector<1x8x512xf32> to vector<8x512xf32>
    %51 = arith.truncf %46 : vector<8x128xf32> to vector<8x128xbf16>
    %cst_32 = arith.constant dense<0.000000e+00> : vector<8x512xf32>
    %52 = tpu.matmul %51, %1, %cst_32 {dimension_numbers = #tpu.dot_dimension_numbers<[1], [0], [0], [1], [0, 0, 1, 1], [], []>} : vector<8x128xbf16>, vector<128x512xbf16>, vector<8x512xf32> -> vector<8x512xf32>
    %53 = arith.addf %50, %52 : vector<8x512xf32>
    %54 = vector.extract_strided_slice %53 {offsets = [0, 0], sizes = [8, 128], strides = [1, 1]} : vector<8x512xf32> to vector<8x128xf32>
    %55 = math.tanh %54 : vector<8x128xf32>
    %cst_33 = arith.constant 5.000000e-01 : f32
    %56 = vector.broadcast %cst_33 : f32 to vector<8x128xf32>
    %57 = arith.mulf %56, %55 : vector<8x128xf32>
    %cst_34 = arith.constant 5.000000e-01 : f32
    %58 = vector.broadcast %cst_34 : f32 to vector<8x128xf32>
    %59 = arith.addf %57, %58 : vector<8x128xf32>
    %60 = vector.extract_strided_slice %53 {offsets = [0, 128], sizes = [8, 128], strides = [1, 1]} : vector<8x512xf32> to vector<8x128xf32>
    %61 = math.tanh %60 : vector<8x128xf32>
    %cst_35 = arith.constant 5.000000e-01 : f32
    %62 = vector.broadcast %cst_35 : f32 to vector<8x128xf32>
    %63 = arith.mulf %62, %61 : vector<8x128xf32>
    %cst_36 = arith.constant 5.000000e-01 : f32
    %64 = vector.broadcast %cst_36 : f32 to vector<8x128xf32>
    %65 = arith.addf %63, %64 : vector<8x128xf32>
    %66 = vector.extract_strided_slice %53 {offsets = [0, 256], sizes = [8, 128], strides = [1, 1]} : vector<8x512xf32> to vector<8x128xf32>
    %67 = math.tanh %66 : vector<8x128xf32>
    %68 = vector.extract_strided_slice %53 {offsets = [0, 384], sizes = [8, 128], strides = [1, 1]} : vector<8x512xf32> to vector<8x128xf32>
    %69 = math.tanh %68 : vector<8x128xf32>
    %cst_37 = arith.constant 5.000000e-01 : f32
    %70 = vector.broadcast %cst_37 : f32 to vector<8x128xf32>
    %71 = arith.mulf %70, %69 : vector<8x128xf32>
    %cst_38 = arith.constant 5.000000e-01 : f32
    %72 = vector.broadcast %cst_38 : f32 to vector<8x128xf32>
    %73 = arith.addf %71, %72 : vector<8x128xf32>
    %74 = arith.mulf %65, %47 : vector<8x128xf32>
    %75 = arith.mulf %59, %67 : vector<8x128xf32>
    %76 = arith.addf %74, %75 : vector<8x128xf32>
    %77 = math.tanh %76 : vector<8x128xf32>
    %78 = arith.mulf %73, %77 : vector<8x128xf32>
    %c0_39 = arith.constant 0 : index
    %c0_40 = arith.constant 0 : index
    %79 = vector.load %arg9[%c0_39, %c0_40] : memref<8x128xf32, #tpu.memory_space<vmem>>, vector<8x128xf32>
    tpu.vector_store %arg9[%c0_39, %c0_40], %78 {strides = array<i32>} : memref<8x128xf32, #tpu.memory_space<vmem>>, vector<8x128xf32>,
    %c0_41 = arith.constant 0 : index
    %c0_42 = arith.constant 0 : index
    %80 = vector.load %arg10[%c0_41, %c0_42] : memref<8x128xf32, #tpu.memory_space<vmem>>, vector<8x128xf32>
    tpu.vector_store %arg10[%c0_41, %c0_42], %76 {strides = array<i32>} : memref<8x128xf32, #tpu.memory_space<vmem>>, vector<8x128xf32>,
    %81 = arith.truncf %78 : vector<8x128xf32> to vector<8x128xbf16>
    %82 = arith.index_cast %c1_i32 : i32 to index
    %c0_43 = arith.constant 0 : index
    %c0_44 = arith.constant 0 : index
    %83 = vector.load %arg8[%82, %c0_43, %c0_44] : memref<8x8x128xbf16, #tpu.memory_space<vmem>>, vector<1x8x128xbf16>
    %84 = vector.shape_cast %83 : vector<1x8x128xbf16> to vector<8x128xbf16>
    %85 = vector.shape_cast %81 : vector<8x128xbf16> to vector<1x8x128xbf16>
    tpu.vector_store %arg8[%82, %c0_43, %c0_44], %85 {strides = array<i32>} : memref<8x8x128xbf16, #tpu.memory_space<vmem>>, vector<1x8x128xbf16>,
    %c2_i32 = arith.constant 2 : i32
    %c0_45 = arith.constant 0 : index
    %c0_46 = arith.constant 0 : index
    %86 = vector.load %arg9[%c0_45, %c0_46] : memref<8x128xf32, #tpu.memory_space<vmem>>, vector<8x128xf32>
    %c0_47 = arith.constant 0 : index
    %c0_48 = arith.constant 0 : index
    %87 = vector.load %arg10[%c0_47, %c0_48] : memref<8x128xf32, #tpu.memory_space<vmem>>, vector<8x128xf32>
    %88 = arith.index_cast %c2_i32 : i32 to index
    %c0_49 = arith.constant 0 : index
    %c0_50 = arith.constant 0 : index
    %89 = vector.load %arg1[%88, %c0_49, %c0_50] : memref<8x8x512xf32, #tpu.memory_space<vmem>>, vector<1x8x512xf32>
    %90 = vector.shape_cast %89 : vector<1x8x512xf32> to vector<8x512xf32>
    %91 = arith.truncf %86 : vector<8x128xf32> to vector<8x128xbf16>
    %cst_51 = arith.constant dense<0.000000e+00> : vector<8x512xf32>
    %92 = tpu.matmul %91, %1, %cst_51 {dimension_numbers = #tpu.dot_dimension_numbers<[1], [0], [0], [1], [0, 0, 1, 1], [], []>} : vector<8x128xbf16>, vector<128x512xbf16>, vector<8x512xf32> -> vector<8x512xf32>
    %93 = arith.addf %90, %92 : vector<8x512xf32>
    %94 = vector.extract_strided_slice %93 {offsets = [0, 0], sizes = [8, 128], strides = [1, 1]} : vector<8x512xf32> to vector<8x128xf32>
    %95 = math.tanh %94 : vector<8x128xf32>
    %cst_52 = arith.constant 5.000000e-01 : f32
    %96 = vector.broadcast %cst_52 : f32 to vector<8x128xf32>
    %97 = arith.mulf %96, %95 : vector<8x128xf32>
    %cst_53 = arith.constant 5.000000e-01 : f32
    %98 = vector.broadcast %cst_53 : f32 to vector<8x128xf32>
    %99 = arith.addf %97, %98 : vector<8x128xf32>
    %100 = vector.extract_strided_slice %93 {offsets = [0, 128], sizes = [8, 128], strides = [1, 1]} : vector<8x512xf32> to vector<8x128xf32>
    %101 = math.tanh %100 : vector<8x128xf32>
    %cst_54 = arith.constant 5.000000e-01 : f32
    %102 = vector.broadcast %cst_54 : f32 to vector<8x128xf32>
    %103 = arith.mulf %102, %101 : vector<8x128xf32>
    %cst_55 = arith.constant 5.000000e-01 : f32
    %104 = vector.broadcast %cst_55 : f32 to vector<8x128xf32>
    %105 = arith.addf %103, %104 : vector<8x128xf32>
    %106 = vector.extract_strided_slice %93 {offsets = [0, 256], sizes = [8, 128], strides = [1, 1]} : vector<8x512xf32> to vector<8x128xf32>
    %107 = math.tanh %106 : vector<8x128xf32>
    %108 = vector.extract_strided_slice %93 {offsets = [0, 384], sizes = [8, 128], strides = [1, 1]} : vector<8x512xf32> to vector<8x128xf32>
    %109 = math.tanh %108 : vector<8x128xf32>
    %cst_56 = arith.constant 5.000000e-01 : f32
    %110 = vector.broadcast %cst_56 : f32 to vector<8x128xf32>
    %111 = arith.mulf %110, %109 : vector<8x128xf32>
    %cst_57 = arith.constant 5.000000e-01 : f32
    %112 = vector.broadcast %cst_57 : f32 to vector<8x128xf32>
    %113 = arith.addf %111, %112 : vector<8x128xf32>
    %114 = arith.mulf %105, %87 : vector<8x128xf32>
    %115 = arith.mulf %99, %107 : vector<8x128xf32>
    %116 = arith.addf %114, %115 : vector<8x128xf32>
    %117 = math.tanh %116 : vector<8x128xf32>
    %118 = arith.mulf %113, %117 : vector<8x128xf32>
    %c0_58 = arith.constant 0 : index
    %c0_59 = arith.constant 0 : index
    %119 = vector.load %arg9[%c0_58, %c0_59] : memref<8x128xf32, #tpu.memory_space<vmem>>, vector<8x128xf32>
    tpu.vector_store %arg9[%c0_58, %c0_59], %118 {strides = array<i32>} : memref<8x128xf32, #tpu.memory_space<vmem>>, vector<8x128xf32>,
    %c0_60 = arith.constant 0 : index
    %c0_61 = arith.constant 0 : index
    %120 = vector.load %arg10[%c0_60, %c0_61] : memref<8x128xf32, #tpu.memory_space<vmem>>, vector<8x128xf32>
    tpu.vector_store %arg10[%c0_60, %c0_61], %116 {strides = array<i32>} : memref<8x128xf32, #tpu.memory_space<vmem>>, vector<8x128xf32>,
    %121 = arith.truncf %118 : vector<8x128xf32> to vector<8x128xbf16>
    %122 = arith.index_cast %c2_i32 : i32 to index
    %c0_62 = arith.constant 0 : index
    %c0_63 = arith.constant 0 : index
    %123 = vector.load %arg8[%122, %c0_62, %c0_63] : memref<8x8x128xbf16, #tpu.memory_space<vmem>>, vector<1x8x128xbf16>
    %124 = vector.shape_cast %123 : vector<1x8x128xbf16> to vector<8x128xbf16>
    %125 = vector.shape_cast %121 : vector<8x128xbf16> to vector<1x8x128xbf16>
    tpu.vector_store %arg8[%122, %c0_62, %c0_63], %125 {strides = array<i32>} : memref<8x8x128xbf16, #tpu.memory_space<vmem>>, vector<1x8x128xbf16>,
    %c3_i32 = arith.constant 3 : i32
    %c0_64 = arith.constant 0 : index
    %c0_65 = arith.constant 0 : index
    %126 = vector.load %arg9[%c0_64, %c0_65] : memref<8x128xf32, #tpu.memory_space<vmem>>, vector<8x128xf32>
    %c0_66 = arith.constant 0 : index
    %c0_67 = arith.constant 0 : index
    %127 = vector.load %arg10[%c0_66, %c0_67] : memref<8x128xf32, #tpu.memory_space<vmem>>, vector<8x128xf32>
    %128 = arith.index_cast %c3_i32 : i32 to index
    %c0_68 = arith.constant 0 : index
    %c0_69 = arith.constant 0 : index
    %129 = vector.load %arg1[%128, %c0_68, %c0_69] : memref<8x8x512xf32, #tpu.memory_space<vmem>>, vector<1x8x512xf32>
    %130 = vector.shape_cast %129 : vector<1x8x512xf32> to vector<8x512xf32>
    %131 = arith.truncf %126 : vector<8x128xf32> to vector<8x128xbf16>
    %cst_70 = arith.constant dense<0.000000e+00> : vector<8x512xf32>
    %132 = tpu.matmul %131, %1, %cst_70 {dimension_numbers = #tpu.dot_dimension_numbers<[1], [0], [0], [1], [0, 0, 1, 1], [], []>} : vector<8x128xbf16>, vector<128x512xbf16>, vector<8x512xf32> -> vector<8x512xf32>
    %133 = arith.addf %130, %132 : vector<8x512xf32>
    %134 = vector.extract_strided_slice %133 {offsets = [0, 0], sizes = [8, 128], strides = [1, 1]} : vector<8x512xf32> to vector<8x128xf32>
    %135 = math.tanh %134 : vector<8x128xf32>
    %cst_71 = arith.constant 5.000000e-01 : f32
    %136 = vector.broadcast %cst_71 : f32 to vector<8x128xf32>
    %137 = arith.mulf %136, %135 : vector<8x128xf32>
    %cst_72 = arith.constant 5.000000e-01 : f32
    %138 = vector.broadcast %cst_72 : f32 to vector<8x128xf32>
    %139 = arith.addf %137, %138 : vector<8x128xf32>
    %140 = vector.extract_strided_slice %133 {offsets = [0, 128], sizes = [8, 128], strides = [1, 1]} : vector<8x512xf32> to vector<8x128xf32>
    %141 = math.tanh %140 : vector<8x128xf32>
    %cst_73 = arith.constant 5.000000e-01 : f32
    %142 = vector.broadcast %cst_73 : f32 to vector<8x128xf32>
    %143 = arith.mulf %142, %141 : vector<8x128xf32>
    %cst_74 = arith.constant 5.000000e-01 : f32
    %144 = vector.broadcast %cst_74 : f32 to vector<8x128xf32>
    %145 = arith.addf %143, %144 : vector<8x128xf32>
    %146 = vector.extract_strided_slice %133 {offsets = [0, 256], sizes = [8, 128], strides = [1, 1]} : vector<8x512xf32> to vector<8x128xf32>
    %147 = math.tanh %146 : vector<8x128xf32>
    %148 = vector.extract_strided_slice %133 {offsets = [0, 384], sizes = [8, 128], strides = [1, 1]} : vector<8x512xf32> to vector<8x128xf32>
    %149 = math.tanh %148 : vector<8x128xf32>
    %cst_75 = arith.constant 5.000000e-01 : f32
    %150 = vector.broadcast %cst_75 : f32 to vector<8x128xf32>
    %151 = arith.mulf %150, %149 : vector<8x128xf32>
    %cst_76 = arith.constant 5.000000e-01 : f32
    %152 = vector.broadcast %cst_76 : f32 to vector<8x128xf32>
    %153 = arith.addf %151, %152 : vector<8x128xf32>
    %154 = arith.mulf %145, %127 : vector<8x128xf32>
    %155 = arith.mulf %139, %147 : vector<8x128xf32>
    %156 = arith.addf %154, %155 : vector<8x128xf32>
    %157 = math.tanh %156 : vector<8x128xf32>
    %158 = arith.mulf %153, %157 : vector<8x128xf32>
    %c0_77 = arith.constant 0 : index
    %c0_78 = arith.constant 0 : index
    %159 = vector.load %arg9[%c0_77, %c0_78] : memref<8x128xf32, #tpu.memory_space<vmem>>, vector<8x128xf32>
    tpu.vector_store %arg9[%c0_77, %c0_78], %158 {strides = array<i32>} : memref<8x128xf32, #tpu.memory_space<vmem>>, vector<8x128xf32>,
    %c0_79 = arith.constant 0 : index
    %c0_80 = arith.constant 0 : index
    %160 = vector.load %arg10[%c0_79, %c0_80] : memref<8x128xf32, #tpu.memory_space<vmem>>, vector<8x128xf32>
    tpu.vector_store %arg10[%c0_79, %c0_80], %156 {strides = array<i32>} : memref<8x128xf32, #tpu.memory_space<vmem>>, vector<8x128xf32>,
    %161 = arith.truncf %158 : vector<8x128xf32> to vector<8x128xbf16>
    %162 = arith.index_cast %c3_i32 : i32 to index
    %c0_81 = arith.constant 0 : index
    %c0_82 = arith.constant 0 : index
    %163 = vector.load %arg8[%162, %c0_81, %c0_82] : memref<8x8x128xbf16, #tpu.memory_space<vmem>>, vector<1x8x128xbf16>
    %164 = vector.shape_cast %163 : vector<1x8x128xbf16> to vector<8x128xbf16>
    %165 = vector.shape_cast %161 : vector<8x128xbf16> to vector<1x8x128xbf16>
    tpu.vector_store %arg8[%162, %c0_81, %c0_82], %165 {strides = array<i32>} : memref<8x8x128xbf16, #tpu.memory_space<vmem>>, vector<1x8x128xbf16>,
    %c4_i32 = arith.constant 4 : i32
    %c0_83 = arith.constant 0 : index
    %c0_84 = arith.constant 0 : index
    %166 = vector.load %arg9[%c0_83, %c0_84] : memref<8x128xf32, #tpu.memory_space<vmem>>, vector<8x128xf32>
    %c0_85 = arith.constant 0 : index
    %c0_86 = arith.constant 0 : index
    %167 = vector.load %arg10[%c0_85, %c0_86] : memref<8x128xf32, #tpu.memory_space<vmem>>, vector<8x128xf32>
    %168 = arith.index_cast %c4_i32 : i32 to index
    %c0_87 = arith.constant 0 : index
    %c0_88 = arith.constant 0 : index
    %169 = vector.load %arg1[%168, %c0_87, %c0_88] : memref<8x8x512xf32, #tpu.memory_space<vmem>>, vector<1x8x512xf32>
    %170 = vector.shape_cast %169 : vector<1x8x512xf32> to vector<8x512xf32>
    %171 = arith.truncf %166 : vector<8x128xf32> to vector<8x128xbf16>
    %cst_89 = arith.constant dense<0.000000e+00> : vector<8x512xf32>
    %172 = tpu.matmul %171, %1, %cst_89 {dimension_numbers = #tpu.dot_dimension_numbers<[1], [0], [0], [1], [0, 0, 1, 1], [], []>} : vector<8x128xbf16>, vector<128x512xbf16>, vector<8x512xf32> -> vector<8x512xf32>
    %173 = arith.addf %170, %172 : vector<8x512xf32>
    %174 = vector.extract_strided_slice %173 {offsets = [0, 0], sizes = [8, 128], strides = [1, 1]} : vector<8x512xf32> to vector<8x128xf32>
    %175 = math.tanh %174 : vector<8x128xf32>
    %cst_90 = arith.constant 5.000000e-01 : f32
    %176 = vector.broadcast %cst_90 : f32 to vector<8x128xf32>
    %177 = arith.mulf %176, %175 : vector<8x128xf32>
    %cst_91 = arith.constant 5.000000e-01 : f32
    %178 = vector.broadcast %cst_91 : f32 to vector<8x128xf32>
    %179 = arith.addf %177, %178 : vector<8x128xf32>
    %180 = vector.extract_strided_slice %173 {offsets = [0, 128], sizes = [8, 128], strides = [1, 1]} : vector<8x512xf32> to vector<8x128xf32>
    %181 = math.tanh %180 : vector<8x128xf32>
    %cst_92 = arith.constant 5.000000e-01 : f32
    %182 = vector.broadcast %cst_92 : f32 to vector<8x128xf32>
    %183 = arith.mulf %182, %181 : vector<8x128xf32>
    %cst_93 = arith.constant 5.000000e-01 : f32
    %184 = vector.broadcast %cst_93 : f32 to vector<8x128xf32>
    %185 = arith.addf %183, %184 : vector<8x128xf32>
    %186 = vector.extract_strided_slice %173 {offsets = [0, 256], sizes = [8, 128], strides = [1, 1]} : vector<8x512xf32> to vector<8x128xf32>
    %187 = math.tanh %186 : vector<8x128xf32>
    %188 = vector.extract_strided_slice %173 {offsets = [0, 384], sizes = [8, 128], strides = [1, 1]} : vector<8x512xf32> to vector<8x128xf32>
    %189 = math.tanh %188 : vector<8x128xf32>
    %cst_94 = arith.constant 5.000000e-01 : f32
    %190 = vector.broadcast %cst_94 : f32 to vector<8x128xf32>
    %191 = arith.mulf %190, %189 : vector<8x128xf32>
    %cst_95 = arith.constant 5.000000e-01 : f32
    %192 = vector.broadcast %cst_95 : f32 to vector<8x128xf32>
    %193 = arith.addf %191, %192 : vector<8x128xf32>
    %194 = arith.mulf %185, %167 : vector<8x128xf32>
    %195 = arith.mulf %179, %187 : vector<8x128xf32>
    %196 = arith.addf %194, %195 : vector<8x128xf32>
    %197 = math.tanh %196 : vector<8x128xf32>
    %198 = arith.mulf %193, %197 : vector<8x128xf32>
    %c0_96 = arith.constant 0 : index
    %c0_97 = arith.constant 0 : index
    %199 = vector.load %arg9[%c0_96, %c0_97] : memref<8x128xf32, #tpu.memory_space<vmem>>, vector<8x128xf32>
    tpu.vector_store %arg9[%c0_96, %c0_97], %198 {strides = array<i32>} : memref<8x128xf32, #tpu.memory_space<vmem>>, vector<8x128xf32>,
    %c0_98 = arith.constant 0 : index
    %c0_99 = arith.constant 0 : index
    %200 = vector.load %arg10[%c0_98, %c0_99] : memref<8x128xf32, #tpu.memory_space<vmem>>, vector<8x128xf32>
    tpu.vector_store %arg10[%c0_98, %c0_99], %196 {strides = array<i32>} : memref<8x128xf32, #tpu.memory_space<vmem>>, vector<8x128xf32>,
    %201 = arith.truncf %198 : vector<8x128xf32> to vector<8x128xbf16>
    %202 = arith.index_cast %c4_i32 : i32 to index
    %c0_100 = arith.constant 0 : index
    %c0_101 = arith.constant 0 : index
    %203 = vector.load %arg8[%202, %c0_100, %c0_101] : memref<8x8x128xbf16, #tpu.memory_space<vmem>>, vector<1x8x128xbf16>
    %204 = vector.shape_cast %203 : vector<1x8x128xbf16> to vector<8x128xbf16>
    %205 = vector.shape_cast %201 : vector<8x128xbf16> to vector<1x8x128xbf16>
    tpu.vector_store %arg8[%202, %c0_100, %c0_101], %205 {strides = array<i32>} : memref<8x8x128xbf16, #tpu.memory_space<vmem>>, vector<1x8x128xbf16>,
    %c5_i32 = arith.constant 5 : i32
    %c0_102 = arith.constant 0 : index
    %c0_103 = arith.constant 0 : index
    %206 = vector.load %arg9[%c0_102, %c0_103] : memref<8x128xf32, #tpu.memory_space<vmem>>, vector<8x128xf32>
    %c0_104 = arith.constant 0 : index
    %c0_105 = arith.constant 0 : index
    %207 = vector.load %arg10[%c0_104, %c0_105] : memref<8x128xf32, #tpu.memory_space<vmem>>, vector<8x128xf32>
    %208 = arith.index_cast %c5_i32 : i32 to index
    %c0_106 = arith.constant 0 : index
    %c0_107 = arith.constant 0 : index
    %209 = vector.load %arg1[%208, %c0_106, %c0_107] : memref<8x8x512xf32, #tpu.memory_space<vmem>>, vector<1x8x512xf32>
    %210 = vector.shape_cast %209 : vector<1x8x512xf32> to vector<8x512xf32>
    %211 = arith.truncf %206 : vector<8x128xf32> to vector<8x128xbf16>
    %cst_108 = arith.constant dense<0.000000e+00> : vector<8x512xf32>
    %212 = tpu.matmul %211, %1, %cst_108 {dimension_numbers = #tpu.dot_dimension_numbers<[1], [0], [0], [1], [0, 0, 1, 1], [], []>} : vector<8x128xbf16>, vector<128x512xbf16>, vector<8x512xf32> -> vector<8x512xf32>
    %213 = arith.addf %210, %212 : vector<8x512xf32>
    %214 = vector.extract_strided_slice %213 {offsets = [0, 0], sizes = [8, 128], strides = [1, 1]} : vector<8x512xf32> to vector<8x128xf32>
    %215 = math.tanh %214 : vector<8x128xf32>
    %cst_109 = arith.constant 5.000000e-01 : f32
    %216 = vector.broadcast %cst_109 : f32 to vector<8x128xf32>
    %217 = arith.mulf %216, %215 : vector<8x128xf32>
    %cst_110 = arith.constant 5.000000e-01 : f32
    %218 = vector.broadcast %cst_110 : f32 to vector<8x128xf32>
    %219 = arith.addf %217, %218 : vector<8x128xf32>
    %220 = vector.extract_strided_slice %213 {offsets = [0, 128], sizes = [8, 128], strides = [1, 1]} : vector<8x512xf32> to vector<8x128xf32>
    %221 = math.tanh %220 : vector<8x128xf32>
    %cst_111 = arith.constant 5.000000e-01 : f32
    %222 = vector.broadcast %cst_111 : f32 to vector<8x128xf32>
    %223 = arith.mulf %222, %221 : vector<8x128xf32>
    %cst_112 = arith.constant 5.000000e-01 : f32
    %224 = vector.broadcast %cst_112 : f32 to vector<8x128xf32>
    %225 = arith.addf %223, %224 : vector<8x128xf32>
    %226 = vector.extract_strided_slice %213 {offsets = [0, 256], sizes = [8, 128], strides = [1, 1]} : vector<8x512xf32> to vector<8x128xf32>
    %227 = math.tanh %226 : vector<8x128xf32>
    %228 = vector.extract_strided_slice %213 {offsets = [0, 384], sizes = [8, 128], strides = [1, 1]} : vector<8x512xf32> to vector<8x128xf32>
    %229 = math.tanh %228 : vector<8x128xf32>
    %cst_113 = arith.constant 5.000000e-01 : f32
    %230 = vector.broadcast %cst_113 : f32 to vector<8x128xf32>
    %231 = arith.mulf %230, %229 : vector<8x128xf32>
    %cst_114 = arith.constant 5.000000e-01 : f32
    %232 = vector.broadcast %cst_114 : f32 to vector<8x128xf32>
    %233 = arith.addf %231, %232 : vector<8x128xf32>
    %234 = arith.mulf %225, %207 : vector<8x128xf32>
    %235 = arith.mulf %219, %227 : vector<8x128xf32>
    %236 = arith.addf %234, %235 : vector<8x128xf32>
    %237 = math.tanh %236 : vector<8x128xf32>
    %238 = arith.mulf %233, %237 : vector<8x128xf32>
    %c0_115 = arith.constant 0 : index
    %c0_116 = arith.constant 0 : index
    %239 = vector.load %arg9[%c0_115, %c0_116] : memref<8x128xf32, #tpu.memory_space<vmem>>, vector<8x128xf32>
    tpu.vector_store %arg9[%c0_115, %c0_116], %238 {strides = array<i32>} : memref<8x128xf32, #tpu.memory_space<vmem>>, vector<8x128xf32>,
    %c0_117 = arith.constant 0 : index
    %c0_118 = arith.constant 0 : index
    %240 = vector.load %arg10[%c0_117, %c0_118] : memref<8x128xf32, #tpu.memory_space<vmem>>, vector<8x128xf32>
    tpu.vector_store %arg10[%c0_117, %c0_118], %236 {strides = array<i32>} : memref<8x128xf32, #tpu.memory_space<vmem>>, vector<8x128xf32>,
    %241 = arith.truncf %238 : vector<8x128xf32> to vector<8x128xbf16>
    %242 = arith.index_cast %c5_i32 : i32 to index
    %c0_119 = arith.constant 0 : index
    %c0_120 = arith.constant 0 : index
    %243 = vector.load %arg8[%242, %c0_119, %c0_120] : memref<8x8x128xbf16, #tpu.memory_space<vmem>>, vector<1x8x128xbf16>
    %244 = vector.shape_cast %243 : vector<1x8x128xbf16> to vector<8x128xbf16>
    %245 = vector.shape_cast %241 : vector<8x128xbf16> to vector<1x8x128xbf16>
    tpu.vector_store %arg8[%242, %c0_119, %c0_120], %245 {strides = array<i32>} : memref<8x8x128xbf16, #tpu.memory_space<vmem>>, vector<1x8x128xbf16>,
    %c6_i32 = arith.constant 6 : i32
    %c0_121 = arith.constant 0 : index
    %c0_122 = arith.constant 0 : index
    %246 = vector.load %arg9[%c0_121, %c0_122] : memref<8x128xf32, #tpu.memory_space<vmem>>, vector<8x128xf32>
    %c0_123 = arith.constant 0 : index
    %c0_124 = arith.constant 0 : index
    %247 = vector.load %arg10[%c0_123, %c0_124] : memref<8x128xf32, #tpu.memory_space<vmem>>, vector<8x128xf32>
    %248 = arith.index_cast %c6_i32 : i32 to index
    %c0_125 = arith.constant 0 : index
    %c0_126 = arith.constant 0 : index
    %249 = vector.load %arg1[%248, %c0_125, %c0_126] : memref<8x8x512xf32, #tpu.memory_space<vmem>>, vector<1x8x512xf32>
    %250 = vector.shape_cast %249 : vector<1x8x512xf32> to vector<8x512xf32>
    %251 = arith.truncf %246 : vector<8x128xf32> to vector<8x128xbf16>
    %cst_127 = arith.constant dense<0.000000e+00> : vector<8x512xf32>
    %252 = tpu.matmul %251, %1, %cst_127 {dimension_numbers = #tpu.dot_dimension_numbers<[1], [0], [0], [1], [0, 0, 1, 1], [], []>} : vector<8x128xbf16>, vector<128x512xbf16>, vector<8x512xf32> -> vector<8x512xf32>
    %253 = arith.addf %250, %252 : vector<8x512xf32>
    %254 = vector.extract_strided_slice %253 {offsets = [0, 0], sizes = [8, 128], strides = [1, 1]} : vector<8x512xf32> to vector<8x128xf32>
    %255 = math.tanh %254 : vector<8x128xf32>
    %cst_128 = arith.constant 5.000000e-01 : f32
    %256 = vector.broadcast %cst_128 : f32 to vector<8x128xf32>
    %257 = arith.mulf %256, %255 : vector<8x128xf32>
    %cst_129 = arith.constant 5.000000e-01 : f32
    %258 = vector.broadcast %cst_129 : f32 to vector<8x128xf32>
    %259 = arith.addf %257, %258 : vector<8x128xf32>
    %260 = vector.extract_strided_slice %253 {offsets = [0, 128], sizes = [8, 128], strides = [1, 1]} : vector<8x512xf32> to vector<8x128xf32>
    %261 = math.tanh %260 : vector<8x128xf32>
    %cst_130 = arith.constant 5.000000e-01 : f32
    %262 = vector.broadcast %cst_130 : f32 to vector<8x128xf32>
    %263 = arith.mulf %262, %261 : vector<8x128xf32>
    %cst_131 = arith.constant 5.000000e-01 : f32
    %264 = vector.broadcast %cst_131 : f32 to vector<8x128xf32>
    %265 = arith.addf %263, %264 : vector<8x128xf32>
    %266 = vector.extract_strided_slice %253 {offsets = [0, 256], sizes = [8, 128], strides = [1, 1]} : vector<8x512xf32> to vector<8x128xf32>
    %267 = math.tanh %266 : vector<8x128xf32>
    %268 = vector.extract_strided_slice %253 {offsets = [0, 384], sizes = [8, 128], strides = [1, 1]} : vector<8x512xf32> to vector<8x128xf32>
    %269 = math.tanh %268 : vector<8x128xf32>
    %cst_132 = arith.constant 5.000000e-01 : f32
    %270 = vector.broadcast %cst_132 : f32 to vector<8x128xf32>
    %271 = arith.mulf %270, %269 : vector<8x128xf32>
    %cst_133 = arith.constant 5.000000e-01 : f32
    %272 = vector.broadcast %cst_133 : f32 to vector<8x128xf32>
    %273 = arith.addf %271, %272 : vector<8x128xf32>
    %274 = arith.mulf %265, %247 : vector<8x128xf32>
    %275 = arith.mulf %259, %267 : vector<8x128xf32>
    %276 = arith.addf %274, %275 : vector<8x128xf32>
    %277 = math.tanh %276 : vector<8x128xf32>
    %278 = arith.mulf %273, %277 : vector<8x128xf32>
    %c0_134 = arith.constant 0 : index
    %c0_135 = arith.constant 0 : index
    %279 = vector.load %arg9[%c0_134, %c0_135] : memref<8x128xf32, #tpu.memory_space<vmem>>, vector<8x128xf32>
    tpu.vector_store %arg9[%c0_134, %c0_135], %278 {strides = array<i32>} : memref<8x128xf32, #tpu.memory_space<vmem>>, vector<8x128xf32>,
    %c0_136 = arith.constant 0 : index
    %c0_137 = arith.constant 0 : index
    %280 = vector.load %arg10[%c0_136, %c0_137] : memref<8x128xf32, #tpu.memory_space<vmem>>, vector<8x128xf32>
    tpu.vector_store %arg10[%c0_136, %c0_137], %276 {strides = array<i32>} : memref<8x128xf32, #tpu.memory_space<vmem>>, vector<8x128xf32>,
    %281 = arith.truncf %278 : vector<8x128xf32> to vector<8x128xbf16>
    %282 = arith.index_cast %c6_i32 : i32 to index
    %c0_138 = arith.constant 0 : index
    %c0_139 = arith.constant 0 : index
    %283 = vector.load %arg8[%282, %c0_138, %c0_139] : memref<8x8x128xbf16, #tpu.memory_space<vmem>>, vector<1x8x128xbf16>
    %284 = vector.shape_cast %283 : vector<1x8x128xbf16> to vector<8x128xbf16>
    %285 = vector.shape_cast %281 : vector<8x128xbf16> to vector<1x8x128xbf16>
    tpu.vector_store %arg8[%282, %c0_138, %c0_139], %285 {strides = array<i32>} : memref<8x8x128xbf16, #tpu.memory_space<vmem>>, vector<1x8x128xbf16>,
    %c7_i32 = arith.constant 7 : i32
    %c0_140 = arith.constant 0 : index
    %c0_141 = arith.constant 0 : index
    %286 = vector.load %arg9[%c0_140, %c0_141] : memref<8x128xf32, #tpu.memory_space<vmem>>, vector<8x128xf32>
    %c0_142 = arith.constant 0 : index
    %c0_143 = arith.constant 0 : index
    %287 = vector.load %arg10[%c0_142, %c0_143] : memref<8x128xf32, #tpu.memory_space<vmem>>, vector<8x128xf32>
    %288 = arith.index_cast %c7_i32 : i32 to index
    %c0_144 = arith.constant 0 : index
    %c0_145 = arith.constant 0 : index
    %289 = vector.load %arg1[%288, %c0_144, %c0_145] : memref<8x8x512xf32, #tpu.memory_space<vmem>>, vector<1x8x512xf32>
    %290 = vector.shape_cast %289 : vector<1x8x512xf32> to vector<8x512xf32>
    %291 = arith.truncf %286 : vector<8x128xf32> to vector<8x128xbf16>
    %cst_146 = arith.constant dense<0.000000e+00> : vector<8x512xf32>
    %292 = tpu.matmul %291, %1, %cst_146 {dimension_numbers = #tpu.dot_dimension_numbers<[1], [0], [0], [1], [0, 0, 1, 1], [], []>} : vector<8x128xbf16>, vector<128x512xbf16>, vector<8x512xf32> -> vector<8x512xf32>
    %293 = arith.addf %290, %292 : vector<8x512xf32>
    %294 = vector.extract_strided_slice %293 {offsets = [0, 0], sizes = [8, 128], strides = [1, 1]} : vector<8x512xf32> to vector<8x128xf32>
    %295 = math.tanh %294 : vector<8x128xf32>
    %cst_147 = arith.constant 5.000000e-01 : f32
    %296 = vector.broadcast %cst_147 : f32 to vector<8x128xf32>
    %297 = arith.mulf %296, %295 : vector<8x128xf32>
    %cst_148 = arith.constant 5.000000e-01 : f32
    %298 = vector.broadcast %cst_148 : f32 to vector<8x128xf32>
    %299 = arith.addf %297, %298 : vector<8x128xf32>
    %300 = vector.extract_strided_slice %293 {offsets = [0, 128], sizes = [8, 128], strides = [1, 1]} : vector<8x512xf32> to vector<8x128xf32>
    %301 = math.tanh %300 : vector<8x128xf32>
    %cst_149 = arith.constant 5.000000e-01 : f32
    %302 = vector.broadcast %cst_149 : f32 to vector<8x128xf32>
    %303 = arith.mulf %302, %301 : vector<8x128xf32>
    %cst_150 = arith.constant 5.000000e-01 : f32
    %304 = vector.broadcast %cst_150 : f32 to vector<8x128xf32>
    %305 = arith.addf %303, %304 : vector<8x128xf32>
    %306 = vector.extract_strided_slice %293 {offsets = [0, 256], sizes = [8, 128], strides = [1, 1]} : vector<8x512xf32> to vector<8x128xf32>
    %307 = math.tanh %306 : vector<8x128xf32>
    %308 = vector.extract_strided_slice %293 {offsets = [0, 384], sizes = [8, 128], strides = [1, 1]} : vector<8x512xf32> to vector<8x128xf32>
    %309 = math.tanh %308 : vector<8x128xf32>
    %cst_151 = arith.constant 5.000000e-01 : f32
    %310 = vector.broadcast %cst_151 : f32 to vector<8x128xf32>
    %311 = arith.mulf %310, %309 : vector<8x128xf32>
    %cst_152 = arith.constant 5.000000e-01 : f32
    %312 = vector.broadcast %cst_152 : f32 to vector<8x128xf32>
    %313 = arith.addf %311, %312 : vector<8x128xf32>
    %314 = arith.mulf %305, %287 : vector<8x128xf32>
    %315 = arith.mulf %299, %307 : vector<8x128xf32>
    %316 = arith.addf %314, %315 : vector<8x128xf32>
    %317 = math.tanh %316 : vector<8x128xf32>
    %318 = arith.mulf %313, %317 : vector<8x128xf32>
    %c0_153 = arith.constant 0 : index
    %c0_154 = arith.constant 0 : index
    %319 = vector.load %arg9[%c0_153, %c0_154] : memref<8x128xf32, #tpu.memory_space<vmem>>, vector<8x128xf32>
    tpu.vector_store %arg9[%c0_153, %c0_154], %318 {strides = array<i32>} : memref<8x128xf32, #tpu.memory_space<vmem>>, vector<8x128xf32>,
    %c0_155 = arith.constant 0 : index
    %c0_156 = arith.constant 0 : index
    %320 = vector.load %arg10[%c0_155, %c0_156] : memref<8x128xf32, #tpu.memory_space<vmem>>, vector<8x128xf32>
    tpu.vector_store %arg10[%c0_155, %c0_156], %316 {strides = array<i32>} : memref<8x128xf32, #tpu.memory_space<vmem>>, vector<8x128xf32>,
    %321 = arith.truncf %318 : vector<8x128xf32> to vector<8x128xbf16>
    %322 = arith.index_cast %c7_i32 : i32 to index
    %c0_157 = arith.constant 0 : index
    %c0_158 = arith.constant 0 : index
    %323 = vector.load %arg8[%322, %c0_157, %c0_158] : memref<8x8x128xbf16, #tpu.memory_space<vmem>>, vector<1x8x128xbf16>
    %324 = vector.shape_cast %323 : vector<1x8x128xbf16> to vector<8x128xbf16>
    %325 = vector.shape_cast %321 : vector<8x128xbf16> to vector<1x8x128xbf16>
    tpu.vector_store %arg8[%322, %c0_157, %c0_158], %325 {strides = array<i32>} : memref<8x8x128xbf16, #tpu.memory_space<vmem>>, vector<1x8x128xbf16>,
    %c8_i32 = arith.constant 8 : i32
    %c0_159 = arith.constant 0 : index
    %c0_160 = arith.constant 0 : index
    %326 = vector.load %arg9[%c0_159, %c0_160] : memref<8x128xf32, #tpu.memory_space<vmem>>, vector<8x128xf32>
    %c0_161 = arith.constant 0 : index
    %c0_162 = arith.constant 0 : index
    %c0_163 = arith.constant 0 : index
    %327 = vector.load %arg5[%c0_161, %c0_162, %c0_163] : memref<2x8x128xf32, #tpu.memory_space<vmem>>, vector<1x8x128xf32>
    %328 = vector.shape_cast %327 : vector<1x8x128xf32> to vector<8x128xf32>
    %329 = vector.shape_cast %326 : vector<8x128xf32> to vector<1x8x128xf32>
    tpu.vector_store %arg5[%c0_161, %c0_162, %c0_163], %329 {strides = array<i32>} : memref<2x8x128xf32, #tpu.memory_space<vmem>>, vector<1x8x128xf32>,
    %c0_164 = arith.constant 0 : index
    %c0_165 = arith.constant 0 : index
    %330 = vector.load %arg10[%c0_164, %c0_165] : memref<8x128xf32, #tpu.memory_space<vmem>>, vector<8x128xf32>
    %c0_166 = arith.constant 0 : index
    %c0_167 = arith.constant 0 : index
    %c0_168 = arith.constant 0 : index
    %331 = vector.load %arg6[%c0_166, %c0_167, %c0_168] : memref<2x8x128xf32, #tpu.memory_space<vmem>>, vector<1x8x128xf32>
    %332 = vector.shape_cast %331 : vector<1x8x128xf32> to vector<8x128xf32>
    %333 = vector.shape_cast %330 : vector<8x128xf32> to vector<1x8x128xf32>
    tpu.vector_store %arg6[%c0_166, %c0_167, %c0_168], %333 {strides = array<i32>} : memref<2x8x128xf32, #tpu.memory_space<vmem>>, vector<1x8x128xf32>,
    %c1 = arith.constant 1 : index
    %c0_169 = arith.constant 0 : index
    %c0_170 = arith.constant 0 : index
    %334 = vector.load %arg3[%c1, %c0_169, %c0_170] : memref<2x128x512xbf16, #tpu.memory_space<vmem>>, vector<1x128x512xbf16>
    %335 = vector.shape_cast %334 : vector<1x128x512xbf16> to vector<128x512xbf16>
    %c0_171 = arith.constant 0 : index
    %c0_172 = arith.constant 0 : index
    %c0_173 = arith.constant 0 : index
    %336 = vector.load %arg2[%c0_171, %c0_172, %c0_173] : memref<1x128x512xbf16, #tpu.memory_space<vmem>>, vector<1x128x512xbf16>
    %337 = vector.shape_cast %336 : vector<1x128x512xbf16> to vector<128x512xbf16>
    %c0_174 = arith.constant 0 : index
    %c0_175 = arith.constant 0 : index
    %c0_176 = arith.constant 0 : index
    %338 = vector.load %arg8[%c0_174, %c0_175, %c0_176] : memref<8x8x128xbf16, #tpu.memory_space<vmem>>, vector<8x8x128xbf16>
    %339 = vector.shape_cast %338 : vector<8x8x128xbf16> to vector<64x128xbf16>
    %cst_177 = arith.constant dense<0.000000e+00> : vector<64x512xf32>
    %340 = tpu.matmul %339, %337, %cst_177 {dimension_numbers = #tpu.dot_dimension_numbers<[1], [0], [0], [1], [0, 0, 1, 1], [], []>} : vector<64x128xbf16>, vector<128x512xbf16>, vector<64x512xf32> -> vector<64x512xf32>
    %341 = vector.shape_cast %340 : vector<64x512xf32> to vector<8x8x512xf32>
    %c1_178 = arith.constant 1 : index
    %c0_179 = arith.constant 0 : index
    %c0_180 = arith.constant 0 : index
    %342 = vector.load %arg4[%c1_178, %c0_179, %c0_180] : memref<2x1x512xf32, #tpu.memory_space<vmem>>, vector<1x1x512xf32>
    %343 = vector.shape_cast %342 : vector<1x1x512xf32> to vector<1x512xf32>
    %344 = vector.shape_cast %343 : vector<1x512xf32> to vector<1x1x512xf32>
    %345 = vector.broadcast %344 : vector<1x1x512xf32> to vector<8x8x512xf32>
    %346 = arith.addf %341, %345 : vector<8x8x512xf32>
    %c0_181 = arith.constant 0 : index
    %c0_182 = arith.constant 0 : index
    %c0_183 = arith.constant 0 : index
    %347 = vector.load %arg7[%c0_181, %c0_182, %c0_183] : memref<8x8x512xf32, #tpu.memory_space<vmem>>, vector<8x8x512xf32>
    tpu.vector_store %arg7[%c0_181, %c0_182, %c0_183], %346 {strides = array<i32>} : memref<8x8x512xf32, #tpu.memory_space<vmem>>, vector<8x8x512xf32>,
    %cst_184 = arith.constant 0.000000e+00 : f32
    %348 = vector.broadcast %cst_184 : f32 to vector<8x128xf32>
    %c0_185 = arith.constant 0 : index
    %c0_186 = arith.constant 0 : index
    %349 = vector.load %arg9[%c0_185, %c0_186] : memref<8x128xf32, #tpu.memory_space<vmem>>, vector<8x128xf32>
    tpu.vector_store %arg9[%c0_185, %c0_186], %348 {strides = array<i32>} : memref<8x128xf32, #tpu.memory_space<vmem>>, vector<8x128xf32>,
    %cst_187 = arith.constant 0.000000e+00 : f32
    %350 = vector.broadcast %cst_187 : f32 to vector<8x128xf32>
    %c0_188 = arith.constant 0 : index
    %c0_189 = arith.constant 0 : index
    %351 = vector.load %arg10[%c0_188, %c0_189] : memref<8x128xf32, #tpu.memory_space<vmem>>, vector<8x128xf32>
    tpu.vector_store %arg10[%c0_188, %c0_189], %350 {strides = array<i32>} : memref<8x128xf32, #tpu.memory_space<vmem>>, vector<8x128xf32>,
    %c0_i32_190 = arith.constant 0 : i32
    %c0_191 = arith.constant 0 : index
    %c0_192 = arith.constant 0 : index
    %352 = vector.load %arg9[%c0_191, %c0_192] : memref<8x128xf32, #tpu.memory_space<vmem>>, vector<8x128xf32>
    %c0_193 = arith.constant 0 : index
    %c0_194 = arith.constant 0 : index
    %353 = vector.load %arg10[%c0_193, %c0_194] : memref<8x128xf32, #tpu.memory_space<vmem>>, vector<8x128xf32>
    %354 = arith.index_cast %c0_i32_190 : i32 to index
    %c0_195 = arith.constant 0 : index
    %c0_196 = arith.constant 0 : index
    %355 = vector.load %arg7[%354, %c0_195, %c0_196] : memref<8x8x512xf32, #tpu.memory_space<vmem>>, vector<1x8x512xf32>
    %356 = vector.shape_cast %355 : vector<1x8x512xf32> to vector<8x512xf32>
    %357 = arith.truncf %352 : vector<8x128xf32> to vector<8x128xbf16>
    %cst_197 = arith.constant dense<0.000000e+00> : vector<8x512xf32>
    %358 = tpu.matmul %357, %335, %cst_197 {dimension_numbers = #tpu.dot_dimension_numbers<[1], [0], [0], [1], [0, 0, 1, 1], [], []>} : vector<8x128xbf16>, vector<128x512xbf16>, vector<8x512xf32> -> vector<8x512xf32>
    %359 = arith.addf %356, %358 : vector<8x512xf32>
    %360 = vector.extract_strided_slice %359 {offsets = [0, 0], sizes = [8, 128], strides = [1, 1]} : vector<8x512xf32> to vector<8x128xf32>
    %361 = math.tanh %360 : vector<8x128xf32>
    %cst_198 = arith.constant 5.000000e-01 : f32
    %362 = vector.broadcast %cst_198 : f32 to vector<8x128xf32>
    %363 = arith.mulf %362, %361 : vector<8x128xf32>
    %cst_199 = arith.constant 5.000000e-01 : f32
    %364 = vector.broadcast %cst_199 : f32 to vector<8x128xf32>
    %365 = arith.addf %363, %364 : vector<8x128xf32>
    %366 = vector.extract_strided_slice %359 {offsets = [0, 128], sizes = [8, 128], strides = [1, 1]} : vector<8x512xf32> to vector<8x128xf32>
    %367 = math.tanh %366 : vector<8x128xf32>
    %cst_200 = arith.constant 5.000000e-01 : f32
    %368 = vector.broadcast %cst_200 : f32 to vector<8x128xf32>
    %369 = arith.mulf %368, %367 : vector<8x128xf32>
    %cst_201 = arith.constant 5.000000e-01 : f32
    %370 = vector.broadcast %cst_201 : f32 to vector<8x128xf32>
    %371 = arith.addf %369, %370 : vector<8x128xf32>
    %372 = vector.extract_strided_slice %359 {offsets = [0, 256], sizes = [8, 128], strides = [1, 1]} : vector<8x512xf32> to vector<8x128xf32>
    %373 = math.tanh %372 : vector<8x128xf32>
    %374 = vector.extract_strided_slice %359 {offsets = [0, 384], sizes = [8, 128], strides = [1, 1]} : vector<8x512xf32> to vector<8x128xf32>
    %375 = math.tanh %374 : vector<8x128xf32>
    %cst_202 = arith.constant 5.000000e-01 : f32
    %376 = vector.broadcast %cst_202 : f32 to vector<8x128xf32>
    %377 = arith.mulf %376, %375 : vector<8x128xf32>
    %cst_203 = arith.constant 5.000000e-01 : f32
    %378 = vector.broadcast %cst_203 : f32 to vector<8x128xf32>
    %379 = arith.addf %377, %378 : vector<8x128xf32>
    %380 = arith.mulf %371, %353 : vector<8x128xf32>
    %381 = arith.mulf %365, %373 : vector<8x128xf32>
    %382 = arith.addf %380, %381 : vector<8x128xf32>
    %383 = math.tanh %382 : vector<8x128xf32>
    %384 = arith.mulf %379, %383 : vector<8x128xf32>
    %c0_204 = arith.constant 0 : index
    %c0_205 = arith.constant 0 : index
    %385 = vector.load %arg9[%c0_204, %c0_205] : memref<8x128xf32, #tpu.memory_space<vmem>>, vector<8x128xf32>
    tpu.vector_store %arg9[%c0_204, %c0_205], %384 {strides = array<i32>} : memref<8x128xf32, #tpu.memory_space<vmem>>, vector<8x128xf32>,
    %c0_206 = arith.constant 0 : index
    %c0_207 = arith.constant 0 : index
    %386 = vector.load %arg10[%c0_206, %c0_207] : memref<8x128xf32, #tpu.memory_space<vmem>>, vector<8x128xf32>
    tpu.vector_store %arg10[%c0_206, %c0_207], %382 {strides = array<i32>} : memref<8x128xf32, #tpu.memory_space<vmem>>, vector<8x128xf32>,
    %387 = arith.truncf %384 : vector<8x128xf32> to vector<8x128xbf16>
    %388 = arith.index_cast %c0_i32_190 : i32 to index
    %c0_208 = arith.constant 0 : index
    %c0_209 = arith.constant 0 : index
    %389 = vector.load %arg8[%388, %c0_208, %c0_209] : memref<8x8x128xbf16, #tpu.memory_space<vmem>>, vector<1x8x128xbf16>
    %390 = vector.shape_cast %389 : vector<1x8x128xbf16> to vector<8x128xbf16>
    %391 = vector.shape_cast %387 : vector<8x128xbf16> to vector<1x8x128xbf16>
    tpu.vector_store %arg8[%388, %c0_208, %c0_209], %391 {strides = array<i32>} : memref<8x8x128xbf16, #tpu.memory_space<vmem>>, vector<1x8x128xbf16>,
    %c1_i32_210 = arith.constant 1 : i32
    %c0_211 = arith.constant 0 : index
    %c0_212 = arith.constant 0 : index
    %392 = vector.load %arg9[%c0_211, %c0_212] : memref<8x128xf32, #tpu.memory_space<vmem>>, vector<8x128xf32>
    %c0_213 = arith.constant 0 : index
    %c0_214 = arith.constant 0 : index
    %393 = vector.load %arg10[%c0_213, %c0_214] : memref<8x128xf32, #tpu.memory_space<vmem>>, vector<8x128xf32>
    %394 = arith.index_cast %c1_i32_210 : i32 to index
    %c0_215 = arith.constant 0 : index
    %c0_216 = arith.constant 0 : index
    %395 = vector.load %arg7[%394, %c0_215, %c0_216] : memref<8x8x512xf32, #tpu.memory_space<vmem>>, vector<1x8x512xf32>
    %396 = vector.shape_cast %395 : vector<1x8x512xf32> to vector<8x512xf32>
    %397 = arith.truncf %392 : vector<8x128xf32> to vector<8x128xbf16>
    %cst_217 = arith.constant dense<0.000000e+00> : vector<8x512xf32>
    %398 = tpu.matmul %397, %335, %cst_217 {dimension_numbers = #tpu.dot_dimension_numbers<[1], [0], [0], [1], [0, 0, 1, 1], [], []>} : vector<8x128xbf16>, vector<128x512xbf16>, vector<8x512xf32> -> vector<8x512xf32>
    %399 = arith.addf %396, %398 : vector<8x512xf32>
    %400 = vector.extract_strided_slice %399 {offsets = [0, 0], sizes = [8, 128], strides = [1, 1]} : vector<8x512xf32> to vector<8x128xf32>
    %401 = math.tanh %400 : vector<8x128xf32>
    %cst_218 = arith.constant 5.000000e-01 : f32
    %402 = vector.broadcast %cst_218 : f32 to vector<8x128xf32>
    %403 = arith.mulf %402, %401 : vector<8x128xf32>
    %cst_219 = arith.constant 5.000000e-01 : f32
    %404 = vector.broadcast %cst_219 : f32 to vector<8x128xf32>
    %405 = arith.addf %403, %404 : vector<8x128xf32>
    %406 = vector.extract_strided_slice %399 {offsets = [0, 128], sizes = [8, 128], strides = [1, 1]} : vector<8x512xf32> to vector<8x128xf32>
    %407 = math.tanh %406 : vector<8x128xf32>
    %cst_220 = arith.constant 5.000000e-01 : f32
    %408 = vector.broadcast %cst_220 : f32 to vector<8x128xf32>
    %409 = arith.mulf %408, %407 : vector<8x128xf32>
    %cst_221 = arith.constant 5.000000e-01 : f32
    %410 = vector.broadcast %cst_221 : f32 to vector<8x128xf32>
    %411 = arith.addf %409, %410 : vector<8x128xf32>
    %412 = vector.extract_strided_slice %399 {offsets = [0, 256], sizes = [8, 128], strides = [1, 1]} : vector<8x512xf32> to vector<8x128xf32>
    %413 = math.tanh %412 : vector<8x128xf32>
    %414 = vector.extract_strided_slice %399 {offsets = [0, 384], sizes = [8, 128], strides = [1, 1]} : vector<8x512xf32> to vector<8x128xf32>
    %415 = math.tanh %414 : vector<8x128xf32>
    %cst_222 = arith.constant 5.000000e-01 : f32
    %416 = vector.broadcast %cst_222 : f32 to vector<8x128xf32>
    %417 = arith.mulf %416, %415 : vector<8x128xf32>
    %cst_223 = arith.constant 5.000000e-01 : f32
    %418 = vector.broadcast %cst_223 : f32 to vector<8x128xf32>
    %419 = arith.addf %417, %418 : vector<8x128xf32>
    %420 = arith.mulf %411, %393 : vector<8x128xf32>
    %421 = arith.mulf %405, %413 : vector<8x128xf32>
    %422 = arith.addf %420, %421 : vector<8x128xf32>
    %423 = math.tanh %422 : vector<8x128xf32>
    %424 = arith.mulf %419, %423 : vector<8x128xf32>
    %c0_224 = arith.constant 0 : index
    %c0_225 = arith.constant 0 : index
    %425 = vector.load %arg9[%c0_224, %c0_225] : memref<8x128xf32, #tpu.memory_space<vmem>>, vector<8x128xf32>
    tpu.vector_store %arg9[%c0_224, %c0_225], %424 {strides = array<i32>} : memref<8x128xf32, #tpu.memory_space<vmem>>, vector<8x128xf32>,
    %c0_226 = arith.constant 0 : index
    %c0_227 = arith.constant 0 : index
    %426 = vector.load %arg10[%c0_226, %c0_227] : memref<8x128xf32, #tpu.memory_space<vmem>>, vector<8x128xf32>
    tpu.vector_store %arg10[%c0_226, %c0_227], %422 {strides = array<i32>} : memref<8x128xf32, #tpu.memory_space<vmem>>, vector<8x128xf32>,
    %427 = arith.truncf %424 : vector<8x128xf32> to vector<8x128xbf16>
    %428 = arith.index_cast %c1_i32_210 : i32 to index
    %c0_228 = arith.constant 0 : index
    %c0_229 = arith.constant 0 : index
    %429 = vector.load %arg8[%428, %c0_228, %c0_229] : memref<8x8x128xbf16, #tpu.memory_space<vmem>>, vector<1x8x128xbf16>
    %430 = vector.shape_cast %429 : vector<1x8x128xbf16> to vector<8x128xbf16>
    %431 = vector.shape_cast %427 : vector<8x128xbf16> to vector<1x8x128xbf16>
    tpu.vector_store %arg8[%428, %c0_228, %c0_229], %431 {strides = array<i32>} : memref<8x8x128xbf16, #tpu.memory_space<vmem>>, vector<1x8x128xbf16>,
    %c2_i32_230 = arith.constant 2 : i32
    %c0_231 = arith.constant 0 : index
    %c0_232 = arith.constant 0 : index
    %432 = vector.load %arg9[%c0_231, %c0_232] : memref<8x128xf32, #tpu.memory_space<vmem>>, vector<8x128xf32>
    %c0_233 = arith.constant 0 : index
    %c0_234 = arith.constant 0 : index
    %433 = vector.load %arg10[%c0_233, %c0_234] : memref<8x128xf32, #tpu.memory_space<vmem>>, vector<8x128xf32>
    %434 = arith.index_cast %c2_i32_230 : i32 to index
    %c0_235 = arith.constant 0 : index
    %c0_236 = arith.constant 0 : index
    %435 = vector.load %arg7[%434, %c0_235, %c0_236] : memref<8x8x512xf32, #tpu.memory_space<vmem>>, vector<1x8x512xf32>
    %436 = vector.shape_cast %435 : vector<1x8x512xf32> to vector<8x512xf32>
    %437 = arith.truncf %432 : vector<8x128xf32> to vector<8x128xbf16>
    %cst_237 = arith.constant dense<0.000000e+00> : vector<8x512xf32>
    %438 = tpu.matmul %437, %335, %cst_237 {dimension_numbers = #tpu.dot_dimension_numbers<[1], [0], [0], [1], [0, 0, 1, 1], [], []>} : vector<8x128xbf16>, vector<128x512xbf16>, vector<8x512xf32> -> vector<8x512xf32>
    %439 = arith.addf %436, %438 : vector<8x512xf32>
    %440 = vector.extract_strided_slice %439 {offsets = [0, 0], sizes = [8, 128], strides = [1, 1]} : vector<8x512xf32> to vector<8x128xf32>
    %441 = math.tanh %440 : vector<8x128xf32>
    %cst_238 = arith.constant 5.000000e-01 : f32
    %442 = vector.broadcast %cst_238 : f32 to vector<8x128xf32>
    %443 = arith.mulf %442, %441 : vector<8x128xf32>
    %cst_239 = arith.constant 5.000000e-01 : f32
    %444 = vector.broadcast %cst_239 : f32 to vector<8x128xf32>
    %445 = arith.addf %443, %444 : vector<8x128xf32>
    %446 = vector.extract_strided_slice %439 {offsets = [0, 128], sizes = [8, 128], strides = [1, 1]} : vector<8x512xf32> to vector<8x128xf32>
    %447 = math.tanh %446 : vector<8x128xf32>
    %cst_240 = arith.constant 5.000000e-01 : f32
    %448 = vector.broadcast %cst_240 : f32 to vector<8x128xf32>
    %449 = arith.mulf %448, %447 : vector<8x128xf32>
    %cst_241 = arith.constant 5.000000e-01 : f32
    %450 = vector.broadcast %cst_241 : f32 to vector<8x128xf32>
    %451 = arith.addf %449, %450 : vector<8x128xf32>
    %452 = vector.extract_strided_slice %439 {offsets = [0, 256], sizes = [8, 128], strides = [1, 1]} : vector<8x512xf32> to vector<8x128xf32>
    %453 = math.tanh %452 : vector<8x128xf32>
    %454 = vector.extract_strided_slice %439 {offsets = [0, 384], sizes = [8, 128], strides = [1, 1]} : vector<8x512xf32> to vector<8x128xf32>
    %455 = math.tanh %454 : vector<8x128xf32>
    %cst_242 = arith.constant 5.000000e-01 : f32
    %456 = vector.broadcast %cst_242 : f32 to vector<8x128xf32>
    %457 = arith.mulf %456, %455 : vector<8x128xf32>
    %cst_243 = arith.constant 5.000000e-01 : f32
    %458 = vector.broadcast %cst_243 : f32 to vector<8x128xf32>
    %459 = arith.addf %457, %458 : vector<8x128xf32>
    %460 = arith.mulf %451, %433 : vector<8x128xf32>
    %461 = arith.mulf %445, %453 : vector<8x128xf32>
    %462 = arith.addf %460, %461 : vector<8x128xf32>
    %463 = math.tanh %462 : vector<8x128xf32>
    %464 = arith.mulf %459, %463 : vector<8x128xf32>
    %c0_244 = arith.constant 0 : index
    %c0_245 = arith.constant 0 : index
    %465 = vector.load %arg9[%c0_244, %c0_245] : memref<8x128xf32, #tpu.memory_space<vmem>>, vector<8x128xf32>
    tpu.vector_store %arg9[%c0_244, %c0_245], %464 {strides = array<i32>} : memref<8x128xf32, #tpu.memory_space<vmem>>, vector<8x128xf32>,
    %c0_246 = arith.constant 0 : index
    %c0_247 = arith.constant 0 : index
    %466 = vector.load %arg10[%c0_246, %c0_247] : memref<8x128xf32, #tpu.memory_space<vmem>>, vector<8x128xf32>
    tpu.vector_store %arg10[%c0_246, %c0_247], %462 {strides = array<i32>} : memref<8x128xf32, #tpu.memory_space<vmem>>, vector<8x128xf32>,
    %467 = arith.truncf %464 : vector<8x128xf32> to vector<8x128xbf16>
    %468 = arith.index_cast %c2_i32_230 : i32 to index
    %c0_248 = arith.constant 0 : index
    %c0_249 = arith.constant 0 : index
    %469 = vector.load %arg8[%468, %c0_248, %c0_249] : memref<8x8x128xbf16, #tpu.memory_space<vmem>>, vector<1x8x128xbf16>
    %470 = vector.shape_cast %469 : vector<1x8x128xbf16> to vector<8x128xbf16>
    %471 = vector.shape_cast %467 : vector<8x128xbf16> to vector<1x8x128xbf16>
    tpu.vector_store %arg8[%468, %c0_248, %c0_249], %471 {strides = array<i32>} : memref<8x8x128xbf16, #tpu.memory_space<vmem>>, vector<1x8x128xbf16>,
    %c3_i32_250 = arith.constant 3 : i32
    %c0_251 = arith.constant 0 : index
    %c0_252 = arith.constant 0 : index
    %472 = vector.load %arg9[%c0_251, %c0_252] : memref<8x128xf32, #tpu.memory_space<vmem>>, vector<8x128xf32>
    %c0_253 = arith.constant 0 : index
    %c0_254 = arith.constant 0 : index
    %473 = vector.load %arg10[%c0_253, %c0_254] : memref<8x128xf32, #tpu.memory_space<vmem>>, vector<8x128xf32>
    %474 = arith.index_cast %c3_i32_250 : i32 to index
    %c0_255 = arith.constant 0 : index
    %c0_256 = arith.constant 0 : index
    %475 = vector.load %arg7[%474, %c0_255, %c0_256] : memref<8x8x512xf32, #tpu.memory_space<vmem>>, vector<1x8x512xf32>
    %476 = vector.shape_cast %475 : vector<1x8x512xf32> to vector<8x512xf32>
    %477 = arith.truncf %472 : vector<8x128xf32> to vector<8x128xbf16>
    %cst_257 = arith.constant dense<0.000000e+00> : vector<8x512xf32>
    %478 = tpu.matmul %477, %335, %cst_257 {dimension_numbers = #tpu.dot_dimension_numbers<[1], [0], [0], [1], [0, 0, 1, 1], [], []>} : vector<8x128xbf16>, vector<128x512xbf16>, vector<8x512xf32> -> vector<8x512xf32>
    %479 = arith.addf %476, %478 : vector<8x512xf32>
    %480 = vector.extract_strided_slice %479 {offsets = [0, 0], sizes = [8, 128], strides = [1, 1]} : vector<8x512xf32> to vector<8x128xf32>
    %481 = math.tanh %480 : vector<8x128xf32>
    %cst_258 = arith.constant 5.000000e-01 : f32
    %482 = vector.broadcast %cst_258 : f32 to vector<8x128xf32>
    %483 = arith.mulf %482, %481 : vector<8x128xf32>
    %cst_259 = arith.constant 5.000000e-01 : f32
    %484 = vector.broadcast %cst_259 : f32 to vector<8x128xf32>
    %485 = arith.addf %483, %484 : vector<8x128xf32>
    %486 = vector.extract_strided_slice %479 {offsets = [0, 128], sizes = [8, 128], strides = [1, 1]} : vector<8x512xf32> to vector<8x128xf32>
    %487 = math.tanh %486 : vector<8x128xf32>
    %cst_260 = arith.constant 5.000000e-01 : f32
    %488 = vector.broadcast %cst_260 : f32 to vector<8x128xf32>
    %489 = arith.mulf %488, %487 : vector<8x128xf32>
    %cst_261 = arith.constant 5.000000e-01 : f32
    %490 = vector.broadcast %cst_261 : f32 to vector<8x128xf32>
    %491 = arith.addf %489, %490 : vector<8x128xf32>
    %492 = vector.extract_strided_slice %479 {offsets = [0, 256], sizes = [8, 128], strides = [1, 1]} : vector<8x512xf32> to vector<8x128xf32>
    %493 = math.tanh %492 : vector<8x128xf32>
    %494 = vector.extract_strided_slice %479 {offsets = [0, 384], sizes = [8, 128], strides = [1, 1]} : vector<8x512xf32> to vector<8x128xf32>
    %495 = math.tanh %494 : vector<8x128xf32>
    %cst_262 = arith.constant 5.000000e-01 : f32
    %496 = vector.broadcast %cst_262 : f32 to vector<8x128xf32>
    %497 = arith.mulf %496, %495 : vector<8x128xf32>
    %cst_263 = arith.constant 5.000000e-01 : f32
    %498 = vector.broadcast %cst_263 : f32 to vector<8x128xf32>
    %499 = arith.addf %497, %498 : vector<8x128xf32>
    %500 = arith.mulf %491, %473 : vector<8x128xf32>
    %501 = arith.mulf %485, %493 : vector<8x128xf32>
    %502 = arith.addf %500, %501 : vector<8x128xf32>
    %503 = math.tanh %502 : vector<8x128xf32>
    %504 = arith.mulf %499, %503 : vector<8x128xf32>
    %c0_264 = arith.constant 0 : index
    %c0_265 = arith.constant 0 : index
    %505 = vector.load %arg9[%c0_264, %c0_265] : memref<8x128xf32, #tpu.memory_space<vmem>>, vector<8x128xf32>
    tpu.vector_store %arg9[%c0_264, %c0_265], %504 {strides = array<i32>} : memref<8x128xf32, #tpu.memory_space<vmem>>, vector<8x128xf32>,
    %c0_266 = arith.constant 0 : index
    %c0_267 = arith.constant 0 : index
    %506 = vector.load %arg10[%c0_266, %c0_267] : memref<8x128xf32, #tpu.memory_space<vmem>>, vector<8x128xf32>
    tpu.vector_store %arg10[%c0_266, %c0_267], %502 {strides = array<i32>} : memref<8x128xf32, #tpu.memory_space<vmem>>, vector<8x128xf32>,
    %507 = arith.truncf %504 : vector<8x128xf32> to vector<8x128xbf16>
    %508 = arith.index_cast %c3_i32_250 : i32 to index
    %c0_268 = arith.constant 0 : index
    %c0_269 = arith.constant 0 : index
    %509 = vector.load %arg8[%508, %c0_268, %c0_269] : memref<8x8x128xbf16, #tpu.memory_space<vmem>>, vector<1x8x128xbf16>
    %510 = vector.shape_cast %509 : vector<1x8x128xbf16> to vector<8x128xbf16>
    %511 = vector.shape_cast %507 : vector<8x128xbf16> to vector<1x8x128xbf16>
    tpu.vector_store %arg8[%508, %c0_268, %c0_269], %511 {strides = array<i32>} : memref<8x8x128xbf16, #tpu.memory_space<vmem>>, vector<1x8x128xbf16>,
    %c4_i32_270 = arith.constant 4 : i32
    %c0_271 = arith.constant 0 : index
    %c0_272 = arith.constant 0 : index
    %512 = vector.load %arg9[%c0_271, %c0_272] : memref<8x128xf32, #tpu.memory_space<vmem>>, vector<8x128xf32>
    %c0_273 = arith.constant 0 : index
    %c0_274 = arith.constant 0 : index
    %513 = vector.load %arg10[%c0_273, %c0_274] : memref<8x128xf32, #tpu.memory_space<vmem>>, vector<8x128xf32>
    %514 = arith.index_cast %c4_i32_270 : i32 to index
    %c0_275 = arith.constant 0 : index
    %c0_276 = arith.constant 0 : index
    %515 = vector.load %arg7[%514, %c0_275, %c0_276] : memref<8x8x512xf32, #tpu.memory_space<vmem>>, vector<1x8x512xf32>
    %516 = vector.shape_cast %515 : vector<1x8x512xf32> to vector<8x512xf32>
    %517 = arith.truncf %512 : vector<8x128xf32> to vector<8x128xbf16>
    %cst_277 = arith.constant dense<0.000000e+00> : vector<8x512xf32>
    %518 = tpu.matmul %517, %335, %cst_277 {dimension_numbers = #tpu.dot_dimension_numbers<[1], [0], [0], [1], [0, 0, 1, 1], [], []>} : vector<8x128xbf16>, vector<128x512xbf16>, vector<8x512xf32> -> vector<8x512xf32>
    %519 = arith.addf %516, %518 : vector<8x512xf32>
    %520 = vector.extract_strided_slice %519 {offsets = [0, 0], sizes = [8, 128], strides = [1, 1]} : vector<8x512xf32> to vector<8x128xf32>
    %521 = math.tanh %520 : vector<8x128xf32>
    %cst_278 = arith.constant 5.000000e-01 : f32
    %522 = vector.broadcast %cst_278 : f32 to vector<8x128xf32>
    %523 = arith.mulf %522, %521 : vector<8x128xf32>
    %cst_279 = arith.constant 5.000000e-01 : f32
    %524 = vector.broadcast %cst_279 : f32 to vector<8x128xf32>
    %525 = arith.addf %523, %524 : vector<8x128xf32>
    %526 = vector.extract_strided_slice %519 {offsets = [0, 128], sizes = [8, 128], strides = [1, 1]} : vector<8x512xf32> to vector<8x128xf32>
    %527 = math.tanh %526 : vector<8x128xf32>
    %cst_280 = arith.constant 5.000000e-01 : f32
    %528 = vector.broadcast %cst_280 : f32 to vector<8x128xf32>
    %529 = arith.mulf %528, %527 : vector<8x128xf32>
    %cst_281 = arith.constant 5.000000e-01 : f32
    %530 = vector.broadcast %cst_281 : f32 to vector<8x128xf32>
    %531 = arith.addf %529, %530 : vector<8x128xf32>
    %532 = vector.extract_strided_slice %519 {offsets = [0, 256], sizes = [8, 128], strides = [1, 1]} : vector<8x512xf32> to vector<8x128xf32>
    %533 = math.tanh %532 : vector<8x128xf32>
    %534 = vector.extract_strided_slice %519 {offsets = [0, 384], sizes = [8, 128], strides = [1, 1]} : vector<8x512xf32> to vector<8x128xf32>
    %535 = math.tanh %534 : vector<8x128xf32>
    %cst_282 = arith.constant 5.000000e-01 : f32
    %536 = vector.broadcast %cst_282 : f32 to vector<8x128xf32>
    %537 = arith.mulf %536, %535 : vector<8x128xf32>
    %cst_283 = arith.constant 5.000000e-01 : f32
    %538 = vector.broadcast %cst_283 : f32 to vector<8x128xf32>
    %539 = arith.addf %537, %538 : vector<8x128xf32>
    %540 = arith.mulf %531, %513 : vector<8x128xf32>
    %541 = arith.mulf %525, %533 : vector<8x128xf32>
    %542 = arith.addf %540, %541 : vector<8x128xf32>
    %543 = math.tanh %542 : vector<8x128xf32>
    %544 = arith.mulf %539, %543 : vector<8x128xf32>
    %c0_284 = arith.constant 0 : index
    %c0_285 = arith.constant 0 : index
    %545 = vector.load %arg9[%c0_284, %c0_285] : memref<8x128xf32, #tpu.memory_space<vmem>>, vector<8x128xf32>
    tpu.vector_store %arg9[%c0_284, %c0_285], %544 {strides = array<i32>} : memref<8x128xf32, #tpu.memory_space<vmem>>, vector<8x128xf32>,
    %c0_286 = arith.constant 0 : index
    %c0_287 = arith.constant 0 : index
    %546 = vector.load %arg10[%c0_286, %c0_287] : memref<8x128xf32, #tpu.memory_space<vmem>>, vector<8x128xf32>
    tpu.vector_store %arg10[%c0_286, %c0_287], %542 {strides = array<i32>} : memref<8x128xf32, #tpu.memory_space<vmem>>, vector<8x128xf32>,
    %547 = arith.truncf %544 : vector<8x128xf32> to vector<8x128xbf16>
    %548 = arith.index_cast %c4_i32_270 : i32 to index
    %c0_288 = arith.constant 0 : index
    %c0_289 = arith.constant 0 : index
    %549 = vector.load %arg8[%548, %c0_288, %c0_289] : memref<8x8x128xbf16, #tpu.memory_space<vmem>>, vector<1x8x128xbf16>
    %550 = vector.shape_cast %549 : vector<1x8x128xbf16> to vector<8x128xbf16>
    %551 = vector.shape_cast %547 : vector<8x128xbf16> to vector<1x8x128xbf16>
    tpu.vector_store %arg8[%548, %c0_288, %c0_289], %551 {strides = array<i32>} : memref<8x8x128xbf16, #tpu.memory_space<vmem>>, vector<1x8x128xbf16>,
    %c5_i32_290 = arith.constant 5 : i32
    %c0_291 = arith.constant 0 : index
    %c0_292 = arith.constant 0 : index
    %552 = vector.load %arg9[%c0_291, %c0_292] : memref<8x128xf32, #tpu.memory_space<vmem>>, vector<8x128xf32>
    %c0_293 = arith.constant 0 : index
    %c0_294 = arith.constant 0 : index
    %553 = vector.load %arg10[%c0_293, %c0_294] : memref<8x128xf32, #tpu.memory_space<vmem>>, vector<8x128xf32>
    %554 = arith.index_cast %c5_i32_290 : i32 to index
    %c0_295 = arith.constant 0 : index
    %c0_296 = arith.constant 0 : index
    %555 = vector.load %arg7[%554, %c0_295, %c0_296] : memref<8x8x512xf32, #tpu.memory_space<vmem>>, vector<1x8x512xf32>
    %556 = vector.shape_cast %555 : vector<1x8x512xf32> to vector<8x512xf32>
    %557 = arith.truncf %552 : vector<8x128xf32> to vector<8x128xbf16>
    %cst_297 = arith.constant dense<0.000000e+00> : vector<8x512xf32>
    %558 = tpu.matmul %557, %335, %cst_297 {dimension_numbers = #tpu.dot_dimension_numbers<[1], [0], [0], [1], [0, 0, 1, 1], [], []>} : vector<8x128xbf16>, vector<128x512xbf16>, vector<8x512xf32> -> vector<8x512xf32>
    %559 = arith.addf %556, %558 : vector<8x512xf32>
    %560 = vector.extract_strided_slice %559 {offsets = [0, 0], sizes = [8, 128], strides = [1, 1]} : vector<8x512xf32> to vector<8x128xf32>
    %561 = math.tanh %560 : vector<8x128xf32>
    %cst_298 = arith.constant 5.000000e-01 : f32
    %562 = vector.broadcast %cst_298 : f32 to vector<8x128xf32>
    %563 = arith.mulf %562, %561 : vector<8x128xf32>
    %cst_299 = arith.constant 5.000000e-01 : f32
    %564 = vector.broadcast %cst_299 : f32 to vector<8x128xf32>
    %565 = arith.addf %563, %564 : vector<8x128xf32>
    %566 = vector.extract_strided_slice %559 {offsets = [0, 128], sizes = [8, 128], strides = [1, 1]} : vector<8x512xf32> to vector<8x128xf32>
    %567 = math.tanh %566 : vector<8x128xf32>
    %cst_300 = arith.constant 5.000000e-01 : f32
    %568 = vector.broadcast %cst_300 : f32 to vector<8x128xf32>
    %569 = arith.mulf %568, %567 : vector<8x128xf32>
    %cst_301 = arith.constant 5.000000e-01 : f32
    %570 = vector.broadcast %cst_301 : f32 to vector<8x128xf32>
    %571 = arith.addf %569, %570 : vector<8x128xf32>
    %572 = vector.extract_strided_slice %559 {offsets = [0, 256], sizes = [8, 128], strides = [1, 1]} : vector<8x512xf32> to vector<8x128xf32>
    %573 = math.tanh %572 : vector<8x128xf32>
    %574 = vector.extract_strided_slice %559 {offsets = [0, 384], sizes = [8, 128], strides = [1, 1]} : vector<8x512xf32> to vector<8x128xf32>
    %575 = math.tanh %574 : vector<8x128xf32>
    %cst_302 = arith.constant 5.000000e-01 : f32
    %576 = vector.broadcast %cst_302 : f32 to vector<8x128xf32>
    %577 = arith.mulf %576, %575 : vector<8x128xf32>
    %cst_303 = arith.constant 5.000000e-01 : f32
    %578 = vector.broadcast %cst_303 : f32 to vector<8x128xf32>
    %579 = arith.addf %577, %578 : vector<8x128xf32>
    %580 = arith.mulf %571, %553 : vector<8x128xf32>
    %581 = arith.mulf %565, %573 : vector<8x128xf32>
    %582 = arith.addf %580, %581 : vector<8x128xf32>
    %583 = math.tanh %582 : vector<8x128xf32>
    %584 = arith.mulf %579, %583 : vector<8x128xf32>
    %c0_304 = arith.constant 0 : index
    %c0_305 = arith.constant 0 : index
    %585 = vector.load %arg9[%c0_304, %c0_305] : memref<8x128xf32, #tpu.memory_space<vmem>>, vector<8x128xf32>
    tpu.vector_store %arg9[%c0_304, %c0_305], %584 {strides = array<i32>} : memref<8x128xf32, #tpu.memory_space<vmem>>, vector<8x128xf32>,
    %c0_306 = arith.constant 0 : index
    %c0_307 = arith.constant 0 : index
    %586 = vector.load %arg10[%c0_306, %c0_307] : memref<8x128xf32, #tpu.memory_space<vmem>>, vector<8x128xf32>
    tpu.vector_store %arg10[%c0_306, %c0_307], %582 {strides = array<i32>} : memref<8x128xf32, #tpu.memory_space<vmem>>, vector<8x128xf32>,
    %587 = arith.truncf %584 : vector<8x128xf32> to vector<8x128xbf16>
    %588 = arith.index_cast %c5_i32_290 : i32 to index
    %c0_308 = arith.constant 0 : index
    %c0_309 = arith.constant 0 : index
    %589 = vector.load %arg8[%588, %c0_308, %c0_309] : memref<8x8x128xbf16, #tpu.memory_space<vmem>>, vector<1x8x128xbf16>
    %590 = vector.shape_cast %589 : vector<1x8x128xbf16> to vector<8x128xbf16>
    %591 = vector.shape_cast %587 : vector<8x128xbf16> to vector<1x8x128xbf16>
    tpu.vector_store %arg8[%588, %c0_308, %c0_309], %591 {strides = array<i32>} : memref<8x8x128xbf16, #tpu.memory_space<vmem>>, vector<1x8x128xbf16>,
    %c6_i32_310 = arith.constant 6 : i32
    %c0_311 = arith.constant 0 : index
    %c0_312 = arith.constant 0 : index
    %592 = vector.load %arg9[%c0_311, %c0_312] : memref<8x128xf32, #tpu.memory_space<vmem>>, vector<8x128xf32>
    %c0_313 = arith.constant 0 : index
    %c0_314 = arith.constant 0 : index
    %593 = vector.load %arg10[%c0_313, %c0_314] : memref<8x128xf32, #tpu.memory_space<vmem>>, vector<8x128xf32>
    %594 = arith.index_cast %c6_i32_310 : i32 to index
    %c0_315 = arith.constant 0 : index
    %c0_316 = arith.constant 0 : index
    %595 = vector.load %arg7[%594, %c0_315, %c0_316] : memref<8x8x512xf32, #tpu.memory_space<vmem>>, vector<1x8x512xf32>
    %596 = vector.shape_cast %595 : vector<1x8x512xf32> to vector<8x512xf32>
    %597 = arith.truncf %592 : vector<8x128xf32> to vector<8x128xbf16>
    %cst_317 = arith.constant dense<0.000000e+00> : vector<8x512xf32>
    %598 = tpu.matmul %597, %335, %cst_317 {dimension_numbers = #tpu.dot_dimension_numbers<[1], [0], [0], [1], [0, 0, 1, 1], [], []>} : vector<8x128xbf16>, vector<128x512xbf16>, vector<8x512xf32> -> vector<8x512xf32>
    %599 = arith.addf %596, %598 : vector<8x512xf32>
    %600 = vector.extract_strided_slice %599 {offsets = [0, 0], sizes = [8, 128], strides = [1, 1]} : vector<8x512xf32> to vector<8x128xf32>
    %601 = math.tanh %600 : vector<8x128xf32>
    %cst_318 = arith.constant 5.000000e-01 : f32
    %602 = vector.broadcast %cst_318 : f32 to vector<8x128xf32>
    %603 = arith.mulf %602, %601 : vector<8x128xf32>
    %cst_319 = arith.constant 5.000000e-01 : f32
    %604 = vector.broadcast %cst_319 : f32 to vector<8x128xf32>
    %605 = arith.addf %603, %604 : vector<8x128xf32>
    %606 = vector.extract_strided_slice %599 {offsets = [0, 128], sizes = [8, 128], strides = [1, 1]} : vector<8x512xf32> to vector<8x128xf32>
    %607 = math.tanh %606 : vector<8x128xf32>
    %cst_320 = arith.constant 5.000000e-01 : f32
    %608 = vector.broadcast %cst_320 : f32 to vector<8x128xf32>
    %609 = arith.mulf %608, %607 : vector<8x128xf32>
    %cst_321 = arith.constant 5.000000e-01 : f32
    %610 = vector.broadcast %cst_321 : f32 to vector<8x128xf32>
    %611 = arith.addf %609, %610 : vector<8x128xf32>
    %612 = vector.extract_strided_slice %599 {offsets = [0, 256], sizes = [8, 128], strides = [1, 1]} : vector<8x512xf32> to vector<8x128xf32>
    %613 = math.tanh %612 : vector<8x128xf32>
    %614 = vector.extract_strided_slice %599 {offsets = [0, 384], sizes = [8, 128], strides = [1, 1]} : vector<8x512xf32> to vector<8x128xf32>
    %615 = math.tanh %614 : vector<8x128xf32>
    %cst_322 = arith.constant 5.000000e-01 : f32
    %616 = vector.broadcast %cst_322 : f32 to vector<8x128xf32>
    %617 = arith.mulf %616, %615 : vector<8x128xf32>
    %cst_323 = arith.constant 5.000000e-01 : f32
    %618 = vector.broadcast %cst_323 : f32 to vector<8x128xf32>
    %619 = arith.addf %617, %618 : vector<8x128xf32>
    %620 = arith.mulf %611, %593 : vector<8x128xf32>
    %621 = arith.mulf %605, %613 : vector<8x128xf32>
    %622 = arith.addf %620, %621 : vector<8x128xf32>
    %623 = math.tanh %622 : vector<8x128xf32>
    %624 = arith.mulf %619, %623 : vector<8x128xf32>
    %c0_324 = arith.constant 0 : index
    %c0_325 = arith.constant 0 : index
    %625 = vector.load %arg9[%c0_324, %c0_325] : memref<8x128xf32, #tpu.memory_space<vmem>>, vector<8x128xf32>
    tpu.vector_store %arg9[%c0_324, %c0_325], %624 {strides = array<i32>} : memref<8x128xf32, #tpu.memory_space<vmem>>, vector<8x128xf32>,
    %c0_326 = arith.constant 0 : index
    %c0_327 = arith.constant 0 : index
    %626 = vector.load %arg10[%c0_326, %c0_327] : memref<8x128xf32, #tpu.memory_space<vmem>>, vector<8x128xf32>
    tpu.vector_store %arg10[%c0_326, %c0_327], %622 {strides = array<i32>} : memref<8x128xf32, #tpu.memory_space<vmem>>, vector<8x128xf32>,
    %627 = arith.truncf %624 : vector<8x128xf32> to vector<8x128xbf16>
    %628 = arith.index_cast %c6_i32_310 : i32 to index
    %c0_328 = arith.constant 0 : index
    %c0_329 = arith.constant 0 : index
    %629 = vector.load %arg8[%628, %c0_328, %c0_329] : memref<8x8x128xbf16, #tpu.memory_space<vmem>>, vector<1x8x128xbf16>
    %630 = vector.shape_cast %629 : vector<1x8x128xbf16> to vector<8x128xbf16>
    %631 = vector.shape_cast %627 : vector<8x128xbf16> to vector<1x8x128xbf16>
    tpu.vector_store %arg8[%628, %c0_328, %c0_329], %631 {strides = array<i32>} : memref<8x8x128xbf16, #tpu.memory_space<vmem>>, vector<1x8x128xbf16>,
    %c7_i32_330 = arith.constant 7 : i32
    %c0_331 = arith.constant 0 : index
    %c0_332 = arith.constant 0 : index
    %632 = vector.load %arg9[%c0_331, %c0_332] : memref<8x128xf32, #tpu.memory_space<vmem>>, vector<8x128xf32>
    %c0_333 = arith.constant 0 : index
    %c0_334 = arith.constant 0 : index
    %633 = vector.load %arg10[%c0_333, %c0_334] : memref<8x128xf32, #tpu.memory_space<vmem>>, vector<8x128xf32>
    %634 = arith.index_cast %c7_i32_330 : i32 to index
    %c0_335 = arith.constant 0 : index
    %c0_336 = arith.constant 0 : index
    %635 = vector.load %arg7[%634, %c0_335, %c0_336] : memref<8x8x512xf32, #tpu.memory_space<vmem>>, vector<1x8x512xf32>
    %636 = vector.shape_cast %635 : vector<1x8x512xf32> to vector<8x512xf32>
    %637 = arith.truncf %632 : vector<8x128xf32> to vector<8x128xbf16>
    %cst_337 = arith.constant dense<0.000000e+00> : vector<8x512xf32>
    %638 = tpu.matmul %637, %335, %cst_337 {dimension_numbers = #tpu.dot_dimension_numbers<[1], [0], [0], [1], [0, 0, 1, 1], [], []>} : vector<8x128xbf16>, vector<128x512xbf16>, vector<8x512xf32> -> vector<8x512xf32>
    %639 = arith.addf %636, %638 : vector<8x512xf32>
    %640 = vector.extract_strided_slice %639 {offsets = [0, 0], sizes = [8, 128], strides = [1, 1]} : vector<8x512xf32> to vector<8x128xf32>
    %641 = math.tanh %640 : vector<8x128xf32>
    %cst_338 = arith.constant 5.000000e-01 : f32
    %642 = vector.broadcast %cst_338 : f32 to vector<8x128xf32>
    %643 = arith.mulf %642, %641 : vector<8x128xf32>
    %cst_339 = arith.constant 5.000000e-01 : f32
    %644 = vector.broadcast %cst_339 : f32 to vector<8x128xf32>
    %645 = arith.addf %643, %644 : vector<8x128xf32>
    %646 = vector.extract_strided_slice %639 {offsets = [0, 128], sizes = [8, 128], strides = [1, 1]} : vector<8x512xf32> to vector<8x128xf32>
    %647 = math.tanh %646 : vector<8x128xf32>
    %cst_340 = arith.constant 5.000000e-01 : f32
    %648 = vector.broadcast %cst_340 : f32 to vector<8x128xf32>
    %649 = arith.mulf %648, %647 : vector<8x128xf32>
    %cst_341 = arith.constant 5.000000e-01 : f32
    %650 = vector.broadcast %cst_341 : f32 to vector<8x128xf32>
    %651 = arith.addf %649, %650 : vector<8x128xf32>
    %652 = vector.extract_strided_slice %639 {offsets = [0, 256], sizes = [8, 128], strides = [1, 1]} : vector<8x512xf32> to vector<8x128xf32>
    %653 = math.tanh %652 : vector<8x128xf32>
    %654 = vector.extract_strided_slice %639 {offsets = [0, 384], sizes = [8, 128], strides = [1, 1]} : vector<8x512xf32> to vector<8x128xf32>
    %655 = math.tanh %654 : vector<8x128xf32>
    %cst_342 = arith.constant 5.000000e-01 : f32
    %656 = vector.broadcast %cst_342 : f32 to vector<8x128xf32>
    %657 = arith.mulf %656, %655 : vector<8x128xf32>
    %cst_343 = arith.constant 5.000000e-01 : f32
    %658 = vector.broadcast %cst_343 : f32 to vector<8x128xf32>
    %659 = arith.addf %657, %658 : vector<8x128xf32>
    %660 = arith.mulf %651, %633 : vector<8x128xf32>
    %661 = arith.mulf %645, %653 : vector<8x128xf32>
    %662 = arith.addf %660, %661 : vector<8x128xf32>
    %663 = math.tanh %662 : vector<8x128xf32>
    %664 = arith.mulf %659, %663 : vector<8x128xf32>
    %c0_344 = arith.constant 0 : index
    %c0_345 = arith.constant 0 : index
    %665 = vector.load %arg9[%c0_344, %c0_345] : memref<8x128xf32, #tpu.memory_space<vmem>>, vector<8x128xf32>
    tpu.vector_store %arg9[%c0_344, %c0_345], %664 {strides = array<i32>} : memref<8x128xf32, #tpu.memory_space<vmem>>, vector<8x128xf32>,
    %c0_346 = arith.constant 0 : index
    %c0_347 = arith.constant 0 : index
    %666 = vector.load %arg10[%c0_346, %c0_347] : memref<8x128xf32, #tpu.memory_space<vmem>>, vector<8x128xf32>
    tpu.vector_store %arg10[%c0_346, %c0_347], %662 {strides = array<i32>} : memref<8x128xf32, #tpu.memory_space<vmem>>, vector<8x128xf32>,
    %667 = arith.truncf %664 : vector<8x128xf32> to vector<8x128xbf16>
    %668 = arith.index_cast %c7_i32_330 : i32 to index
    %c0_348 = arith.constant 0 : index
    %c0_349 = arith.constant 0 : index
    %669 = vector.load %arg8[%668, %c0_348, %c0_349] : memref<8x8x128xbf16, #tpu.memory_space<vmem>>, vector<1x8x128xbf16>
    %670 = vector.shape_cast %669 : vector<1x8x128xbf16> to vector<8x128xbf16>
    %671 = vector.shape_cast %667 : vector<8x128xbf16> to vector<1x8x128xbf16>
    tpu.vector_store %arg8[%668, %c0_348, %c0_349], %671 {strides = array<i32>} : memref<8x8x128xbf16, #tpu.memory_space<vmem>>, vector<1x8x128xbf16>,
    %c8_i32_350 = arith.constant 8 : i32
    %c0_351 = arith.constant 0 : index
    %c0_352 = arith.constant 0 : index
    %672 = vector.load %arg9[%c0_351, %c0_352] : memref<8x128xf32, #tpu.memory_space<vmem>>, vector<8x128xf32>
    %c1_353 = arith.constant 1 : index
    %c0_354 = arith.constant 0 : index
    %c0_355 = arith.constant 0 : index
    %673 = vector.load %arg5[%c1_353, %c0_354, %c0_355] : memref<2x8x128xf32, #tpu.memory_space<vmem>>, vector<1x8x128xf32>
    %674 = vector.shape_cast %673 : vector<1x8x128xf32> to vector<8x128xf32>
    %675 = vector.shape_cast %672 : vector<8x128xf32> to vector<1x8x128xf32>
    tpu.vector_store %arg5[%c1_353, %c0_354, %c0_355], %675 {strides = array<i32>} : memref<2x8x128xf32, #tpu.memory_space<vmem>>, vector<1x8x128xf32>,
    %c0_356 = arith.constant 0 : index
    %c0_357 = arith.constant 0 : index
    %676 = vector.load %arg10[%c0_356, %c0_357] : memref<8x128xf32, #tpu.memory_space<vmem>>, vector<8x128xf32>
    %c1_358 = arith.constant 1 : index
    %c0_359 = arith.constant 0 : index
    %c0_360 = arith.constant 0 : index
    %677 = vector.load %arg6[%c1_358, %c0_359, %c0_360] : memref<2x8x128xf32, #tpu.memory_space<vmem>>, vector<1x8x128xf32>
    %678 = vector.shape_cast %677 : vector<1x8x128xf32> to vector<8x128xf32>
    %679 = vector.shape_cast %676 : vector<8x128xf32> to vector<1x8x128xf32>
    tpu.vector_store %arg6[%c1_358, %c0_359, %c0_360], %679 {strides = array<i32>} : memref<2x8x128xf32, #tpu.memory_space<vmem>>, vector<1x8x128xf32>,
    return
  }
  func.func @transform_0(%arg0: i32) -> (i32, i32, i32) {
    %c0_i32 = arith.constant 0 : i32
    %c0_i32_0 = arith.constant 0 : i32
    %c0_i32_1 = arith.constant 0 : i32
    return %c0_i32, %arg0, %c0_i32_0 : i32, i32, i32
  }
  func.func @transform_1(%arg0: i32) -> (i32, i32, i32) {
    %c0_i32 = arith.constant 0 : i32
    %c0_i32_0 = arith.constant 0 : i32
    %c0_i32_1 = arith.constant 0 : i32
    %c0_i32_2 = arith.constant 0 : i32
    return %c0_i32, %c0_i32_0, %c0_i32_1 : i32, i32, i32
  }
  func.func @transform_2(%arg0: i32) -> (i32, i32, i32) {
    %c0_i32 = arith.constant 0 : i32
    %c0_i32_0 = arith.constant 0 : i32
    %c0_i32_1 = arith.constant 0 : i32
    %c0_i32_2 = arith.constant 0 : i32
    return %c0_i32, %c0_i32_0, %c0_i32_1 : i32, i32, i32
  }
  func.func @transform_3(%arg0: i32) -> (i32, i32, i32) {
    %c0_i32 = arith.constant 0 : i32
    %c0_i32_0 = arith.constant 0 : i32
    %c0_i32_1 = arith.constant 0 : i32
    %c0_i32_2 = arith.constant 0 : i32
    return %c0_i32, %c0_i32_0, %c0_i32_1 : i32, i32, i32
  }
  func.func @transform_4(%arg0: i32) -> (i32, i32, i32) {
    %c0_i32 = arith.constant 0 : i32
    %c0_i32_0 = arith.constant 0 : i32
    %c0_i32_1 = arith.constant 0 : i32
    return %c0_i32, %arg0, %c0_i32_0 : i32, i32, i32
  }
  func.func @transform_5(%arg0: i32) -> (i32, i32, i32) {
    %c0_i32 = arith.constant 0 : i32
    %c0_i32_0 = arith.constant 0 : i32
    %c0_i32_1 = arith.constant 0 : i32
    return %c0_i32, %arg0, %c0_i32_0 : i32, i32, i32
  }
}

</mosaic_0001>

<llo_original>
// kernel: tpu_custom_call.1
$region0: #{tpu_custom_call.1}
  #allocation0 [shape = 'u32[]', space=smem, size = 0x4, offset = 0x4, fixed_abs, tag = 'smem constant byte address 0x4 - core index']
  #allocation1 [shape = 'u32[144,128]{1,0:T(1,128)}', space=vmem, size = 0x12000, scoped, tag = 'internal scratch']
  #allocation2 [shape = 'f32[8,8,512]{2,1,0:T(8,128)}', space=vmem, size = 0x20000, scoped, tag = 'scratch operand']
  #allocation3 [shape = 'bf16[8,8,128]{2,1,0:T(8,128)(2,1)}', space=vmem, size = 0x4000, scoped, tag = 'scratch operand']
  #allocation4 [shape = 'f32[8,128]{1,0:T(8,128)}', space=vmem, size = 0x1000, scoped, tag = 'scratch operand']
  #allocation5 [shape = 'f32[8,128]{1,0:T(8,128)}', space=vmem, size = 0x1000, scoped, tag = 'scratch operand']
  %s0 = inlined_call_operand.hbm [shape: f32[8,8,512], index: 0, kind: input, shape index: {}]
  %s1 = inlined_call_operand.hbm [shape: bf16[1,128,512], index: 1, kind: input, shape index: {}]
  %s2 = inlined_call_operand.hbm [shape: bf16[2,128,512], index: 2, kind: input, shape index: {}]
  %s3 = inlined_call_operand.vmem [shape: f32[2,1,512], index: 3, kind: input, shape index: {}]
  %s4 = inlined_call_operand.hbm [shape: f32[2,8,128], index: 4, kind: output, shape index: {0}]
  %s5 = inlined_call_operand.hbm [shape: f32[2,8,128], index: 5, kind: output, shape index: {1}]
  %6 = xla_tuple %s4, %s5
  %s7 = sld [smem:[#allocation0]]
  $region46: #{tpu_custom_call.1} parent=0
    _
  %s9 = ssub.s32 1, %s7
  %s10 = scalar_select 0, %s9, %s7
  $region1: #{tpu_custom_call.1} parent=0
    #allocation6 [shape = 'u8[131072]{0}', space=vmem, size = 0x20000, scoped, tag = 'input window, operand 0, single buffered']
    #allocation7 [shape = 's32[1]{0}', space=sflag, size = 0x4, scoped, tag = 'scoped memory for tpu_custom_call.1']
    #allocation8 [shape = 's32[1]{0}', space=sflag, size = 0x4, scoped, tag = 'scoped memory for tpu_custom_call.1']
    #allocation9 [shape = 'u8[131072]{0}', space=vmem, size = 0x20000, scoped, tag = 'input window, operand 1, single buffered']
    #allocation10 [shape = 's32[1]{0}', space=sflag, size = 0x4, scoped, tag = 'scoped memory for tpu_custom_call.1']
    #allocation11 [shape = 'u8[262144]{0}', space=vmem, size = 0x40000, scoped, tag = 'input window, operand 2, single buffered']
    #allocation12 [shape = 'u8[8192]{0}', space=vmem, size = 0x2000, scoped, tag = 'output window, operand 0, single buffered']
    #allocation13 [shape = 'u8[8192]{0}', space=vmem, size = 0x2000, scoped, tag = 'output window, operand 1, single buffered']
    #allocation14 [shape = 's32[1]{0}', space=sflag, size = 0x4, scoped, tag = 'scoped memory for tpu_custom_call.1']
    %11 = vsyncpa [#allocation7], 0
    %12 = vsyncpa [#allocation10], 0
    %13 = vsyncpa [#allocation8], 0
    %14 = vsyncpa [#allocation14], 0
    // Predicated region
    $region2: #{tpu_custom_call.1} parent=1 // pred_check
      _
    $region3: #{tpu_custom_call.1} parent=1 // pred_check_branch
      %16 = sbr.rel (0) target = $region5
    $region4: #{tpu_custom_call.1} parent=1 // pred_region
      %s18 = ssub.s32 4096, 4096
      %19 = vsyncadd [#allocation7], %s18
      %s20 = sshll.u32 [#allocation6], 4
      %s21 = int_to_ptr.vmem [resolvable:$true] %s20
      %26 = dma.hbm_to_vmem [thread:$0]  %s0, 4096, %s21, [#allocation7], 512, 512, 32
    $region5: #{tpu_custom_call.1} parent=1 // pred_fallthru
      _
    // Predicated region
    $region6: #{tpu_custom_call.1} parent=1 // pred_check
      _
    $region7: #{tpu_custom_call.1} parent=1 // pred_check_branch
      %28 = sbr.rel (0) target = $region9
    $region8: #{tpu_custom_call.1} parent=1 // pred_region
      %s30 = ssub.s32 4096, 4096
      %31 = vsyncadd [#allocation10], %s30
      %s32 = sshll.u32 [#allocation9], 4
      %s33 = int_to_ptr.vmem [resolvable:$true] %s32
      %38 = dma.hbm_to_vmem [thread:$0]  %s1, 4096, %s33, [#allocation10], 256, 256, 16
    $region9: #{tpu_custom_call.1} parent=1 // pred_fallthru
      _
    // Predicated region
    $region10: #{tpu_custom_call.1} parent=1 // pred_check
      _
    $region11: #{tpu_custom_call.1} parent=1 // pred_check_branch
      %40 = sbr.rel (0) target = $region13
    $region12: #{tpu_custom_call.1} parent=1 // pred_region
      %s42 = ssub.s32 8192, 8192
      %43 = vsyncadd [#allocation10], %s42
      %s44 = sshll.u32 [#allocation11], 4
      %s45 = int_to_ptr.vmem [resolvable:$true] %s44
      %50 = dma.hbm_to_vmem [thread:$0]  %s2, 8192, %s45, [#allocation10], 256, 256, 16
    $region13: #{tpu_custom_call.1} parent=1 // pred_fallthru
      _
    // Predicated region
    $region14: #{tpu_custom_call.1} parent=1 // pred_check
      _
    $region15: #{tpu_custom_call.1} parent=1 // pred_check_branch
      %52 = sbr.rel (0) target = $region17
    $region16: #{tpu_custom_call.1} parent=1 // pred_region
      _
    $region17: #{tpu_custom_call.1} parent=1 // pred_fallthru
      _
    // Predicated region
    $region18: #{tpu_custom_call.1} parent=1 // pred_check
      _
    $region19: #{tpu_custom_call.1} parent=1 // pred_check_branch
      %54 = sbr.rel (0) target = $region21
    $region20: #{tpu_custom_call.1} parent=1 // pred_region
      %55 = dma.done [#allocation7], 4096
    $region21: #{tpu_custom_call.1} parent=1 // pred_fallthru
      _
    // Predicated region
    $region22: #{tpu_custom_call.1} parent=1 // pred_check
      _
    $region23: #{tpu_custom_call.1} parent=1 // pred_check_branch
      %57 = sbr.rel (0) target = $region25
    $region24: #{tpu_custom_call.1} parent=1 // pred_region
      %58 = dma.done [#allocation10], 4096
    $region25: #{tpu_custom_call.1} parent=1 // pred_fallthru
      _
    // Predicated region
    $region26: #{tpu_custom_call.1} parent=1 // pred_check
      _
    $region27: #{tpu_custom_call.1} parent=1 // pred_check_branch
      %60 = sbr.rel (0) target = $region29
    $region28: #{tpu_custom_call.1} parent=1 // pred_region
      %61 = dma.done [#allocation10], 8192
    $region29: #{tpu_custom_call.1} parent=1 // pred_fallthru
      _
    %v63 = vld [vmem:[#allocation11] sm:$0xff]
    %v64 = vld [vmem:[#allocation11 + $0x8] sm:$0xff]
    %v65 = vld [vmem:[#allocation11 + $0x10] sm:$0xff]
    %v66 = vld [vmem:[#allocation11 + $0x18] sm:$0xff]
    %v67 = vld [vmem:[#allocation11 + $0x20] sm:$0xff]
    %v68 = vld [vmem:[#allocation11 + $0x28] sm:$0xff]
    %v69 = vld [vmem:[#allocation11 + $0x30] sm:$0xff]
    %v70 = vld [vmem:[#allocation11 + $0x38] sm:$0xff]
    %v71 = vld [vmem:[#allocation11 + $0x40] sm:$0xff]
    %v72 = vld [vmem:[#allocation11 + $0x48] sm:$0xff]
    %v73 = vld [vmem:[#allocation11 + $0x50] sm:$0xff]
    %v74 = vld [vmem:[#allocation11 + $0x58] sm:$0xff]
    %v75 = vld [vmem:[#allocation11 + $0x60] sm:$0xff]
    %v76 = vld [vmem:[#allocation11 + $0x68] sm:$0xff]
    %v77 = vld [vmem:[#allocation11 + $0x70] sm:$0xff]
    %v78 = vld [vmem:[#allocation11 + $0x78] sm:$0xff]
    %v79 = vld [vmem:[#allocation11 + $0x80] sm:$0xff]
    %v80 = vld [vmem:[#allocation11 + $0x88] sm:$0xff]
    %v81 = vld [vmem:[#allocation11 + $0x90] sm:$0xff]
    %v82 = vld [vmem:[#allocation11 + $0x98] sm:$0xff]
    %v83 = vld [vmem:[#allocation11 + $0xa0] sm:$0xff]
    %v84 = vld [vmem:[#allocation11 + $0xa8] sm:$0xff]
    %v85 = vld [vmem:[#allocation11 + $0xb0] sm:$0xff]
    %v86 = vld [vmem:[#allocation11 + $0xb8] sm:$0xff]
    %v87 = vld [vmem:[#allocation11 + $0xc0] sm:$0xff]
    %v88 = vld [vmem:[#allocation11 + $0xc8] sm:$0xff]
    %v89 = vld [vmem:[#allocation11 + $0xd0] sm:$0xff]
    %v90 = vld [vmem:[#allocation11 + $0xd8] sm:$0xff]
    %v91 = vld [vmem:[#allocation11 + $0xe0] sm:$0xff]
    %v92 = vld [vmem:[#allocation11 + $0xe8] sm:$0xff]
    %v93 = vld [vmem:[#allocation11 + $0xf0] sm:$0xff]
    %v94 = vld [vmem:[#allocation11 + $0xf8] sm:$0xff]
    %95 = vst [vmem:[#allocation4] sm:$0xff] 0.0
    %96 = vst [vmem:[#allocation5] sm:$0xff] 0.0
    %v97 = vld [vmem:[#allocation4] sm:$0xff]
    %v98 = vld [vmem:[#allocation5] sm:$0xff]
    %v99 = vld [vmem:[#allocation6] sm:$0xff]
    %v100 = vld [vmem:[#allocation6 + $0x8] sm:$0xff]
    %v101 = vld [vmem:[#allocation6 + $0x10] sm:$0xff]
    %v102 = vld [vmem:[#allocation6 + $0x18] sm:$0xff]
    %v103 = vpack.c.bf16 %v97, %v97
    %v136 = vunpack.c.l.b16 %v63
    %v137 = vunpack.c.h.b16 %v63
    %v138 = vunpack.c.l.b16 %v64
    %v139 = vunpack.c.h.b16 %v64
    %v140 = vunpack.c.l.b16 %v65
    %v141 = vunpack.c.h.b16 %v65
    %v142 = vunpack.c.l.b16 %v66
    %v143 = vunpack.c.h.b16 %v66
    %v144 = vunpack.c.l.b16 %v67
    %v145 = vunpack.c.h.b16 %v67
    %v146 = vunpack.c.l.b16 %v68
    %v147 = vunpack.c.h.b16 %v68
    %v148 = vunpack.c.l.b16 %v69
    %v149 = vunpack.c.h.b16 %v69
    %v150 = vunpack.c.l.b16 %v70
    %v151 = vunpack.c.h.b16 %v70
    %v152 = vunpack.c.l.b16 %v71
    %v153 = vunpack.c.h.b16 %v71
    %v154 = vunpack.c.l.b16 %v72
    %v155 = vunpack.c.h.b16 %v72
    %v156 = vunpack.c.l.b16 %v73
    %v157 = vunpack.c.h.b16 %v73
    %v158 = vunpack.c.l.b16 %v74
    %v159 = vunpack.c.h.b16 %v74
    %v160 = vunpack.c.l.b16 %v75
    %v161 = vunpack.c.h.b16 %v75
    %v162 = vunpack.c.l.b16 %v76
    %v163 = vunpack.c.h.b16 %v76
    %v164 = vunpack.c.l.b16 %v77
    %v165 = vunpack.c.h.b16 %v77
    %v166 = vunpack.c.l.b16 %v78
    %v167 = vunpack.c.h.b16 %v78
    %v168 = vunpack.c.l.b16 %v79
    %v169 = vunpack.c.h.b16 %v79
    %v170 = vunpack.c.l.b16 %v80
    %v171 = vunpack.c.h.b16 %v80
    %v172 = vunpack.c.l.b16 %v81
    %v173 = vunpack.c.h.b16 %v81
    %v174 = vunpack.c.l.b16 %v82
    %v175 = vunpack.c.h.b16 %v82
    %v176 = vunpack.c.l.b16 %v83
    %v177 = vunpack.c.h.b16 %v83
    %v178 = vunpack.c.l.b16 %v84
    %v179 = vunpack.c.h.b16 %v84
    %v180 = vunpack.c.l.b16 %v85
    %v181 = vunpack.c.h.b16 %v85
    %v182 = vunpack.c.l.b16 %v86
    %v183 = vunpack.c.h.b16 %v86
    %v184 = vunpack.c.l.b16 %v87
    %v185 = vunpack.c.h.b16 %v87
    %v186 = vunpack.c.l.b16 %v88
    %v187 = vunpack.c.h.b16 %v88
    %v188 = vunpack.c.l.b16 %v89
    %v189 = vunpack.c.h.b16 %v89
    %v190 = vunpack.c.l.b16 %v90
    %v191 = vunpack.c.h.b16 %v90
    %v192 = vunpack.c.l.b16 %v91
    %v193 = vunpack.c.h.b16 %v91
    %v194 = vunpack.c.l.b16 %v92
    %v195 = vunpack.c.h.b16 %v92
    %v196 = vunpack.c.l.b16 %v93
    %v197 = vunpack.c.h.b16 %v93
    %v198 = vunpack.c.l.b16 %v94
    %v199 = vunpack.c.h.b16 %v94
    %v200 = vpack.c.b16 %v140, %v136
    %v201 = vpack.c.b16 %v141, %v137
    %v202 = vpack.c.b16 %v142, %v138
    %v203 = vpack.c.b16 %v143, %v139
    %v204 = vpack.c.b16 %v148, %v144
    %v205 = vpack.c.b16 %v149, %v145
    %v206 = vpack.c.b16 %v150, %v146
    %v207 = vpack.c.b16 %v151, %v147
    %v208 = vpack.c.b16 %v156, %v152
    %v209 = vpack.c.b16 %v157, %v153
    %v210 = vpack.c.b16 %v158, %v154
    %v211 = vpack.c.b16 %v159, %v155
    %v212 = vpack.c.b16 %v164, %v160
    %v213 = vpack.c.b16 %v165, %v161
    %v214 = vpack.c.b16 %v166, %v162
    %v215 = vpack.c.b16 %v167, %v163
    %v216 = vpack.c.b16 %v172, %v168
    %v217 = vpack.c.b16 %v173, %v169
    %v218 = vpack.c.b16 %v174, %v170
    %v219 = vpack.c.b16 %v175, %v171
    %v220 = vpack.c.b16 %v180, %v176
    %v221 = vpack.c.b16 %v181, %v177
    %v222 = vpack.c.b16 %v182, %v178
    %v223 = vpack.c.b16 %v183, %v179
    %v224 = vpack.c.b16 %v188, %v184
    %v225 = vpack.c.b16 %v189, %v185
    %v226 = vpack.c.b16 %v190, %v186
    %v227 = vpack.c.b16 %v191, %v187
    %v228 = vpack.c.b16 %v196, %v192
    %v229 = vpack.c.b16 %v197, %v193
    %v230 = vpack.c.b16 %v198, %v194
    %v231 = vpack.c.b16 %v199, %v195
    %264 = vmatprep.subr.bf16.mxu0 %v201
    %265 = vmatpush1.bf16.msra.mxu0 %v200
    %266 = vmatprep.subr.bf16.mxu0 %v205
    %267 = vmatpush1.bf16.msra.mxu0 %v204
    %268 = vmatprep.subr.bf16.mxu0 %v209
    %269 = vmatpush1.bf16.msra.mxu0 %v208
    %270 = vmatprep.subr.bf16.mxu0 %v213
    %271 = vmatpush1.bf16.msra.mxu0 %v212
    %272 = vmatprep.subr.bf16.mxu0 %v217
    %273 = vmatpush1.bf16.msra.mxu0 %v216
    %274 = vmatprep.subr.bf16.mxu0 %v221
    %275 = vmatpush1.bf16.msra.mxu0 %v220
    %276 = vmatprep.subr.bf16.mxu0 %v225
    %277 = vmatpush1.bf16.msra.mxu0 %v224
    %278 = vmatprep.subr.bf16.mxu0 %v229
    %279 = vmatpush1.bf16.msra.mxu0 %v228
    %280 = vmatprep.subr.bf16.mxu0 0
    %281 = vmatpush1.bf16.msra.mxu0 0
    %282 = vmatprep.subr.bf16.mxu0 0
    %283 = vmatpush1.bf16.msra.mxu0 0
    %284 = vmatprep.subr.bf16.mxu0 0
    %285 = vmatpush1.bf16.msra.mxu0 0
    %286 = vmatprep.subr.bf16.mxu0 0
    %287 = vmatpush1.bf16.msra.mxu0 0
    %288 = vmatprep.subr.bf16.mxu0 0
    %289 = vmatpush1.bf16.msra.mxu0 0
    %290 = vmatprep.subr.bf16.mxu0 0
    %291 = vmatpush1.bf16.msra.mxu0 0
    %292 = vmatprep.subr.bf16.mxu0 0
    %293 = vmatpush1.bf16.msra.mxu0 0
    %294 = vmatprep.subr.bf16.mxu0 0
    %295 = vmatpush1.bf16.msra.mxu0 0
    %296 = vmatprep.mubr.bf16.mxu0 0
    %297 = vmatmul.mubr.bf16.gmra.mrb[0].mxu0 %v103
    %v298 = vpop.f32.mrb[0].mxu0
    %v299 = vadd.f32 0.0, %v298
    %v300 = vpop.f32.mrb[0].mxu0
    %v301 = vadd.f32 0.0, %v300
    %v302 = vpop.f32.mrb[0].mxu0
    %v303 = vpop.f32.mrb[0].mxu0
    %304 = vdwg.mxu0
    %305 = vmatprep.subr.bf16.mxu0 %v203
    %306 = vmatpush1.bf16.msra.mxu0 %v202
    %307 = vmatprep.subr.bf16.mxu0 %v207
    %308 = vmatpush1.bf16.msra.mxu0 %v206
    %309 = vmatprep.subr.bf16.mxu0 %v211
    %310 = vmatpush1.bf16.msra.mxu0 %v210
    %311 = vmatprep.subr.bf16.mxu0 %v215
    %312 = vmatpush1.bf16.msra.mxu0 %v214
    %313 = vmatprep.subr.bf16.mxu0 %v219
    %314 = vmatpush1.bf16.msra.mxu0 %v218
    %315 = vmatprep.subr.bf16.mxu0 %v223
    %316 = vmatpush1.bf16.msra.mxu0 %v222
    %317 = vmatprep.subr.bf16.mxu0 %v227
    %318 = vmatpush1.bf16.msra.mxu0 %v226
    %319 = vmatprep.subr.bf16.mxu0 %v231
    %320 = vmatpush1.bf16.msra.mxu0 %v230
    %321 = vmatprep.subr.bf16.mxu0 0
    %322 = vmatpush1.bf16.msra.mxu0 0
    %323 = vmatprep.subr.bf16.mxu0 0
    %324 = vmatpush1.bf16.msra.mxu0 0
    %325 = vmatprep.subr.bf16.mxu0 0
    %326 = vmatpush1.bf16.msra.mxu0 0
    %327 = vmatprep.subr.bf16.mxu0 0
    %328 = vmatpush1.bf16.msra.mxu0 0
    %329 = vmatprep.subr.bf16.mxu0 0
    %330 = vmatpush1.bf16.msra.mxu0 0
    %331 = vmatprep.subr.bf16.mxu0 0
    %332 = vmatpush1.bf16.msra.mxu0 0
    %333 = vmatprep.subr.bf16.mxu0 0
    %334 = vmatpush1.bf16.msra.mxu0 0
    %335 = vmatprep.subr.bf16.mxu0 0
    %336 = vmatpush1.bf16.msra.mxu0 0
    %337 = vmatprep.mubr.bf16.mxu0 0
    %338 = vmatmul.mubr.bf16.gmra.mrb[0].mxu0 %v103
    %v339 = vpop.f32.mrb[0].mxu0
    %v340 = vadd.f32 0.0, %v339
    %v341 = vpop.f32.mrb[0].mxu0
    %v342 = vadd.f32 0.0, %v341
    %v343 = vpop.f32.mrb[0].mxu0
    %v344 = vpop.f32.mrb[0].mxu0
    %345 = vdwg.mxu0
    %v346 = vadd.f32 %v99, %v299
    %v347 = vadd.f32 %v100, %v301
    %v348 = vadd.f32 %v101, %v340
    %v349 = vadd.f32 %v102, %v342
    %v350 = vtanh.pop %v346
    %v351 = vmul.f32 %v350, 0.5
    %v352 = vadd.f32 %v351, 0.5
    %v353 = vtanh.pop %v347
    %v354 = vmul.f32 %v353, 0.5
    %v355 = vadd.f32 %v354, 0.5
    %v356 = vtanh.pop %v348
    %v357 = vtanh.pop %v349
    %v358 = vmul.f32 %v357, 0.5
    %v359 = vadd.f32 %v358, 0.5
    %v360 = vmul.f32 %v355, %v98
    %v361 = vmul.f32 %v352, %v356
    %v362 = vadd.f32 %v360, %v361
    %v363 = vtanh.pop %v362
    %v364 = vmul.f32 %v359, %v363
    %365 = vst [vmem:[#allocation4] sm:$0xff] %v364
    %366 = vst [vmem:[#allocation5] sm:$0xff] %v362
    %v367 = vpack.c.bf16 %v364, %v364
    %368 = vst [vmem:[#allocation3] sm:$0xf] %v367
    %v369 = vld [vmem:[#allocation4] sm:$0xff]
    %v370 = vld [vmem:[#allocation5] sm:$0xff]
    %s371 = scalar_lea.vmem [#allocation6], 32
    %v372 = vld [vmem:[%s371] sm:$0xff]
    %v373 = vld [vmem:[%s371 + $0x8] sm:$0xff]
    %v374 = vld [vmem:[%s371 + $0x10] sm:$0xff]
    %v375 = vld [vmem:[%s371 + $0x18] sm:$0xff]
    %v376 = vpack.c.bf16 %v369, %v369
    %377 = vmatprep.subr.bf16.mxu0 %v201
    %378 = vmatpush1.bf16.msra.mxu0 %v200
    %379 = vmatprep.subr.bf16.mxu0 %v205
    %380 = vmatpush1.bf16.msra.mxu0 %v204
    %381 = vmatprep.subr.bf16.mxu0 %v209
    %382 = vmatpush1.bf16.msra.mxu0 %v208
    %383 = vmatprep.subr.bf16.mxu0 %v213
    %384 = vmatpush1.bf16.msra.mxu0 %v212
    %385 = vmatprep.subr.bf16.mxu0 %v217
    %386 = vmatpush1.bf16.msra.mxu0 %v216
    %387 = vmatprep.subr.bf16.mxu0 %v221
    %388 = vmatpush1.bf16.msra.mxu0 %v220
    %389 = vmatprep.subr.bf16.mxu0 %v225
    %390 = vmatpush1.bf16.msra.mxu0 %v224
    %391 = vmatprep.subr.bf16.mxu0 %v229
    %392 = vmatpush1.bf16.msra.mxu0 %v228
    %393 = vmatprep.subr.bf16.mxu0 0
    %394 = vmatpush1.bf16.msra.mxu0 0
    %395 = vmatprep.subr.bf16.mxu0 0
    %396 = vmatpush1.bf16.msra.mxu0 0
    %397 = vmatprep.subr.bf16.mxu0 0
    %398 = vmatpush1.bf16.msra.mxu0 0
    %399 = vmatprep.subr.bf16.mxu0 0
    %400 = vmatpush1.bf16.msra.mxu0 0
    %401 = vmatprep.subr.bf16.mxu0 0
    %402 = vmatpush1.bf16.msra.mxu0 0
    %403 = vmatprep.subr.bf16.mxu0 0
    %404 = vmatpush1.bf16.msra.mxu0 0
    %405 = vmatprep.subr.bf16.mxu0 0
    %406 = vmatpush1.bf16.msra.mxu0 0
    %407 = vmatprep.subr.bf16.mxu0 0
    %408 = vmatpush1.bf16.msra.mxu0 0
    %409 = vmatprep.mubr.bf16.mxu0 0
    %410 = vmatmul.mubr.bf16.gmra.mrb[0].mxu0 %v376
    %v411 = vpop.f32.mrb[0].mxu0
    %v412 = vadd.f32 0.0, %v411
    %v413 = vpop.f32.mrb[0].mxu0
    %v414 = vadd.f32 0.0, %v413
    %v415 = vpop.f32.mrb[0].mxu0
    %v416 = vpop.f32.mrb[0].mxu0
    %417 = vdwg.mxu0
    %418 = vmatprep.subr.bf16.mxu0 %v203
    %419 = vmatpush1.bf16.msra.mxu0 %v202
    %420 = vmatprep.subr.bf16.mxu0 %v207
    %421 = vmatpush1.bf16.msra.mxu0 %v206
    %422 = vmatprep.subr.bf16.mxu0 %v211
    %423 = vmatpush1.bf16.msra.mxu0 %v210
    %424 = vmatprep.subr.bf16.mxu0 %v215
    %425 = vmatpush1.bf16.msra.mxu0 %v214
    %426 = vmatprep.subr.bf16.mxu0 %v219
    %427 = vmatpush1.bf16.msra.mxu0 %v218
    %428 = vmatprep.subr.bf16.mxu0 %v223
    %429 = vmatpush1.bf16.msra.mxu0 %v222
    %430 = vmatprep.subr.bf16.mxu0 %v227
    %431 = vmatpush1.bf16.msra.mxu0 %v226
    %432 = vmatprep.subr.bf16.mxu0 %v231
    %433 = vmatpush1.bf16.msra.mxu0 %v230
    %434 = vmatprep.subr.bf16.mxu0 0
    %435 = vmatpush1.bf16.msra.mxu0 0
    %436 = vmatprep.subr.bf16.mxu0 0
    %437 = vmatpush1.bf16.msra.mxu0 0
    %438 = vmatprep.subr.bf16.mxu0 0
    %439 = vmatpush1.bf16.msra.mxu0 0
    %440 = vmatprep.subr.bf16.mxu0 0
    %441 = vmatpush1.bf16.msra.mxu0 0
    %442 = vmatprep.subr.bf16.mxu0 0
    %443 = vmatpush1.bf16.msra.mxu0 0
    %444 = vmatprep.subr.bf16.mxu0 0
    %445 = vmatpush1.bf16.msra.mxu0 0
    %446 = vmatprep.subr.bf16.mxu0 0
    %447 = vmatpush1.bf16.msra.mxu0 0
    %448 = vmatprep.subr.bf16.mxu0 0
    %449 = vmatpush1.bf16.msra.mxu0 0
    %450 = vmatprep.mubr.bf16.mxu0 0
    %451 = vmatmul.mubr.bf16.gmra.mrb[0].mxu0 %v376
    %v452 = vpop.f32.mrb[0].mxu0
    %v453 = vadd.f32 0.0, %v452
    %v454 = vpop.f32.mrb[0].mxu0
    %v455 = vadd.f32 0.0, %v454
    %v456 = vpop.f32.mrb[0].mxu0
    %v457 = vpop.f32.mrb[0].mxu0
    %458 = vdwg.mxu0
    %v459 = vadd.f32 %v372, %v412
    %v460 = vadd.f32 %v373, %v414
    %v461 = vadd.f32 %v374, %v453
    %v462 = vadd.f32 %v375, %v455
    %v463 = vtanh.pop %v459
    %v464 = vmul.f32 %v463, 0.5
    %v465 = vadd.f32 %v464, 0.5
    %v466 = vtanh.pop %v460
    %v467 = vmul.f32 %v466, 0.5
    %v468 = vadd.f32 %v467, 0.5
    %v469 = vtanh.pop %v461
    %v470 = vtanh.pop %v462
    %v471 = vmul.f32 %v470, 0.5
    %v472 = vadd.f32 %v471, 0.5
    %v473 = vmul.f32 %v468, %v370
    %v474 = vmul.f32 %v465, %v469
    %v475 = vadd.f32 %v473, %v474
    %v476 = vtanh.pop %v475
    %v477 = vmul.f32 %v472, %v476
    %478 = vst [vmem:[#allocation4] sm:$0xff] %v477
    %479 = vst [vmem:[#allocation5] sm:$0xff] %v475
    %v480 = vpack.c.bf16 %v477, %v477
    %s481 = scalar_lea.vmem [#allocation3], 4
    %482 = vst [vmem:[%s481] sm:$0xf] %v480
    %v483 = vld [vmem:[#allocation4] sm:$0xff]
    %v484 = vld [vmem:[#allocation5] sm:$0xff]
    %s485 = scalar_lea.vmem [#allocation6], 64
    %v486 = vld [vmem:[%s485] sm:$0xff]
    %v487 = vld [vmem:[%s485 + $0x8] sm:$0xff]
    %v488 = vld [vmem:[%s485 + $0x10] sm:$0xff]
    %v489 = vld [vmem:[%s485 + $0x18] sm:$0xff]
    %v490 = vpack.c.bf16 %v483, %v483
    %491 = vmatprep.subr.bf16.mxu0 %v201
    %492 = vmatpush1.bf16.msra.mxu0 %v200
    %493 = vmatprep.subr.bf16.mxu0 %v205
    %494 = vmatpush1.bf16.msra.mxu0 %v204
    %495 = vmatprep.subr.bf16.mxu0 %v209
    %496 = vmatpush1.bf16.msra.mxu0 %v208
    %497 = vmatprep.subr.bf16.mxu0 %v213
    %498 = vmatpush1.bf16.msra.mxu0 %v212
    %499 = vmatprep.subr.bf16.mxu0 %v217
    %500 = vmatpush1.bf16.msra.mxu0 %v216
    %501 = vmatprep.subr.bf16.mxu0 %v221
    %502 = vmatpush1.bf16.msra.mxu0 %v220
    %503 = vmatprep.subr.bf16.mxu0 %v225
    %504 = vmatpush1.bf16.msra.mxu0 %v224
    %505 = vmatprep.subr.bf16.mxu0 %v229
    %506 = vmatpush1.bf16.msra.mxu0 %v228
    %507 = vmatprep.subr.bf16.mxu0 0
    %508 = vmatpush1.bf16.msra.mxu0 0
    %509 = vmatprep.subr.bf16.mxu0 0
    %510 = vmatpush1.bf16.msra.mxu0 0
    %511 = vmatprep.subr.bf16.mxu0 0
    %512 = vmatpush1.bf16.msra.mxu0 0
    %513 = vmatprep.subr.bf16.mxu0 0
    %514 = vmatpush1.bf16.msra.mxu0 0
    %515 = vmatprep.subr.bf16.mxu0 0
    %516 = vmatpush1.bf16.msra.mxu0 0
    %517 = vmatprep.subr.bf16.mxu0 0
    %518 = vmatpush1.bf16.msra.mxu0 0
    %519 = vmatprep.subr.bf16.mxu0 0
    %520 = vmatpush1.bf16.msra.mxu0 0
    %521 = vmatprep.subr.bf16.mxu0 0
    %522 = vmatpush1.bf16.msra.mxu0 0
    %523 = vmatprep.mubr.bf16.mxu0 0
    %524 = vmatmul.mubr.bf16.gmra.mrb[0].mxu0 %v490
    %v525 = vpop.f32.mrb[0].mxu0
    %v526 = vadd.f32 0.0, %v525
    %v527 = vpop.f32.mrb[0].mxu0
    %v528 = vadd.f32 0.0, %v527
    %v529 = vpop.f32.mrb[0].mxu0
    %v530 = vpop.f32.mrb[0].mxu0
    %531 = vdwg.mxu0
    %532 = vmatprep.subr.bf16.mxu0 %v203
    %533 = vmatpush1.bf16.msra.mxu0 %v202
    %534 = vmatprep.subr.bf16.mxu0 %v207
    %535 = vmatpush1.bf16.msra.mxu0 %v206
    %536 = vmatprep.subr.bf16.mxu0 %v211
    %537 = vmatpush1.bf16.msra.mxu0 %v210
    %538 = vmatprep.subr.bf16.mxu0 %v215
    %539 = vmatpush1.bf16.msra.mxu0 %v214
    %540 = vmatprep.subr.bf16.mxu0 %v219
    %541 = vmatpush1.bf16.msra.mxu0 %v218
    %542 = vmatprep.subr.bf16.mxu0 %v223
    %543 = vmatpush1.bf16.msra.mxu0 %v222
    %544 = vmatprep.subr.bf16.mxu0 %v227
    %545 = vmatpush1.bf16.msra.mxu0 %v226
    %546 = vmatprep.subr.bf16.mxu0 %v231
    %547 = vmatpush1.bf16.msra.mxu0 %v230
    %548 = vmatprep.subr.bf16.mxu0 0
    %549 = vmatpush1.bf16.msra.mxu0 0
    %550 = vmatprep.subr.bf16.mxu0 0
    %551 = vmatpush1.bf16.msra.mxu0 0
    %552 = vmatprep.subr.bf16.mxu0 0
    %553 = vmatpush1.bf16.msra.mxu0 0
    %554 = vmatprep.subr.bf16.mxu0 0
    %555 = vmatpush1.bf16.msra.mxu0 0
    %556 = vmatprep.subr.bf16.mxu0 0
    %557 = vmatpush1.bf16.msra.mxu0 0
    %558 = vmatprep.subr.bf16.mxu0 0
    %559 = vmatpush1.bf16.msra.mxu0 0
    %560 = vmatprep.subr.bf16.mxu0 0
    %561 = vmatpush1.bf16.msra.mxu0 0
    %562 = vmatprep.subr.bf16.mxu0 0
    %563 = vmatpush1.bf16.msra.mxu0 0
    %564 = vmatprep.mubr.bf16.mxu0 0
    %565 = vmatmul.mubr.bf16.gmra.mrb[0].mxu0 %v490
    %v566 = vpop.f32.mrb[0].mxu0
    %v567 = vadd.f32 0.0, %v566
    %v568 = vpop.f32.mrb[0].mxu0
    %v569 = vadd.f32 0.0, %v568
    %v570 = vpop.f32.mrb[0].mxu0
    %v571 = vpop.f32.mrb[0].mxu0
    %572 = vdwg.mxu0
    %v573 = vadd.f32 %v486, %v526
    %v574 = vadd.f32 %v487, %v528
    %v575 = vadd.f32 %v488, %v567
    %v576 = vadd.f32 %v489, %v569
    %v577 = vtanh.pop %v573
    %v578 = vmul.f32 %v577, 0.5
    %v579 = vadd.f32 %v578, 0.5
    %v580 = vtanh.pop %v574
    %v581 = vmul.f32 %v580, 0.5
    %v582 = vadd.f32 %v581, 0.5
    %v583 = vtanh.pop %v575
    %v584 = vtanh.pop %v576
    %v585 = vmul.f32 %v584, 0.5
    %v586 = vadd.f32 %v585, 0.5
    %v587 = vmul.f32 %v582, %v484
    %v588 = vmul.f32 %v579, %v583
    %v589 = vadd.f32 %v587, %v588
    %v590 = vtanh.pop %v589
    %v591 = vmul.f32 %v586, %v590
    %592 = vst [vmem:[#allocation4] sm:$0xff] %v591
    %593 = vst [vmem:[#allocation5] sm:$0xff] %v589
    %v594 = vpack.c.bf16 %v591, %v591
    %s595 = scalar_lea.vmem [#allocation3], 8
    %596 = vst [vmem:[%s595] sm:$0xf] %v594
    %v597 = vld [vmem:[#allocation4] sm:$0xff]
    %v598 = vld [vmem:[#allocation5] sm:$0xff]
    %s599 = scalar_lea.vmem [#allocation6], 96
    %v600 = vld [vmem:[%s599] sm:$0xff]
    %v601 = vld [vmem:[%s599 + $0x8] sm:$0xff]
    %v602 = vld [vmem:[%s599 + $0x10] sm:$0xff]
    %v603 = vld [vmem:[%s599 + $0x18] sm:$0xff]
    %v604 = vpack.c.bf16 %v597, %v597
    %605 = vmatprep.subr.bf16.mxu0 %v201
    %606 = vmatpush1.bf16.msra.mxu0 %v200
    %607 = vmatprep.subr.bf16.mxu0 %v205
    %608 = vmatpush1.bf16.msra.mxu0 %v204
    %609 = vmatprep.subr.bf16.mxu0 %v209
    %610 = vmatpush1.bf16.msra.mxu0 %v208
    %611 = vmatprep.subr.bf16.mxu0 %v213
    %612 = vmatpush1.bf16.msra.mxu0 %v212
    %613 = vmatprep.subr.bf16.mxu0 %v217
    %614 = vmatpush1.bf16.msra.mxu0 %v216
    %615 = vmatprep.subr.bf16.mxu0 %v221
    %616 = vmatpush1.bf16.msra.mxu0 %v220
    %617 = vmatprep.subr.bf16.mxu0 %v225
    %618 = vmatpush1.bf16.msra.mxu0 %v224
    %619 = vmatprep.subr.bf16.mxu0 %v229
    %620 = vmatpush1.bf16.msra.mxu0 %v228
    %621 = vmatprep.subr.bf16.mxu0 0
    %622 = vmatpush1.bf16.msra.mxu0 0
    %623 = vmatprep.subr.bf16.mxu0 0
    %624 = vmatpush1.bf16.msra.mxu0 0
    %625 = vmatprep.subr.bf16.mxu0 0
    %626 = vmatpush1.bf16.msra.mxu0 0
    %627 = vmatprep.subr.bf16.mxu0 0
    %628 = vmatpush1.bf16.msra.mxu0 0
    %629 = vmatprep.subr.bf16.mxu0 0
    %630 = vmatpush1.bf16.msra.mxu0 0
    %631 = vmatprep.subr.bf16.mxu0 0
    %632 = vmatpush1.bf16.msra.mxu0 0
    %633 = vmatprep.subr.bf16.mxu0 0
    %634 = vmatpush1.bf16.msra.mxu0 0
    %635 = vmatprep.subr.bf16.mxu0 0
    %636 = vmatpush1.bf16.msra.mxu0 0
    %637 = vmatprep.mubr.bf16.mxu0 0
    %638 = vmatmul.mubr.bf16.gmra.mrb[0].mxu0 %v604
    %v639 = vpop.f32.mrb[0].mxu0
    %v640 = vadd.f32 0.0, %v639
    %v641 = vpop.f32.mrb[0].mxu0
    %v642 = vadd.f32 0.0, %v641
    %v643 = vpop.f32.mrb[0].mxu0
    %v644 = vpop.f32.mrb[0].mxu0
    %645 = vdwg.mxu0
    %646 = vmatprep.subr.bf16.mxu0 %v203
    %647 = vmatpush1.bf16.msra.mxu0 %v202
    %648 = vmatprep.subr.bf16.mxu0 %v207
    %649 = vmatpush1.bf16.msra.mxu0 %v206
    %650 = vmatprep.subr.bf16.mxu0 %v211
    %651 = vmatpush1.bf16.msra.mxu0 %v210
    %652 = vmatprep.subr.bf16.mxu0 %v215
    %653 = vmatpush1.bf16.msra.mxu0 %v214
    %654 = vmatprep.subr.bf16.mxu0 %v219
    %655 = vmatpush1.bf16.msra.mxu0 %v218
    %656 = vmatprep.subr.bf16.mxu0 %v223
    %657 = vmatpush1.bf16.msra.mxu0 %v222
    %658 = vmatprep.subr.bf16.mxu0 %v227
    %659 = vmatpush1.bf16.msra.mxu0 %v226
    %660 = vmatprep.subr.bf16.mxu0 %v231
    %661 = vmatpush1.bf16.msra.mxu0 %v230
    %662 = vmatprep.subr.bf16.mxu0 0
    %663 = vmatpush1.bf16.msra.mxu0 0
    %664 = vmatprep.subr.bf16.mxu0 0
    %665 = vmatpush1.bf16.msra.mxu0 0
    %666 = vmatprep.subr.bf16.mxu0 0
    %667 = vmatpush1.bf16.msra.mxu0 0
    %668 = vmatprep.subr.bf16.mxu0 0
    %669 = vmatpush1.bf16.msra.mxu0 0
    %670 = vmatprep.subr.bf16.mxu0 0
    %671 = vmatpush1.bf16.msra.mxu0 0
    %672 = vmatprep.subr.bf16.mxu0 0
    %673 = vmatpush1.bf16.msra.mxu0 0
    %674 = vmatprep.subr.bf16.mxu0 0
    %675 = vmatpush1.bf16.msra.mxu0 0
    %676 = vmatprep.subr.bf16.mxu0 0
    %677 = vmatpush1.bf16.msra.mxu0 0
    %678 = vmatprep.mubr.bf16.mxu0 0
    %679 = vmatmul.mubr.bf16.gmra.mrb[0].mxu0 %v604
    %v680 = vpop.f32.mrb[0].mxu0
    %v681 = vadd.f32 0.0, %v680
    %v682 = vpop.f32.mrb[0].mxu0
    %v683 = vadd.f32 0.0, %v682
    %v684 = vpop.f32.mrb[0].mxu0
    %v685 = vpop.f32.mrb[0].mxu0
    %686 = vdwg.mxu0
    %v687 = vadd.f32 %v600, %v640
    %v688 = vadd.f32 %v601, %v642
    %v689 = vadd.f32 %v602, %v681
    %v690 = vadd.f32 %v603, %v683
    %v691 = vtanh.pop %v687
    %v692 = vmul.f32 %v691, 0.5
    %v693 = vadd.f32 %v692, 0.5
    %v694 = vtanh.pop %v688
    %v695 = vmul.f32 %v694, 0.5
    %v696 = vadd.f32 %v695, 0.5
    %v697 = vtanh.pop %v689
    %v698 = vtanh.pop %v690
    %v699 = vmul.f32 %v698, 0.5
    %v700 = vadd.f32 %v699, 0.5
    %v701 = vmul.f32 %v696, %v598
    %v702 = vmul.f32 %v693, %v697
    %v703 = vadd.f32 %v701, %v702
    %v704 = vtanh.pop %v703
    %v705 = vmul.f32 %v700, %v704
    %706 = vst [vmem:[#allocation4] sm:$0xff] %v705
    %707 = vst [vmem:[#allocation5] sm:$0xff] %v703
    %v708 = vpack.c.bf16 %v705, %v705
    %s709 = scalar_lea.vmem [#allocation3], 12
    %710 = vst [vmem:[%s709] sm:$0xf] %v708
    %v711 = vld [vmem:[#allocation4] sm:$0xff]
    %v712 = vld [vmem:[#allocation5] sm:$0xff]
    %s713 = scalar_lea.vmem [#allocation6], 128
    %v714 = vld [vmem:[%s713] sm:$0xff]
    %v715 = vld [vmem:[%s713 + $0x8] sm:$0xff]
    %v716 = vld [vmem:[%s713 + $0x10] sm:$0xff]
    %v717 = vld [vmem:[%s713 + $0x18] sm:$0xff]
    %v718 = vpack.c.bf16 %v711, %v711
    %719 = vmatprep.subr.bf16.mxu0 %v201
    %720 = vmatpush1.bf16.msra.mxu0 %v200
    %721 = vmatprep.subr.bf16.mxu0 %v205
    %722 = vmatpush1.bf16.msra.mxu0 %v204
    %723 = vmatprep.subr.bf16.mxu0 %v209
    %724 = vmatpush1.bf16.msra.mxu0 %v208
    %725 = vmatprep.subr.bf16.mxu0 %v213
    %726 = vmatpush1.bf16.msra.mxu0 %v212
    %727 = vmatprep.subr.bf16.mxu0 %v217
    %728 = vmatpush1.bf16.msra.mxu0 %v216
    %729 = vmatprep.subr.bf16.mxu0 %v221
    %730 = vmatpush1.bf16.msra.mxu0 %v220
    %731 = vmatprep.subr.bf16.mxu0 %v225
    %732 = vmatpush1.bf16.msra.mxu0 %v224
    %733 = vmatprep.subr.bf16.mxu0 %v229
    %734 = vmatpush1.bf16.msra.mxu0 %v228
    %735 = vmatprep.subr.bf16.mxu0 0
    %736 = vmatpush1.bf16.msra.mxu0 0
    %737 = vmatprep.subr.bf16.mxu0 0
    %738 = vmatpush1.bf16.msra.mxu0 0
    %739 = vmatprep.subr.bf16.mxu0 0
    %740 = vmatpush1.bf16.msra.mxu0 0
    %741 = vmatprep.subr.bf16.mxu0 0
    %742 = vmatpush1.bf16.msra.mxu0 0
    %743 = vmatprep.subr.bf16.mxu0 0
    %744 = vmatpush1.bf16.msra.mxu0 0
    %745 = vmatprep.subr.bf16.mxu0 0
    %746 = vmatpush1.bf16.msra.mxu0 0
    %747 = vmatprep.subr.bf16.mxu0 0
    %748 = vmatpush1.bf16.msra.mxu0 0
    %749 = vmatprep.subr.bf16.mxu0 0
    %750 = vmatpush1.bf16.msra.mxu0 0
    %751 = vmatprep.mubr.bf16.mxu0 0
    %752 = vmatmul.mubr.bf16.gmra.mrb[0].mxu0 %v718
    %v753 = vpop.f32.mrb[0].mxu0
    %v754 = vadd.f32 0.0, %v753
    %v755 = vpop.f32.mrb[0].mxu0
    %v756 = vadd.f32 0.0, %v755
    %v757 = vpop.f32.mrb[0].mxu0
    %v758 = vpop.f32.mrb[0].mxu0
    %759 = vdwg.mxu0
    %760 = vmatprep.subr.bf16.mxu0 %v203
    %761 = vmatpush1.bf16.msra.mxu0 %v202
    %762 = vmatprep.subr.bf16.mxu0 %v207
    %763 = vmatpush1.bf16.msra.mxu0 %v206
    %764 = vmatprep.subr.bf16.mxu0 %v211
    %765 = vmatpush1.bf16.msra.mxu0 %v210
    %766 = vmatprep.subr.bf16.mxu0 %v215
    %767 = vmatpush1.bf16.msra.mxu0 %v214
    %768 = vmatprep.subr.bf16.mxu0 %v219
    %769 = vmatpush1.bf16.msra.mxu0 %v218
    %770 = vmatprep.subr.bf16.mxu0 %v223
    %771 = vmatpush1.bf16.msra.mxu0 %v222
    %772 = vmatprep.subr.bf16.mxu0 %v227
    %773 = vmatpush1.bf16.msra.mxu0 %v226
    %774 = vmatprep.subr.bf16.mxu0 %v231
    %775 = vmatpush1.bf16.msra.mxu0 %v230
    %776 = vmatprep.subr.bf16.mxu0 0
    %777 = vmatpush1.bf16.msra.mxu0 0
    %778 = vmatprep.subr.bf16.mxu0 0
    %779 = vmatpush1.bf16.msra.mxu0 0
    %780 = vmatprep.subr.bf16.mxu0 0
    %781 = vmatpush1.bf16.msra.mxu0 0
    %782 = vmatprep.subr.bf16.mxu0 0
    %783 = vmatpush1.bf16.msra.mxu0 0
    %784 = vmatprep.subr.bf16.mxu0 0
    %785 = vmatpush1.bf16.msra.mxu0 0
    %786 = vmatprep.subr.bf16.mxu0 0
    %787 = vmatpush1.bf16.msra.mxu0 0
    %788 = vmatprep.subr.bf16.mxu0 0
    %789 = vmatpush1.bf16.msra.mxu0 0
    %790 = vmatprep.subr.bf16.mxu0 0
    %791 = vmatpush1.bf16.msra.mxu0 0
    %792 = vmatprep.mubr.bf16.mxu0 0
    %793 = vmatmul.mubr.bf16.gmra.mrb[0].mxu0 %v718
    %v794 = vpop.f32.mrb[0].mxu0
    %v795 = vadd.f32 0.0, %v794
    %v796 = vpop.f32.mrb[0].mxu0
    %v797 = vadd.f32 0.0, %v796
    %v798 = vpop.f32.mrb[0].mxu0
    %v799 = vpop.f32.mrb[0].mxu0
    %800 = vdwg.mxu0
    %v801 = vadd.f32 %v714, %v754
    %v802 = vadd.f32 %v715, %v756
    %v803 = vadd.f32 %v716, %v795
    %v804 = vadd.f32 %v717, %v797
    %v805 = vtanh.pop %v801
    %v806 = vmul.f32 %v805, 0.5
    %v807 = vadd.f32 %v806, 0.5
    %v808 = vtanh.pop %v802
    %v809 = vmul.f32 %v808, 0.5
    %v810 = vadd.f32 %v809, 0.5
    %v811 = vtanh.pop %v803
    %v812 = vtanh.pop %v804
    %v813 = vmul.f32 %v812, 0.5
    %v814 = vadd.f32 %v813, 0.5
    %v815 = vmul.f32 %v810, %v712
    %v816 = vmul.f32 %v807, %v811
    %v817 = vadd.f32 %v815, %v816
    %v818 = vtanh.pop %v817
    %v819 = vmul.f32 %v814, %v818
    %820 = vst [vmem:[#allocation4] sm:$0xff] %v819
    %821 = vst [vmem:[#allocation5] sm:$0xff] %v817
    %v822 = vpack.c.bf16 %v819, %v819
    %s823 = scalar_lea.vmem [#allocation3], 16
    %824 = vst [vmem:[%s823] sm:$0xf] %v822
    %v825 = vld [vmem:[#allocation4] sm:$0xff]
    %v826 = vld [vmem:[#allocation5] sm:$0xff]
    %s827 = scalar_lea.vmem [#allocation6], 160
    %v828 = vld [vmem:[%s827] sm:$0xff]
    %v829 = vld [vmem:[%s827 + $0x8] sm:$0xff]
    %v830 = vld [vmem:[%s827 + $0x10] sm:$0xff]
    %v831 = vld [vmem:[%s827 + $0x18] sm:$0xff]
    %v832 = vpack.c.bf16 %v825, %v825
    %833 = vmatprep.subr.bf16.mxu0 %v201
    %834 = vmatpush1.bf16.msra.mxu0 %v200
    %835 = vmatprep.subr.bf16.mxu0 %v205
    %836 = vmatpush1.bf16.msra.mxu0 %v204
    %837 = vmatprep.subr.bf16.mxu0 %v209
    %838 = vmatpush1.bf16.msra.mxu0 %v208
    %839 = vmatprep.subr.bf16.mxu0 %v213
    %840 = vmatpush1.bf16.msra.mxu0 %v212
    %841 = vmatprep.subr.bf16.mxu0 %v217
    %842 = vmatpush1.bf16.msra.mxu0 %v216
    %843 = vmatprep.subr.bf16.mxu0 %v221
    %844 = vmatpush1.bf16.msra.mxu0 %v220
    %845 = vmatprep.subr.bf16.mxu0 %v225
    %846 = vmatpush1.bf16.msra.mxu0 %v224
    %847 = vmatprep.subr.bf16.mxu0 %v229
    %848 = vmatpush1.bf16.msra.mxu0 %v228
    %849 = vmatprep.subr.bf16.mxu0 0
    %850 = vmatpush1.bf16.msra.mxu0 0
    %851 = vmatprep.subr.bf16.mxu0 0
    %852 = vmatpush1.bf16.msra.mxu0 0
    %853 = vmatprep.subr.bf16.mxu0 0
    %854 = vmatpush1.bf16.msra.mxu0 0
    %855 = vmatprep.subr.bf16.mxu0 0
    %856 = vmatpush1.bf16.msra.mxu0 0
    %857 = vmatprep.subr.bf16.mxu0 0
    %858 = vmatpush1.bf16.msra.mxu0 0
    %859 = vmatprep.subr.bf16.mxu0 0
    %860 = vmatpush1.bf16.msra.mxu0 0
    %861 = vmatprep.subr.bf16.mxu0 0
    %862 = vmatpush1.bf16.msra.mxu0 0
    %863 = vmatprep.subr.bf16.mxu0 0
    %864 = vmatpush1.bf16.msra.mxu0 0
    %865 = vmatprep.mubr.bf16.mxu0 0
    %866 = vmatmul.mubr.bf16.gmra.mrb[0].mxu0 %v832
    %v867 = vpop.f32.mrb[0].mxu0
    %v868 = vadd.f32 0.0, %v867
    %v869 = vpop.f32.mrb[0].mxu0
    %v870 = vadd.f32 0.0, %v869
    %v871 = vpop.f32.mrb[0].mxu0
    %v872 = vpop.f32.mrb[0].mxu0
    %873 = vdwg.mxu0
    %874 = vmatprep.subr.bf16.mxu0 %v203
    %875 = vmatpush1.bf16.msra.mxu0 %v202
    %876 = vmatprep.subr.bf16.mxu0 %v207
    %877 = vmatpush1.bf16.msra.mxu0 %v206
    %878 = vmatprep.subr.bf16.mxu0 %v211
    %879 = vmatpush1.bf16.msra.mxu0 %v210
    %880 = vmatprep.subr.bf16.mxu0 %v215
    %881 = vmatpush1.bf16.msra.mxu0 %v214
    %882 = vmatprep.subr.bf16.mxu0 %v219
    %883 = vmatpush1.bf16.msra.mxu0 %v218
    %884 = vmatprep.subr.bf16.mxu0 %v223
    %885 = vmatpush1.bf16.msra.mxu0 %v222
    %886 = vmatprep.subr.bf16.mxu0 %v227
    %887 = vmatpush1.bf16.msra.mxu0 %v226
    %888 = vmatprep.subr.bf16.mxu0 %v231
    %889 = vmatpush1.bf16.msra.mxu0 %v230
    %890 = vmatprep.subr.bf16.mxu0 0
    %891 = vmatpush1.bf16.msra.mxu0 0
    %892 = vmatprep.subr.bf16.mxu0 0
    %893 = vmatpush1.bf16.msra.mxu0 0
    %894 = vmatprep.subr.bf16.mxu0 0
    %895 = vmatpush1.bf16.msra.mxu0 0
    %896 = vmatprep.subr.bf16.mxu0 0
    %897 = vmatpush1.bf16.msra.mxu0 0
    %898 = vmatprep.subr.bf16.mxu0 0
    %899 = vmatpush1.bf16.msra.mxu0 0
    %900 = vmatprep.subr.bf16.mxu0 0
    %901 = vmatpush1.bf16.msra.mxu0 0
    %902 = vmatprep.subr.bf16.mxu0 0
    %903 = vmatpush1.bf16.msra.mxu0 0
    %904 = vmatprep.subr.bf16.mxu0 0
    %905 = vmatpush1.bf16.msra.mxu0 0
    %906 = vmatprep.mubr.bf16.mxu0 0
    %907 = vmatmul.mubr.bf16.gmra.mrb[0].mxu0 %v832
    %v908 = vpop.f32.mrb[0].mxu0
    %v909 = vadd.f32 0.0, %v908
    %v910 = vpop.f32.mrb[0].mxu0
    %v911 = vadd.f32 0.0, %v910
    %v912 = vpop.f32.mrb[0].mxu0
    %v913 = vpop.f32.mrb[0].mxu0
    %914 = vdwg.mxu0
    %v915 = vadd.f32 %v828, %v868
    %v916 = vadd.f32 %v829, %v870
    %v917 = vadd.f32 %v830, %v909
    %v918 = vadd.f32 %v831, %v911
    %v919 = vtanh.pop %v915
    %v920 = vmul.f32 %v919, 0.5
    %v921 = vadd.f32 %v920, 0.5
    %v922 = vtanh.pop %v916
    %v923 = vmul.f32 %v922, 0.5
    %v924 = vadd.f32 %v923, 0.5
    %v925 = vtanh.pop %v917
    %v926 = vtanh.pop %v918
    %v927 = vmul.f32 %v926, 0.5
    %v928 = vadd.f32 %v927, 0.5
    %v929 = vmul.f32 %v924, %v826
    %v930 = vmul.f32 %v921, %v925
    %v931 = vadd.f32 %v929, %v930
    %v932 = vtanh.pop %v931
    %v933 = vmul.f32 %v928, %v932
    %934 = vst [vmem:[#allocation4] sm:$0xff] %v933
    %935 = vst [vmem:[#allocation5] sm:$0xff] %v931
    %v936 = vpack.c.bf16 %v933, %v933
    %s937 = scalar_lea.vmem [#allocation3], 20
    %938 = vst [vmem:[%s937] sm:$0xf] %v936
    %v939 = vld [vmem:[#allocation4] sm:$0xff]
    %v940 = vld [vmem:[#allocation5] sm:$0xff]
    %s941 = scalar_lea.vmem [#allocation6], 192
    %v942 = vld [vmem:[%s941] sm:$0xff]
    %v943 = vld [vmem:[%s941 + $0x8] sm:$0xff]
    %v944 = vld [vmem:[%s941 + $0x10] sm:$0xff]
    %v945 = vld [vmem:[%s941 + $0x18] sm:$0xff]
    %v946 = vpack.c.bf16 %v939, %v939
    %947 = vmatprep.subr.bf16.mxu0 %v201
    %948 = vmatpush1.bf16.msra.mxu0 %v200
    %949 = vmatprep.subr.bf16.mxu0 %v205
    %950 = vmatpush1.bf16.msra.mxu0 %v204
    %951 = vmatprep.subr.bf16.mxu0 %v209
    %952 = vmatpush1.bf16.msra.mxu0 %v208
    %953 = vmatprep.subr.bf16.mxu0 %v213
    %954 = vmatpush1.bf16.msra.mxu0 %v212
    %955 = vmatprep.subr.bf16.mxu0 %v217
    %956 = vmatpush1.bf16.msra.mxu0 %v216
    %957 = vmatprep.subr.bf16.mxu0 %v221
    %958 = vmatpush1.bf16.msra.mxu0 %v220
    %959 = vmatprep.subr.bf16.mxu0 %v225
    %960 = vmatpush1.bf16.msra.mxu0 %v224
    %961 = vmatprep.subr.bf16.mxu0 %v229
    %962 = vmatpush1.bf16.msra.mxu0 %v228
    %963 = vmatprep.subr.bf16.mxu0 0
    %964 = vmatpush1.bf16.msra.mxu0 0
    %965 = vmatprep.subr.bf16.mxu0 0
    %966 = vmatpush1.bf16.msra.mxu0 0
    %967 = vmatprep.subr.bf16.mxu0 0
    %968 = vmatpush1.bf16.msra.mxu0 0
    %969 = vmatprep.subr.bf16.mxu0 0
    %970 = vmatpush1.bf16.msra.mxu0 0
    %971 = vmatprep.subr.bf16.mxu0 0
    %972 = vmatpush1.bf16.msra.mxu0 0
    %973 = vmatprep.subr.bf16.mxu0 0
    %974 = vmatpush1.bf16.msra.mxu0 0
    %975 = vmatprep.subr.bf16.mxu0 0
    %976 = vmatpush1.bf16.msra.mxu0 0
    %977 = vmatprep.subr.bf16.mxu0 0
    %978 = vmatpush1.bf16.msra.mxu0 0
    %979 = vmatprep.mubr.bf16.mxu0 0
    %980 = vmatmul.mubr.bf16.gmra.mrb[0].mxu0 %v946
    %v981 = vpop.f32.mrb[0].mxu0
    %v982 = vadd.f32 0.0, %v981
    %v983 = vpop.f32.mrb[0].mxu0
    %v984 = vadd.f32 0.0, %v983
    %v985 = vpop.f32.mrb[0].mxu0
    %v986 = vpop.f32.mrb[0].mxu0
    %987 = vdwg.mxu0
    %988 = vmatprep.subr.bf16.mxu0 %v203
    %989 = vmatpush1.bf16.msra.mxu0 %v202
    %990 = vmatprep.subr.bf16.mxu0 %v207
    %991 = vmatpush1.bf16.msra.mxu0 %v206
    %992 = vmatprep.subr.bf16.mxu0 %v211
    %993 = vmatpush1.bf16.msra.mxu0 %v210
    %994 = vmatprep.subr.bf16.mxu0 %v215
    %995 = vmatpush1.bf16.msra.mxu0 %v214
    %996 = vmatprep.subr.bf16.mxu0 %v219
    %997 = vmatpush1.bf16.msra.mxu0 %v218
    %998 = vmatprep.subr.bf16.mxu0 %v223
    %999 = vmatpush1.bf16.msra.mxu0 %v222
    %1000 = vmatprep.subr.bf16.mxu0 %v227
    %1001 = vmatpush1.bf16.msra.mxu0 %v226
    %1002 = vmatprep.subr.bf16.mxu0 %v231
    %1003 = vmatpush1.bf16.msra.mxu0 %v230
    %1004 = vmatprep.subr.bf16.mxu0 0
    %1005 = vmatpush1.bf16.msra.mxu0 0
    %1006 = vmatprep.subr.bf16.mxu0 0
    %1007 = vmatpush1.bf16.msra.mxu0 0
    %1008 = vmatprep.subr.bf16.mxu0 0
    %1009 = vmatpush1.bf16.msra.mxu0 0
    %1010 = vmatprep.subr.bf16.mxu0 0
    %1011 = vmatpush1.bf16.msra.mxu0 0
    %1012 = vmatprep.subr.bf16.mxu0 0
    %1013 = vmatpush1.bf16.msra.mxu0 0
    %1014 = vmatprep.subr.bf16.mxu0 0
    %1015 = vmatpush1.bf16.msra.mxu0 0
    %1016 = vmatprep.subr.bf16.mxu0 0
    %1017 = vmatpush1.bf16.msra.mxu0 0
    %1018 = vmatprep.subr.bf16.mxu0 0
    %1019 = vmatpush1.bf16.msra.mxu0 0
    %1020 = vmatprep.mubr.bf16.mxu0 0
    %1021 = vmatmul.mubr.bf16.gmra.mrb[0].mxu0 %v946
    %v1022 = vpop.f32.mrb[0].mxu0
    %v1023 = vadd.f32 0.0, %v1022
    %v1024 = vpop.f32.mrb[0].mxu0
    %v1025 = vadd.f32 0.0, %v1024
    %v1026 = vpop.f32.mrb[0].mxu0
    %v1027 = vpop.f32.mrb[0].mxu0
    %1028 = vdwg.mxu0
    %v1029 = vadd.f32 %v942, %v982
    %v1030 = vadd.f32 %v943, %v984
    %v1031 = vadd.f32 %v944, %v1023
    %v1032 = vadd.f32 %v945, %v1025
    %v1033 = vtanh.pop %v1029
    %v1034 = vmul.f32 %v1033, 0.5
    %v1035 = vadd.f32 %v1034, 0.5
    %v1036 = vtanh.pop %v1030
    %v1037 = vmul.f32 %v1036, 0.5
    %v1038 = vadd.f32 %v1037, 0.5
    %v1039 = vtanh.pop %v1031
    %v1040 = vtanh.pop %v1032
    %v1041 = vmul.f32 %v1040, 0.5
    %v1042 = vadd.f32 %v1041, 0.5
    %v1043 = vmul.f32 %v1038, %v940
    %v1044 = vmul.f32 %v1035, %v1039
    %v1045 = vadd.f32 %v1043, %v1044
    %v1046 = vtanh.pop %v1045
    %v1047 = vmul.f32 %v1042, %v1046
    %1048 = vst [vmem:[#allocation4] sm:$0xff] %v1047
    %1049 = vst [vmem:[#allocation5] sm:$0xff] %v1045
    %v1050 = vpack.c.bf16 %v1047, %v1047
    %s1051 = scalar_lea.vmem [#allocation3], 24
    %1052 = vst [vmem:[%s1051] sm:$0xf] %v1050
    %v1053 = vld [vmem:[#allocation4] sm:$0xff]
    %v1054 = vld [vmem:[#allocation5] sm:$0xff]
    %s1055 = scalar_lea.vmem [#allocation6], 224
    %v1056 = vld [vmem:[%s1055] sm:$0xff]
    %v1057 = vld [vmem:[%s1055 + $0x8] sm:$0xff]
    %v1058 = vld [vmem:[%s1055 + $0x10] sm:$0xff]
    %v1059 = vld [vmem:[%s1055 + $0x18] sm:$0xff]
    %v1060 = vpack.c.bf16 %v1053, %v1053
    %1061 = vmatprep.subr.bf16.mxu0 %v201
    %1062 = vmatpush1.bf16.msra.mxu0 %v200
    %1063 = vmatprep.subr.bf16.mxu0 %v205
    %1064 = vmatpush1.bf16.msra.mxu0 %v204
    %1065 = vmatprep.subr.bf16.mxu0 %v209
    %1066 = vmatpush1.bf16.msra.mxu0 %v208
    %1067 = vmatprep.subr.bf16.mxu0 %v213
    %1068 = vmatpush1.bf16.msra.mxu0 %v212
    %1069 = vmatprep.subr.bf16.mxu0 %v217
    %1070 = vmatpush1.bf16.msra.mxu0 %v216
    %1071 = vmatprep.subr.bf16.mxu0 %v221
    %1072 = vmatpush1.bf16.msra.mxu0 %v220
    %1073 = vmatprep.subr.bf16.mxu0 %v225
    %1074 = vmatpush1.bf16.msra.mxu0 %v224
    %1075 = vmatprep.subr.bf16.mxu0 %v229
    %1076 = vmatpush1.bf16.msra.mxu0 %v228
    %1077 = vmatprep.subr.bf16.mxu0 0
    %1078 = vmatpush1.bf16.msra.mxu0 0
    %1079 = vmatprep.subr.bf16.mxu0 0
    %1080 = vmatpush1.bf16.msra.mxu0 0
    %1081 = vmatprep.subr.bf16.mxu0 0
    %1082 = vmatpush1.bf16.msra.mxu0 0
    %1083 = vmatprep.subr.bf16.mxu0 0
    %1084 = vmatpush1.bf16.msra.mxu0 0
    %1085 = vmatprep.subr.bf16.mxu0 0
    %1086 = vmatpush1.bf16.msra.mxu0 0
    %1087 = vmatprep.subr.bf16.mxu0 0
    %1088 = vmatpush1.bf16.msra.mxu0 0
    %1089 = vmatprep.subr.bf16.mxu0 0
    %1090 = vmatpush1.bf16.msra.mxu0 0
    %1091 = vmatprep.subr.bf16.mxu0 0
    %1092 = vmatpush1.bf16.msra.mxu0 0
    %1093 = vmatprep.mubr.bf16.mxu0 0
    %1094 = vmatmul.mubr.bf16.gmra.mrb[0].mxu0 %v1060
    %v1095 = vpop.f32.mrb[0].mxu0
    %v1096 = vadd.f32 0.0, %v1095
    %v1097 = vpop.f32.mrb[0].mxu0
    %v1098 = vadd.f32 0.0, %v1097
    %v1099 = vpop.f32.mrb[0].mxu0
    %v1100 = vpop.f32.mrb[0].mxu0
    %1101 = vdwg.mxu0
    %1102 = vmatprep.subr.bf16.mxu0 %v203
    %1103 = vmatpush1.bf16.msra.mxu0 %v202
    %1104 = vmatprep.subr.bf16.mxu0 %v207
    %1105 = vmatpush1.bf16.msra.mxu0 %v206
    %1106 = vmatprep.subr.bf16.mxu0 %v211
    %1107 = vmatpush1.bf16.msra.mxu0 %v210
    %1108 = vmatprep.subr.bf16.mxu0 %v215
    %1109 = vmatpush1.bf16.msra.mxu0 %v214
    %1110 = vmatprep.subr.bf16.mxu0 %v219
    %1111 = vmatpush1.bf16.msra.mxu0 %v218
    %1112 = vmatprep.subr.bf16.mxu0 %v223
    %1113 = vmatpush1.bf16.msra.mxu0 %v222
    %1114 = vmatprep.subr.bf16.mxu0 %v227
    %1115 = vmatpush1.bf16.msra.mxu0 %v226
    %1116 = vmatprep.subr.bf16.mxu0 %v231
    %1117 = vmatpush1.bf16.msra.mxu0 %v230
    %1118 = vmatprep.subr.bf16.mxu0 0
    %1119 = vmatpush1.bf16.msra.mxu0 0
    %1120 = vmatprep.subr.bf16.mxu0 0
    %1121 = vmatpush1.bf16.msra.mxu0 0
    %1122 = vmatprep.subr.bf16.mxu0 0
    %1123 = vmatpush1.bf16.msra.mxu0 0
    %1124 = vmatprep.subr.bf16.mxu0 0
    %1125 = vmatpush1.bf16.msra.mxu0 0
    %1126 = vmatprep.subr.bf16.mxu0 0
    %1127 = vmatpush1.bf16.msra.mxu0 0
    %1128 = vmatprep.subr.bf16.mxu0 0
    %1129 = vmatpush1.bf16.msra.mxu0 0
    %1130 = vmatprep.subr.bf16.mxu0 0
    %1131 = vmatpush1.bf16.msra.mxu0 0
    %1132 = vmatprep.subr.bf16.mxu0 0
    %1133 = vmatpush1.bf16.msra.mxu0 0
    %1134 = vmatprep.mubr.bf16.mxu0 0
    %1135 = vmatmul.mubr.bf16.gmra.mrb[0].mxu0 %v1060
    %v1136 = vpop.f32.mrb[0].mxu0
    %v1137 = vadd.f32 0.0, %v1136
    %v1138 = vpop.f32.mrb[0].mxu0
    %v1139 = vadd.f32 0.0, %v1138
    %v1140 = vpop.f32.mrb[0].mxu0
    %v1141 = vpop.f32.mrb[0].mxu0
    %1142 = vdwg.mxu0
    %v1143 = vadd.f32 %v1056, %v1096
    %v1144 = vadd.f32 %v1057, %v1098
    %v1145 = vadd.f32 %v1058, %v1137
    %v1146 = vadd.f32 %v1059, %v1139
    %v1147 = vtanh.pop %v1143
    %v1148 = vmul.f32 %v1147, 0.5
    %v1149 = vadd.f32 %v1148, 0.5
    %v1150 = vtanh.pop %v1144
    %v1151 = vmul.f32 %v1150, 0.5
    %v1152 = vadd.f32 %v1151, 0.5
    %v1153 = vtanh.pop %v1145
    %v1154 = vtanh.pop %v1146
    %v1155 = vmul.f32 %v1154, 0.5
    %v1156 = vadd.f32 %v1155, 0.5
    %v1157 = vmul.f32 %v1152, %v1054
    %v1158 = vmul.f32 %v1149, %v1153
    %v1159 = vadd.f32 %v1157, %v1158
    %v1160 = vtanh.pop %v1159
    %v1161 = vmul.f32 %v1156, %v1160
    %1162 = vst [vmem:[#allocation4] sm:$0xff] %v1161
    %1163 = vst [vmem:[#allocation5] sm:$0xff] %v1159
    %v1164 = vpack.c.bf16 %v1161, %v1161
    %s1165 = scalar_lea.vmem [#allocation3], 28
    %1166 = vst [vmem:[%s1165] sm:$0xf] %v1164
    %v1167 = vld [vmem:[#allocation4] sm:$0xff]
    %1168 = vst [vmem:[#allocation12] sm:$0xff] %v1167
    %v1169 = vld [vmem:[#allocation5] sm:$0xff]
    %1170 = vst [vmem:[#allocation13] sm:$0xff] %v1169
    %s1171 = scalar_lea.vmem [#allocation11], 256
    %v1172 = vld [vmem:[%s1171] sm:$0xff]
    %v1173 = vld [vmem:[%s1171 + $0x8] sm:$0xff]
    %v1174 = vld [vmem:[%s1171 + $0x10] sm:$0xff]
    %v1175 = vld [vmem:[%s1171 + $0x18] sm:$0xff]
    %v1176 = vld [vmem:[%s1171 + $0x20] sm:$0xff]
    %v1177 = vld [vmem:[%s1171 + $0x28] sm:$0xff]
    %v1178 = vld [vmem:[%s1171 + $0x30] sm:$0xff]
    %v1179 = vld [vmem:[%s1171 + $0x38] sm:$0xff]
    %v1180 = vld [vmem:[%s1171 + $0x40] sm:$0xff]
    %v1181 = vld [vmem:[%s1171 + $0x48] sm:$0xff]
    %v1182 = vld [vmem:[%s1171 + $0x50] sm:$0xff]
    %v1183 = vld [vmem:[%s1171 + $0x58] sm:$0xff]
    %v1184 = vld [vmem:[%s1171 + $0x60] sm:$0xff]
    %v1185 = vld [vmem:[%s1171 + $0x68] sm:$0xff]
    %v1186 = vld [vmem:[%s1171 + $0x70] sm:$0xff]
    %v1187 = vld [vmem:[%s1171 + $0x78] sm:$0xff]
    %v1188 = vld [vmem:[%s1171 + $0x80] sm:$0xff]
    %v1189 = vld [vmem:[%s1171 + $0x88] sm:$0xff]
    %v1190 = vld [vmem:[%s1171 + $0x90] sm:$0xff]
    %v1191 = vld [vmem:[%s1171 + $0x98] sm:$0xff]
    %v1192 = vld [vmem:[%s1171 + $0xa0] sm:$0xff]
    %v1193 = vld [vmem:[%s1171 + $0xa8] sm:$0xff]
    %v1194 = vld [vmem:[%s1171 + $0xb0] sm:$0xff]
    %v1195 = vld [vmem:[%s1171 + $0xb8] sm:$0xff]
    %v1196 = vld [vmem:[%s1171 + $0xc0] sm:$0xff]
    %v1197 = vld [vmem:[%s1171 + $0xc8] sm:$0xff]
    %v1198 = vld [vmem:[%s1171 + $0xd0] sm:$0xff]
    %v1199 = vld [vmem:[%s1171 + $0xd8] sm:$0xff]
    %v1200 = vld [vmem:[%s1171 + $0xe0] sm:$0xff]
    %v1201 = vld [vmem:[%s1171 + $0xe8] sm:$0xff]
    %v1202 = vld [vmem:[%s1171 + $0xf0] sm:$0xff]
    %v1203 = vld [vmem:[%s1171 + $0xf8] sm:$0xff]
    %v1204 = vld [vmem:[#allocation9] sm:$0xff]
    %v1205 = vld [vmem:[#allocation9 + $0x8] sm:$0xff]
    %v1206 = vld [vmem:[#allocation9 + $0x10] sm:$0xff]
    %v1207 = vld [vmem:[#allocation9 + $0x18] sm:$0xff]
    %v1208 = vld [vmem:[#allocation9 + $0x20] sm:$0xff]
    %v1209 = vld [vmem:[#allocation9 + $0x28] sm:$0xff]
    %v1210 = vld [vmem:[#allocation9 + $0x30] sm:$0xff]
    %v1211 = vld [vmem:[#allocation9 + $0x38] sm:$0xff]
    %v1212 = vld [vmem:[#allocation9 + $0x40] sm:$0xff]
    %v1213 = vld [vmem:[#allocation9 + $0x48] sm:$0xff]
    %v1214 = vld [vmem:[#allocation9 + $0x50] sm:$0xff]
    %v1215 = vld [vmem:[#allocation9 + $0x58] sm:$0xff]
    %v1216 = vld [vmem:[#allocation9 + $0x60] sm:$0xff]
    %v1217 = vld [vmem:[#allocation9 + $0x68] sm:$0xff]
    %v1218 = vld [vmem:[#allocation9 + $0x70] sm:$0xff]
    %v1219 = vld [vmem:[#allocation9 + $0x78] sm:$0xff]
    %v1220 = vld [vmem:[#allocation9 + $0x80] sm:$0xff]
    %v1221 = vld [vmem:[#allocation9 + $0x88] sm:$0xff]
    %v1222 = vld [vmem:[#allocation9 + $0x90] sm:$0xff]
    %v1223 = vld [vmem:[#allocation9 + $0x98] sm:$0xff]
    %v1224 = vld [vmem:[#allocation9 + $0xa0] sm:$0xff]
    %v1225 = vld [vmem:[#allocation9 + $0xa8] sm:$0xff]
    %v1226 = vld [vmem:[#allocation9 + $0xb0] sm:$0xff]
    %v1227 = vld [vmem:[#allocation9 + $0xb8] sm:$0xff]
    %v1228 = vld [vmem:[#allocation9 + $0xc0] sm:$0xff]
    %v1229 = vld [vmem:[#allocation9 + $0xc8] sm:$0xff]
    %v1230 = vld [vmem:[#allocation9 + $0xd0] sm:$0xff]
    %v1231 = vld [vmem:[#allocation9 + $0xd8] sm:$0xff]
    %v1232 = vld [vmem:[#allocation9 + $0xe0] sm:$0xff]
    %v1233 = vld [vmem:[#allocation9 + $0xe8] sm:$0xff]
    %v1234 = vld [vmem:[#allocation9 + $0xf0] sm:$0xff]
    %v1235 = vld [vmem:[#allocation9 + $0xf8] sm:$0xff]
    %v1236 = vld [vmem:[#allocation3] sm:$0xf]
    %v1237 = vld [vmem:[#allocation3 + $0x4] sm:$0xf]
    %v1238 = vld [vmem:[#allocation3 + $0x8] sm:$0xf]
    %v1239 = vld [vmem:[#allocation3 + $0xc] sm:$0xf]
    %v1240 = vld [vmem:[#allocation3 + $0x10] sm:$0xf]
    %v1241 = vld [vmem:[#allocation3 + $0x14] sm:$0xf]
    %v1242 = vld [vmem:[#allocation3 + $0x18] sm:$0xf]
    %v1243 = vld [vmem:[#allocation3 + $0x1c] sm:$0xf]
    %v1252 = vunpack.c.l.b16 %v1236
    %v1253 = vunpack.c.l.b16 %v1237
    %v1254 = vunpack.c.l.b16 %v1238
    %v1255 = vunpack.c.l.b16 %v1239
    %v1256 = vunpack.c.l.b16 %v1240
    %v1257 = vunpack.c.l.b16 %v1241
    %v1258 = vunpack.c.l.b16 %v1242
    %v1259 = vunpack.c.l.b16 %v1243
    %v1260 = vpack.c.b16 %v1253, %v1252
    %v1261 = vpack.c.b16 %v1255, %v1254
    %v1262 = vpack.c.b16 %v1257, %v1256
    %v1263 = vpack.c.b16 %v1259, %v1258
    %v1300 = vunpack.c.l.b16 %v1204
    %v1301 = vunpack.c.h.b16 %v1204
    %v1302 = vunpack.c.l.b16 %v1205
    %v1303 = vunpack.c.h.b16 %v1205
    %v1304 = vunpack.c.l.b16 %v1206
    %v1305 = vunpack.c.h.b16 %v1206
    %v1306 = vunpack.c.l.b16 %v1207
    %v1307 = vunpack.c.h.b16 %v1207
    %v1308 = vunpack.c.l.b16 %v1208
    %v1309 = vunpack.c.h.b16 %v1208
    %v1310 = vunpack.c.l.b16 %v1209
    %v1311 = vunpack.c.h.b16 %v1209
    %v1312 = vunpack.c.l.b16 %v1210
    %v1313 = vunpack.c.h.b16 %v1210
    %v1314 = vunpack.c.l.b16 %v1211
    %v1315 = vunpack.c.h.b16 %v1211
    %v1316 = vunpack.c.l.b16 %v1212
    %v1317 = vunpack.c.h.b16 %v1212
    %v1318 = vunpack.c.l.b16 %v1213
    %v1319 = vunpack.c.h.b16 %v1213
    %v1320 = vunpack.c.l.b16 %v1214
    %v1321 = vunpack.c.h.b16 %v1214
    %v1322 = vunpack.c.l.b16 %v1215
    %v1323 = vunpack.c.h.b16 %v1215
    %v1324 = vunpack.c.l.b16 %v1216
    %v1325 = vunpack.c.h.b16 %v1216
    %v1326 = vunpack.c.l.b16 %v1217
    %v1327 = vunpack.c.h.b16 %v1217
    %v1328 = vunpack.c.l.b16 %v1218
    %v1329 = vunpack.c.h.b16 %v1218
    %v1330 = vunpack.c.l.b16 %v1219
    %v1331 = vunpack.c.h.b16 %v1219
    %v1332 = vunpack.c.l.b16 %v1220
    %v1333 = vunpack.c.h.b16 %v1220
    %v1334 = vunpack.c.l.b16 %v1221
    %v1335 = vunpack.c.h.b16 %v1221
    %v1336 = vunpack.c.l.b16 %v1222
    %v1337 = vunpack.c.h.b16 %v1222
    %v1338 = vunpack.c.l.b16 %v1223
    %v1339 = vunpack.c.h.b16 %v1223
    %v1340 = vunpack.c.l.b16 %v1224
    %v1341 = vunpack.c.h.b16 %v1224
    %v1342 = vunpack.c.l.b16 %v1225
    %v1343 = vunpack.c.h.b16 %v1225
    %v1344 = vunpack.c.l.b16 %v1226
    %v1345 = vunpack.c.h.b16 %v1226
    %v1346 = vunpack.c.l.b16 %v1227
    %v1347 = vunpack.c.h.b16 %v1227
    %v1348 = vunpack.c.l.b16 %v1228
    %v1349 = vunpack.c.h.b16 %v1228
    %v1350 = vunpack.c.l.b16 %v1229
    %v1351 = vunpack.c.h.b16 %v1229
    %v1352 = vunpack.c.l.b16 %v1230
    %v1353 = vunpack.c.h.b16 %v1230
    %v1354 = vunpack.c.l.b16 %v1231
    %v1355 = vunpack.c.h.b16 %v1231
    %v1356 = vunpack.c.l.b16 %v1232
    %v1357 = vunpack.c.h.b16 %v1232
    %v1358 = vunpack.c.l.b16 %v1233
    %v1359 = vunpack.c.h.b16 %v1233
    %v1360 = vunpack.c.l.b16 %v1234
    %v1361 = vunpack.c.h.b16 %v1234
    %v1362 = vunpack.c.l.b16 %v1235
    %v1363 = vunpack.c.h.b16 %v1235
    %v1364 = vpack.c.b16 %v1304, %v1300
    %v1365 = vpack.c.b16 %v1305, %v1301
    %v1366 = vpack.c.b16 %v1306, %v1302
    %v1367 = vpack.c.b16 %v1307, %v1303
    %v1368 = vpack.c.b16 %v1312, %v1308
    %v1369 = vpack.c.b16 %v1313, %v1309
    %v1370 = vpack.c.b16 %v1314, %v1310
    %v1371 = vpack.c.b16 %v1315, %v1311
    %v1372 = vpack.c.b16 %v1320, %v1316
    %v1373 = vpack.c.b16 %v1321, %v1317
    %v1374 = vpack.c.b16 %v1322, %v1318
    %v1375 = vpack.c.b16 %v1323, %v1319
    %v1376 = vpack.c.b16 %v1328, %v1324
    %v1377 = vpack.c.b16 %v1329, %v1325
    %v1378 = vpack.c.b16 %v1330, %v1326
    %v1379 = vpack.c.b16 %v1331, %v1327
    %v1380 = vpack.c.b16 %v1336, %v1332
    %v1381 = vpack.c.b16 %v1337, %v1333
    %v1382 = vpack.c.b16 %v1338, %v1334
    %v1383 = vpack.c.b16 %v1339, %v1335
    %v1384 = vpack.c.b16 %v1344, %v1340
    %v1385 = vpack.c.b16 %v1345, %v1341
    %v1386 = vpack.c.b16 %v1346, %v1342
    %v1387 = vpack.c.b16 %v1347, %v1343
    %v1388 = vpack.c.b16 %v1352, %v1348
    %v1389 = vpack.c.b16 %v1353, %v1349
    %v1390 = vpack.c.b16 %v1354, %v1350
    %v1391 = vpack.c.b16 %v1355, %v1351
    %v1392 = vpack.c.b16 %v1360, %v1356
    %v1393 = vpack.c.b16 %v1361, %v1357
    %v1394 = vpack.c.b16 %v1362, %v1358
    %v1395 = vpack.c.b16 %v1363, %v1359
    %1428 = vmatprep.subr.bf16.mxu0 %v1365
    %1429 = vmatpush1.bf16.msra.mxu0 %v1364
    %1430 = vmatprep.subr.bf16.mxu0 %v1369
    %1431 = vmatpush1.bf16.msra.mxu0 %v1368
    %1432 = vmatprep.subr.bf16.mxu0 %v1373
    %1433 = vmatpush1.bf16.msra.mxu0 %v1372
    %1434 = vmatprep.subr.bf16.mxu0 %v1377
    %1435 = vmatpush1.bf16.msra.mxu0 %v1376
    %1436 = vmatprep.subr.bf16.mxu0 %v1381
    %1437 = vmatpush1.bf16.msra.mxu0 %v1380
    %1438 = vmatprep.subr.bf16.mxu0 %v1385
    %1439 = vmatpush1.bf16.msra.mxu0 %v1384
    %1440 = vmatprep.subr.bf16.mxu0 %v1389
    %1441 = vmatpush1.bf16.msra.mxu0 %v1388
    %1442 = vmatprep.subr.bf16.mxu0 %v1393
    %1443 = vmatpush1.bf16.msra.mxu0 %v1392
    %1444 = vmatprep.subr.bf16.mxu0 0
    %1445 = vmatpush1.bf16.msra.mxu0 0
    %1446 = vmatprep.subr.bf16.mxu0 0
    %1447 = vmatpush1.bf16.msra.mxu0 0
    %1448 = vmatprep.subr.bf16.mxu0 0
    %1449 = vmatpush1.bf16.msra.mxu0 0
    %1450 = vmatprep.subr.bf16.mxu0 0
    %1451 = vmatpush1.bf16.msra.mxu0 0
    %1452 = vmatprep.subr.bf16.mxu0 0
    %1453 = vmatpush1.bf16.msra.mxu0 0
    %1454 = vmatprep.subr.bf16.mxu0 0
    %1455 = vmatpush1.bf16.msra.mxu0 0
    %1456 = vmatprep.subr.bf16.mxu0 0
    %1457 = vmatpush1.bf16.msra.mxu0 0
    %1458 = vmatprep.subr.bf16.mxu0 0
    %1459 = vmatpush1.bf16.msra.mxu0 0
    %1460 = vmatprep.mubr.bf16.mxu0 0
    %1461 = vmatmul.mubr.bf16.gmra.mrb[0].mxu0 %v1260
    %v1462 = vpop.f32.mrb[0].mxu0
    %v1463 = vadd.f32 0.0, %v1462
    %v1464 = vpop.f32.mrb[0].mxu0
    %v1465 = vadd.f32 0.0, %v1464
    %v1466 = vpop.f32.mrb[0].mxu0
    %v1467 = vadd.f32 0.0, %v1466
    %v1468 = vpop.f32.mrb[0].mxu0
    %v1469 = vadd.f32 0.0, %v1468
    %1470 = vmatprep.mubr.bf16.mxu0 0
    %1471 = vmatmul.mubr.bf16.gmra.mrb[0].mxu0 %v1261
    %v1472 = vpop.f32.mrb[0].mxu0
    %v1473 = vadd.f32 0.0, %v1472
    %v1474 = vpop.f32.mrb[0].mxu0
    %v1475 = vadd.f32 0.0, %v1474
    %v1476 = vpop.f32.mrb[0].mxu0
    %v1477 = vadd.f32 0.0, %v1476
    %v1478 = vpop.f32.mrb[0].mxu0
    %v1479 = vadd.f32 0.0, %v1478
    %1480 = vmatprep.mubr.bf16.mxu0 0
    %1481 = vmatmul.mubr.bf16.gmra.mrb[0].mxu0 %v1262
    %v1482 = vpop.f32.mrb[0].mxu0
    %v1483 = vadd.f32 0.0, %v1482
    %v1484 = vpop.f32.mrb[0].mxu0
    %v1485 = vadd.f32 0.0, %v1484
    %v1486 = vpop.f32.mrb[0].mxu0
    %v1487 = vadd.f32 0.0, %v1486
    %v1488 = vpop.f32.mrb[0].mxu0
    %v1489 = vadd.f32 0.0, %v1488
    %1490 = vmatprep.mubr.bf16.mxu0 0
    %1491 = vmatmul.mubr.bf16.gmra.mrb[0].mxu0 %v1263
    %v1492 = vpop.f32.mrb[0].mxu0
    %v1493 = vadd.f32 0.0, %v1492
    %v1494 = vpop.f32.mrb[0].mxu0
    %v1495 = vadd.f32 0.0, %v1494
    %v1496 = vpop.f32.mrb[0].mxu0
    %v1497 = vadd.f32 0.0, %v1496
    %v1498 = vpop.f32.mrb[0].mxu0
    %v1499 = vadd.f32 0.0, %v1498
    %1500 = vdwg.mxu0
    %1501 = vmatprep.subr.bf16.mxu0 %v1367
    %1502 = vmatpush1.bf16.msra.mxu0 %v1366
    %1503 = vmatprep.subr.bf16.mxu0 %v1371
    %1504 = vmatpush1.bf16.msra.mxu0 %v1370
    %1505 = vmatprep.subr.bf16.mxu0 %v1375
    %1506 = vmatpush1.bf16.msra.mxu0 %v1374
    %1507 = vmatprep.subr.bf16.mxu0 %v1379
    %1508 = vmatpush1.bf16.msra.mxu0 %v1378
    %1509 = vmatprep.subr.bf16.mxu0 %v1383
    %1510 = vmatpush1.bf16.msra.mxu0 %v1382
    %1511 = vmatprep.subr.bf16.mxu0 %v1387
    %1512 = vmatpush1.bf16.msra.mxu0 %v1386
    %1513 = vmatprep.subr.bf16.mxu0 %v1391
    %1514 = vmatpush1.bf16.msra.mxu0 %v1390
    %1515 = vmatprep.subr.bf16.mxu0 %v1395
    %1516 = vmatpush1.bf16.msra.mxu0 %v1394
    %1517 = vmatprep.subr.bf16.mxu0 0
    %1518 = vmatpush1.bf16.msra.mxu0 0
    %1519 = vmatprep.subr.bf16.mxu0 0
    %1520 = vmatpush1.bf16.msra.mxu0 0
    %1521 = vmatprep.subr.bf16.mxu0 0
    %1522 = vmatpush1.bf16.msra.mxu0 0
    %1523 = vmatprep.subr.bf16.mxu0 0
    %1524 = vmatpush1.bf16.msra.mxu0 0
    %1525 = vmatprep.subr.bf16.mxu0 0
    %1526 = vmatpush1.bf16.msra.mxu0 0
    %1527 = vmatprep.subr.bf16.mxu0 0
    %1528 = vmatpush1.bf16.msra.mxu0 0
    %1529 = vmatprep.subr.bf16.mxu0 0
    %1530 = vmatpush1.bf16.msra.mxu0 0
    %1531 = vmatprep.subr.bf16.mxu0 0
    %1532 = vmatpush1.bf16.msra.mxu0 0
    %1533 = vmatprep.mubr.bf16.mxu0 0
    %1534 = vmatmul.mubr.bf16.gmra.mrb[0].mxu0 %v1260
    %v1535 = vpop.f32.mrb[0].mxu0
    %v1536 = vadd.f32 0.0, %v1535
    %v1537 = vpop.f32.mrb[0].mxu0
    %v1538 = vadd.f32 0.0, %v1537
    %v1539 = vpop.f32.mrb[0].mxu0
    %v1540 = vadd.f32 0.0, %v1539
    %v1541 = vpop.f32.mrb[0].mxu0
    %v1542 = vadd.f32 0.0, %v1541
    %1543 = vmatprep.mubr.bf16.mxu0 0
    %1544 = vmatmul.mubr.bf16.gmra.mrb[0].mxu0 %v1261
    %v1545 = vpop.f32.mrb[0].mxu0
    %v1546 = vadd.f32 0.0, %v1545
    %v1547 = vpop.f32.mrb[0].mxu0
    %v1548 = vadd.f32 0.0, %v1547
    %v1549 = vpop.f32.mrb[0].mxu0
    %v1550 = vadd.f32 0.0, %v1549
    %v1551 = vpop.f32.mrb[0].mxu0
    %v1552 = vadd.f32 0.0, %v1551
    %1553 = vmatprep.mubr.bf16.mxu0 0
    %1554 = vmatmul.mubr.bf16.gmra.mrb[0].mxu0 %v1262
    %v1555 = vpop.f32.mrb[0].mxu0
    %v1556 = vadd.f32 0.0, %v1555
    %v1557 = vpop.f32.mrb[0].mxu0
    %v1558 = vadd.f32 0.0, %v1557
    %v1559 = vpop.f32.mrb[0].mxu0
    %v1560 = vadd.f32 0.0, %v1559
    %v1561 = vpop.f32.mrb[0].mxu0
    %v1562 = vadd.f32 0.0, %v1561
    %1563 = vmatprep.mubr.bf16.mxu0 0
    %1564 = vmatmul.mubr.bf16.gmra.mrb[0].mxu0 %v1263
    %v1565 = vpop.f32.mrb[0].mxu0
    %v1566 = vadd.f32 0.0, %v1565
    %v1567 = vpop.f32.mrb[0].mxu0
    %v1568 = vadd.f32 0.0, %v1567
    %v1569 = vpop.f32.mrb[0].mxu0
    %v1570 = vadd.f32 0.0, %v1569
    %v1571 = vpop.f32.mrb[0].mxu0
    %v1572 = vadd.f32 0.0, %v1571
    %1573 = vdwg.mxu0
    %s1574 = scalar_lea.vmem %s3, 4
    %v1575 = vld [vmem:[%s1574] sm:$0xf]
    %v1577 = vlaneseq
    %v1578 = vshrl.u32 %v1577, 7
    %v1579 = vsub.s32 0, %v1578
    %v1580 = vrot.slane %v1575, %v1579
    %v1581 = vlaneseq
    %v1582 = vshrl.u32 %v1581, 7
    %v1583 = vsub.s32 1, %v1582
    %v1584 = vrot.slane %v1575, %v1583
    %v1585 = vlaneseq
    %v1586 = vshrl.u32 %v1585, 7
    %v1587 = vsub.s32 2, %v1586
    %v1588 = vrot.slane %v1575, %v1587
    %v1589 = vlaneseq
    %v1590 = vshrl.u32 %v1589, 7
    %v1591 = vsub.s32 3, %v1590
    %v1592 = vrot.slane %v1575, %v1591
    %v1597 = vadd.f32 %v1463, %v1580
    %v1598 = vadd.f32 %v1465, %v1584
    %v1599 = vadd.f32 %v1536, %v1588
    %v1600 = vadd.f32 %v1538, %v1592
    %v1601 = vadd.f32 %v1467, %v1580
    %v1602 = vadd.f32 %v1469, %v1584
    %v1603 = vadd.f32 %v1540, %v1588
    %v1604 = vadd.f32 %v1542, %v1592
    %v1605 = vadd.f32 %v1473, %v1580
    %v1606 = vadd.f32 %v1475, %v1584
    %v1607 = vadd.f32 %v1546, %v1588
    %v1608 = vadd.f32 %v1548, %v1592
    %v1609 = vadd.f32 %v1477, %v1580
    %v1610 = vadd.f32 %v1479, %v1584
    %v1611 = vadd.f32 %v1550, %v1588
    %v1612 = vadd.f32 %v1552, %v1592
    %v1613 = vadd.f32 %v1483, %v1580
    %v1614 = vadd.f32 %v1485, %v1584
    %v1615 = vadd.f32 %v1556, %v1588
    %v1616 = vadd.f32 %v1558, %v1592
    %v1617 = vadd.f32 %v1487, %v1580
    %v1618 = vadd.f32 %v1489, %v1584
    %v1619 = vadd.f32 %v1560, %v1588
    %v1620 = vadd.f32 %v1562, %v1592
    %v1621 = vadd.f32 %v1493, %v1580
    %v1622 = vadd.f32 %v1495, %v1584
    %v1623 = vadd.f32 %v1566, %v1588
    %v1624 = vadd.f32 %v1568, %v1592
    %v1625 = vadd.f32 %v1497, %v1580
    %v1626 = vadd.f32 %v1499, %v1584
    %v1627 = vadd.f32 %v1570, %v1588
    %v1628 = vadd.f32 %v1572, %v1592
    %1629 = vst [vmem:[#allocation2] sm:$0xff] %v1597
    %1630 = vst [vmem:[#allocation2 + $0x8] sm:$0xff] %v1598
    %1631 = vst [vmem:[#allocation2 + $0x10] sm:$0xff] %v1599
    %1632 = vst [vmem:[#allocation2 + $0x18] sm:$0xff] %v1600
    %1633 = vst [vmem:[#allocation2 + $0x20] sm:$0xff] %v1601
    %1634 = vst [vmem:[#allocation2 + $0x28] sm:$0xff] %v1602
    %1635 = vst [vmem:[#allocation2 + $0x30] sm:$0xff] %v1603
    %1636 = vst [vmem:[#allocation2 + $0x38] sm:$0xff] %v1604
    %1637 = vst [vmem:[#allocation2 + $0x40] sm:$0xff] %v1605
    %1638 = vst [vmem:[#allocation2 + $0x48] sm:$0xff] %v1606
    %1639 = vst [vmem:[#allocation2 + $0x50] sm:$0xff] %v1607
    %1640 = vst [vmem:[#allocation2 + $0x58] sm:$0xff] %v1608
    %1641 = vst [vmem:[#allocation2 + $0x60] sm:$0xff] %v1609
    %1642 = vst [vmem:[#allocation2 + $0x68] sm:$0xff] %v1610
    %1643 = vst [vmem:[#allocation2 + $0x70] sm:$0xff] %v1611
    %1644 = vst [vmem:[#allocation2 + $0x78] sm:$0xff] %v1612
    %1645 = vst [vmem:[#allocation2 + $0x80] sm:$0xff] %v1613
    %1646 = vst [vmem:[#allocation2 + $0x88] sm:$0xff] %v1614
    %1647 = vst [vmem:[#allocation2 + $0x90] sm:$0xff] %v1615
    %1648 = vst [vmem:[#allocation2 + $0x98] sm:$0xff] %v1616
    %1649 = vst [vmem:[#allocation2 + $0xa0] sm:$0xff] %v1617
    %1650 = vst [vmem:[#allocation2 + $0xa8] sm:$0xff] %v1618
    %1651 = vst [vmem:[#allocation2 + $0xb0] sm:$0xff] %v1619
    %1652 = vst [vmem:[#allocation2 + $0xb8] sm:$0xff] %v1620
    %1653 = vst [vmem:[#allocation2 + $0xc0] sm:$0xff] %v1621
    %1654 = vst [vmem:[#allocation2 + $0xc8] sm:$0xff] %v1622
    %1655 = vst [vmem:[#allocation2 + $0xd0] sm:$0xff] %v1623
    %1656 = vst [vmem:[#allocation2 + $0xd8] sm:$0xff] %v1624
    %1657 = vst [vmem:[#allocation2 + $0xe0] sm:$0xff] %v1625
    %1658 = vst [vmem:[#allocation2 + $0xe8] sm:$0xff] %v1626
    %1659 = vst [vmem:[#allocation2 + $0xf0] sm:$0xff] %v1627
    %1660 = vst [vmem:[#allocation2 + $0xf8] sm:$0xff] %v1628
    %1661 = vst [vmem:[#allocation4] sm:$0xff] 0.0
    %1662 = vst [vmem:[#allocation5] sm:$0xff] 0.0
    %v1663 = vld [vmem:[#allocation4] sm:$0xff]
    %v1664 = vld [vmem:[#allocation5] sm:$0xff]
    %v1665 = vld [vmem:[#allocation2] sm:$0xff]
    %v1666 = vld [vmem:[#allocation2 + $0x8] sm:$0xff]
    %v1667 = vld [vmem:[#allocation2 + $0x10] sm:$0xff]
    %v1668 = vld [vmem:[#allocation2 + $0x18] sm:$0xff]
    %v1669 = vpack.c.bf16 %v1663, %v1663
    %v1702 = vunpack.c.l.b16 %v1172
    %v1703 = vunpack.c.h.b16 %v1172
    %v1704 = vunpack.c.l.b16 %v1173
    %v1705 = vunpack.c.h.b16 %v1173
    %v1706 = vunpack.c.l.b16 %v1174
    %v1707 = vunpack.c.h.b16 %v1174
    %v1708 = vunpack.c.l.b16 %v1175
    %v1709 = vunpack.c.h.b16 %v1175
    %v1710 = vunpack.c.l.b16 %v1176
    %v1711 = vunpack.c.h.b16 %v1176
    %v1712 = vunpack.c.l.b16 %v1177
    %v1713 = vunpack.c.h.b16 %v1177
    %v1714 = vunpack.c.l.b16 %v1178
    %v1715 = vunpack.c.h.b16 %v1178
    %v1716 = vunpack.c.l.b16 %v1179
    %v1717 = vunpack.c.h.b16 %v1179
    %v1718 = vunpack.c.l.b16 %v1180
    %v1719 = vunpack.c.h.b16 %v1180
    %v1720 = vunpack.c.l.b16 %v1181
    %v1721 = vunpack.c.h.b16 %v1181
    %v1722 = vunpack.c.l.b16 %v1182
    %v1723 = vunpack.c.h.b16 %v1182
    %v1724 = vunpack.c.l.b16 %v1183
    %v1725 = vunpack.c.h.b16 %v1183
    %v1726 = vunpack.c.l.b16 %v1184
    %v1727 = vunpack.c.h.b16 %v1184
    %v1728 = vunpack.c.l.b16 %v1185
    %v1729 = vunpack.c.h.b16 %v1185
    %v1730 = vunpack.c.l.b16 %v1186
    %v1731 = vunpack.c.h.b16 %v1186
    %v1732 = vunpack.c.l.b16 %v1187
    %v1733 = vunpack.c.h.b16 %v1187
    %v1734 = vunpack.c.l.b16 %v1188
    %v1735 = vunpack.c.h.b16 %v1188
    %v1736 = vunpack.c.l.b16 %v1189
    %v1737 = vunpack.c.h.b16 %v1189
    %v1738 = vunpack.c.l.b16 %v1190
    %v1739 = vunpack.c.h.b16 %v1190
    %v1740 = vunpack.c.l.b16 %v1191
    %v1741 = vunpack.c.h.b16 %v1191
    %v1742 = vunpack.c.l.b16 %v1192
    %v1743 = vunpack.c.h.b16 %v1192
    %v1744 = vunpack.c.l.b16 %v1193
    %v1745 = vunpack.c.h.b16 %v1193
    %v1746 = vunpack.c.l.b16 %v1194
    %v1747 = vunpack.c.h.b16 %v1194
    %v1748 = vunpack.c.l.b16 %v1195
    %v1749 = vunpack.c.h.b16 %v1195
    %v1750 = vunpack.c.l.b16 %v1196
    %v1751 = vunpack.c.h.b16 %v1196
    %v1752 = vunpack.c.l.b16 %v1197
    %v1753 = vunpack.c.h.b16 %v1197
    %v1754 = vunpack.c.l.b16 %v1198
    %v1755 = vunpack.c.h.b16 %v1198
    %v1756 = vunpack.c.l.b16 %v1199
    %v1757 = vunpack.c.h.b16 %v1199
    %v1758 = vunpack.c.l.b16 %v1200
    %v1759 = vunpack.c.h.b16 %v1200
    %v1760 = vunpack.c.l.b16 %v1201
    %v1761 = vunpack.c.h.b16 %v1201
    %v1762 = vunpack.c.l.b16 %v1202
    %v1763 = vunpack.c.h.b16 %v1202
    %v1764 = vunpack.c.l.b16 %v1203
    %v1765 = vunpack.c.h.b16 %v1203
    %v1766 = vpack.c.b16 %v1706, %v1702
    %v1767 = vpack.c.b16 %v1707, %v1703
    %v1768 = vpack.c.b16 %v1708, %v1704
    %v1769 = vpack.c.b16 %v1709, %v1705
    %v1770 = vpack.c.b16 %v1714, %v1710
    %v1771 = vpack.c.b16 %v1715, %v1711
    %v1772 = vpack.c.b16 %v1716, %v1712
    %v1773 = vpack.c.b16 %v1717, %v1713
    %v1774 = vpack.c.b16 %v1722, %v1718
    %v1775 = vpack.c.b16 %v1723, %v1719
    %v1776 = vpack.c.b16 %v1724, %v1720
    %v1777 = vpack.c.b16 %v1725, %v1721
    %v1778 = vpack.c.b16 %v1730, %v1726
    %v1779 = vpack.c.b16 %v1731, %v1727
    %v1780 = vpack.c.b16 %v1732, %v1728
    %v1781 = vpack.c.b16 %v1733, %v1729
    %v1782 = vpack.c.b16 %v1738, %v1734
    %v1783 = vpack.c.b16 %v1739, %v1735
    %v1784 = vpack.c.b16 %v1740, %v1736
    %v1785 = vpack.c.b16 %v1741, %v1737
    %v1786 = vpack.c.b16 %v1746, %v1742
    %v1787 = vpack.c.b16 %v1747, %v1743
    %v1788 = vpack.c.b16 %v1748, %v1744
    %v1789 = vpack.c.b16 %v1749, %v1745
    %v1790 = vpack.c.b16 %v1754, %v1750
    %v1791 = vpack.c.b16 %v1755, %v1751
    %v1792 = vpack.c.b16 %v1756, %v1752
    %v1793 = vpack.c.b16 %v1757, %v1753
    %v1794 = vpack.c.b16 %v1762, %v1758
    %v1795 = vpack.c.b16 %v1763, %v1759
    %v1796 = vpack.c.b16 %v1764, %v1760
    %v1797 = vpack.c.b16 %v1765, %v1761
    %1830 = vmatprep.subr.bf16.mxu0 %v1767
    %1831 = vmatpush1.bf16.msra.mxu0 %v1766
    %1832 = vmatprep.subr.bf16.mxu0 %v1771
    %1833 = vmatpush1.bf16.msra.mxu0 %v1770
    %1834 = vmatprep.subr.bf16.mxu0 %v1775
    %1835 = vmatpush1.bf16.msra.mxu0 %v1774
    %1836 = vmatprep.subr.bf16.mxu0 %v1779
    %1837 = vmatpush1.bf16.msra.mxu0 %v1778
    %1838 = vmatprep.subr.bf16.mxu0 %v1783
    %1839 = vmatpush1.bf16.msra.mxu0 %v1782
    %1840 = vmatprep.subr.bf16.mxu0 %v1787
    %1841 = vmatpush1.bf16.msra.mxu0 %v1786
    %1842 = vmatprep.subr.bf16.mxu0 %v1791
    %1843 = vmatpush1.bf16.msra.mxu0 %v1790
    %1844 = vmatprep.subr.bf16.mxu0 %v1795
    %1845 = vmatpush1.bf16.msra.mxu0 %v1794
    %1846 = vmatprep.subr.bf16.mxu0 0
    %1847 = vmatpush1.bf16.msra.mxu0 0
    %1848 = vmatprep.subr.bf16.mxu0 0
    %1849 = vmatpush1.bf16.msra.mxu0 0
    %1850 = vmatprep.subr.bf16.mxu0 0
    %1851 = vmatpush1.bf16.msra.mxu0 0
    %1852 = vmatprep.subr.bf16.mxu0 0
    %1853 = vmatpush1.bf16.msra.mxu0 0
    %1854 = vmatprep.subr.bf16.mxu0 0
    %1855 = vmatpush1.bf16.msra.mxu0 0
    %1856 = vmatprep.subr.bf16.mxu0 0
    %1857 = vmatpush1.bf16.msra.mxu0 0
    %1858 = vmatprep.subr.bf16.mxu0 0
    %1859 = vmatpush1.bf16.msra.mxu0 0
    %1860 = vmatprep.subr.bf16.mxu0 0
    %1861 = vmatpush1.bf16.msra.mxu0 0
    %1862 = vmatprep.mubr.bf16.mxu0 0
    %1863 = vmatmul.mubr.bf16.gmra.mrb[0].mxu0 %v1669
    %v1864 = vpop.f32.mrb[0].mxu0
    %v1865 = vadd.f32 0.0, %v1864
    %v1866 = vpop.f32.mrb[0].mxu0
    %v1867 = vadd.f32 0.0, %v1866
    %v1868 = vpop.f32.mrb[0].mxu0
    %v1869 = vpop.f32.mrb[0].mxu0
    %1870 = vdwg.mxu0
    %1871 = vmatprep.subr.bf16.mxu0 %v1769
    %1872 = vmatpush1.bf16.msra.mxu0 %v1768
    %1873 = vmatprep.subr.bf16.mxu0 %v1773
    %1874 = vmatpush1.bf16.msra.mxu0 %v1772
    %1875 = vmatprep.subr.bf16.mxu0 %v1777
    %1876 = vmatpush1.bf16.msra.mxu0 %v1776
    %1877 = vmatprep.subr.bf16.mxu0 %v1781
    %1878 = vmatpush1.bf16.msra.mxu0 %v1780
    %1879 = vmatprep.subr.bf16.mxu0 %v1785
    %1880 = vmatpush1.bf16.msra.mxu0 %v1784
    %1881 = vmatprep.subr.bf16.mxu0 %v1789
    %1882 = vmatpush1.bf16.msra.mxu0 %v1788
    %1883 = vmatprep.subr.bf16.mxu0 %v1793
    %1884 = vmatpush1.bf16.msra.mxu0 %v1792
    %1885 = vmatprep.subr.bf16.mxu0 %v1797
    %1886 = vmatpush1.bf16.msra.mxu0 %v1796
    %1887 = vmatprep.subr.bf16.mxu0 0
    %1888 = vmatpush1.bf16.msra.mxu0 0
    %1889 = vmatprep.subr.bf16.mxu0 0
    %1890 = vmatpush1.bf16.msra.mxu0 0
    %1891 = vmatprep.subr.bf16.mxu0 0
    %1892 = vmatpush1.bf16.msra.mxu0 0
    %1893 = vmatprep.subr.bf16.mxu0 0
    %1894 = vmatpush1.bf16.msra.mxu0 0
    %1895 = vmatprep.subr.bf16.mxu0 0
    %1896 = vmatpush1.bf16.msra.mxu0 0
    %1897 = vmatprep.subr.bf16.mxu0 0
    %1898 = vmatpush1.bf16.msra.mxu0 0
    %1899 = vmatprep.subr.bf16.mxu0 0
    %1900 = vmatpush1.bf16.msra.mxu0 0
    %1901 = vmatprep.subr.bf16.mxu0 0
    %1902 = vmatpush1.bf16.msra.mxu0 0
    %1903 = vmatprep.mubr.bf16.mxu0 0
    %1904 = vmatmul.mubr.bf16.gmra.mrb[0].mxu0 %v1669
    %v1905 = vpop.f32.mrb[0].mxu0
    %v1906 = vadd.f32 0.0, %v1905
    %v1907 = vpop.f32.mrb[0].mxu0
    %v1908 = vadd.f32 0.0, %v1907
    %v1909 = vpop.f32.mrb[0].mxu0
    %v1910 = vpop.f32.mrb[0].mxu0
    %1911 = vdwg.mxu0
    %v1912 = vadd.f32 %v1665, %v1865
    %v1913 = vadd.f32 %v1666, %v1867
    %v1914 = vadd.f32 %v1667, %v1906
    %v1915 = vadd.f32 %v1668, %v1908
    %v1916 = vtanh.pop %v1912
    %v1917 = vmul.f32 %v1916, 0.5
    %v1918 = vadd.f32 %v1917, 0.5
    %v1919 = vtanh.pop %v1913
    %v1920 = vmul.f32 %v1919, 0.5
    %v1921 = vadd.f32 %v1920, 0.5
    %v1922 = vtanh.pop %v1914
    %v1923 = vtanh.pop %v1915
    %v1924 = vmul.f32 %v1923, 0.5
    %v1925 = vadd.f32 %v1924, 0.5
    %v1926 = vmul.f32 %v1921, %v1664
    %v1927 = vmul.f32 %v1918, %v1922
    %v1928 = vadd.f32 %v1926, %v1927
    %v1929 = vtanh.pop %v1928
    %v1930 = vmul.f32 %v1925, %v1929
    %1931 = vst [vmem:[#allocation4] sm:$0xff] %v1930
    %1932 = vst [vmem:[#allocation5] sm:$0xff] %v1928
    %v1933 = vpack.c.bf16 %v1930, %v1930
    %1934 = vst [vmem:[#allocation3] sm:$0xf] %v1933
    %v1935 = vld [vmem:[#allocation4] sm:$0xff]
    %v1936 = vld [vmem:[#allocation5] sm:$0xff]
    %s1937 = scalar_lea.vmem [#allocation2], 32
    %v1938 = vld [vmem:[%s1937] sm:$0xff]
    %v1939 = vld [vmem:[%s1937 + $0x8] sm:$0xff]
    %v1940 = vld [vmem:[%s1937 + $0x10] sm:$0xff]
    %v1941 = vld [vmem:[%s1937 + $0x18] sm:$0xff]
    %v1942 = vpack.c.bf16 %v1935, %v1935
    %1943 = vmatprep.subr.bf16.mxu0 %v1767
    %1944 = vmatpush1.bf16.msra.mxu0 %v1766
    %1945 = vmatprep.subr.bf16.mxu0 %v1771
    %1946 = vmatpush1.bf16.msra.mxu0 %v1770
    %1947 = vmatprep.subr.bf16.mxu0 %v1775
    %1948 = vmatpush1.bf16.msra.mxu0 %v1774
    %1949 = vmatprep.subr.bf16.mxu0 %v1779
    %1950 = vmatpush1.bf16.msra.mxu0 %v1778
    %1951 = vmatprep.subr.bf16.mxu0 %v1783
    %1952 = vmatpush1.bf16.msra.mxu0 %v1782
    %1953 = vmatprep.subr.bf16.mxu0 %v1787
    %1954 = vmatpush1.bf16.msra.mxu0 %v1786
    %1955 = vmatprep.subr.bf16.mxu0 %v1791
    %1956 = vmatpush1.bf16.msra.mxu0 %v1790
    %1957 = vmatprep.subr.bf16.mxu0 %v1795
    %1958 = vmatpush1.bf16.msra.mxu0 %v1794
    %1959 = vmatprep.subr.bf16.mxu0 0
    %1960 = vmatpush1.bf16.msra.mxu0 0
    %1961 = vmatprep.subr.bf16.mxu0 0
    %1962 = vmatpush1.bf16.msra.mxu0 0
    %1963 = vmatprep.subr.bf16.mxu0 0
    %1964 = vmatpush1.bf16.msra.mxu0 0
    %1965 = vmatprep.subr.bf16.mxu0 0
    %1966 = vmatpush1.bf16.msra.mxu0 0
    %1967 = vmatprep.subr.bf16.mxu0 0
    %1968 = vmatpush1.bf16.msra.mxu0 0
    %1969 = vmatprep.subr.bf16.mxu0 0
    %1970 = vmatpush1.bf16.msra.mxu0 0
    %1971 = vmatprep.subr.bf16.mxu0 0
    %1972 = vmatpush1.bf16.msra.mxu0 0
    %1973 = vmatprep.subr.bf16.mxu0 0
    %1974 = vmatpush1.bf16.msra.mxu0 0
    %1975 = vmatprep.mubr.bf16.mxu0 0
    %1976 = vmatmul.mubr.bf16.gmra.mrb[0].mxu0 %v1942
    %v1977 = vpop.f32.mrb[0].mxu0
    %v1978 = vadd.f32 0.0, %v1977
    %v1979 = vpop.f32.mrb[0].mxu0
    %v1980 = vadd.f32 0.0, %v1979
    %v1981 = vpop.f32.mrb[0].mxu0
    %v1982 = vpop.f32.mrb[0].mxu0
    %1983 = vdwg.mxu0
    %1984 = vmatprep.subr.bf16.mxu0 %v1769
    %1985 = vmatpush1.bf16.msra.mxu0 %v1768
    %1986 = vmatprep.subr.bf16.mxu0 %v1773
    %1987 = vmatpush1.bf16.msra.mxu0 %v1772
    %1988 = vmatprep.subr.bf16.mxu0 %v1777
    %1989 = vmatpush1.bf16.msra.mxu0 %v1776
    %1990 = vmatprep.subr.bf16.mxu0 %v1781
    %1991 = vmatpush1.bf16.msra.mxu0 %v1780
    %1992 = vmatprep.subr.bf16.mxu0 %v1785
    %1993 = vmatpush1.bf16.msra.mxu0 %v1784
    %1994 = vmatprep.subr.bf16.mxu0 %v1789
    %1995 = vmatpush1.bf16.msra.mxu0 %v1788
    %1996 = vmatprep.subr.bf16.mxu0 %v1793
    %1997 = vmatpush1.bf16.msra.mxu0 %v1792
    %1998 = vmatprep.subr.bf16.mxu0 %v1797
    %1999 = vmatpush1.bf16.msra.mxu0 %v1796
    %2000 = vmatprep.subr.bf16.mxu0 0
    %2001 = vmatpush1.bf16.msra.mxu0 0
    %2002 = vmatprep.subr.bf16.mxu0 0
    %2003 = vmatpush1.bf16.msra.mxu0 0
    %2004 = vmatprep.subr.bf16.mxu0 0
    %2005 = vmatpush1.bf16.msra.mxu0 0
    %2006 = vmatprep.subr.bf16.mxu0 0
    %2007 = vmatpush1.bf16.msra.mxu0 0
    %2008 = vmatprep.subr.bf16.mxu0 0
    %2009 = vmatpush1.bf16.msra.mxu0 0
    %2010 = vmatprep.subr.bf16.mxu0 0
    %2011 = vmatpush1.bf16.msra.mxu0 0
    %2012 = vmatprep.subr.bf16.mxu0 0
    %2013 = vmatpush1.bf16.msra.mxu0 0
    %2014 = vmatprep.subr.bf16.mxu0 0
    %2015 = vmatpush1.bf16.msra.mxu0 0
    %2016 = vmatprep.mubr.bf16.mxu0 0
    %2017 = vmatmul.mubr.bf16.gmra.mrb[0].mxu0 %v1942
    %v2018 = vpop.f32.mrb[0].mxu0
    %v2019 = vadd.f32 0.0, %v2018
    %v2020 = vpop.f32.mrb[0].mxu0
    %v2021 = vadd.f32 0.0, %v2020
    %v2022 = vpop.f32.mrb[0].mxu0
    %v2023 = vpop.f32.mrb[0].mxu0
    %2024 = vdwg.mxu0
    %v2025 = vadd.f32 %v1938, %v1978
    %v2026 = vadd.f32 %v1939, %v1980
    %v2027 = vadd.f32 %v1940, %v2019
    %v2028 = vadd.f32 %v1941, %v2021
    %v2029 = vtanh.pop %v2025
    %v2030 = vmul.f32 %v2029, 0.5
    %v2031 = vadd.f32 %v2030, 0.5
    %v2032 = vtanh.pop %v2026
    %v2033 = vmul.f32 %v2032, 0.5
    %v2034 = vadd.f32 %v2033, 0.5
    %v2035 = vtanh.pop %v2027
    %v2036 = vtanh.pop %v2028
    %v2037 = vmul.f32 %v2036, 0.5
    %v2038 = vadd.f32 %v2037, 0.5
    %v2039 = vmul.f32 %v2034, %v1936
    %v2040 = vmul.f32 %v2031, %v2035
    %v2041 = vadd.f32 %v2039, %v2040
    %v2042 = vtanh.pop %v2041
    %v2043 = vmul.f32 %v2038, %v2042
    %2044 = vst [vmem:[#allocation4] sm:$0xff] %v2043
    %2045 = vst [vmem:[#allocation5] sm:$0xff] %v2041
    %v2046 = vpack.c.bf16 %v2043, %v2043
    %2047 = vst [vmem:[%s481] sm:$0xf] %v2046
    %v2048 = vld [vmem:[#allocation4] sm:$0xff]
    %v2049 = vld [vmem:[#allocation5] sm:$0xff]
    %s2050 = scalar_lea.vmem [#allocation2], 64
    %v2051 = vld [vmem:[%s2050] sm:$0xff]
    %v2052 = vld [vmem:[%s2050 + $0x8] sm:$0xff]
    %v2053 = vld [vmem:[%s2050 + $0x10] sm:$0xff]
    %v2054 = vld [vmem:[%s2050 + $0x18] sm:$0xff]
    %v2055 = vpack.c.bf16 %v2048, %v2048
    %2056 = vmatprep.subr.bf16.mxu0 %v1767
    %2057 = vmatpush1.bf16.msra.mxu0 %v1766
    %2058 = vmatprep.subr.bf16.mxu0 %v1771
    %2059 = vmatpush1.bf16.msra.mxu0 %v1770
    %2060 = vmatprep.subr.bf16.mxu0 %v1775
    %2061 = vmatpush1.bf16.msra.mxu0 %v1774
    %2062 = vmatprep.subr.bf16.mxu0 %v1779
    %2063 = vmatpush1.bf16.msra.mxu0 %v1778
    %2064 = vmatprep.subr.bf16.mxu0 %v1783
    %2065 = vmatpush1.bf16.msra.mxu0 %v1782
    %2066 = vmatprep.subr.bf16.mxu0 %v1787
    %2067 = vmatpush1.bf16.msra.mxu0 %v1786
    %2068 = vmatprep.subr.bf16.mxu0 %v1791
    %2069 = vmatpush1.bf16.msra.mxu0 %v1790
    %2070 = vmatprep.subr.bf16.mxu0 %v1795
    %2071 = vmatpush1.bf16.msra.mxu0 %v1794
    %2072 = vmatprep.subr.bf16.mxu0 0
    %2073 = vmatpush1.bf16.msra.mxu0 0
    %2074 = vmatprep.subr.bf16.mxu0 0
    %2075 = vmatpush1.bf16.msra.mxu0 0
    %2076 = vmatprep.subr.bf16.mxu0 0
    %2077 = vmatpush1.bf16.msra.mxu0 0
    %2078 = vmatprep.subr.bf16.mxu0 0
    %2079 = vmatpush1.bf16.msra.mxu0 0
    %2080 = vmatprep.subr.bf16.mxu0 0
    %2081 = vmatpush1.bf16.msra.mxu0 0
    %2082 = vmatprep.subr.bf16.mxu0 0
    %2083 = vmatpush1.bf16.msra.mxu0 0
    %2084 = vmatprep.subr.bf16.mxu0 0
    %2085 = vmatpush1.bf16.msra.mxu0 0
    %2086 = vmatprep.subr.bf16.mxu0 0
    %2087 = vmatpush1.bf16.msra.mxu0 0
    %2088 = vmatprep.mubr.bf16.mxu0 0
    %2089 = vmatmul.mubr.bf16.gmra.mrb[0].mxu0 %v2055
    %v2090 = vpop.f32.mrb[0].mxu0
    %v2091 = vadd.f32 0.0, %v2090
    %v2092 = vpop.f32.mrb[0].mxu0
    %v2093 = vadd.f32 0.0, %v2092
    %v2094 = vpop.f32.mrb[0].mxu0
    %v2095 = vpop.f32.mrb[0].mxu0
    %2096 = vdwg.mxu0
    %2097 = vmatprep.subr.bf16.mxu0 %v1769
    %2098 = vmatpush1.bf16.msra.mxu0 %v1768
    %2099 = vmatprep.subr.bf16.mxu0 %v1773
    %2100 = vmatpush1.bf16.msra.mxu0 %v1772
    %2101 = vmatprep.subr.bf16.mxu0 %v1777
    %2102 = vmatpush1.bf16.msra.mxu0 %v1776
    %2103 = vmatprep.subr.bf16.mxu0 %v1781
    %2104 = vmatpush1.bf16.msra.mxu0 %v1780
    %2105 = vmatprep.subr.bf16.mxu0 %v1785
    %2106 = vmatpush1.bf16.msra.mxu0 %v1784
    %2107 = vmatprep.subr.bf16.mxu0 %v1789
    %2108 = vmatpush1.bf16.msra.mxu0 %v1788
    %2109 = vmatprep.subr.bf16.mxu0 %v1793
    %2110 = vmatpush1.bf16.msra.mxu0 %v1792
    %2111 = vmatprep.subr.bf16.mxu0 %v1797
    %2112 = vmatpush1.bf16.msra.mxu0 %v1796
    %2113 = vmatprep.subr.bf16.mxu0 0
    %2114 = vmatpush1.bf16.msra.mxu0 0
    %2115 = vmatprep.subr.bf16.mxu0 0
    %2116 = vmatpush1.bf16.msra.mxu0 0
    %2117 = vmatprep.subr.bf16.mxu0 0
    %2118 = vmatpush1.bf16.msra.mxu0 0
    %2119 = vmatprep.subr.bf16.mxu0 0
    %2120 = vmatpush1.bf16.msra.mxu0 0
    %2121 = vmatprep.subr.bf16.mxu0 0
    %2122 = vmatpush1.bf16.msra.mxu0 0
    %2123 = vmatprep.subr.bf16.mxu0 0
    %2124 = vmatpush1.bf16.msra.mxu0 0
    %2125 = vmatprep.subr.bf16.mxu0 0
    %2126 = vmatpush1.bf16.msra.mxu0 0
    %2127 = vmatprep.subr.bf16.mxu0 0
    %2128 = vmatpush1.bf16.msra.mxu0 0
    %2129 = vmatprep.mubr.bf16.mxu0 0
    %2130 = vmatmul.mubr.bf16.gmra.mrb[0].mxu0 %v2055
    %v2131 = vpop.f32.mrb[0].mxu0
    %v2132 = vadd.f32 0.0, %v2131
    %v2133 = vpop.f32.mrb[0].mxu0
    %v2134 = vadd.f32 0.0, %v2133
    %v2135 = vpop.f32.mrb[0].mxu0
    %v2136 = vpop.f32.mrb[0].mxu0
    %2137 = vdwg.mxu0
    %v2138 = vadd.f32 %v2051, %v2091
    %v2139 = vadd.f32 %v2052, %v2093
    %v2140 = vadd.f32 %v2053, %v2132
    %v2141 = vadd.f32 %v2054, %v2134
    %v2142 = vtanh.pop %v2138
    %v2143 = vmul.f32 %v2142, 0.5
    %v2144 = vadd.f32 %v2143, 0.5
    %v2145 = vtanh.pop %v2139
    %v2146 = vmul.f32 %v2145, 0.5
    %v2147 = vadd.f32 %v2146, 0.5
    %v2148 = vtanh.pop %v2140
    %v2149 = vtanh.pop %v2141
    %v2150 = vmul.f32 %v2149, 0.5
    %v2151 = vadd.f32 %v2150, 0.5
    %v2152 = vmul.f32 %v2147, %v2049
    %v2153 = vmul.f32 %v2144, %v2148
    %v2154 = vadd.f32 %v2152, %v2153
    %v2155 = vtanh.pop %v2154
    %v2156 = vmul.f32 %v2151, %v2155
    %2157 = vst [vmem:[#allocation4] sm:$0xff] %v2156
    %2158 = vst [vmem:[#allocation5] sm:$0xff] %v2154
    %v2159 = vpack.c.bf16 %v2156, %v2156
    %2160 = vst [vmem:[%s595] sm:$0xf] %v2159
    %v2161 = vld [vmem:[#allocation4] sm:$0xff]
    %v2162 = vld [vmem:[#allocation5] sm:$0xff]
    %s2163 = scalar_lea.vmem [#allocation2], 96
    %v2164 = vld [vmem:[%s2163] sm:$0xff]
    %v2165 = vld [vmem:[%s2163 + $0x8] sm:$0xff]
    %v2166 = vld [vmem:[%s2163 + $0x10] sm:$0xff]
    %v2167 = vld [vmem:[%s2163 + $0x18] sm:$0xff]
    %v2168 = vpack.c.bf16 %v2161, %v2161
    %2169 = vmatprep.subr.bf16.mxu0 %v1767
    %2170 = vmatpush1.bf16.msra.mxu0 %v1766
    %2171 = vmatprep.subr.bf16.mxu0 %v1771
    %2172 = vmatpush1.bf16.msra.mxu0 %v1770
    %2173 = vmatprep.subr.bf16.mxu0 %v1775
    %2174 = vmatpush1.bf16.msra.mxu0 %v1774
    %2175 = vmatprep.subr.bf16.mxu0 %v1779
    %2176 = vmatpush1.bf16.msra.mxu0 %v1778
    %2177 = vmatprep.subr.bf16.mxu0 %v1783
    %2178 = vmatpush1.bf16.msra.mxu0 %v1782
    %2179 = vmatprep.subr.bf16.mxu0 %v1787
    %2180 = vmatpush1.bf16.msra.mxu0 %v1786
    %2181 = vmatprep.subr.bf16.mxu0 %v1791
    %2182 = vmatpush1.bf16.msra.mxu0 %v1790
    %2183 = vmatprep.subr.bf16.mxu0 %v1795
    %2184 = vmatpush1.bf16.msra.mxu0 %v1794
    %2185 = vmatprep.subr.bf16.mxu0 0
    %2186 = vmatpush1.bf16.msra.mxu0 0
    %2187 = vmatprep.subr.bf16.mxu0 0
    %2188 = vmatpush1.bf16.msra.mxu0 0
    %2189 = vmatprep.subr.bf16.mxu0 0
    %2190 = vmatpush1.bf16.msra.mxu0 0
    %2191 = vmatprep.subr.bf16.mxu0 0
    %2192 = vmatpush1.bf16.msra.mxu0 0
    %2193 = vmatprep.subr.bf16.mxu0 0
    %2194 = vmatpush1.bf16.msra.mxu0 0
    %2195 = vmatprep.subr.bf16.mxu0 0
    %2196 = vmatpush1.bf16.msra.mxu0 0
    %2197 = vmatprep.subr.bf16.mxu0 0
    %2198 = vmatpush1.bf16.msra.mxu0 0
    %2199 = vmatprep.subr.bf16.mxu0 0
    %2200 = vmatpush1.bf16.msra.mxu0 0
    %2201 = vmatprep.mubr.bf16.mxu0 0
    %2202 = vmatmul.mubr.bf16.gmra.mrb[0].mxu0 %v2168
    %v2203 = vpop.f32.mrb[0].mxu0
    %v2204 = vadd.f32 0.0, %v2203
    %v2205 = vpop.f32.mrb[0].mxu0
    %v2206 = vadd.f32 0.0, %v2205
    %v2207 = vpop.f32.mrb[0].mxu0
    %v2208 = vpop.f32.mrb[0].mxu0
    %2209 = vdwg.mxu0
    %2210 = vmatprep.subr.bf16.mxu0 %v1769
    %2211 = vmatpush1.bf16.msra.mxu0 %v1768
    %2212 = vmatprep.subr.bf16.mxu0 %v1773
    %2213 = vmatpush1.bf16.msra.mxu0 %v1772
    %2214 = vmatprep.subr.bf16.mxu0 %v1777
    %2215 = vmatpush1.bf16.msra.mxu0 %v1776
    %2216 = vmatprep.subr.bf16.mxu0 %v1781
    %2217 = vmatpush1.bf16.msra.mxu0 %v1780
    %2218 = vmatprep.subr.bf16.mxu0 %v1785
    %2219 = vmatpush1.bf16.msra.mxu0 %v1784
    %2220 = vmatprep.subr.bf16.mxu0 %v1789
    %2221 = vmatpush1.bf16.msra.mxu0 %v1788
    %2222 = vmatprep.subr.bf16.mxu0 %v1793
    %2223 = vmatpush1.bf16.msra.mxu0 %v1792
    %2224 = vmatprep.subr.bf16.mxu0 %v1797
    %2225 = vmatpush1.bf16.msra.mxu0 %v1796
    %2226 = vmatprep.subr.bf16.mxu0 0
    %2227 = vmatpush1.bf16.msra.mxu0 0
    %2228 = vmatprep.subr.bf16.mxu0 0
    %2229 = vmatpush1.bf16.msra.mxu0 0
    %2230 = vmatprep.subr.bf16.mxu0 0
    %2231 = vmatpush1.bf16.msra.mxu0 0
    %2232 = vmatprep.subr.bf16.mxu0 0
    %2233 = vmatpush1.bf16.msra.mxu0 0
    %2234 = vmatprep.subr.bf16.mxu0 0
    %2235 = vmatpush1.bf16.msra.mxu0 0
    %2236 = vmatprep.subr.bf16.mxu0 0
    %2237 = vmatpush1.bf16.msra.mxu0 0
    %2238 = vmatprep.subr.bf16.mxu0 0
    %2239 = vmatpush1.bf16.msra.mxu0 0
    %2240 = vmatprep.subr.bf16.mxu0 0
    %2241 = vmatpush1.bf16.msra.mxu0 0
    %2242 = vmatprep.mubr.bf16.mxu0 0
    %2243 = vmatmul.mubr.bf16.gmra.mrb[0].mxu0 %v2168
    %v2244 = vpop.f32.mrb[0].mxu0
    %v2245 = vadd.f32 0.0, %v2244
    %v2246 = vpop.f32.mrb[0].mxu0
    %v2247 = vadd.f32 0.0, %v2246
    %v2248 = vpop.f32.mrb[0].mxu0
    %v2249 = vpop.f32.mrb[0].mxu0
    %2250 = vdwg.mxu0
    %v2251 = vadd.f32 %v2164, %v2204
    %v2252 = vadd.f32 %v2165, %v2206
    %v2253 = vadd.f32 %v2166, %v2245
    %v2254 = vadd.f32 %v2167, %v2247
    %v2255 = vtanh.pop %v2251
    %v2256 = vmul.f32 %v2255, 0.5
    %v2257 = vadd.f32 %v2256, 0.5
    %v2258 = vtanh.pop %v2252
    %v2259 = vmul.f32 %v2258, 0.5
    %v2260 = vadd.f32 %v2259, 0.5
    %v2261 = vtanh.pop %v2253
    %v2262 = vtanh.pop %v2254
    %v2263 = vmul.f32 %v2262, 0.5
    %v2264 = vadd.f32 %v2263, 0.5
    %v2265 = vmul.f32 %v2260, %v2162
    %v2266 = vmul.f32 %v2257, %v2261
    %v2267 = vadd.f32 %v2265, %v2266
    %v2268 = vtanh.pop %v2267
    %v2269 = vmul.f32 %v2264, %v2268
    %2270 = vst [vmem:[#allocation4] sm:$0xff] %v2269
    %2271 = vst [vmem:[#allocation5] sm:$0xff] %v2267
    %v2272 = vpack.c.bf16 %v2269, %v2269
    %2273 = vst [vmem:[%s709] sm:$0xf] %v2272
    %v2274 = vld [vmem:[#allocation4] sm:$0xff]
    %v2275 = vld [vmem:[#allocation5] sm:$0xff]
    %s2276 = scalar_lea.vmem [#allocation2], 128
    %v2277 = vld [vmem:[%s2276] sm:$0xff]
    %v2278 = vld [vmem:[%s2276 + $0x8] sm:$0xff]
    %v2279 = vld [vmem:[%s2276 + $0x10] sm:$0xff]
    %v2280 = vld [vmem:[%s2276 + $0x18] sm:$0xff]
    %v2281 = vpack.c.bf16 %v2274, %v2274
    %2282 = vmatprep.subr.bf16.mxu0 %v1767
    %2283 = vmatpush1.bf16.msra.mxu0 %v1766
    %2284 = vmatprep.subr.bf16.mxu0 %v1771
    %2285 = vmatpush1.bf16.msra.mxu0 %v1770
    %2286 = vmatprep.subr.bf16.mxu0 %v1775
    %2287 = vmatpush1.bf16.msra.mxu0 %v1774
    %2288 = vmatprep.subr.bf16.mxu0 %v1779
    %2289 = vmatpush1.bf16.msra.mxu0 %v1778
    %2290 = vmatprep.subr.bf16.mxu0 %v1783
    %2291 = vmatpush1.bf16.msra.mxu0 %v1782
    %2292 = vmatprep.subr.bf16.mxu0 %v1787
    %2293 = vmatpush1.bf16.msra.mxu0 %v1786
    %2294 = vmatprep.subr.bf16.mxu0 %v1791
    %2295 = vmatpush1.bf16.msra.mxu0 %v1790
    %2296 = vmatprep.subr.bf16.mxu0 %v1795
    %2297 = vmatpush1.bf16.msra.mxu0 %v1794
    %2298 = vmatprep.subr.bf16.mxu0 0
    %2299 = vmatpush1.bf16.msra.mxu0 0
    %2300 = vmatprep.subr.bf16.mxu0 0
    %2301 = vmatpush1.bf16.msra.mxu0 0
    %2302 = vmatprep.subr.bf16.mxu0 0
    %2303 = vmatpush1.bf16.msra.mxu0 0
    %2304 = vmatprep.subr.bf16.mxu0 0
    %2305 = vmatpush1.bf16.msra.mxu0 0
    %2306 = vmatprep.subr.bf16.mxu0 0
    %2307 = vmatpush1.bf16.msra.mxu0 0
    %2308 = vmatprep.subr.bf16.mxu0 0
    %2309 = vmatpush1.bf16.msra.mxu0 0
    %2310 = vmatprep.subr.bf16.mxu0 0
    %2311 = vmatpush1.bf16.msra.mxu0 0
    %2312 = vmatprep.subr.bf16.mxu0 0
    %2313 = vmatpush1.bf16.msra.mxu0 0
    %2314 = vmatprep.mubr.bf16.mxu0 0
    %2315 = vmatmul.mubr.bf16.gmra.mrb[0].mxu0 %v2281
    %v2316 = vpop.f32.mrb[0].mxu0
    %v2317 = vadd.f32 0.0, %v2316
    %v2318 = vpop.f32.mrb[0].mxu0
    %v2319 = vadd.f32 0.0, %v2318
    %v2320 = vpop.f32.mrb[0].mxu0
    %v2321 = vpop.f32.mrb[0].mxu0
    %2322 = vdwg.mxu0
    %2323 = vmatprep.subr.bf16.mxu0 %v1769
    %2324 = vmatpush1.bf16.msra.mxu0 %v1768
    %2325 = vmatprep.subr.bf16.mxu0 %v1773
    %2326 = vmatpush1.bf16.msra.mxu0 %v1772
    %2327 = vmatprep.subr.bf16.mxu0 %v1777
    %2328 = vmatpush1.bf16.msra.mxu0 %v1776
    %2329 = vmatprep.subr.bf16.mxu0 %v1781
    %2330 = vmatpush1.bf16.msra.mxu0 %v1780
    %2331 = vmatprep.subr.bf16.mxu0 %v1785
    %2332 = vmatpush1.bf16.msra.mxu0 %v1784
    %2333 = vmatprep.subr.bf16.mxu0 %v1789
    %2334 = vmatpush1.bf16.msra.mxu0 %v1788
    %2335 = vmatprep.subr.bf16.mxu0 %v1793
    %2336 = vmatpush1.bf16.msra.mxu0 %v1792
    %2337 = vmatprep.subr.bf16.mxu0 %v1797
    %2338 = vmatpush1.bf16.msra.mxu0 %v1796
    %2339 = vmatprep.subr.bf16.mxu0 0
    %2340 = vmatpush1.bf16.msra.mxu0 0
    %2341 = vmatprep.subr.bf16.mxu0 0
    %2342 = vmatpush1.bf16.msra.mxu0 0
    %2343 = vmatprep.subr.bf16.mxu0 0
    %2344 = vmatpush1.bf16.msra.mxu0 0
    %2345 = vmatprep.subr.bf16.mxu0 0
    %2346 = vmatpush1.bf16.msra.mxu0 0
    %2347 = vmatprep.subr.bf16.mxu0 0
    %2348 = vmatpush1.bf16.msra.mxu0 0
    %2349 = vmatprep.subr.bf16.mxu0 0
    %2350 = vmatpush1.bf16.msra.mxu0 0
    %2351 = vmatprep.subr.bf16.mxu0 0
    %2352 = vmatpush1.bf16.msra.mxu0 0
    %2353 = vmatprep.subr.bf16.mxu0 0
    %2354 = vmatpush1.bf16.msra.mxu0 0
    %2355 = vmatprep.mubr.bf16.mxu0 0
    %2356 = vmatmul.mubr.bf16.gmra.mrb[0].mxu0 %v2281
    %v2357 = vpop.f32.mrb[0].mxu0
    %v2358 = vadd.f32 0.0, %v2357
    %v2359 = vpop.f32.mrb[0].mxu0
    %v2360 = vadd.f32 0.0, %v2359
    %v2361 = vpop.f32.mrb[0].mxu0
    %v2362 = vpop.f32.mrb[0].mxu0
    %2363 = vdwg.mxu0
    %v2364 = vadd.f32 %v2277, %v2317
    %v2365 = vadd.f32 %v2278, %v2319
    %v2366 = vadd.f32 %v2279, %v2358
    %v2367 = vadd.f32 %v2280, %v2360
    %v2368 = vtanh.pop %v2364
    %v2369 = vmul.f32 %v2368, 0.5
    %v2370 = vadd.f32 %v2369, 0.5
    %v2371 = vtanh.pop %v2365
    %v2372 = vmul.f32 %v2371, 0.5
    %v2373 = vadd.f32 %v2372, 0.5
    %v2374 = vtanh.pop %v2366
    %v2375 = vtanh.pop %v2367
    %v2376 = vmul.f32 %v2375, 0.5
    %v2377 = vadd.f32 %v2376, 0.5
    %v2378 = vmul.f32 %v2373, %v2275
    %v2379 = vmul.f32 %v2370, %v2374
    %v2380 = vadd.f32 %v2378, %v2379
    %v2381 = vtanh.pop %v2380
    %v2382 = vmul.f32 %v2377, %v2381
    %2383 = vst [vmem:[#allocation4] sm:$0xff] %v2382
    %2384 = vst [vmem:[#allocation5] sm:$0xff] %v2380
    %v2385 = vpack.c.bf16 %v2382, %v2382
    %2386 = vst [vmem:[%s823] sm:$0xf] %v2385
    %v2387 = vld [vmem:[#allocation4] sm:$0xff]
    %v2388 = vld [vmem:[#allocation5] sm:$0xff]
    %s2389 = scalar_lea.vmem [#allocation2], 160
    %v2390 = vld [vmem:[%s2389] sm:$0xff]
    %v2391 = vld [vmem:[%s2389 + $0x8] sm:$0xff]
    %v2392 = vld [vmem:[%s2389 + $0x10] sm:$0xff]
    %v2393 = vld [vmem:[%s2389 + $0x18] sm:$0xff]
    %v2394 = vpack.c.bf16 %v2387, %v2387
    %2395 = vmatprep.subr.bf16.mxu0 %v1767
    %2396 = vmatpush1.bf16.msra.mxu0 %v1766
    %2397 = vmatprep.subr.bf16.mxu0 %v1771
    %2398 = vmatpush1.bf16.msra.mxu0 %v1770
    %2399 = vmatprep.subr.bf16.mxu0 %v1775
    %2400 = vmatpush1.bf16.msra.mxu0 %v1774
    %2401 = vmatprep.subr.bf16.mxu0 %v1779
    %2402 = vmatpush1.bf16.msra.mxu0 %v1778
    %2403 = vmatprep.subr.bf16.mxu0 %v1783
    %2404 = vmatpush1.bf16.msra.mxu0 %v1782
    %2405 = vmatprep.subr.bf16.mxu0 %v1787
    %2406 = vmatpush1.bf16.msra.mxu0 %v1786
    %2407 = vmatprep.subr.bf16.mxu0 %v1791
    %2408 = vmatpush1.bf16.msra.mxu0 %v1790
    %2409 = vmatprep.subr.bf16.mxu0 %v1795
    %2410 = vmatpush1.bf16.msra.mxu0 %v1794
    %2411 = vmatprep.subr.bf16.mxu0 0
    %2412 = vmatpush1.bf16.msra.mxu0 0
    %2413 = vmatprep.subr.bf16.mxu0 0
    %2414 = vmatpush1.bf16.msra.mxu0 0
    %2415 = vmatprep.subr.bf16.mxu0 0
    %2416 = vmatpush1.bf16.msra.mxu0 0
    %2417 = vmatprep.subr.bf16.mxu0 0
    %2418 = vmatpush1.bf16.msra.mxu0 0
    %2419 = vmatprep.subr.bf16.mxu0 0
    %2420 = vmatpush1.bf16.msra.mxu0 0
    %2421 = vmatprep.subr.bf16.mxu0 0
    %2422 = vmatpush1.bf16.msra.mxu0 0
    %2423 = vmatprep.subr.bf16.mxu0 0
    %2424 = vmatpush1.bf16.msra.mxu0 0
    %2425 = vmatprep.subr.bf16.mxu0 0
    %2426 = vmatpush1.bf16.msra.mxu0 0
    %2427 = vmatprep.mubr.bf16.mxu0 0
    %2428 = vmatmul.mubr.bf16.gmra.mrb[0].mxu0 %v2394
    %v2429 = vpop.f32.mrb[0].mxu0
    %v2430 = vadd.f32 0.0, %v2429
    %v2431 = vpop.f32.mrb[0].mxu0
    %v2432 = vadd.f32 0.0, %v2431
    %v2433 = vpop.f32.mrb[0].mxu0
    %v2434 = vpop.f32.mrb[0].mxu0
    %2435 = vdwg.mxu0
    %2436 = vmatprep.subr.bf16.mxu0 %v1769
    %2437 = vmatpush1.bf16.msra.mxu0 %v1768
    %2438 = vmatprep.subr.bf16.mxu0 %v1773
    %2439 = vmatpush1.bf16.msra.mxu0 %v1772
    %2440 = vmatprep.subr.bf16.mxu0 %v1777
    %2441 = vmatpush1.bf16.msra.mxu0 %v1776
    %2442 = vmatprep.subr.bf16.mxu0 %v1781
    %2443 = vmatpush1.bf16.msra.mxu0 %v1780
    %2444 = vmatprep.subr.bf16.mxu0 %v1785
    %2445 = vmatpush1.bf16.msra.mxu0 %v1784
    %2446 = vmatprep.subr.bf16.mxu0 %v1789
    %2447 = vmatpush1.bf16.msra.mxu0 %v1788
    %2448 = vmatprep.subr.bf16.mxu0 %v1793
    %2449 = vmatpush1.bf16.msra.mxu0 %v1792
    %2450 = vmatprep.subr.bf16.mxu0 %v1797
    %2451 = vmatpush1.bf16.msra.mxu0 %v1796
    %2452 = vmatprep.subr.bf16.mxu0 0
    %2453 = vmatpush1.bf16.msra.mxu0 0
    %2454 = vmatprep.subr.bf16.mxu0 0
    %2455 = vmatpush1.bf16.msra.mxu0 0
    %2456 = vmatprep.subr.bf16.mxu0 0
    %2457 = vmatpush1.bf16.msra.mxu0 0
    %2458 = vmatprep.subr.bf16.mxu0 0
    %2459 = vmatpush1.bf16.msra.mxu0 0
    %2460 = vmatprep.subr.bf16.mxu0 0
    %2461 = vmatpush1.bf16.msra.mxu0 0
    %2462 = vmatprep.subr.bf16.mxu0 0
    %2463 = vmatpush1.bf16.msra.mxu0 0
    %2464 = vmatprep.subr.bf16.mxu0 0
    %2465 = vmatpush1.bf16.msra.mxu0 0
    %2466 = vmatprep.subr.bf16.mxu0 0
    %2467 = vmatpush1.bf16.msra.mxu0 0
    %2468 = vmatprep.mubr.bf16.mxu0 0
    %2469 = vmatmul.mubr.bf16.gmra.mrb[0].mxu0 %v2394
    %v2470 = vpop.f32.mrb[0].mxu0
    %v2471 = vadd.f32 0.0, %v2470
    %v2472 = vpop.f32.mrb[0].mxu0
    %v2473 = vadd.f32 0.0, %v2472
    %v2474 = vpop.f32.mrb[0].mxu0
    %v2475 = vpop.f32.mrb[0].mxu0
    %2476 = vdwg.mxu0
    %v2477 = vadd.f32 %v2390, %v2430
    %v2478 = vadd.f32 %v2391, %v2432
    %v2479 = vadd.f32 %v2392, %v2471
    %v2480 = vadd.f32 %v2393, %v2473
    %v2481 = vtanh.pop %v2477
    %v2482 = vmul.f32 %v2481, 0.5
    %v2483 = vadd.f32 %v2482, 0.5
    %v2484 = vtanh.pop %v2478
    %v2485 = vmul.f32 %v2484, 0.5
    %v2486 = vadd.f32 %v2485, 0.5
    %v2487 = vtanh.pop %v2479
    %v2488 = vtanh.pop %v2480
    %v2489 = vmul.f32 %v2488, 0.5
    %v2490 = vadd.f32 %v2489, 0.5
    %v2491 = vmul.f32 %v2486, %v2388
    %v2492 = vmul.f32 %v2483, %v2487
    %v2493 = vadd.f32 %v2491, %v2492
    %v2494 = vtanh.pop %v2493
    %v2495 = vmul.f32 %v2490, %v2494
    %2496 = vst [vmem:[#allocation4] sm:$0xff] %v2495
    %2497 = vst [vmem:[#allocation5] sm:$0xff] %v2493
    %v2498 = vpack.c.bf16 %v2495, %v2495
    %2499 = vst [vmem:[%s937] sm:$0xf] %v2498
    %v2500 = vld [vmem:[#allocation4] sm:$0xff]
    %v2501 = vld [vmem:[#allocation5] sm:$0xff]
    %s2502 = scalar_lea.vmem [#allocation2], 192
    %v2503 = vld [vmem:[%s2502] sm:$0xff]
    %v2504 = vld [vmem:[%s2502 + $0x8] sm:$0xff]
    %v2505 = vld [vmem:[%s2502 + $0x10] sm:$0xff]
    %v2506 = vld [vmem:[%s2502 + $0x18] sm:$0xff]
    %v2507 = vpack.c.bf16 %v2500, %v2500
    %2508 = vmatprep.subr.bf16.mxu0 %v1767
    %2509 = vmatpush1.bf16.msra.mxu0 %v1766
    %2510 = vmatprep.subr.bf16.mxu0 %v1771
    %2511 = vmatpush1.bf16.msra.mxu0 %v1770
    %2512 = vmatprep.subr.bf16.mxu0 %v1775
    %2513 = vmatpush1.bf16.msra.mxu0 %v1774
    %2514 = vmatprep.subr.bf16.mxu0 %v1779
    %2515 = vmatpush1.bf16.msra.mxu0 %v1778
    %2516 = vmatprep.subr.bf16.mxu0 %v1783
    %2517 = vmatpush1.bf16.msra.mxu0 %v1782
    %2518 = vmatprep.subr.bf16.mxu0 %v1787
    %2519 = vmatpush1.bf16.msra.mxu0 %v1786
    %2520 = vmatprep.subr.bf16.mxu0 %v1791
    %2521 = vmatpush1.bf16.msra.mxu0 %v1790
    %2522 = vmatprep.subr.bf16.mxu0 %v1795
    %2523 = vmatpush1.bf16.msra.mxu0 %v1794
    %2524 = vmatprep.subr.bf16.mxu0 0
    %2525 = vmatpush1.bf16.msra.mxu0 0
    %2526 = vmatprep.subr.bf16.mxu0 0
    %2527 = vmatpush1.bf16.msra.mxu0 0
    %2528 = vmatprep.subr.bf16.mxu0 0
    %2529 = vmatpush1.bf16.msra.mxu0 0
    %2530 = vmatprep.subr.bf16.mxu0 0
    %2531 = vmatpush1.bf16.msra.mxu0 0
    %2532 = vmatprep.subr.bf16.mxu0 0
    %2533 = vmatpush1.bf16.msra.mxu0 0
    %2534 = vmatprep.subr.bf16.mxu0 0
    %2535 = vmatpush1.bf16.msra.mxu0 0
    %2536 = vmatprep.subr.bf16.mxu0 0
    %2537 = vmatpush1.bf16.msra.mxu0 0
    %2538 = vmatprep.subr.bf16.mxu0 0
    %2539 = vmatpush1.bf16.msra.mxu0 0
    %2540 = vmatprep.mubr.bf16.mxu0 0
    %2541 = vmatmul.mubr.bf16.gmra.mrb[0].mxu0 %v2507
    %v2542 = vpop.f32.mrb[0].mxu0
    %v2543 = vadd.f32 0.0, %v2542
    %v2544 = vpop.f32.mrb[0].mxu0
    %v2545 = vadd.f32 0.0, %v2544
    %v2546 = vpop.f32.mrb[0].mxu0
    %v2547 = vpop.f32.mrb[0].mxu0
    %2548 = vdwg.mxu0
    %2549 = vmatprep.subr.bf16.mxu0 %v1769
    %2550 = vmatpush1.bf16.msra.mxu0 %v1768
    %2551 = vmatprep.subr.bf16.mxu0 %v1773
    %2552 = vmatpush1.bf16.msra.mxu0 %v1772
    %2553 = vmatprep.subr.bf16.mxu0 %v1777
    %2554 = vmatpush1.bf16.msra.mxu0 %v1776
    %2555 = vmatprep.subr.bf16.mxu0 %v1781
    %2556 = vmatpush1.bf16.msra.mxu0 %v1780
    %2557 = vmatprep.subr.bf16.mxu0 %v1785
    %2558 = vmatpush1.bf16.msra.mxu0 %v1784
    %2559 = vmatprep.subr.bf16.mxu0 %v1789
    %2560 = vmatpush1.bf16.msra.mxu0 %v1788
    %2561 = vmatprep.subr.bf16.mxu0 %v1793
    %2562 = vmatpush1.bf16.msra.mxu0 %v1792
    %2563 = vmatprep.subr.bf16.mxu0 %v1797
    %2564 = vmatpush1.bf16.msra.mxu0 %v1796
    %2565 = vmatprep.subr.bf16.mxu0 0
    %2566 = vmatpush1.bf16.msra.mxu0 0
    %2567 = vmatprep.subr.bf16.mxu0 0
    %2568 = vmatpush1.bf16.msra.mxu0 0
    %2569 = vmatprep.subr.bf16.mxu0 0
    %2570 = vmatpush1.bf16.msra.mxu0 0
    %2571 = vmatprep.subr.bf16.mxu0 0
    %2572 = vmatpush1.bf16.msra.mxu0 0
    %2573 = vmatprep.subr.bf16.mxu0 0
    %2574 = vmatpush1.bf16.msra.mxu0 0
    %2575 = vmatprep.subr.bf16.mxu0 0
    %2576 = vmatpush1.bf16.msra.mxu0 0
    %2577 = vmatprep.subr.bf16.mxu0 0
    %2578 = vmatpush1.bf16.msra.mxu0 0
    %2579 = vmatprep.subr.bf16.mxu0 0
    %2580 = vmatpush1.bf16.msra.mxu0 0
    %2581 = vmatprep.mubr.bf16.mxu0 0
    %2582 = vmatmul.mubr.bf16.gmra.mrb[0].mxu0 %v2507
    %v2583 = vpop.f32.mrb[0].mxu0
    %v2584 = vadd.f32 0.0, %v2583
    %v2585 = vpop.f32.mrb[0].mxu0
    %v2586 = vadd.f32 0.0, %v2585
    %v2587 = vpop.f32.mrb[0].mxu0
    %v2588 = vpop.f32.mrb[0].mxu0
    %2589 = vdwg.mxu0
    %v2590 = vadd.f32 %v2503, %v2543
    %v2591 = vadd.f32 %v2504, %v2545
    %v2592 = vadd.f32 %v2505, %v2584
    %v2593 = vadd.f32 %v2506, %v2586
    %v2594 = vtanh.pop %v2590
    %v2595 = vmul.f32 %v2594, 0.5
    %v2596 = vadd.f32 %v2595, 0.5
    %v2597 = vtanh.pop %v2591
    %v2598 = vmul.f32 %v2597, 0.5
    %v2599 = vadd.f32 %v2598, 0.5
    %v2600 = vtanh.pop %v2592
    %v2601 = vtanh.pop %v2593
    %v2602 = vmul.f32 %v2601, 0.5
    %v2603 = vadd.f32 %v2602, 0.5
    %v2604 = vmul.f32 %v2599, %v2501
    %v2605 = vmul.f32 %v2596, %v2600
    %v2606 = vadd.f32 %v2604, %v2605
    %v2607 = vtanh.pop %v2606
    %v2608 = vmul.f32 %v2603, %v2607
    %2609 = vst [vmem:[#allocation4] sm:$0xff] %v2608
    %2610 = vst [vmem:[#allocation5] sm:$0xff] %v2606
    %v2611 = vpack.c.bf16 %v2608, %v2608
    %2612 = vst [vmem:[%s1051] sm:$0xf] %v2611
    %v2613 = vld [vmem:[#allocation4] sm:$0xff]
    %v2614 = vld [vmem:[#allocation5] sm:$0xff]
    %s2615 = scalar_lea.vmem [#allocation2], 224
    %v2616 = vld [vmem:[%s2615] sm:$0xff]
    %v2617 = vld [vmem:[%s2615 + $0x8] sm:$0xff]
    %v2618 = vld [vmem:[%s2615 + $0x10] sm:$0xff]
    %v2619 = vld [vmem:[%s2615 + $0x18] sm:$0xff]
    %v2620 = vpack.c.bf16 %v2613, %v2613
    %2621 = vmatprep.subr.bf16.mxu0 %v1767
    %2622 = vmatpush1.bf16.msra.mxu0 %v1766
    %2623 = vmatprep.subr.bf16.mxu0 %v1771
    %2624 = vmatpush1.bf16.msra.mxu0 %v1770
    %2625 = vmatprep.subr.bf16.mxu0 %v1775
    %2626 = vmatpush1.bf16.msra.mxu0 %v1774
    %2627 = vmatprep.subr.bf16.mxu0 %v1779
    %2628 = vmatpush1.bf16.msra.mxu0 %v1778
    %2629 = vmatprep.subr.bf16.mxu0 %v1783
    %2630 = vmatpush1.bf16.msra.mxu0 %v1782
    %2631 = vmatprep.subr.bf16.mxu0 %v1787
    %2632 = vmatpush1.bf16.msra.mxu0 %v1786
    %2633 = vmatprep.subr.bf16.mxu0 %v1791
    %2634 = vmatpush1.bf16.msra.mxu0 %v1790
    %2635 = vmatprep.subr.bf16.mxu0 %v1795
    %2636 = vmatpush1.bf16.msra.mxu0 %v1794
    %2637 = vmatprep.subr.bf16.mxu0 0
    %2638 = vmatpush1.bf16.msra.mxu0 0
    %2639 = vmatprep.subr.bf16.mxu0 0
    %2640 = vmatpush1.bf16.msra.mxu0 0
    %2641 = vmatprep.subr.bf16.mxu0 0
    %2642 = vmatpush1.bf16.msra.mxu0 0
    %2643 = vmatprep.subr.bf16.mxu0 0
    %2644 = vmatpush1.bf16.msra.mxu0 0
    %2645 = vmatprep.subr.bf16.mxu0 0
    %2646 = vmatpush1.bf16.msra.mxu0 0
    %2647 = vmatprep.subr.bf16.mxu0 0
    %2648 = vmatpush1.bf16.msra.mxu0 0
    %2649 = vmatprep.subr.bf16.mxu0 0
    %2650 = vmatpush1.bf16.msra.mxu0 0
    %2651 = vmatprep.subr.bf16.mxu0 0
    %2652 = vmatpush1.bf16.msra.mxu0 0
    %2653 = vmatprep.mubr.bf16.mxu0 0
    %2654 = vmatmul.mubr.bf16.gmra.mrb[0].mxu0 %v2620
    %v2655 = vpop.f32.mrb[0].mxu0
    %v2656 = vadd.f32 0.0, %v2655
    %v2657 = vpop.f32.mrb[0].mxu0
    %v2658 = vadd.f32 0.0, %v2657
    %v2659 = vpop.f32.mrb[0].mxu0
    %v2660 = vpop.f32.mrb[0].mxu0
    %2661 = vdwg.mxu0
    %2662 = vmatprep.subr.bf16.mxu0 %v1769
    %2663 = vmatpush1.bf16.msra.mxu0 %v1768
    %2664 = vmatprep.subr.bf16.mxu0 %v1773
    %2665 = vmatpush1.bf16.msra.mxu0 %v1772
    %2666 = vmatprep.subr.bf16.mxu0 %v1777
    %2667 = vmatpush1.bf16.msra.mxu0 %v1776
    %2668 = vmatprep.subr.bf16.mxu0 %v1781
    %2669 = vmatpush1.bf16.msra.mxu0 %v1780
    %2670 = vmatprep.subr.bf16.mxu0 %v1785
    %2671 = vmatpush1.bf16.msra.mxu0 %v1784
    %2672 = vmatprep.subr.bf16.mxu0 %v1789
    %2673 = vmatpush1.bf16.msra.mxu0 %v1788
    %2674 = vmatprep.subr.bf16.mxu0 %v1793
    %2675 = vmatpush1.bf16.msra.mxu0 %v1792
    %2676 = vmatprep.subr.bf16.mxu0 %v1797
    %2677 = vmatpush1.bf16.msra.mxu0 %v1796
    %2678 = vmatprep.subr.bf16.mxu0 0
    %2679 = vmatpush1.bf16.msra.mxu0 0
    %2680 = vmatprep.subr.bf16.mxu0 0
    %2681 = vmatpush1.bf16.msra.mxu0 0
    %2682 = vmatprep.subr.bf16.mxu0 0
    %2683 = vmatpush1.bf16.msra.mxu0 0
    %2684 = vmatprep.subr.bf16.mxu0 0
    %2685 = vmatpush1.bf16.msra.mxu0 0
    %2686 = vmatprep.subr.bf16.mxu0 0
    %2687 = vmatpush1.bf16.msra.mxu0 0
    %2688 = vmatprep.subr.bf16.mxu0 0
    %2689 = vmatpush1.bf16.msra.mxu0 0
    %2690 = vmatprep.subr.bf16.mxu0 0
    %2691 = vmatpush1.bf16.msra.mxu0 0
    %2692 = vmatprep.subr.bf16.mxu0 0
    %2693 = vmatpush1.bf16.msra.mxu0 0
    %2694 = vmatprep.mubr.bf16.mxu0 0
    %2695 = vmatmul.mubr.bf16.gmra.mrb[0].mxu0 %v2620
    %v2696 = vpop.f32.mrb[0].mxu0
    %v2697 = vadd.f32 0.0, %v2696
    %v2698 = vpop.f32.mrb[0].mxu0
    %v2699 = vadd.f32 0.0, %v2698
    %v2700 = vpop.f32.mrb[0].mxu0
    %v2701 = vpop.f32.mrb[0].mxu0
    %2702 = vdwg.mxu0
    %v2703 = vadd.f32 %v2616, %v2656
    %v2704 = vadd.f32 %v2617, %v2658
    %v2705 = vadd.f32 %v2618, %v2697
    %v2706 = vadd.f32 %v2619, %v2699
    %v2707 = vtanh.pop %v2703
    %v2708 = vmul.f32 %v2707, 0.5
    %v2709 = vadd.f32 %v2708, 0.5
    %v2710 = vtanh.pop %v2704
    %v2711 = vmul.f32 %v2710, 0.5
    %v2712 = vadd.f32 %v2711, 0.5
    %v2713 = vtanh.pop %v2705
    %v2714 = vtanh.pop %v2706
    %v2715 = vmul.f32 %v2714, 0.5
    %v2716 = vadd.f32 %v2715, 0.5
    %v2717 = vmul.f32 %v2712, %v2614
    %v2718 = vmul.f32 %v2709, %v2713
    %v2719 = vadd.f32 %v2717, %v2718
    %v2720 = vtanh.pop %v2719
    %v2721 = vmul.f32 %v2716, %v2720
    %2722 = vst [vmem:[#allocation4] sm:$0xff] %v2721
    %2723 = vst [vmem:[#allocation5] sm:$0xff] %v2719
    %v2724 = vpack.c.bf16 %v2721, %v2721
    %2725 = vst [vmem:[%s1165] sm:$0xf] %v2724
    %v2726 = vld [vmem:[#allocation4] sm:$0xff]
    %s2727 = scalar_lea.vmem [#allocation12], 8
    %2728 = vst [vmem:[%s2727] sm:$0xff] %v2726
    %v2729 = vld [vmem:[#allocation5] sm:$0xff]
    %s2730 = scalar_lea.vmem [#allocation13], 8
    %2731 = vst [vmem:[%s2730] sm:$0xff] %v2729
    // Predicated region
    $region30: #{tpu_custom_call.1} parent=1 // pred_check
      _
    $region31: #{tpu_custom_call.1} parent=1 // pred_check_branch
      %2733 = sbr.rel (0) target = $region33
    $region32: #{tpu_custom_call.1} parent=1 // pred_region
      %s2735 = ssub.s32 256, 256
      %2736 = vsyncadd [#allocation8], %s2735
      %s2737 = sshll.u32 [#allocation12], 4
      %s2738 = int_to_ptr.vmem [resolvable:$true] %s2737
      %2743 = dma.vmem_to_hbm [thread:$0]  %s2738, 256, %s4, [#allocation8], 128, 128, 8
    $region33: #{tpu_custom_call.1} parent=1 // pred_fallthru
      _
    // Predicated region
    $region34: #{tpu_custom_call.1} parent=1 // pred_check
      _
    $region35: #{tpu_custom_call.1} parent=1 // pred_check_branch
      %2745 = sbr.rel (0) target = $region37
    $region36: #{tpu_custom_call.1} parent=1 // pred_region
      %s2747 = ssub.s32 256, 256
      %2748 = vsyncadd [#allocation14], %s2747
      %s2749 = sshll.u32 [#allocation13], 4
      %s2750 = int_to_ptr.vmem [resolvable:$true] %s2749
      %2755 = dma.vmem_to_hbm [thread:$0]  %s2750, 256, %s5, [#allocation14], 128, 128, 8
    $region37: #{tpu_custom_call.1} parent=1 // pred_fallthru
      _
    // Predicated region
    $region38: #{tpu_custom_call.1} parent=1 // pred_check
      _
    $region39: #{tpu_custom_call.1} parent=1 // pred_check_branch
      %2757 = sbr.rel (0) target = $region41
    $region40: #{tpu_custom_call.1} parent=1 // pred_region
      %2758 = dma.done [#allocation8], 256
    $region41: #{tpu_custom_call.1} parent=1 // pred_fallthru
      _
    // Predicated region
    $region42: #{tpu_custom_call.1} parent=1 // pred_check
      _
    $region43: #{tpu_custom_call.1} parent=1 // pred_check_branch
      %2760 = sbr.rel (0) target = $region45
    $region44: #{tpu_custom_call.1} parent=1 // pred_region
      %2761 = dma.done [#allocation14], 256
    $region45: #{tpu_custom_call.1} parent=1 // pred_fallthru
      _
    %2762 = vsyncpa [#allocation7], 1
    %2763 = vsyncpa [#allocation10], 1
    %2764 = vsyncpa [#allocation8], 1
    %2765 = vsyncpa [#allocation14], 1

// kernel: tpu_custom_call.1
$region0: #{tpu_custom_call.1}
  #allocation0 [shape = 'u32[]', space=smem, size = 0x4, offset = 0x4, fixed_abs, tag = 'smem constant byte address 0x4 - core index']
  #allocation1 [shape = 'u32[144,128]{1,0:T(1,128)}', space=vmem, size = 0x12000, scoped, tag = 'internal scratch']
  #allocation2 [shape = 'f32[8,8,512]{2,1,0:T(8,128)}', space=vmem, size = 0x20000, scoped, tag = 'scratch operand']
  #allocation3 [shape = 'bf16[8,8,128]{2,1,0:T(8,128)(2,1)}', space=vmem, size = 0x4000, scoped, tag = 'scratch operand']
  #allocation4 [shape = 'f32[8,128]{1,0:T(8,128)}', space=vmem, size = 0x1000, scoped, tag = 'scratch operand']
  #allocation5 [shape = 'f32[8,128]{1,0:T(8,128)}', space=vmem, size = 0x1000, scoped, tag = 'scratch operand']
  %s0 = inlined_call_operand.hbm [shape: f32[8,8,512], index: 0, kind: input, shape index: {}]
  %s1 = inlined_call_operand.hbm [shape: bf16[1,128,512], index: 1, kind: input, shape index: {}]
  %s2 = inlined_call_operand.hbm [shape: bf16[2,128,512], index: 2, kind: input, shape index: {}]
  %s3 = inlined_call_operand.vmem [shape: f32[2,1,512], index: 3, kind: input, shape index: {}]
  %s4 = inlined_call_operand.hbm [shape: f32[2,8,128], index: 4, kind: output, shape index: {0}]
  %s5 = inlined_call_operand.hbm [shape: f32[2,8,128], index: 5, kind: output, shape index: {1}]
  %6 = xla_tuple %s4, %s5
  %s7 = sld [smem:[#allocation0]]
  $region46: #{tpu_custom_call.1} parent=0
    _
  %s9 = ssub.s32 1, %s7
  %s10 = scalar_select 0, %s9, %s7
  $region1: #{tpu_custom_call.1} parent=0
    #allocation6 [shape = 'u8[131072]{0}', space=vmem, size = 0x20000, scoped, tag = 'input window, operand 0, single buffered']
    #allocation7 [shape = 's32[1]{0}', space=sflag, size = 0x4, scoped, tag = 'scoped memory for tpu_custom_call.1']
    #allocation8 [shape = 's32[1]{0}', space=sflag, size = 0x4, scoped, tag = 'scoped memory for tpu_custom_call.1']
    #allocation9 [shape = 'u8[131072]{0}', space=vmem, size = 0x20000, scoped, tag = 'input window, operand 1, single buffered']
    #allocation10 [shape = 's32[1]{0}', space=sflag, size = 0x4, scoped, tag = 'scoped memory for tpu_custom_call.1']
    #allocation11 [shape = 'u8[262144]{0}', space=vmem, size = 0x40000, scoped, tag = 'input window, operand 2, single buffered']
    #allocation12 [shape = 'u8[8192]{0}', space=vmem, size = 0x2000, scoped, tag = 'output window, operand 0, single buffered']
    #allocation13 [shape = 'u8[8192]{0}', space=vmem, size = 0x2000, scoped, tag = 'output window, operand 1, single buffered']
    #allocation14 [shape = 's32[1]{0}', space=sflag, size = 0x4, scoped, tag = 'scoped memory for tpu_custom_call.1']
    %11 = vsyncpa [#allocation7], 0
    %12 = vsyncpa [#allocation10], 0
    %13 = vsyncpa [#allocation8], 0
    %14 = vsyncpa [#allocation14], 0
    // Predicated region
    $region2: #{tpu_custom_call.1} parent=1 // pred_check
      _
    $region3: #{tpu_custom_call.1} parent=1 // pred_check_branch
      %16 = sbr.rel (0) target = $region5
    $region4: #{tpu_custom_call.1} parent=1 // pred_region
      %s18 = ssub.s32 4096, 4096
      %19 = vsyncadd [#allocation7], %s18
      %s20 = sshll.u32 [#allocation6], 4
      %s21 = int_to_ptr.vmem [resolvable:$true] %s20
      %26 = dma.hbm_to_vmem [thread:$0]  %s0, 4096, %s21, [#allocation7], 512, 512, 32
    $region5: #{tpu_custom_call.1} parent=1 // pred_fallthru
      _
    // Predicated region
    $region6: #{tpu_custom_call.1} parent=1 // pred_check
      _
    $region7: #{tpu_custom_call.1} parent=1 // pred_check_branch
      %28 = sbr.rel (0) target = $region9
    $region8: #{tpu_custom_call.1} parent=1 // pred_region
      %s30 = ssub.s32 4096, 4096
      %31 = vsyncadd [#allocation10], %s30
      %s32 = sshll.u32 [#allocation9], 4
      %s33 = int_to_ptr.vmem [resolvable:$true] %s32
      %38 = dma.hbm_to_vmem [thread:$0]  %s1, 4096, %s33, [#allocation10], 256, 256, 16
    $region9: #{tpu_custom_call.1} parent=1 // pred_fallthru
      _
    // Predicated region
    $region10: #{tpu_custom_call.1} parent=1 // pred_check
      _
    $region11: #{tpu_custom_call.1} parent=1 // pred_check_branch
      %40 = sbr.rel (0) target = $region13
    $region12: #{tpu_custom_call.1} parent=1 // pred_region
      %s42 = ssub.s32 8192, 8192
      %43 = vsyncadd [#allocation10], %s42
      %s44 = sshll.u32 [#allocation11], 4
      %s45 = int_to_ptr.vmem [resolvable:$true] %s44
      %50 = dma.hbm_to_vmem [thread:$0]  %s2, 8192, %s45, [#allocation10], 256, 256, 16
    $region13: #{tpu_custom_call.1} parent=1 // pred_fallthru
      _
    // Predicated region
    $region14: #{tpu_custom_call.1} parent=1 // pred_check
      _
    $region15: #{tpu_custom_call.1} parent=1 // pred_check_branch
      %52 = sbr.rel (0) target = $region17
    $region16: #{tpu_custom_call.1} parent=1 // pred_region
      _
    $region17: #{tpu_custom_call.1} parent=1 // pred_fallthru
      _
    // Predicated region
    $region18: #{tpu_custom_call.1} parent=1 // pred_check
      _
    $region19: #{tpu_custom_call.1} parent=1 // pred_check_branch
      %54 = sbr.rel (0) target = $region21
    $region20: #{tpu_custom_call.1} parent=1 // pred_region
      %55 = dma.done [#allocation7], 4096
    $region21: #{tpu_custom_call.1} parent=1 // pred_fallthru
      _
    // Predicated region
    $region22: #{tpu_custom_call.1} parent=1 // pred_check
      _
    $region23: #{tpu_custom_call.1} parent=1 // pred_check_branch
      %57 = sbr.rel (0) target = $region25
    $region24: #{tpu_custom_call.1} parent=1 // pred_region
      %58 = dma.done [#allocation10], 4096
    $region25: #{tpu_custom_call.1} parent=1 // pred_fallthru
      _
    // Predicated region
    $region26: #{tpu_custom_call.1} parent=1 // pred_check
      _
    $region27: #{tpu_custom_call.1} parent=1 // pred_check_branch
      %60 = sbr.rel (0) target = $region29
    $region28: #{tpu_custom_call.1} parent=1 // pred_region
      %61 = dma.done [#allocation10], 8192
    $region29: #{tpu_custom_call.1} parent=1 // pred_fallthru
      _
    %v63 = vld [vmem:[#allocation11] sm:$0xff]
    %v64 = vld [vmem:[#allocation11 + $0x8] sm:$0xff]
    %v65 = vld [vmem:[#allocation11 + $0x10] sm:$0xff]
    %v66 = vld [vmem:[#allocation11 + $0x18] sm:$0xff]
    %v67 = vld [vmem:[#allocation11 + $0x20] sm:$0xff]
    %v68 = vld [vmem:[#allocation11 + $0x28] sm:$0xff]
    %v69 = vld [vmem:[#allocation11 + $0x30] sm:$0xff]
    %v70 = vld [vmem:[#allocation11 + $0x38] sm:$0xff]
    %v71 = vld [vmem:[#allocation11 + $0x40] sm:$0xff]
    %v72 = vld [vmem:[#allocation11 + $0x48] sm:$0xff]
    %v73 = vld [vmem:[#allocation11 + $0x50] sm:$0xff]
    %v74 = vld [vmem:[#allocation11 + $0x58] sm:$0xff]
    %v75 = vld [vmem:[#allocation11 + $0x60] sm:$0xff]
    %v76 = vld [vmem:[#allocation11 + $0x68] sm:$0xff]
    %v77 = vld [vmem:[#allocation11 + $0x70] sm:$0xff]
    %v78 = vld [vmem:[#allocation11 + $0x78] sm:$0xff]
    %v79 = vld [vmem:[#allocation11 + $0x80] sm:$0xff]
    %v80 = vld [vmem:[#allocation11 + $0x88] sm:$0xff]
    %v81 = vld [vmem:[#allocation11 + $0x90] sm:$0xff]
    %v82 = vld [vmem:[#allocation11 + $0x98] sm:$0xff]
    %v83 = vld [vmem:[#allocation11 + $0xa0] sm:$0xff]
    %v84 = vld [vmem:[#allocation11 + $0xa8] sm:$0xff]
    %v85 = vld [vmem:[#allocation11 + $0xb0] sm:$0xff]
    %v86 = vld [vmem:[#allocation11 + $0xb8] sm:$0xff]
    %v87 = vld [vmem:[#allocation11 + $0xc0] sm:$0xff]
    %v88 = vld [vmem:[#allocation11 + $0xc8] sm:$0xff]
    %v89 = vld [vmem:[#allocation11 + $0xd0] sm:$0xff]
    %v90 = vld [vmem:[#allocation11 + $0xd8] sm:$0xff]
    %v91 = vld [vmem:[#allocation11 + $0xe0] sm:$0xff]
    %v92 = vld [vmem:[#allocation11 + $0xe8] sm:$0xff]
    %v93 = vld [vmem:[#allocation11 + $0xf0] sm:$0xff]
    %v94 = vld [vmem:[#allocation11 + $0xf8] sm:$0xff]
    %95 = vst [vmem:[#allocation4] sm:$0xff] 0.0
    %96 = vst [vmem:[#allocation5] sm:$0xff] 0.0
    %v97 = vld [vmem:[#allocation4] sm:$0xff]
    %v98 = vld [vmem:[#allocation5] sm:$0xff]
    %v99 = vld [vmem:[#allocation6] sm:$0xff]
    %v100 = vld [vmem:[#allocation6 + $0x8] sm:$0xff]
    %v101 = vld [vmem:[#allocation6 + $0x10] sm:$0xff]
    %v102 = vld [vmem:[#allocation6 + $0x18] sm:$0xff]
    %v103 = vpack.c.bf16 %v97, %v97
    %v136 = vunpack.c.l.b16 %v63
    %v137 = vunpack.c.h.b16 %v63
    %v138 = vunpack.c.l.b16 %v64
    %v139 = vunpack.c.h.b16 %v64
    %v140 = vunpack.c.l.b16 %v65
    %v141 = vunpack.c.h.b16 %v65
    %v142 = vunpack.c.l.b16 %v66
    %v143 = vunpack.c.h.b16 %v66
    %v144 = vunpack.c.l.b16 %v67
    %v145 = vunpack.c.h.b16 %v67
    %v146 = vunpack.c.l.b16 %v68
    %v147 = vunpack.c.h.b16 %v68
    %v148 = vunpack.c.l.b16 %v69
    %v149 = vunpack.c.h.b16 %v69
    %v150 = vunpack.c.l.b16 %v70
    %v151 = vunpack.c.h.b16 %v70
    %v152 = vunpack.c.l.b16 %v71
    %v153 = vunpack.c.h.b16 %v71
    %v154 = vunpack.c.l.b16 %v72
    %v155 = vunpack.c.h.b16 %v72
    %v156 = vunpack.c.l.b16 %v73
    %v157 = vunpack.c.h.b16 %v73
    %v158 = vunpack.c.l.b16 %v74
    %v159 = vunpack.c.h.b16 %v74
    %v160 = vunpack.c.l.b16 %v75
    %v161 = vunpack.c.h.b16 %v75
    %v162 = vunpack.c.l.b16 %v76
    %v163 = vunpack.c.h.b16 %v76
    %v164 = vunpack.c.l.b16 %v77
    %v165 = vunpack.c.h.b16 %v77
    %v166 = vunpack.c.l.b16 %v78
    %v167 = vunpack.c.h.b16 %v78
    %v168 = vunpack.c.l.b16 %v79
    %v169 = vunpack.c.h.b16 %v79
    %v170 = vunpack.c.l.b16 %v80
    %v171 = vunpack.c.h.b16 %v80
    %v172 = vunpack.c.l.b16 %v81
    %v173 = vunpack.c.h.b16 %v81
    %v174 = vunpack.c.l.b16 %v82
    %v175 = vunpack.c.h.b16 %v82
    %v176 = vunpack.c.l.b16 %v83
    %v177 = vunpack.c.h.b16 %v83
    %v178 = vunpack.c.l.b16 %v84
    %v179 = vunpack.c.h.b16 %v84
    %v180 = vunpack.c.l.b16 %v85
    %v181 = vunpack.c.h.b16 %v85
    %v182 = vunpack.c.l.b16 %v86
    %v183 = vunpack.c.h.b16 %v86
    %v184 = vunpack.c.l.b16 %v87
    %v185 = vunpack.c.h.b16 %v87
    %v186 = vunpack.c.l.b16 %v88
    %v187 = vunpack.c.h.b16 %v88
    %v188 = vunpack.c.l.b16 %v89
    %v189 = vunpack.c.h.b16 %v89
    %v190 = vunpack.c.l.b16 %v90
    %v191 = vunpack.c.h.b16 %v90
    %v192 = vunpack.c.l.b16 %v91
    %v193 = vunpack.c.h.b16 %v91
    %v194 = vunpack.c.l.b16 %v92
    %v195 = vunpack.c.h.b16 %v92
    %v196 = vunpack.c.l.b16 %v93
    %v197 = vunpack.c.h.b16 %v93
    %v198 = vunpack.c.l.b16 %v94
    %v199 = vunpack.c.h.b16 %v94
    %v200 = vpack.c.b16 %v140, %v136
    %v201 = vpack.c.b16 %v141, %v137
    %v202 = vpack.c.b16 %v142, %v138
    %v203 = vpack.c.b16 %v143, %v139
    %v204 = vpack.c.b16 %v148, %v144
    %v205 = vpack.c.b16 %v149, %v145
    %v206 = vpack.c.b16 %v150, %v146
    %v207 = vpack.c.b16 %v151, %v147
    %v208 = vpack.c.b16 %v156, %v152
    %v209 = vpack.c.b16 %v157, %v153
    %v210 = vpack.c.b16 %v158, %v154
    %v211 = vpack.c.b16 %v159, %v155
    %v212 = vpack.c.b16 %v164, %v160
    %v213 = vpack.c.b16 %v165, %v161
    %v214 = vpack.c.b16 %v166, %v162
    %v215 = vpack.c.b16 %v167, %v163
    %v216 = vpack.c.b16 %v172, %v168
    %v217 = vpack.c.b16 %v173, %v169
    %v218 = vpack.c.b16 %v174, %v170
    %v219 = vpack.c.b16 %v175, %v171
    %v220 = vpack.c.b16 %v180, %v176
    %v221 = vpack.c.b16 %v181, %v177
    %v222 = vpack.c.b16 %v182, %v178
    %v223 = vpack.c.b16 %v183, %v179
    %v224 = vpack.c.b16 %v188, %v184
    %v225 = vpack.c.b16 %v189, %v185
    %v226 = vpack.c.b16 %v190, %v186
    %v227 = vpack.c.b16 %v191, %v187
    %v228 = vpack.c.b16 %v196, %v192
    %v229 = vpack.c.b16 %v197, %v193
    %v230 = vpack.c.b16 %v198, %v194
    %v231 = vpack.c.b16 %v199, %v195
    %264 = vmatprep.subr.bf16.mxu0 %v201
    %265 = vmatpush1.bf16.msra.mxu0 %v200
    %266 = vmatprep.subr.bf16.mxu0 %v205
    %267 = vmatpush1.bf16.msra.mxu0 %v204
    %268 = vmatprep.subr.bf16.mxu0 %v209
    %269 = vmatpush1.bf16.msra.mxu0 %v208
    %270 = vmatprep.subr.bf16.mxu0 %v213
    %271 = vmatpush1.bf16.msra.mxu0 %v212
    %272 = vmatprep.subr.bf16.mxu0 %v217
    %273 = vmatpush1.bf16.msra.mxu0 %v216
    %274 = vmatprep.subr.bf16.mxu0 %v221
    %275 = vmatpush1.bf16.msra.mxu0 %v220
    %276 = vmatprep.subr.bf16.mxu0 %v225
    %277 = vmatpush1.bf16.msra.mxu0 %v224
    %278 = vmatprep.subr.bf16.mxu0 %v229
    %279 = vmatpush1.bf16.msra.mxu0 %v228
    %280 = vmatprep.subr.bf16.mxu0 0
    %281 = vmatpush1.bf16.msra.mxu0 0
    %282 = vmatprep.subr.bf16.mxu0 0
    %283 = vmatpush1.bf16.msra.mxu0 0
    %284 = vmatprep.subr.bf16.mxu0 0
    %285 = vmatpush1.bf16.msra.mxu0 0
    %286 = vmatprep.subr.bf16.mxu0 0
    %287 = vmatpush1.bf16.msra.mxu0 0
    %288 = vmatprep.subr.bf16.mxu0 0
    %289 = vmatpush1.bf16.msra.mxu0 0
    %290 = vmatprep.subr.bf16.mxu0 0
    %291 = vmatpush1.bf16.msra.mxu0 0
    %292 = vmatprep.subr.bf16.mxu0 0
    %293 = vmatpush1.bf16.msra.mxu0 0
    %294 = vmatprep.subr.bf16.mxu0 0
    %295 = vmatpush1.bf16.msra.mxu0 0
    %296 = vmatprep.mubr.bf16.mxu0 0
    %297 = vmatmul.mubr.bf16.gmra.mrb[0].mxu0 %v103
    %v298 = vpop.f32.mrb[0].mxu0
    %v299 = vadd.f32 0.0, %v298
    %v300 = vpop.f32.mrb[0].mxu0
    %v301 = vadd.f32 0.0, %v300
    %v302 = vpop.f32.mrb[0].mxu0
    %v303 = vpop.f32.mrb[0].mxu0
    %304 = vdwg.mxu0
    %305 = vmatprep.subr.bf16.mxu0 %v203
    %306 = vmatpush1.bf16.msra.mxu0 %v202
    %307 = vmatprep.subr.bf16.mxu0 %v207
    %308 = vmatpush1.bf16.msra.mxu0 %v206
    %309 = vmatprep.subr.bf16.mxu0 %v211
    %310 = vmatpush1.bf16.msra.mxu0 %v210
    %311 = vmatprep.subr.bf16.mxu0 %v215
    %312 = vmatpush1.bf16.msra.mxu0 %v214
    %313 = vmatprep.subr.bf16.mxu0 %v219
    %314 = vmatpush1.bf16.msra.mxu0 %v218
    %315 = vmatprep.subr.bf16.mxu0 %v223
    %316 = vmatpush1.bf16.msra.mxu0 %v222
    %317 = vmatprep.subr.bf16.mxu0 %v227
    %318 = vmatpush1.bf16.msra.mxu0 %v226
    %319 = vmatprep.subr.bf16.mxu0 %v231
    %320 = vmatpush1.bf16.msra.mxu0 %v230
    %321 = vmatprep.subr.bf16.mxu0 0
    %322 = vmatpush1.bf16.msra.mxu0 0
    %323 = vmatprep.subr.bf16.mxu0 0
    %324 = vmatpush1.bf16.msra.mxu0 0
    %325 = vmatprep.subr.bf16.mxu0 0
    %326 = vmatpush1.bf16.msra.mxu0 0
    %327 = vmatprep.subr.bf16.mxu0 0
    %328 = vmatpush1.bf16.msra.mxu0 0
    %329 = vmatprep.subr.bf16.mxu0 0
    %330 = vmatpush1.bf16.msra.mxu0 0
    %331 = vmatprep.subr.bf16.mxu0 0
    %332 = vmatpush1.bf16.msra.mxu0 0
    %333 = vmatprep.subr.bf16.mxu0 0
    %334 = vmatpush1.bf16.msra.mxu0 0
    %335 = vmatprep.subr.bf16.mxu0 0
    %336 = vmatpush1.bf16.msra.mxu0 0
    %337 = vmatprep.mubr.bf16.mxu0 0
    %338 = vmatmul.mubr.bf16.gmra.mrb[0].mxu0 %v103
    %v339 = vpop.f32.mrb[0].mxu0
    %v340 = vadd.f32 0.0, %v339
    %v341 = vpop.f32.mrb[0].mxu0
    %v342 = vadd.f32 0.0, %v341
    %v343 = vpop.f32.mrb[0].mxu0
    %v344 = vpop.f32.mrb[0].mxu0
    %345 = vdwg.mxu0
    %v346 = vadd.f32 %v99, %v299
    %v347 = vadd.f32 %v100, %v301
    %v348 = vadd.f32 %v101, %v340
    %v349 = vadd.f32 %v102, %v342
    %v350 = vtanh.pop %v346
    %v351 = vmul.f32 %v350, 0.5
    %v352 = vadd.f32 %v351, 0.5
    %v353 = vtanh.pop %v347
    %v354 = vmul.f32 %v353, 0.5
    %v355 = vadd.f32 %v354, 0.5
    %v356 = vtanh.pop %v348
    %v357 = vtanh.pop %v349
    %v358 = vmul.f32 %v357, 0.5
    %v359 = vadd.f32 %v358, 0.5
    %v360 = vmul.f32 %v355, %v98
    %v361 = vmul.f32 %v352, %v356
    %v362 = vadd.f32 %v360, %v361
    %v363 = vtanh.pop %v362
    %v364 = vmul.f32 %v359, %v363
    %365 = vst [vmem:[#allocation4] sm:$0xff] %v364
    %366 = vst [vmem:[#allocation5] sm:$0xff] %v362
    %v367 = vpack.c.bf16 %v364, %v364
    %368 = vst [vmem:[#allocation3] sm:$0xf] %v367
    %v369 = vld [vmem:[#allocation4] sm:$0xff]
    %v370 = vld [vmem:[#allocation5] sm:$0xff]
    %s371 = scalar_lea.vmem [#allocation6], 32
    %v372 = vld [vmem:[%s371] sm:$0xff]
    %v373 = vld [vmem:[%s371 + $0x8] sm:$0xff]
    %v374 = vld [vmem:[%s371 + $0x10] sm:$0xff]
    %v375 = vld [vmem:[%s371 + $0x18] sm:$0xff]
    %v376 = vpack.c.bf16 %v369, %v369
    %377 = vmatprep.subr.bf16.mxu0 %v201
    %378 = vmatpush1.bf16.msra.mxu0 %v200
    %379 = vmatprep.subr.bf16.mxu0 %v205
    %380 = vmatpush1.bf16.msra.mxu0 %v204
    %381 = vmatprep.subr.bf16.mxu0 %v209
    %382 = vmatpush1.bf16.msra.mxu0 %v208
    %383 = vmatprep.subr.bf16.mxu0 %v213
    %384 = vmatpush1.bf16.msra.mxu0 %v212
    %385 = vmatprep.subr.bf16.mxu0 %v217
    %386 = vmatpush1.bf16.msra.mxu0 %v216
    %387 = vmatprep.subr.bf16.mxu0 %v221
    %388 = vmatpush1.bf16.msra.mxu0 %v220
    %389 = vmatprep.subr.bf16.mxu0 %v225
    %390 = vmatpush1.bf16.msra.mxu0 %v224
    %391 = vmatprep.subr.bf16.mxu0 %v229
    %392 = vmatpush1.bf16.msra.mxu0 %v228
    %393 = vmatprep.subr.bf16.mxu0 0
    %394 = vmatpush1.bf16.msra.mxu0 0
    %395 = vmatprep.subr.bf16.mxu0 0
    %396 = vmatpush1.bf16.msra.mxu0 0
    %397 = vmatprep.subr.bf16.mxu0 0
    %398 = vmatpush1.bf16.msra.mxu0 0
    %399 = vmatprep.subr.bf16.mxu0 0
    %400 = vmatpush1.bf16.msra.mxu0 0
    %401 = vmatprep.subr.bf16.mxu0 0
    %402 = vmatpush1.bf16.msra.mxu0 0
    %403 = vmatprep.subr.bf16.mxu0 0
    %404 = vmatpush1.bf16.msra.mxu0 0
    %405 = vmatprep.subr.bf16.mxu0 0
    %406 = vmatpush1.bf16.msra.mxu0 0
    %407 = vmatprep.subr.bf16.mxu0 0
    %408 = vmatpush1.bf16.msra.mxu0 0
    %409 = vmatprep.mubr.bf16.mxu0 0
    %410 = vmatmul.mubr.bf16.gmra.mrb[0].mxu0 %v376
    %v411 = vpop.f32.mrb[0].mxu0
    %v412 = vadd.f32 0.0, %v411
    %v413 = vpop.f32.mrb[0].mxu0
    %v414 = vadd.f32 0.0, %v413
    %v415 = vpop.f32.mrb[0].mxu0
    %v416 = vpop.f32.mrb[0].mxu0
    %417 = vdwg.mxu0
    %418 = vmatprep.subr.bf16.mxu0 %v203
    %419 = vmatpush1.bf16.msra.mxu0 %v202
    %420 = vmatprep.subr.bf16.mxu0 %v207
    %421 = vmatpush1.bf16.msra.mxu0 %v206
    %422 = vmatprep.subr.bf16.mxu0 %v211
    %423 = vmatpush1.bf16.msra.mxu0 %v210
    %424 = vmatprep.subr.bf16.mxu0 %v215
    %425 = vmatpush1.bf16.msra.mxu0 %v214
    %426 = vmatprep.subr.bf16.mxu0 %v219
    %427 = vmatpush1.bf16.msra.mxu0 %v218
    %428 = vmatprep.subr.bf16.mxu0 %v223
    %429 = vmatpush1.bf16.msra.mxu0 %v222
    %430 = vmatprep.subr.bf16.mxu0 %v227
    %431 = vmatpush1.bf16.msra.mxu0 %v226
    %432 = vmatprep.subr.bf16.mxu0 %v231
    %433 = vmatpush1.bf16.msra.mxu0 %v230
    %434 = vmatprep.subr.bf16.mxu0 0
    %435 = vmatpush1.bf16.msra.mxu0 0
    %436 = vmatprep.subr.bf16.mxu0 0
    %437 = vmatpush1.bf16.msra.mxu0 0
    %438 = vmatprep.subr.bf16.mxu0 0
    %439 = vmatpush1.bf16.msra.mxu0 0
    %440 = vmatprep.subr.bf16.mxu0 0
    %441 = vmatpush1.bf16.msra.mxu0 0
    %442 = vmatprep.subr.bf16.mxu0 0
    %443 = vmatpush1.bf16.msra.mxu0 0
    %444 = vmatprep.subr.bf16.mxu0 0
    %445 = vmatpush1.bf16.msra.mxu0 0
    %446 = vmatprep.subr.bf16.mxu0 0
    %447 = vmatpush1.bf16.msra.mxu0 0
    %448 = vmatprep.subr.bf16.mxu0 0
    %449 = vmatpush1.bf16.msra.mxu0 0
    %450 = vmatprep.mubr.bf16.mxu0 0
    %451 = vmatmul.mubr.bf16.gmra.mrb[0].mxu0 %v376
    %v452 = vpop.f32.mrb[0].mxu0
    %v453 = vadd.f32 0.0, %v452
    %v454 = vpop.f32.mrb[0].mxu0
    %v455 = vadd.f32 0.0, %v454
    %v456 = vpop.f32.mrb[0].mxu0
    %v457 = vpop.f32.mrb[0].mxu0
    %458 = vdwg.mxu0
    %v459 = vadd.f32 %v372, %v412
    %v460 = vadd.f32 %v373, %v414
    %v461 = vadd.f32 %v374, %v453
    %v462 = vadd.f32 %v375, %v455
    %v463 = vtanh.pop %v459
    %v464 = vmul.f32 %v463, 0.5
    %v465 = vadd.f32 %v464, 0.5
    %v466 = vtanh.pop %v460
    %v467 = vmul.f32 %v466, 0.5
    %v468 = vadd.f32 %v467, 0.5
    %v469 = vtanh.pop %v461
    %v470 = vtanh.pop %v462
    %v471 = vmul.f32 %v470, 0.5
    %v472 = vadd.f32 %v471, 0.5
    %v473 = vmul.f32 %v468, %v370
    %v474 = vmul.f32 %v465, %v469
    %v475 = vadd.f32 %v473, %v474
    %v476 = vtanh.pop %v475
    %v477 = vmul.f32 %v472, %v476
    %478 = vst [vmem:[#allocation4] sm:$0xff] %v477
    %479 = vst [vmem:[#allocation5] sm:$0xff] %v475
    %v480 = vpack.c.bf16 %v477, %v477
    %s481 = scalar_lea.vmem [#allocation3], 4
    %482 = vst [vmem:[%s481] sm:$0xf] %v480
    %v483 = vld [vmem:[#allocation4] sm:$0xff]
    %v484 = vld [vmem:[#allocation5] sm:$0xff]
    %s485 = scalar_lea.vmem [#allocation6], 64
    %v486 = vld [vmem:[%s485] sm:$0xff]
    %v487 = vld [vmem:[%s485 + $0x8] sm:$0xff]
    %v488 = vld [vmem:[%s485 + $0x10] sm:$0xff]
    %v489 = vld [vmem:[%s485 + $0x18] sm:$0xff]
    %v490 = vpack.c.bf16 %v483, %v483
    %491 = vmatprep.subr.bf16.mxu0 %v201
    %492 = vmatpush1.bf16.msra.mxu0 %v200
    %493 = vmatprep.subr.bf16.mxu0 %v205
    %494 = vmatpush1.bf16.msra.mxu0 %v204
    %495 = vmatprep.subr.bf16.mxu0 %v209
    %496 = vmatpush1.bf16.msra.mxu0 %v208
    %497 = vmatprep.subr.bf16.mxu0 %v213
    %498 = vmatpush1.bf16.msra.mxu0 %v212
    %499 = vmatprep.subr.bf16.mxu0 %v217
    %500 = vmatpush1.bf16.msra.mxu0 %v216
    %501 = vmatprep.subr.bf16.mxu0 %v221
    %502 = vmatpush1.bf16.msra.mxu0 %v220
    %503 = vmatprep.subr.bf16.mxu0 %v225
    %504 = vmatpush1.bf16.msra.mxu0 %v224
    %505 = vmatprep.subr.bf16.mxu0 %v229
    %506 = vmatpush1.bf16.msra.mxu0 %v228
    %507 = vmatprep.subr.bf16.mxu0 0
    %508 = vmatpush1.bf16.msra.mxu0 0
    %509 = vmatprep.subr.bf16.mxu0 0
    %510 = vmatpush1.bf16.msra.mxu0 0
    %511 = vmatprep.subr.bf16.mxu0 0
    %512 = vmatpush1.bf16.msra.mxu0 0
    %513 = vmatprep.subr.bf16.mxu0 0
    %514 = vmatpush1.bf16.msra.mxu0 0
    %515 = vmatprep.subr.bf16.mxu0 0
    %516 = vmatpush1.bf16.msra.mxu0 0
    %517 = vmatprep.subr.bf16.mxu0 0
    %518 = vmatpush1.bf16.msra.mxu0 0
    %519 = vmatprep.subr.bf16.mxu0 0
    %520 = vmatpush1.bf16.msra.mxu0 0
    %521 = vmatprep.subr.bf16.mxu0 0
    %522 = vmatpush1.bf16.msra.mxu0 0
    %523 = vmatprep.mubr.bf16.mxu0 0
    %524 = vmatmul.mubr.bf16.gmra.mrb[0].mxu0 %v490
    %v525 = vpop.f32.mrb[0].mxu0
    %v526 = vadd.f32 0.0, %v525
    %v527 = vpop.f32.mrb[0].mxu0
    %v528 = vadd.f32 0.0, %v527
    %v529 = vpop.f32.mrb[0].mxu0
    %v530 = vpop.f32.mrb[0].mxu0
    %531 = vdwg.mxu0
    %532 = vmatprep.subr.bf16.mxu0 %v203
    %533 = vmatpush1.bf16.msra.mxu0 %v202
    %534 = vmatprep.subr.bf16.mxu0 %v207
    %535 = vmatpush1.bf16.msra.mxu0 %v206
    %536 = vmatprep.subr.bf16.mxu0 %v211
    %537 = vmatpush1.bf16.msra.mxu0 %v210
    %538 = vmatprep.subr.bf16.mxu0 %v215
    %539 = vmatpush1.bf16.msra.mxu0 %v214
    %540 = vmatprep.subr.bf16.mxu0 %v219
    %541 = vmatpush1.bf16.msra.mxu0 %v218
    %542 = vmatprep.subr.bf16.mxu0 %v223
    %543 = vmatpush1.bf16.msra.mxu0 %v222
    %544 = vmatprep.subr.bf16.mxu0 %v227
    %545 = vmatpush1.bf16.msra.mxu0 %v226
    %546 = vmatprep.subr.bf16.mxu0 %v231
    %547 = vmatpush1.bf16.msra.mxu0 %v230
    %548 = vmatprep.subr.bf16.mxu0 0
    %549 = vmatpush1.bf16.msra.mxu0 0
    %550 = vmatprep.subr.bf16.mxu0 0
    %551 = vmatpush1.bf16.msra.mxu0 0
    %552 = vmatprep.subr.bf16.mxu0 0
    %553 = vmatpush1.bf16.msra.mxu0 0
    %554 = vmatprep.subr.bf16.mxu0 0
    %555 = vmatpush1.bf16.msra.mxu0 0
    %556 = vmatprep.subr.bf16.mxu0 0
    %557 = vmatpush1.bf16.msra.mxu0 0
    %558 = vmatprep.subr.bf16.mxu0 0
    %559 = vmatpush1.bf16.msra.mxu0 0
    %560 = vmatprep.subr.bf16.mxu0 0
    %561 = vmatpush1.bf16.msra.mxu0 0
    %562 = vmatprep.subr.bf16.mxu0 0
    %563 = vmatpush1.bf16.msra.mxu0 0
    %564 = vmatprep.mubr.bf16.mxu0 0
    %565 = vmatmul.mubr.bf16.gmra.mrb[0].mxu0 %v490
    %v566 = vpop.f32.mrb[0].mxu0
    %v567 = vadd.f32 0.0, %v566
    %v568 = vpop.f32.mrb[0].mxu0
    %v569 = vadd.f32 0.0, %v568
    %v570 = vpop.f32.mrb[0].mxu0
    %v571 = vpop.f32.mrb[0].mxu0
    %572 = vdwg.mxu0
    %v573 = vadd.f32 %v486, %v526
    %v574 = vadd.f32 %v487, %v528
    %v575 = vadd.f32 %v488, %v567
    %v576 = vadd.f32 %v489, %v569
    %v577 = vtanh.pop %v573
    %v578 = vmul.f32 %v577, 0.5
    %v579 = vadd.f32 %v578, 0.5
    %v580 = vtanh.pop %v574
    %v581 = vmul.f32 %v580, 0.5
    %v582 = vadd.f32 %v581, 0.5
    %v583 = vtanh.pop %v575
    %v584 = vtanh.pop %v576
    %v585 = vmul.f32 %v584, 0.5
    %v586 = vadd.f32 %v585, 0.5
    %v587 = vmul.f32 %v582, %v484
    %v588 = vmul.f32 %v579, %v583
    %v589 = vadd.f32 %v587, %v588
    %v590 = vtanh.pop %v589
    %v591 = vmul.f32 %v586, %v590
    %592 = vst [vmem:[#allocation4] sm:$0xff] %v591
    %593 = vst [vmem:[#allocation5] sm:$0xff] %v589
    %v594 = vpack.c.bf16 %v591, %v591
    %s595 = scalar_lea.vmem [#allocation3], 8
    %596 = vst [vmem:[%s595] sm:$0xf] %v594
    %v597 = vld [vmem:[#allocation4] sm:$0xff]
    %v598 = vld [vmem:[#allocation5] sm:$0xff]
    %s599 = scalar_lea.vmem [#allocation6], 96
    %v600 = vld [vmem:[%s599] sm:$0xff]
    %v601 = vld [vmem:[%s599 + $0x8] sm:$0xff]
    %v602 = vld [vmem:[%s599 + $0x10] sm:$0xff]
    %v603 = vld [vmem:[%s599 + $0x18] sm:$0xff]
    %v604 = vpack.c.bf16 %v597, %v597
    %605 = vmatprep.subr.bf16.mxu0 %v201
    %606 = vmatpush1.bf16.msra.mxu0 %v200
    %607 = vmatprep.subr.bf16.mxu0 %v205
    %608 = vmatpush1.bf16.msra.mxu0 %v204
    %609 = vmatprep.subr.bf16.mxu0 %v209
    %610 = vmatpush1.bf16.msra.mxu0 %v208
    %611 = vmatprep.subr.bf16.mxu0 %v213
    %612 = vmatpush1.bf16.msra.mxu0 %v212
    %613 = vmatprep.subr.bf16.mxu0 %v217
    %614 = vmatpush1.bf16.msra.mxu0 %v216
    %615 = vmatprep.subr.bf16.mxu0 %v221
    %616 = vmatpush1.bf16.msra.mxu0 %v220
    %617 = vmatprep.subr.bf16.mxu0 %v225
    %618 = vmatpush1.bf16.msra.mxu0 %v224
    %619 = vmatprep.subr.bf16.mxu0 %v229
    %620 = vmatpush1.bf16.msra.mxu0 %v228
    %621 = vmatprep.subr.bf16.mxu0 0
    %622 = vmatpush1.bf16.msra.mxu0 0
    %623 = vmatprep.subr.bf16.mxu0 0
    %624 = vmatpush1.bf16.msra.mxu0 0
    %625 = vmatprep.subr.bf16.mxu0 0
    %626 = vmatpush1.bf16.msra.mxu0 0
    %627 = vmatprep.subr.bf16.mxu0 0
    %628 = vmatpush1.bf16.msra.mxu0 0
    %629 = vmatprep.subr.bf16.mxu0 0
    %630 = vmatpush1.bf16.msra.mxu0 0
    %631 = vmatprep.subr.bf16.mxu0 0
    %632 = vmatpush1.bf16.msra.mxu0 0
    %633 = vmatprep.subr.bf16.mxu0 0
    %634 = vmatpush1.bf16.msra.mxu0 0
    %635 = vmatprep.subr.bf16.mxu0 0
    %636 = vmatpush1.bf16.msra.mxu0 0
    %637 = vmatprep.mubr.bf16.mxu0 0
    %638 = vmatmul.mubr.bf16.gmra.mrb[0].mxu0 %v604
    %v639 = vpop.f32.mrb[0].mxu0
    %v640 = vadd.f32 0.0, %v639
    %v641 = vpop.f32.mrb[0].mxu0
    %v642 = vadd.f32 0.0, %v641
    %v643 = vpop.f32.mrb[0].mxu0
    %v644 = vpop.f32.mrb[0].mxu0
    %645 = vdwg.mxu0
    %646 = vmatprep.subr.bf16.mxu0 %v203
    %647 = vmatpush1.bf16.msra.mxu0 %v202
    %648 = vmatprep.subr.bf16.mxu0 %v207
    %649 = vmatpush1.bf16.msra.mxu0 %v206
    %650 = vmatprep.subr.bf16.mxu0 %v211
    %651 = vmatpush1.bf16.msra.mxu0 %v210
    %652 = vmatprep.subr.bf16.mxu0 %v215
    %653 = vmatpush1.bf16.msra.mxu0 %v214
    %654 = vmatprep.subr.bf16.mxu0 %v219
    %655 = vmatpush1.bf16.msra.mxu0 %v218
    %656 = vmatprep.subr.bf16.mxu0 %v223
    %657 = vmatpush1.bf16.msra.mxu0 %v222
    %658 = vmatprep.subr.bf16.mxu0 %v227
    %659 = vmatpush1.bf16.msra.mxu0 %v226
    %660 = vmatprep.subr.bf16.mxu0 %v231
    %661 = vmatpush1.bf16.msra.mxu0 %v230
    %662 = vmatprep.subr.bf16.mxu0 0
    %663 = vmatpush1.bf16.msra.mxu0 0
    %664 = vmatprep.subr.bf16.mxu0 0
    %665 = vmatpush1.bf16.msra.mxu0 0
    %666 = vmatprep.subr.bf16.mxu0 0
    %667 = vmatpush1.bf16.msra.mxu0 0
    %668 = vmatprep.subr.bf16.mxu0 0
    %669 = vmatpush1.bf16.msra.mxu0 0
    %670 = vmatprep.subr.bf16.mxu0 0
    %671 = vmatpush1.bf16.msra.mxu0 0
    %672 = vmatprep.subr.bf16.mxu0 0
    %673 = vmatpush1.bf16.msra.mxu0 0
    %674 = vmatprep.subr.bf16.mxu0 0
    %675 = vmatpush1.bf16.msra.mxu0 0
    %676 = vmatprep.subr.bf16.mxu0 0
    %677 = vmatpush1.bf16.msra.mxu0 0
    %678 = vmatprep.mubr.bf16.mxu0 0
    %679 = vmatmul.mubr.bf16.gmra.mrb[0].mxu0 %v604
    %v680 = vpop.f32.mrb[0].mxu0
    %v681 = vadd.f32 0.0, %v680
    %v682 = vpop.f32.mrb[0].mxu0
    %v683 = vadd.f32 0.0, %v682
    %v684 = vpop.f32.mrb[0].mxu0
    %v685 = vpop.f32.mrb[0].mxu0
    %686 = vdwg.mxu0
    %v687 = vadd.f32 %v600, %v640
    %v688 = vadd.f32 %v601, %v642
    %v689 = vadd.f32 %v602, %v681
    %v690 = vadd.f32 %v603, %v683
    %v691 = vtanh.pop %v687
    %v692 = vmul.f32 %v691, 0.5
    %v693 = vadd.f32 %v692, 0.5
    %v694 = vtanh.pop %v688
    %v695 = vmul.f32 %v694, 0.5
    %v696 = vadd.f32 %v695, 0.5
    %v697 = vtanh.pop %v689
    %v698 = vtanh.pop %v690
    %v699 = vmul.f32 %v698, 0.5
    %v700 = vadd.f32 %v699, 0.5
    %v701 = vmul.f32 %v696, %v598
    %v702 = vmul.f32 %v693, %v697
    %v703 = vadd.f32 %v701, %v702
    %v704 = vtanh.pop %v703
    %v705 = vmul.f32 %v700, %v704
    %706 = vst [vmem:[#allocation4] sm:$0xff] %v705
    %707 = vst [vmem:[#allocation5] sm:$0xff] %v703
    %v708 = vpack.c.bf16 %v705, %v705
    %s709 = scalar_lea.vmem [#allocation3], 12
    %710 = vst [vmem:[%s709] sm:$0xf] %v708
    %v711 = vld [vmem:[#allocation4] sm:$0xff]
    %v712 = vld [vmem:[#allocation5] sm:$0xff]
    %s713 = scalar_lea.vmem [#allocation6], 128
    %v714 = vld [vmem:[%s713] sm:$0xff]
    %v715 = vld [vmem:[%s713 + $0x8] sm:$0xff]
    %v716 = vld [vmem:[%s713 + $0x10] sm:$0xff]
    %v717 = vld [vmem:[%s713 + $0x18] sm:$0xff]
    %v718 = vpack.c.bf16 %v711, %v711
    %719 = vmatprep.subr.bf16.mxu0 %v201
    %720 = vmatpush1.bf16.msra.mxu0 %v200
    %721 = vmatprep.subr.bf16.mxu0 %v205
    %722 = vmatpush1.bf16.msra.mxu0 %v204
    %723 = vmatprep.subr.bf16.mxu0 %v209
    %724 = vmatpush1.bf16.msra.mxu0 %v208
    %725 = vmatprep.subr.bf16.mxu0 %v213
    %726 = vmatpush1.bf16.msra.mxu0 %v212
    %727 = vmatprep.subr.bf16.mxu0 %v217
    %728 = vmatpush1.bf16.msra.mxu0 %v216
    %729 = vmatprep.subr.bf16.mxu0 %v221
    %730 = vmatpush1.bf16.msra.mxu0 %v220
    %731 = vmatprep.subr.bf16.mxu0 %v225
    %732 = vmatpush1.bf16.msra.mxu0 %v224
    %733 = vmatprep.subr.bf16.mxu0 %v229
    %734 = vmatpush1.bf16.msra.mxu0 %v228
    %735 = vmatprep.subr.bf16.mxu0 0
    %736 = vmatpush1.bf16.msra.mxu0 0
    %737 = vmatprep.subr.bf16.mxu0 0
    %738 = vmatpush1.bf16.msra.mxu0 0
    %739 = vmatprep.subr.bf16.mxu0 0
    %740 = vmatpush1.bf16.msra.mxu0 0
    %741 = vmatprep.subr.bf16.mxu0 0
    %742 = vmatpush1.bf16.msra.mxu0 0
    %743 = vmatprep.subr.bf16.mxu0 0
    %744 = vmatpush1.bf16.msra.mxu0 0
    %745 = vmatprep.subr.bf16.mxu0 0
    %746 = vmatpush1.bf16.msra.mxu0 0
    %747 = vmatprep.subr.bf16.mxu0 0
    %748 = vmatpush1.bf16.msra.mxu0 0
    %749 = vmatprep.subr.bf16.mxu0 0
    %750 = vmatpush1.bf16.msra.mxu0 0
    %751 = vmatprep.mubr.bf16.mxu0 0
    %752 = vmatmul.mubr.bf16.gmra.mrb[0].mxu0 %v718
    %v753 = vpop.f32.mrb[0].mxu0
    %v754 = vadd.f32 0.0, %v753
    %v755 = vpop.f32.mrb[0].mxu0
    %v756 = vadd.f32 0.0, %v755
    %v757 = vpop.f32.mrb[0].mxu0
    %v758 = vpop.f32.mrb[0].mxu0
    %759 = vdwg.mxu0
    %760 = vmatprep.subr.bf16.mxu0 %v203
    %761 = vmatpush1.bf16.msra.mxu0 %v202
    %762 = vmatprep.subr.bf16.mxu0 %v207
    %763 = vmatpush1.bf16.msra.mxu0 %v206
    %764 = vmatprep.subr.bf16.mxu0 %v211
    %765 = vmatpush1.bf16.msra.mxu0 %v210
    %766 = vmatprep.subr.bf16.mxu0 %v215
    %767 = vmatpush1.bf16.msra.mxu0 %v214
    %768 = vmatprep.subr.bf16.mxu0 %v219
    %769 = vmatpush1.bf16.msra.mxu0 %v218
    %770 = vmatprep.subr.bf16.mxu0 %v223
    %771 = vmatpush1.bf16.msra.mxu0 %v222
    %772 = vmatprep.subr.bf16.mxu0 %v227
    %773 = vmatpush1.bf16.msra.mxu0 %v226
    %774 = vmatprep.subr.bf16.mxu0 %v231
    %775 = vmatpush1.bf16.msra.mxu0 %v230
    %776 = vmatprep.subr.bf16.mxu0 0
    %777 = vmatpush1.bf16.msra.mxu0 0
    %778 = vmatprep.subr.bf16.mxu0 0
    %779 = vmatpush1.bf16.msra.mxu0 0
    %780 = vmatprep.subr.bf16.mxu0 0
    %781 = vmatpush1.bf16.msra.mxu0 0
    %782 = vmatprep.subr.bf16.mxu0 0
    %783 = vmatpush1.bf16.msra.mxu0 0
    %784 = vmatprep.subr.bf16.mxu0 0
    %785 = vmatpush1.bf16.msra.mxu0 0
    %786 = vmatprep.subr.bf16.mxu0 0
    %787 = vmatpush1.bf16.msra.mxu0 0
    %788 = vmatprep.subr.bf16.mxu0 0
    %789 = vmatpush1.bf16.msra.mxu0 0
    %790 = vmatprep.subr.bf16.mxu0 0
    %791 = vmatpush1.bf16.msra.mxu0 0
    %792 = vmatprep.mubr.bf16.mxu0 0
    %793 = vmatmul.mubr.bf16.gmra.mrb[0].mxu0 %v718
    %v794 = vpop.f32.mrb[0].mxu0
    %v795 = vadd.f32 0.0, %v794
    %v796 = vpop.f32.mrb[0].mxu0
    %v797 = vadd.f32 0.0, %v796
    %v798 = vpop.f32.mrb[0].mxu0
    %v799 = vpop.f32.mrb[0].mxu0
    %800 = vdwg.mxu0
    %v801 = vadd.f32 %v714, %v754
    %v802 = vadd.f32 %v715, %v756
    %v803 = vadd.f32 %v716, %v795
    %v804 = vadd.f32 %v717, %v797
    %v805 = vtanh.pop %v801
    %v806 = vmul.f32 %v805, 0.5
    %v807 = vadd.f32 %v806, 0.5
    %v808 = vtanh.pop %v802
    %v809 = vmul.f32 %v808, 0.5
    %v810 = vadd.f32 %v809, 0.5
    %v811 = vtanh.pop %v803
    %v812 = vtanh.pop %v804
    %v813 = vmul.f32 %v812, 0.5
    %v814 = vadd.f32 %v813, 0.5
    %v815 = vmul.f32 %v810, %v712
    %v816 = vmul.f32 %v807, %v811
    %v817 = vadd.f32 %v815, %v816
    %v818 = vtanh.pop %v817
    %v819 = vmul.f32 %v814, %v818
    %820 = vst [vmem:[#allocation4] sm:$0xff] %v819
    %821 = vst [vmem:[#allocation5] sm:$0xff] %v817
    %v822 = vpack.c.bf16 %v819, %v819
    %s823 = scalar_lea.vmem [#allocation3], 16
    %824 = vst [vmem:[%s823] sm:$0xf] %v822
    %v825 = vld [vmem:[#allocation4] sm:$0xff]
    %v826 = vld [vmem:[#allocation5] sm:$0xff]
    %s827 = scalar_lea.vmem [#allocation6], 160
    %v828 = vld [vmem:[%s827] sm:$0xff]
    %v829 = vld [vmem:[%s827 + $0x8] sm:$0xff]
    %v830 = vld [vmem:[%s827 + $0x10] sm:$0xff]
    %v831 = vld [vmem:[%s827 + $0x18] sm:$0xff]
    %v832 = vpack.c.bf16 %v825, %v825
    %833 = vmatprep.subr.bf16.mxu0 %v201
    %834 = vmatpush1.bf16.msra.mxu0 %v200
    %835 = vmatprep.subr.bf16.mxu0 %v205
    %836 = vmatpush1.bf16.msra.mxu0 %v204
    %837 = vmatprep.subr.bf16.mxu0 %v209
    %838 = vmatpush1.bf16.msra.mxu0 %v208
    %839 = vmatprep.subr.bf16.mxu0 %v213
    %840 = vmatpush1.bf16.msra.mxu0 %v212
    %841 = vmatprep.subr.bf16.mxu0 %v217
    %842 = vmatpush1.bf16.msra.mxu0 %v216
    %843 = vmatprep.subr.bf16.mxu0 %v221
    %844 = vmatpush1.bf16.msra.mxu0 %v220
    %845 = vmatprep.subr.bf16.mxu0 %v225
    %846 = vmatpush1.bf16.msra.mxu0 %v224
    %847 = vmatprep.subr.bf16.mxu0 %v229
    %848 = vmatpush1.bf16.msra.mxu0 %v228
    %849 = vmatprep.subr.bf16.mxu0 0
    %850 = vmatpush1.bf16.msra.mxu0 0
    %851 = vmatprep.subr.bf16.mxu0 0
    %852 = vmatpush1.bf16.msra.mxu0 0
    %853 = vmatprep.subr.bf16.mxu0 0
    %854 = vmatpush1.bf16.msra.mxu0 0
    %855 = vmatprep.subr.bf16.mxu0 0
    %856 = vmatpush1.bf16.msra.mxu0 0
    %857 = vmatprep.subr.bf16.mxu0 0
    %858 = vmatpush1.bf16.msra.mxu0 0
    %859 = vmatprep.subr.bf16.mxu0 0
    %860 = vmatpush1.bf16.msra.mxu0 0
    %861 = vmatprep.subr.bf16.mxu0 0
    %862 = vmatpush1.bf16.msra.mxu0 0
    %863 = vmatprep.subr.bf16.mxu0 0
    %864 = vmatpush1.bf16.msra.mxu0 0
    %865 = vmatprep.mubr.bf16.mxu0 0
    %866 = vmatmul.mubr.bf16.gmra.mrb[0].mxu0 %v832
    %v867 = vpop.f32.mrb[0].mxu0
    %v868 = vadd.f32 0.0, %v867
    %v869 = vpop.f32.mrb[0].mxu0
    %v870 = vadd.f32 0.0, %v869
    %v871 = vpop.f32.mrb[0].mxu0
    %v872 = vpop.f32.mrb[0].mxu0
    %873 = vdwg.mxu0
    %874 = vmatprep.subr.bf16.mxu0 %v203
    %875 = vmatpush1.bf16.msra.mxu0 %v202
    %876 = vmatprep.subr.bf16.mxu0 %v207
    %877 = vmatpush1.bf16.msra.mxu0 %v206
    %878 = vmatprep.subr.bf16.mxu0 %v211
    %879 = vmatpush1.bf16.msra.mxu0 %v210
    %880 = vmatprep.subr.bf16.mxu0 %v215
    %881 = vmatpush1.bf16.msra.mxu0 %v214
    %882 = vmatprep.subr.bf16.mxu0 %v219
    %883 = vmatpush1.bf16.msra.mxu0 %v218
    %884 = vmatprep.subr.bf16.mxu0 %v223
    %885 = vmatpush1.bf16.msra.mxu0 %v222
    %886 = vmatprep.subr.bf16.mxu0 %v227
    %887 = vmatpush1.bf16.msra.mxu0 %v226
    %888 = vmatprep.subr.bf16.mxu0 %v231
    %889 = vmatpush1.bf16.msra.mxu0 %v230
    %890 = vmatprep.subr.bf16.mxu0 0
    %891 = vmatpush1.bf16.msra.mxu0 0
    %892 = vmatprep.subr.bf16.mxu0 0
    %893 = vmatpush1.bf16.msra.mxu0 0
    %894 = vmatprep.subr.bf16.mxu0 0
    %895 = vmatpush1.bf16.msra.mxu0 0
    %896 = vmatprep.subr.bf16.mxu0 0
    %897 = vmatpush1.bf16.msra.mxu0 0
    %898 = vmatprep.subr.bf16.mxu0 0
    %899 = vmatpush1.bf16.msra.mxu0 0
    %900 = vmatprep.subr.bf16.mxu0 0
    %901 = vmatpush1.bf16.msra.mxu0 0
    %902 = vmatprep.subr.bf16.mxu0 0
    %903 = vmatpush1.bf16.msra.mxu0 0
    %904 = vmatprep.subr.bf16.mxu0 0
    %905 = vmatpush1.bf16.msra.mxu0 0
    %906 = vmatprep.mubr.bf16.mxu0 0
    %907 = vmatmul.mubr.bf16.gmra.mrb[0].mxu0 %v832
    %v908 = vpop.f32.mrb[0].mxu0
    %v909 = vadd.f32 0.0, %v908
    %v910 = vpop.f32.mrb[0].mxu0
    %v911 = vadd.f32 0.0, %v910
    %v912 = vpop.f32.mrb[0].mxu0
    %v913 = vpop.f32.mrb[0].mxu0
    %914 = vdwg.mxu0
    %v915 = vadd.f32 %v828, %v868
    %v916 = vadd.f32 %v829, %v870
    %v917 = vadd.f32 %v830, %v909
    %v918 = vadd.f32 %v831, %v911
    %v919 = vtanh.pop %v915
    %v920 = vmul.f32 %v919, 0.5
    %v921 = vadd.f32 %v920, 0.5
    %v922 = vtanh.pop %v916
    %v923 = vmul.f32 %v922, 0.5
    %v924 = vadd.f32 %v923, 0.5
    %v925 = vtanh.pop %v917
    %v926 = vtanh.pop %v918
    %v927 = vmul.f32 %v926, 0.5
    %v928 = vadd.f32 %v927, 0.5
    %v929 = vmul.f32 %v924, %v826
    %v930 = vmul.f32 %v921, %v925
    %v931 = vadd.f32 %v929, %v930
    %v932 = vtanh.pop %v931
    %v933 = vmul.f32 %v928, %v932
    %934 = vst [vmem:[#allocation4] sm:$0xff] %v933
    %935 = vst [vmem:[#allocation5] sm:$0xff] %v931
    %v936 = vpack.c.bf16 %v933, %v933
    %s937 = scalar_lea.vmem [#allocation3], 20
    %938 = vst [vmem:[%s937] sm:$0xf] %v936
    %v939 = vld [vmem:[#allocation4] sm:$0xff]
    %v940 = vld [vmem:[#allocation5] sm:$0xff]
    %s941 = scalar_lea.vmem [#allocation6], 192
    %v942 = vld [vmem:[%s941] sm:$0xff]
    %v943 = vld [vmem:[%s941 + $0x8] sm:$0xff]
    %v944 = vld [vmem:[%s941 + $0x10] sm:$0xff]
    %v945 = vld [vmem:[%s941 + $0x18] sm:$0xff]
    %v946 = vpack.c.bf16 %v939, %v939
    %947 = vmatprep.subr.bf16.mxu0 %v201
    %948 = vmatpush1.bf16.msra.mxu0 %v200
    %949 = vmatprep.subr.bf16.mxu0 %v205
    %950 = vmatpush1.bf16.msra.mxu0 %v204
    %951 = vmatprep.subr.bf16.mxu0 %v209
    %952 = vmatpush1.bf16.msra.mxu0 %v208
    %953 = vmatprep.subr.bf16.mxu0 %v213
    %954 = vmatpush1.bf16.msra.mxu0 %v212
    %955 = vmatprep.subr.bf16.mxu0 %v217
    %956 = vmatpush1.bf16.msra.mxu0 %v216
    %957 = vmatprep.subr.bf16.mxu0 %v221
    %958 = vmatpush1.bf16.msra.mxu0 %v220
    %959 = vmatprep.subr.bf16.mxu0 %v225
    %960 = vmatpush1.bf16.msra.mxu0 %v224
    %961 = vmatprep.subr.bf16.mxu0 %v229
    %962 = vmatpush1.bf16.msra.mxu0 %v228
    %963 = vmatprep.subr.bf16.mxu0 0
    %964 = vmatpush1.bf16.msra.mxu0 0
    %965 = vmatprep.subr.bf16.mxu0 0
    %966 = vmatpush1.bf16.msra.mxu0 0
    %967 = vmatprep.subr.bf16.mxu0 0
    %968 = vmatpush1.bf16.msra.mxu0 0
    %969 = vmatprep.subr.bf16.mxu0 0
    %970 = vmatpush1.bf16.msra.mxu0 0
    %971 = vmatprep.subr.bf16.mxu0 0
    %972 = vmatpush1.bf16.msra.mxu0 0
    %973 = vmatprep.subr.bf16.mxu0 0
    %974 = vmatpush1.bf16.msra.mxu0 0
    %975 = vmatprep.subr.bf16.mxu0 0
    %976 = vmatpush1.bf16.msra.mxu0 0
    %977 = vmatprep.subr.bf16.mxu0 0
    %978 = vmatpush1.bf16.msra.mxu0 0
    %979 = vmatprep.mubr.bf16.mxu0 0
    %980 = vmatmul.mubr.bf16.gmra.mrb[0].mxu0 %v946
    %v981 = vpop.f32.mrb[0].mxu0
    %v982 = vadd.f32 0.0, %v981
    %v983 = vpop.f32.mrb[0].mxu0
    %v984 = vadd.f32 0.0, %v983
    %v985 = vpop.f32.mrb[0].mxu0
    %v986 = vpop.f32.mrb[0].mxu0
    %987 = vdwg.mxu0
    %988 = vmatprep.subr.bf16.mxu0 %v203
    %989 = vmatpush1.bf16.msra.mxu0 %v202
    %990 = vmatprep.subr.bf16.mxu0 %v207
    %991 = vmatpush1.bf16.msra.mxu0 %v206
    %992 = vmatprep.subr.bf16.mxu0 %v211
    %993 = vmatpush1.bf16.msra.mxu0 %v210
    %994 = vmatprep.subr.bf16.mxu0 %v215
    %995 = vmatpush1.bf16.msra.mxu0 %v214
    %996 = vmatprep.subr.bf16.mxu0 %v219
    %997 = vmatpush1.bf16.msra.mxu0 %v218
    %998 = vmatprep.subr.bf16.mxu0 %v223
    %999 = vmatpush1.bf16.msra.mxu0 %v222
    %1000 = vmatprep.subr.bf16.mxu0 %v227
    %1001 = vmatpush1.bf16.msra.mxu0 %v226
    %1002 = vmatprep.subr.bf16.mxu0 %v231
    %1003 = vmatpush1.bf16.msra.mxu0 %v230
    %1004 = vmatprep.subr.bf16.mxu0 0
    %1005 = vmatpush1.bf16.msra.mxu0 0
    %1006 = vmatprep.subr.bf16.mxu0 0
    %1007 = vmatpush1.bf16.msra.mxu0 0
    %1008 = vmatprep.subr.bf16.mxu0 0
    %1009 = vmatpush1.bf16.msra.mxu0 0
    %1010 = vmatprep.subr.bf16.mxu0 0
    %1011 = vmatpush1.bf16.msra.mxu0 0
    %1012 = vmatprep.subr.bf16.mxu0 0
    %1013 = vmatpush1.bf16.msra.mxu0 0
    %1014 = vmatprep.subr.bf16.mxu0 0
    %1015 = vmatpush1.bf16.msra.mxu0 0
    %1016 = vmatprep.subr.bf16.mxu0 0
    %1017 = vmatpush1.bf16.msra.mxu0 0
    %1018 = vmatprep.subr.bf16.mxu0 0
    %1019 = vmatpush1.bf16.msra.mxu0 0
    %1020 = vmatprep.mubr.bf16.mxu0 0
    %1021 = vmatmul.mubr.bf16.gmra.mrb[0].mxu0 %v946
    %v1022 = vpop.f32.mrb[0].mxu0
    %v1023 = vadd.f32 0.0, %v1022
    %v1024 = vpop.f32.mrb[0].mxu0
    %v1025 = vadd.f32 0.0, %v1024
    %v1026 = vpop.f32.mrb[0].mxu0
    %v1027 = vpop.f32.mrb[0].mxu0
    %1028 = vdwg.mxu0
    %v1029 = vadd.f32 %v942, %v982
    %v1030 = vadd.f32 %v943, %v984
    %v1031 = vadd.f32 %v944, %v1023
    %v1032 = vadd.f32 %v945, %v1025
    %v1033 = vtanh.pop %v1029
    %v1034 = vmul.f32 %v1033, 0.5
    %v1035 = vadd.f32 %v1034, 0.5
    %v1036 = vtanh.pop %v1030
    %v1037 = vmul.f32 %v1036, 0.5
    %v1038 = vadd.f32 %v1037, 0.5
    %v1039 = vtanh.pop %v1031
    %v1040 = vtanh.pop %v1032
    %v1041 = vmul.f32 %v1040, 0.5
    %v1042 = vadd.f32 %v1041, 0.5
    %v1043 = vmul.f32 %v1038, %v940
    %v1044 = vmul.f32 %v1035, %v1039
    %v1045 = vadd.f32 %v1043, %v1044
    %v1046 = vtanh.pop %v1045
    %v1047 = vmul.f32 %v1042, %v1046
    %1048 = vst [vmem:[#allocation4] sm:$0xff] %v1047
    %1049 = vst [vmem:[#allocation5] sm:$0xff] %v1045
    %v1050 = vpack.c.bf16 %v1047, %v1047
    %s1051 = scalar_lea.vmem [#allocation3], 24
    %1052 = vst [vmem:[%s1051] sm:$0xf] %v1050
    %v1053 = vld [vmem:[#allocation4] sm:$0xff]
    %v1054 = vld [vmem:[#allocation5] sm:$0xff]
    %s1055 = scalar_lea.vmem [#allocation6], 224
    %v1056 = vld [vmem:[%s1055] sm:$0xff]
    %v1057 = vld [vmem:[%s1055 + $0x8] sm:$0xff]
    %v1058 = vld [vmem:[%s1055 + $0x10] sm:$0xff]
    %v1059 = vld [vmem:[%s1055 + $0x18] sm:$0xff]
    %v1060 = vpack.c.bf16 %v1053, %v1053
    %1061 = vmatprep.subr.bf16.mxu0 %v201
    %1062 = vmatpush1.bf16.msra.mxu0 %v200
    %1063 = vmatprep.subr.bf16.mxu0 %v205
    %1064 = vmatpush1.bf16.msra.mxu0 %v204
    %1065 = vmatprep.subr.bf16.mxu0 %v209
    %1066 = vmatpush1.bf16.msra.mxu0 %v208
    %1067 = vmatprep.subr.bf16.mxu0 %v213
    %1068 = vmatpush1.bf16.msra.mxu0 %v212
    %1069 = vmatprep.subr.bf16.mxu0 %v217
    %1070 = vmatpush1.bf16.msra.mxu0 %v216
    %1071 = vmatprep.subr.bf16.mxu0 %v221
    %1072 = vmatpush1.bf16.msra.mxu0 %v220
    %1073 = vmatprep.subr.bf16.mxu0 %v225
    %1074 = vmatpush1.bf16.msra.mxu0 %v224
    %1075 = vmatprep.subr.bf16.mxu0 %v229
    %1076 = vmatpush1.bf16.msra.mxu0 %v228
    %1077 = vmatprep.subr.bf16.mxu0 0
    %1078 = vmatpush1.bf16.msra.mxu0 0
    %1079 = vmatprep.subr.bf16.mxu0 0
    %1080 = vmatpush1.bf16.msra.mxu0 0
    %1081 = vmatprep.subr.bf16.mxu0 0
    %1082 = vmatpush1.bf16.msra.mxu0 0
    %1083 = vmatprep.subr.bf16.mxu0 0
    %1084 = vmatpush1.bf16.msra.mxu0 0
    %1085 = vmatprep.subr.bf16.mxu0 0
    %1086 = vmatpush1.bf16.msra.mxu0 0
    %1087 = vmatprep.subr.bf16.mxu0 0
    %1088 = vmatpush1.bf16.msra.mxu0 0
    %1089 = vmatprep.subr.bf16.mxu0 0
    %1090 = vmatpush1.bf16.msra.mxu0 0
    %1091 = vmatprep.subr.bf16.mxu0 0
    %1092 = vmatpush1.bf16.msra.mxu0 0
    %1093 = vmatprep.mubr.bf16.mxu0 0
    %1094 = vmatmul.mubr.bf16.gmra.mrb[0].mxu0 %v1060
    %v1095 = vpop.f32.mrb[0].mxu0
    %v1096 = vadd.f32 0.0, %v1095
    %v1097 = vpop.f32.mrb[0].mxu0
    %v1098 = vadd.f32 0.0, %v1097
    %v1099 = vpop.f32.mrb[0].mxu0
    %v1100 = vpop.f32.mrb[0].mxu0
    %1101 = vdwg.mxu0
    %1102 = vmatprep.subr.bf16.mxu0 %v203
    %1103 = vmatpush1.bf16.msra.mxu0 %v202
    %1104 = vmatprep.subr.bf16.mxu0 %v207
    %1105 = vmatpush1.bf16.msra.mxu0 %v206
    %1106 = vmatprep.subr.bf16.mxu0 %v211
    %1107 = vmatpush1.bf16.msra.mxu0 %v210
    %1108 = vmatprep.subr.bf16.mxu0 %v215
    %1109 = vmatpush1.bf16.msra.mxu0 %v214
    %1110 = vmatprep.subr.bf16.mxu0 %v219
    %1111 = vmatpush1.bf16.msra.mxu0 %v218
    %1112 = vmatprep.subr.bf16.mxu0 %v223
    %1113 = vmatpush1.bf16.msra.mxu0 %v222
    %1114 = vmatprep.subr.bf16.mxu0 %v227
    %1115 = vmatpush1.bf16.msra.mxu0 %v226
    %1116 = vmatprep.subr.bf16.mxu0 %v231
    %1117 = vmatpush1.bf16.msra.mxu0 %v230
    %1118 = vmatprep.subr.bf16.mxu0 0
    %1119 = vmatpush1.bf16.msra.mxu0 0
    %1120 = vmatprep.subr.bf16.mxu0 0
    %1121 = vmatpush1.bf16.msra.mxu0 0
    %1122 = vmatprep.subr.bf16.mxu0 0
    %1123 = vmatpush1.bf16.msra.mxu0 0
    %1124 = vmatprep.subr.bf16.mxu0 0
    %1125 = vmatpush1.bf16.msra.mxu0 0
    %1126 = vmatprep.subr.bf16.mxu0 0
    %1127 = vmatpush1.bf16.msra.mxu0 0
    %1128 = vmatprep.subr.bf16.mxu0 0
    %1129 = vmatpush1.bf16.msra.mxu0 0
    %1130 = vmatprep.subr.bf16.mxu0 0
    %1131 = vmatpush1.bf16.msra.mxu0 0
    %1132 = vmatprep.subr.bf16.mxu0 0
    %1133 = vmatpush1.bf16.msra.mxu0 0
    %1134 = vmatprep.mubr.bf16.mxu0 0
    %1135 = vmatmul.mubr.bf16.gmra.mrb[0].mxu0 %v1060
    %v1136 = vpop.f32.mrb[0].mxu0
    %v1137 = vadd.f32 0.0, %v1136
    %v1138 = vpop.f32.mrb[0].mxu0
    %v1139 = vadd.f32 0.0, %v1138
    %v1140 = vpop.f32.mrb[0].mxu0
    %v1141 = vpop.f32.mrb[0].mxu0
    %1142 = vdwg.mxu0
    %v1143 = vadd.f32 %v1056, %v1096
    %v1144 = vadd.f32 %v1057, %v1098
    %v1145 = vadd.f32 %v1058, %v1137
    %v1146 = vadd.f32 %v1059, %v1139
    %v1147 = vtanh.pop %v1143
    %v1148 = vmul.f32 %v1147, 0.5
    %v1149 = vadd.f32 %v1148, 0.5
    %v1150 = vtanh.pop %v1144
    %v1151 = vmul.f32 %v1150, 0.5
    %v1152 = vadd.f32 %v1151, 0.5
    %v1153 = vtanh.pop %v1145
    %v1154 = vtanh.pop %v1146
    %v1155 = vmul.f32 %v1154, 0.5
    %v1156 = vadd.f32 %v1155, 0.5
    %v1157 = vmul.f32 %v1152, %v1054
    %v1158 = vmul.f32 %v1149, %v1153
    %v1159 = vadd.f32 %v1157, %v1158
    %v1160 = vtanh.pop %v1159
    %v1161 = vmul.f32 %v1156, %v1160
    %1162 = vst [vmem:[#allocation4] sm:$0xff] %v1161
    %1163 = vst [vmem:[#allocation5] sm:$0xff] %v1159
    %v1164 = vpack.c.bf16 %v1161, %v1161
    %s1165 = scalar_lea.vmem [#allocation3], 28
    %1166 = vst [vmem:[%s1165] sm:$0xf] %v1164
    %v1167 = vld [vmem:[#allocation4] sm:$0xff]
    %1168 = vst [vmem:[#allocation12] sm:$0xff] %v1167
    %v1169 = vld [vmem:[#allocation5] sm:$0xff]
    %1170 = vst [vmem:[#allocation13] sm:$0xff] %v1169
    %s1171 = scalar_lea.vmem [#allocation11], 256
    %v1172 = vld [vmem:[%s1171] sm:$0xff]
    %v1173 = vld [vmem:[%s1171 + $0x8] sm:$0xff]
    %v1174 = vld [vmem:[%s1171 + $0x10] sm:$0xff]
    %v1175 = vld [vmem:[%s1171 + $0x18] sm:$0xff]
    %v1176 = vld [vmem:[%s1171 + $0x20] sm:$0xff]
    %v1177 = vld [vmem:[%s1171 + $0x28] sm:$0xff]
    %v1178 = vld [vmem:[%s1171 + $0x30] sm:$0xff]
    %v1179 = vld [vmem:[%s1171 + $0x38] sm:$0xff]
    %v1180 = vld [vmem:[%s1171 + $0x40] sm:$0xff]
    %v1181 = vld [vmem:[%s1171 + $0x48] sm:$0xff]
    %v1182 = vld [vmem:[%s1171 + $0x50] sm:$0xff]
    %v1183 = vld [vmem:[%s1171 + $0x58] sm:$0xff]
    %v1184 = vld [vmem:[%s1171 + $0x60] sm:$0xff]
    %v1185 = vld [vmem:[%s1171 + $0x68] sm:$0xff]
    %v1186 = vld [vmem:[%s1171 + $0x70] sm:$0xff]
    %v1187 = vld [vmem:[%s1171 + $0x78] sm:$0xff]
    %v1188 = vld [vmem:[%s1171 + $0x80] sm:$0xff]
    %v1189 = vld [vmem:[%s1171 + $0x88] sm:$0xff]
    %v1190 = vld [vmem:[%s1171 + $0x90] sm:$0xff]
    %v1191 = vld [vmem:[%s1171 + $0x98] sm:$0xff]
    %v1192 = vld [vmem:[%s1171 + $0xa0] sm:$0xff]
    %v1193 = vld [vmem:[%s1171 + $0xa8] sm:$0xff]
    %v1194 = vld [vmem:[%s1171 + $0xb0] sm:$0xff]
    %v1195 = vld [vmem:[%s1171 + $0xb8] sm:$0xff]
    %v1196 = vld [vmem:[%s1171 + $0xc0] sm:$0xff]
    %v1197 = vld [vmem:[%s1171 + $0xc8] sm:$0xff]
    %v1198 = vld [vmem:[%s1171 + $0xd0] sm:$0xff]
    %v1199 = vld [vmem:[%s1171 + $0xd8] sm:$0xff]
    %v1200 = vld [vmem:[%s1171 + $0xe0] sm:$0xff]
    %v1201 = vld [vmem:[%s1171 + $0xe8] sm:$0xff]
    %v1202 = vld [vmem:[%s1171 + $0xf0] sm:$0xff]
    %v1203 = vld [vmem:[%s1171 + $0xf8] sm:$0xff]
    %v1204 = vld [vmem:[#allocation9] sm:$0xff]
    %v1205 = vld [vmem:[#allocation9 + $0x8] sm:$0xff]
    %v1206 = vld [vmem:[#allocation9 + $0x10] sm:$0xff]
    %v1207 = vld [vmem:[#allocation9 + $0x18] sm:$0xff]
    %v1208 = vld [vmem:[#allocation9 + $0x20] sm:$0xff]
    %v1209 = vld [vmem:[#allocation9 + $0x28] sm:$0xff]
    %v1210 = vld [vmem:[#allocation9 + $0x30] sm:$0xff]
    %v1211 = vld [vmem:[#allocation9 + $0x38] sm:$0xff]
    %v1212 = vld [vmem:[#allocation9 + $0x40] sm:$0xff]
    %v1213 = vld [vmem:[#allocation9 + $0x48] sm:$0xff]
    %v1214 = vld [vmem:[#allocation9 + $0x50] sm:$0xff]
    %v1215 = vld [vmem:[#allocation9 + $0x58] sm:$0xff]
    %v1216 = vld [vmem:[#allocation9 + $0x60] sm:$0xff]
    %v1217 = vld [vmem:[#allocation9 + $0x68] sm:$0xff]
    %v1218 = vld [vmem:[#allocation9 + $0x70] sm:$0xff]
    %v1219 = vld [vmem:[#allocation9 + $0x78] sm:$0xff]
    %v1220 = vld [vmem:[#allocation9 + $0x80] sm:$0xff]
    %v1221 = vld [vmem:[#allocation9 + $0x88] sm:$0xff]
    %v1222 = vld [vmem:[#allocation9 + $0x90] sm:$0xff]
    %v1223 = vld [vmem:[#allocation9 + $0x98] sm:$0xff]
    %v1224 = vld [vmem:[#allocation9 + $0xa0] sm:$0xff]
    %v1225 = vld [vmem:[#allocation9 + $0xa8] sm:$0xff]
    %v1226 = vld [vmem:[#allocation9 + $0xb0] sm:$0xff]
    %v1227 = vld [vmem:[#allocation9 + $0xb8] sm:$0xff]
    %v1228 = vld [vmem:[#allocation9 + $0xc0] sm:$0xff]
    %v1229 = vld [vmem:[#allocation9 + $0xc8] sm:$0xff]
    %v1230 = vld [vmem:[#allocation9 + $0xd0] sm:$0xff]
    %v1231 = vld [vmem:[#allocation9 + $0xd8] sm:$0xff]
    %v1232 = vld [vmem:[#allocation9 + $0xe0] sm:$0xff]
    %v1233 = vld [vmem:[#allocation9 + $0xe8] sm:$0xff]
    %v1234 = vld [vmem:[#allocation9 + $0xf0] sm:$0xff]
    %v1235 = vld [vmem:[#allocation9 + $0xf8] sm:$0xff]
    %v1236 = vld [vmem:[#allocation3] sm:$0xf]
    %v1237 = vld [vmem:[#allocation3 + $0x4] sm:$0xf]
    %v1238 = vld [vmem:[#allocation3 + $0x8] sm:$0xf]
    %v1239 = vld [vmem:[#allocation3 + $0xc] sm:$0xf]
    %v1240 = vld [vmem:[#allocation3 + $0x10] sm:$0xf]
    %v1241 = vld [vmem:[#allocation3 + $0x14] sm:$0xf]
    %v1242 = vld [vmem:[#allocation3 + $0x18] sm:$0xf]
    %v1243 = vld [vmem:[#allocation3 + $0x1c] sm:$0xf]
    %v1252 = vunpack.c.l.b16 %v1236
    %v1253 = vunpack.c.l.b16 %v1237
    %v1254 = vunpack.c.l.b16 %v1238
    %v1255 = vunpack.c.l.b16 %v1239
    %v1256 = vunpack.c.l.b16 %v1240
    %v1257 = vunpack.c.l.b16 %v1241
    %v1258 = vunpack.c.l.b16 %v1242
    %v1259 = vunpack.c.l.b16 %v1243
    %v1260 = vpack.c.b16 %v1253, %v1252
    %v1261 = vpack.c.b16 %v1255, %v1254
    %v1262 = vpack.c.b16 %v1257, %v1256
    %v1263 = vpack.c.b16 %v1259, %v1258
    %v1300 = vunpack.c.l.b16 %v1204
    %v1301 = vunpack.c.h.b16 %v1204
    %v1302 = vunpack.c.l.b16 %v1205
    %v1303 = vunpack.c.h.b16 %v1205
    %v1304 = vunpack.c.l.b16 %v1206
    %v1305 = vunpack.c.h.b16 %v1206
    %v1306 = vunpack.c.l.b16 %v1207
    %v1307 = vunpack.c.h.b16 %v1207
    %v1308 = vunpack.c.l.b16 %v1208
    %v1309 = vunpack.c.h.b16 %v1208
    %v1310 = vunpack.c.l.b16 %v1209
    %v1311 = vunpack.c.h.b16 %v1209
    %v1312 = vunpack.c.l.b16 %v1210
    %v1313 = vunpack.c.h.b16 %v1210
    %v1314 = vunpack.c.l.b16 %v1211
    %v1315 = vunpack.c.h.b16 %v1211
    %v1316 = vunpack.c.l.b16 %v1212
    %v1317 = vunpack.c.h.b16 %v1212
    %v1318 = vunpack.c.l.b16 %v1213
    %v1319 = vunpack.c.h.b16 %v1213
    %v1320 = vunpack.c.l.b16 %v1214
    %v1321 = vunpack.c.h.b16 %v1214
    %v1322 = vunpack.c.l.b16 %v1215
    %v1323 = vunpack.c.h.b16 %v1215
    %v1324 = vunpack.c.l.b16 %v1216
    %v1325 = vunpack.c.h.b16 %v1216
    %v1326 = vunpack.c.l.b16 %v1217
    %v1327 = vunpack.c.h.b16 %v1217
    %v1328 = vunpack.c.l.b16 %v1218
    %v1329 = vunpack.c.h.b16 %v1218
    %v1330 = vunpack.c.l.b16 %v1219
    %v1331 = vunpack.c.h.b16 %v1219
    %v1332 = vunpack.c.l.b16 %v1220
    %v1333 = vunpack.c.h.b16 %v1220
    %v1334 = vunpack.c.l.b16 %v1221
    %v1335 = vunpack.c.h.b16 %v1221
    %v1336 = vunpack.c.l.b16 %v1222
    %v1337 = vunpack.c.h.b16 %v1222
    %v1338 = vunpack.c.l.b16 %v1223
    %v1339 = vunpack.c.h.b16 %v1223
    %v1340 = vunpack.c.l.b16 %v1224
    %v1341 = vunpack.c.h.b16 %v1224
    %v1342 = vunpack.c.l.b16 %v1225
    %v1343 = vunpack.c.h.b16 %v1225
    %v1344 = vunpack.c.l.b16 %v1226
    %v1345 = vunpack.c.h.b16 %v1226
    %v1346 = vunpack.c.l.b16 %v1227
    %v1347 = vunpack.c.h.b16 %v1227
    %v1348 = vunpack.c.l.b16 %v1228
    %v1349 = vunpack.c.h.b16 %v1228
    %v1350 = vunpack.c.l.b16 %v1229
    %v1351 = vunpack.c.h.b16 %v1229
    %v1352 = vunpack.c.l.b16 %v1230
    %v1353 = vunpack.c.h.b16 %v1230
    %v1354 = vunpack.c.l.b16 %v1231
    %v1355 = vunpack.c.h.b16 %v1231
    %v1356 = vunpack.c.l.b16 %v1232
    %v1357 = vunpack.c.h.b16 %v1232
    %v1358 = vunpack.c.l.b16 %v1233
    %v1359 = vunpack.c.h.b16 %v1233
    %v1360 = vunpack.c.l.b16 %v1234
    %v1361 = vunpack.c.h.b16 %v1234
    %v1362 = vunpack.c.l.b16 %v1235
    %v1363 = vunpack.c.h.b16 %v1235
    %v1364 = vpack.c.b16 %v1304, %v1300
    %v1365 = vpack.c.b16 %v1305, %v1301
    %v1366 = vpack.c.b16 %v1306, %v1302
    %v1367 = vpack.c.b16 %v1307, %v1303
    %v1368 = vpack.c.b16 %v1312, %v1308
    %v1369 = vpack.c.b16 %v1313, %v1309
    %v1370 = vpack.c.b16 %v1314, %v1310
    %v1371 = vpack.c.b16 %v1315, %v1311
    %v1372 = vpack.c.b16 %v1320, %v1316
    %v1373 = vpack.c.b16 %v1321, %v1317
    %v1374 = vpack.c.b16 %v1322, %v1318
    %v1375 = vpack.c.b16 %v1323, %v1319
    %v1376 = vpack.c.b16 %v1328, %v1324
    %v1377 = vpack.c.b16 %v1329, %v1325
    %v1378 = vpack.c.b16 %v1330, %v1326
    %v1379 = vpack.c.b16 %v1331, %v1327
    %v1380 = vpack.c.b16 %v1336, %v1332
    %v1381 = vpack.c.b16 %v1337, %v1333
    %v1382 = vpack.c.b16 %v1338, %v1334
    %v1383 = vpack.c.b16 %v1339, %v1335
    %v1384 = vpack.c.b16 %v1344, %v1340
    %v1385 = vpack.c.b16 %v1345, %v1341
    %v1386 = vpack.c.b16 %v1346, %v1342
    %v1387 = vpack.c.b16 %v1347, %v1343
    %v1388 = vpack.c.b16 %v1352, %v1348
    %v1389 = vpack.c.b16 %v1353, %v1349
    %v1390 = vpack.c.b16 %v1354, %v1350
    %v1391 = vpack.c.b16 %v1355, %v1351
    %v1392 = vpack.c.b16 %v1360, %v1356
    %v1393 = vpack.c.b16 %v1361, %v1357
    %v1394 = vpack.c.b16 %v1362, %v1358
    %v1395 = vpack.c.b16 %v1363, %v1359
    %1428 = vmatprep.subr.bf16.mxu0 %v1365
    %1429 = vmatpush1.bf16.msra.mxu0 %v1364
    %1430 = vmatprep.subr.bf16.mxu0 %v1369
    %1431 = vmatpush1.bf16.msra.mxu0 %v1368
    %1432 = vmatprep.subr.bf16.mxu0 %v1373
    %1433 = vmatpush1.bf16.msra.mxu0 %v1372
    %1434 = vmatprep.subr.bf16.mxu0 %v1377
    %1435 = vmatpush1.bf16.msra.mxu0 %v1376
    %1436 = vmatprep.subr.bf16.mxu0 %v1381
    %1437 = vmatpush1.bf16.msra.mxu0 %v1380
    %1438 = vmatprep.subr.bf16.mxu0 %v1385
    %1439 = vmatpush1.bf16.msra.mxu0 %v1384
    %1440 = vmatprep.subr.bf16.mxu0 %v1389
    %1441 = vmatpush1.bf16.msra.mxu0 %v1388
    %1442 = vmatprep.subr.bf16.mxu0 %v1393
    %1443 = vmatpush1.bf16.msra.mxu0 %v1392
    %1444 = vmatprep.subr.bf16.mxu0 0
    %1445 = vmatpush1.bf16.msra.mxu0 0
    %1446 = vmatprep.subr.bf16.mxu0 0
    %1447 = vmatpush1.bf16.msra.mxu0 0
    %1448 = vmatprep.subr.bf16.mxu0 0
    %1449 = vmatpush1.bf16.msra.mxu0 0
    %1450 = vmatprep.subr.bf16.mxu0 0
    %1451 = vmatpush1.bf16.msra.mxu0 0
    %1452 = vmatprep.subr.bf16.mxu0 0
    %1453 = vmatpush1.bf16.msra.mxu0 0
    %1454 = vmatprep.subr.bf16.mxu0 0
    %1455 = vmatpush1.bf16.msra.mxu0 0
    %1456 = vmatprep.subr.bf16.mxu0 0
    %1457 = vmatpush1.bf16.msra.mxu0 0
    %1458 = vmatprep.subr.bf16.mxu0 0
    %1459 = vmatpush1.bf16.msra.mxu0 0
    %1460 = vmatprep.mubr.bf16.mxu0 0
    %1461 = vmatmul.mubr.bf16.gmra.mrb[0].mxu0 %v1260
    %v1462 = vpop.f32.mrb[0].mxu0
    %v1463 = vadd.f32 0.0, %v1462
    %v1464 = vpop.f32.mrb[0].mxu0
    %v1465 = vadd.f32 0.0, %v1464
    %v1466 = vpop.f32.mrb[0].mxu0
    %v1467 = vadd.f32 0.0, %v1466
    %v1468 = vpop.f32.mrb[0].mxu0
    %v1469 = vadd.f32 0.0, %v1468
    %1470 = vmatprep.mubr.bf16.mxu0 0
    %1471 = vmatmul.mubr.bf16.gmra.mrb[0].mxu0 %v1261
    %v1472 = vpop.f32.mrb[0].mxu0
    %v1473 = vadd.f32 0.0, %v1472
    %v1474 = vpop.f32.mrb[0].mxu0
    %v1475 = vadd.f32 0.0, %v1474
    %v1476 = vpop.f32.mrb[0].mxu0
    %v1477 = vadd.f32 0.0, %v1476
    %v1478 = vpop.f32.mrb[0].mxu0
    %v1479 = vadd.f32 0.0, %v1478
    %1480 = vmatprep.mubr.bf16.mxu0 0
    %1481 = vmatmul.mubr.bf16.gmra.mrb[0].mxu0 %v1262
    %v1482 = vpop.f32.mrb[0].mxu0
    %v1483 = vadd.f32 0.0, %v1482
    %v1484 = vpop.f32.mrb[0].mxu0
    %v1485 = vadd.f32 0.0, %v1484
    %v1486 = vpop.f32.mrb[0].mxu0
    %v1487 = vadd.f32 0.0, %v1486
    %v1488 = vpop.f32.mrb[0].mxu0
    %v1489 = vadd.f32 0.0, %v1488
    %1490 = vmatprep.mubr.bf16.mxu0 0
    %1491 = vmatmul.mubr.bf16.gmra.mrb[0].mxu0 %v1263
    %v1492 = vpop.f32.mrb[0].mxu0
    %v1493 = vadd.f32 0.0, %v1492
    %v1494 = vpop.f32.mrb[0].mxu0
    %v1495 = vadd.f32 0.0, %v1494
    %v1496 = vpop.f32.mrb[0].mxu0
    %v1497 = vadd.f32 0.0, %v1496
    %v1498 = vpop.f32.mrb[0].mxu0
    %v1499 = vadd.f32 0.0, %v1498
    %1500 = vdwg.mxu0
    %1501 = vmatprep.subr.bf16.mxu0 %v1367
    %1502 = vmatpush1.bf16.msra.mxu0 %v1366
    %1503 = vmatprep.subr.bf16.mxu0 %v1371
    %1504 = vmatpush1.bf16.msra.mxu0 %v1370
    %1505 = vmatprep.subr.bf16.mxu0 %v1375
    %1506 = vmatpush1.bf16.msra.mxu0 %v1374
    %1507 = vmatprep.subr.bf16.mxu0 %v1379
    %1508 = vmatpush1.bf16.msra.mxu0 %v1378
    %1509 = vmatprep.subr.bf16.mxu0 %v1383
    %1510 = vmatpush1.bf16.msra.mxu0 %v1382
    %1511 = vmatprep.subr.bf16.mxu0 %v1387
    %1512 = vmatpush1.bf16.msra.mxu0 %v1386
    %1513 = vmatprep.subr.bf16.mxu0 %v1391
    %1514 = vmatpush1.bf16.msra.mxu0 %v1390
    %1515 = vmatprep.subr.bf16.mxu0 %v1395
    %1516 = vmatpush1.bf16.msra.mxu0 %v1394
    %1517 = vmatprep.subr.bf16.mxu0 0
    %1518 = vmatpush1.bf16.msra.mxu0 0
    %1519 = vmatprep.subr.bf16.mxu0 0
    %1520 = vmatpush1.bf16.msra.mxu0 0
    %1521 = vmatprep.subr.bf16.mxu0 0
    %1522 = vmatpush1.bf16.msra.mxu0 0
    %1523 = vmatprep.subr.bf16.mxu0 0
    %1524 = vmatpush1.bf16.msra.mxu0 0
    %1525 = vmatprep.subr.bf16.mxu0 0
    %1526 = vmatpush1.bf16.msra.mxu0 0
    %1527 = vmatprep.subr.bf16.mxu0 0
    %1528 = vmatpush1.bf16.msra.mxu0 0
    %1529 = vmatprep.subr.bf16.mxu0 0
    %1530 = vmatpush1.bf16.msra.mxu0 0
    %1531 = vmatprep.subr.bf16.mxu0 0
    %1532 = vmatpush1.bf16.msra.mxu0 0
    %1533 = vmatprep.mubr.bf16.mxu0 0
    %1534 = vmatmul.mubr.bf16.gmra.mrb[0].mxu0 %v1260
    %v1535 = vpop.f32.mrb[0].mxu0
    %v1536 = vadd.f32 0.0, %v1535
    %v1537 = vpop.f32.mrb[0].mxu0
    %v1538 = vadd.f32 0.0, %v1537
    %v1539 = vpop.f32.mrb[0].mxu0
    %v1540 = vadd.f32 0.0, %v1539
    %v1541 = vpop.f32.mrb[0].mxu0
    %v1542 = vadd.f32 0.0, %v1541
    %1543 = vmatprep.mubr.bf16.mxu0 0
    %1544 = vmatmul.mubr.bf16.gmra.mrb[0].mxu0 %v1261
    %v1545 = vpop.f32.mrb[0].mxu0
    %v1546 = vadd.f32 0.0, %v1545
    %v1547 = vpop.f32.mrb[0].mxu0
    %v1548 = vadd.f32 0.0, %v1547
    %v1549 = vpop.f32.mrb[0].mxu0
    %v1550 = vadd.f32 0.0, %v1549
    %v1551 = vpop.f32.mrb[0].mxu0
    %v1552 = vadd.f32 0.0, %v1551
    %1553 = vmatprep.mubr.bf16.mxu0 0
    %1554 = vmatmul.mubr.bf16.gmra.mrb[0].mxu0 %v1262
    %v1555 = vpop.f32.mrb[0].mxu0
    %v1556 = vadd.f32 0.0, %v1555
    %v1557 = vpop.f32.mrb[0].mxu0
    %v1558 = vadd.f32 0.0, %v1557
    %v1559 = vpop.f32.mrb[0].mxu0
    %v1560 = vadd.f32 0.0, %v1559
    %v1561 = vpop.f32.mrb[0].mxu0
    %v1562 = vadd.f32 0.0, %v1561
    %1563 = vmatprep.mubr.bf16.mxu0 0
    %1564 = vmatmul.mubr.bf16.gmra.mrb[0].mxu0 %v1263
    %v1565 = vpop.f32.mrb[0].mxu0
    %v1566 = vadd.f32 0.0, %v1565
    %v1567 = vpop.f32.mrb[0].mxu0
    %v1568 = vadd.f32 0.0, %v1567
    %v1569 = vpop.f32.mrb[0].mxu0
    %v1570 = vadd.f32 0.0, %v1569
    %v1571 = vpop.f32.mrb[0].mxu0
    %v1572 = vadd.f32 0.0, %v1571
    %1573 = vdwg.mxu0
    %s1574 = scalar_lea.vmem %s3, 4
    %v1575 = vld [vmem:[%s1574] sm:$0xf]
    %v1577 = vlaneseq
    %v1578 = vshrl.u32 %v1577, 7
    %v1579 = vsub.s32 0, %v1578
    %v1580 = vrot.slane %v1575, %v1579
    %v1581 = vlaneseq
    %v1582 = vshrl.u32 %v1581, 7
    %v1583 = vsub.s32 1, %v1582
    %v1584 = vrot.slane %v1575, %v1583
    %v1585 = vlaneseq
    %v1586 = vshrl.u32 %v1585, 7
    %v1587 = vsub.s32 2, %v1586
    %v1588 = vrot.slane %v1575, %v1587
    %v1589 = vlaneseq
    %v1590 = vshrl.u32 %v1589, 7
    %v1591 = vsub.s32 3, %v1590
    %v1592 = vrot.slane %v1575, %v1591
    %v1597 = vadd.f32 %v1463, %v1580
    %v1598 = vadd.f32 %v1465, %v1584
    %v1599 = vadd.f32 %v1536, %v1588
    %v1600 = vadd.f32 %v1538, %v1592
    %v1601 = vadd.f32 %v1467, %v1580
    %v1602 = vadd.f32 %v1469, %v1584
    %v1603 = vadd.f32 %v1540, %v1588
    %v1604 = vadd.f32 %v1542, %v1592
    %v1605 = vadd.f32 %v1473, %v1580
    %v1606 = vadd.f32 %v1475, %v1584
    %v1607 = vadd.f32 %v1546, %v1588
    %v1608 = vadd.f32 %v1548, %v1592
    %v1609 = vadd.f32 %v1477, %v1580
    %v1610 = vadd.f32 %v1479, %v1584
    %v1611 = vadd.f32 %v1550, %v1588
    %v1612 = vadd.f32 %v1552, %v1592
    %v1613 = vadd.f32 %v1483, %v1580
    %v1614 = vadd.f32 %v1485, %v1584
    %v1615 = vadd.f32 %v1556, %v1588
    %v1616 = vadd.f32 %v1558, %v1592
    %v1617 = vadd.f32 %v1487, %v1580
    %v1618 = vadd.f32 %v1489, %v1584
    %v1619 = vadd.f32 %v1560, %v1588
    %v1620 = vadd.f32 %v1562, %v1592
    %v1621 = vadd.f32 %v1493, %v1580
    %v1622 = vadd.f32 %v1495, %v1584
    %v1623 = vadd.f32 %v1566, %v1588
    %v1624 = vadd.f32 %v1568, %v1592
    %v1625 = vadd.f32 %v1497, %v1580
    %v1626 = vadd.f32 %v1499, %v1584
    %v1627 = vadd.f32 %v1570, %v1588
    %v1628 = vadd.f32 %v1572, %v1592
    %1629 = vst [vmem:[#allocation2] sm:$0xff] %v1597
    %1630 = vst [vmem:[#allocation2 + $0x8] sm:$0xff] %v1598
    %1631 = vst [vmem:[#allocation2 + $0x10] sm:$0xff] %v1599
    %1632 = vst [vmem:[#allocation2 + $0x18] sm:$0xff] %v1600
    %1633 = vst [vmem:[#allocation2 + $0x20] sm:$0xff] %v1601
    %1634 = vst [vmem:[#allocation2 + $0x28] sm:$0xff] %v1602
    %1635 = vst [vmem:[#allocation2 + $0x30] sm:$0xff] %v1603
    %1636 = vst [vmem:[#allocation2 + $0x38] sm:$0xff] %v1604
    %1637 = vst [vmem:[#allocation2 + $0x40] sm:$0xff] %v1605
    %1638 = vst [vmem:[#allocation2 + $0x48] sm:$0xff] %v1606
    %1639 = vst [vmem:[#allocation2 + $0x50] sm:$0xff] %v1607
    %1640 = vst [vmem:[#allocation2 + $0x58] sm:$0xff] %v1608
    %1641 = vst [vmem:[#allocation2 + $0x60] sm:$0xff] %v1609
    %1642 = vst [vmem:[#allocation2 + $0x68] sm:$0xff] %v1610
    %1643 = vst [vmem:[#allocation2 + $0x70] sm:$0xff] %v1611
    %1644 = vst [vmem:[#allocation2 + $0x78] sm:$0xff] %v1612
    %1645 = vst [vmem:[#allocation2 + $0x80] sm:$0xff] %v1613
    %1646 = vst [vmem:[#allocation2 + $0x88] sm:$0xff] %v1614
    %1647 = vst [vmem:[#allocation2 + $0x90] sm:$0xff] %v1615
    %1648 = vst [vmem:[#allocation2 + $0x98] sm:$0xff] %v1616
    %1649 = vst [vmem:[#allocation2 + $0xa0] sm:$0xff] %v1617
    %1650 = vst [vmem:[#allocation2 + $0xa8] sm:$0xff] %v1618
    %1651 = vst [vmem:[#allocation2 + $0xb0] sm:$0xff] %v1619
    %1652 = vst [vmem:[#allocation2 + $0xb8] sm:$0xff] %v1620
    %1653 = vst [vmem:[#allocation2 + $0xc0] sm:$0xff] %v1621
    %1654 = vst [vmem:[#allocation2 + $0xc8] sm:$0xff] %v1622
    %1655 = vst [vmem:[#allocation2 + $0xd0] sm:$0xff] %v1623
    %1656 = vst [vmem:[#allocation2 + $0xd8] sm:$0xff] %v1624
    %1657 = vst [vmem:[#allocation2 + $0xe0] sm:$0xff] %v1625
    %1658 = vst [vmem:[#allocation2 + $0xe8] sm:$0xff] %v1626
    %1659 = vst [vmem:[#allocation2 + $0xf0] sm:$0xff] %v1627
    %1660 = vst [vmem:[#allocation2 + $0xf8] sm:$0xff] %v1628
    %1661 = vst [vmem:[#allocation4] sm:$0xff] 0.0
    %1662 = vst [vmem:[#allocation5] sm:$0xff] 0.0
    %v1663 = vld [vmem:[#allocation4] sm:$0xff]
    %v1664 = vld [vmem:[#allocation5] sm:$0xff]
    %v1665 = vld [vmem:[#allocation2] sm:$0xff]
    %v1666 = vld [vmem:[#allocation2 + $0x8] sm:$0xff]
    %v1667 = vld [vmem:[#allocation2 + $0x10] sm:$0xff]
    %v1668 = vld [vmem:[#allocation2 + $0x18] sm:$0xff]
    %v1669 = vpack.c.bf16 %v1663, %v1663
    %v1702 = vunpack.c.l.b16 %v1172
    %v1703 = vunpack.c.h.b16 %v1172
    %v1704 = vunpack.c.l.b16 %v1173
    %v1705 = vunpack.c.h.b16 %v1173
    %v1706 = vunpack.c.l.b16 %v1174
    %v1707 = vunpack.c.h.b16 %v1174
    %v1708 = vunpack.c.l.b16 %v1175
    %v1709 = vunpack.c.h.b16 %v1175
    %v1710 = vunpack.c.l.b16 %v1176
    %v1711 = vunpack.c.h.b16 %v1176
    %v1712 = vunpack.c.l.b16 %v1177
    %v1713 = vunpack.c.h.b16 %v1177
    %v1714 = vunpack.c.l.b16 %v1178
    %v1715 = vunpack.c.h.b16 %v1178
    %v1716 = vunpack.c.l.b16 %v1179
    %v1717 = vunpack.c.h.b16 %v1179
    %v1718 = vunpack.c.l.b16 %v1180
    %v1719 = vunpack.c.h.b16 %v1180
    %v1720 = vunpack.c.l.b16 %v1181
    %v1721 = vunpack.c.h.b16 %v1181
    %v1722 = vunpack.c.l.b16 %v1182
    %v1723 = vunpack.c.h.b16 %v1182
    %v1724 = vunpack.c.l.b16 %v1183
    %v1725 = vunpack.c.h.b16 %v1183
    %v1726 = vunpack.c.l.b16 %v1184
    %v1727 = vunpack.c.h.b16 %v1184
    %v1728 = vunpack.c.l.b16 %v1185
    %v1729 = vunpack.c.h.b16 %v1185
    %v1730 = vunpack.c.l.b16 %v1186
    %v1731 = vunpack.c.h.b16 %v1186
    %v1732 = vunpack.c.l.b16 %v1187
    %v1733 = vunpack.c.h.b16 %v1187
    %v1734 = vunpack.c.l.b16 %v1188
    %v1735 = vunpack.c.h.b16 %v1188
    %v1736 = vunpack.c.l.b16 %v1189
    %v1737 = vunpack.c.h.b16 %v1189
    %v1738 = vunpack.c.l.b16 %v1190
    %v1739 = vunpack.c.h.b16 %v1190
    %v1740 = vunpack.c.l.b16 %v1191
    %v1741 = vunpack.c.h.b16 %v1191
    %v1742 = vunpack.c.l.b16 %v1192
    %v1743 = vunpack.c.h.b16 %v1192
    %v1744 = vunpack.c.l.b16 %v1193
    %v1745 = vunpack.c.h.b16 %v1193
    %v1746 = vunpack.c.l.b16 %v1194
    %v1747 = vunpack.c.h.b16 %v1194
    %v1748 = vunpack.c.l.b16 %v1195
    %v1749 = vunpack.c.h.b16 %v1195
    %v1750 = vunpack.c.l.b16 %v1196
    %v1751 = vunpack.c.h.b16 %v1196
    %v1752 = vunpack.c.l.b16 %v1197
    %v1753 = vunpack.c.h.b16 %v1197
    %v1754 = vunpack.c.l.b16 %v1198
    %v1755 = vunpack.c.h.b16 %v1198
    %v1756 = vunpack.c.l.b16 %v1199
    %v1757 = vunpack.c.h.b16 %v1199
    %v1758 = vunpack.c.l.b16 %v1200
    %v1759 = vunpack.c.h.b16 %v1200
    %v1760 = vunpack.c.l.b16 %v1201
    %v1761 = vunpack.c.h.b16 %v1201
    %v1762 = vunpack.c.l.b16 %v1202
    %v1763 = vunpack.c.h.b16 %v1202
    %v1764 = vunpack.c.l.b16 %v1203
    %v1765 = vunpack.c.h.b16 %v1203
    %v1766 = vpack.c.b16 %v1706, %v1702
    %v1767 = vpack.c.b16 %v1707, %v1703
    %v1768 = vpack.c.b16 %v1708, %v1704
    %v1769 = vpack.c.b16 %v1709, %v1705
    %v1770 = vpack.c.b16 %v1714, %v1710
    %v1771 = vpack.c.b16 %v1715, %v1711
    %v1772 = vpack.c.b16 %v1716, %v1712
    %v1773 = vpack.c.b16 %v1717, %v1713
    %v1774 = vpack.c.b16 %v1722, %v1718
    %v1775 = vpack.c.b16 %v1723, %v1719
    %v1776 = vpack.c.b16 %v1724, %v1720
    %v1777 = vpack.c.b16 %v1725, %v1721
    %v1778 = vpack.c.b16 %v1730, %v1726
    %v1779 = vpack.c.b16 %v1731, %v1727
    %v1780 = vpack.c.b16 %v1732, %v1728
    %v1781 = vpack.c.b16 %v1733, %v1729
    %v1782 = vpack.c.b16 %v1738, %v1734
    %v1783 = vpack.c.b16 %v1739, %v1735
    %v1784 = vpack.c.b16 %v1740, %v1736
    %v1785 = vpack.c.b16 %v1741, %v1737
    %v1786 = vpack.c.b16 %v1746, %v1742
    %v1787 = vpack.c.b16 %v1747, %v1743
    %v1788 = vpack.c.b16 %v1748, %v1744
    %v1789 = vpack.c.b16 %v1749, %v1745
    %v1790 = vpack.c.b16 %v1754, %v1750
    %v1791 = vpack.c.b16 %v1755, %v1751
    %v1792 = vpack.c.b16 %v1756, %v1752
    %v1793 = vpack.c.b16 %v1757, %v1753
    %v1794 = vpack.c.b16 %v1762, %v1758
    %v1795 = vpack.c.b16 %v1763, %v1759
    %v1796 = vpack.c.b16 %v1764, %v1760
    %v1797 = vpack.c.b16 %v1765, %v1761
    %1830 = vmatprep.subr.bf16.mxu0 %v1767
    %1831 = vmatpush1.bf16.msra.mxu0 %v1766
    %1832 = vmatprep.subr.bf16.mxu0 %v1771
    %1833 = vmatpush1.bf16.msra.mxu0 %v1770
    %1834 = vmatprep.subr.bf16.mxu0 %v1775
    %1835 = vmatpush1.bf16.msra.mxu0 %v1774
    %1836 = vmatprep.subr.bf16.mxu0 %v1779
    %1837 = vmatpush1.bf16.msra.mxu0 %v1778
    %1838 = vmatprep.subr.bf16.mxu0 %v1783
    %1839 = vmatpush1.bf16.msra.mxu0 %v1782
    %1840 = vmatprep.subr.bf16.mxu0 %v1787
    %1841 = vmatpush1.bf16.msra.mxu0 %v1786
    %1842 = vmatprep.subr.bf16.mxu0 %v1791
    %1843 = vmatpush1.bf16.msra.mxu0 %v1790
    %1844 = vmatprep.subr.bf16.mxu0 %v1795
    %1845 = vmatpush1.bf16.msra.mxu0 %v1794
    %1846 = vmatprep.subr.bf16.mxu0 0
    %1847 = vmatpush1.bf16.msra.mxu0 0
    %1848 = vmatprep.subr.bf16.mxu0 0
    %1849 = vmatpush1.bf16.msra.mxu0 0
    %1850 = vmatprep.subr.bf16.mxu0 0
    %1851 = vmatpush1.bf16.msra.mxu0 0
    %1852 = vmatprep.subr.bf16.mxu0 0
    %1853 = vmatpush1.bf16.msra.mxu0 0
    %1854 = vmatprep.subr.bf16.mxu0 0
    %1855 = vmatpush1.bf16.msra.mxu0 0
    %1856 = vmatprep.subr.bf16.mxu0 0
    %1857 = vmatpush1.bf16.msra.mxu0 0
    %1858 = vmatprep.subr.bf16.mxu0 0
    %1859 = vmatpush1.bf16.msra.mxu0 0
    %1860 = vmatprep.subr.bf16.mxu0 0
    %1861 = vmatpush1.bf16.msra.mxu0 0
    %1862 = vmatprep.mubr.bf16.mxu0 0
    %1863 = vmatmul.mubr.bf16.gmra.mrb[0].mxu0 %v1669
    %v1864 = vpop.f32.mrb[0].mxu0
    %v1865 = vadd.f32 0.0, %v1864
    %v1866 = vpop.f32.mrb[0].mxu0
    %v1867 = vadd.f32 0.0, %v1866
    %v1868 = vpop.f32.mrb[0].mxu0
    %v1869 = vpop.f32.mrb[0].mxu0
    %1870 = vdwg.mxu0
    %1871 = vmatprep.subr.bf16.mxu0 %v1769
    %1872 = vmatpush1.bf16.msra.mxu0 %v1768
    %1873 = vmatprep.subr.bf16.mxu0 %v1773
    %1874 = vmatpush1.bf16.msra.mxu0 %v1772
    %1875 = vmatprep.subr.bf16.mxu0 %v1777
    %1876 = vmatpush1.bf16.msra.mxu0 %v1776
    %1877 = vmatprep.subr.bf16.mxu0 %v1781
    %1878 = vmatpush1.bf16.msra.mxu0 %v1780
    %1879 = vmatprep.subr.bf16.mxu0 %v1785
    %1880 = vmatpush1.bf16.msra.mxu0 %v1784
    %1881 = vmatprep.subr.bf16.mxu0 %v1789
    %1882 = vmatpush1.bf16.msra.mxu0 %v1788
    %1883 = vmatprep.subr.bf16.mxu0 %v1793
    %1884 = vmatpush1.bf16.msra.mxu0 %v1792
    %1885 = vmatprep.subr.bf16.mxu0 %v1797
    %1886 = vmatpush1.bf16.msra.mxu0 %v1796
    %1887 = vmatprep.subr.bf16.mxu0 0
    %1888 = vmatpush1.bf16.msra.mxu0 0
    %1889 = vmatprep.subr.bf16.mxu0 0
    %1890 = vmatpush1.bf16.msra.mxu0 0
    %1891 = vmatprep.subr.bf16.mxu0 0
    %1892 = vmatpush1.bf16.msra.mxu0 0
    %1893 = vmatprep.subr.bf16.mxu0 0
    %1894 = vmatpush1.bf16.msra.mxu0 0
    %1895 = vmatprep.subr.bf16.mxu0 0
    %1896 = vmatpush1.bf16.msra.mxu0 0
    %1897 = vmatprep.subr.bf16.mxu0 0
    %1898 = vmatpush1.bf16.msra.mxu0 0
    %1899 = vmatprep.subr.bf16.mxu0 0
    %1900 = vmatpush1.bf16.msra.mxu0 0
    %1901 = vmatprep.subr.bf16.mxu0 0
    %1902 = vmatpush1.bf16.msra.mxu0 0
    %1903 = vmatprep.mubr.bf16.mxu0 0
    %1904 = vmatmul.mubr.bf16.gmra.mrb[0].mxu0 %v1669
    %v1905 = vpop.f32.mrb[0].mxu0
    %v1906 = vadd.f32 0.0, %v1905
    %v1907 = vpop.f32.mrb[0].mxu0
    %v1908 = vadd.f32 0.0, %v1907
    %v1909 = vpop.f32.mrb[0].mxu0
    %v1910 = vpop.f32.mrb[0].mxu0
    %1911 = vdwg.mxu0
    %v1912 = vadd.f32 %v1665, %v1865
    %v1913 = vadd.f32 %v1666, %v1867
    %v1914 = vadd.f32 %v1667, %v1906
    %v1915 = vadd.f32 %v1668, %v1908
    %v1916 = vtanh.pop %v1912
    %v1917 = vmul.f32 %v1916, 0.5
    %v1918 = vadd.f32 %v1917, 0.5
    %v1919 = vtanh.pop %v1913
    %v1920 = vmul.f32 %v1919, 0.5
    %v1921 = vadd.f32 %v1920, 0.5
    %v1922 = vtanh.pop %v1914
    %v1923 = vtanh.pop %v1915
    %v1924 = vmul.f32 %v1923, 0.5
    %v1925 = vadd.f32 %v1924, 0.5
    %v1926 = vmul.f32 %v1921, %v1664
    %v1927 = vmul.f32 %v1918, %v1922
    %v1928 = vadd.f32 %v1926, %v1927
    %v1929 = vtanh.pop %v1928
    %v1930 = vmul.f32 %v1925, %v1929
    %1931 = vst [vmem:[#allocation4] sm:$0xff] %v1930
    %1932 = vst [vmem:[#allocation5] sm:$0xff] %v1928
    %v1933 = vpack.c.bf16 %v1930, %v1930
    %1934 = vst [vmem:[#allocation3] sm:$0xf] %v1933
    %v1935 = vld [vmem:[#allocation4] sm:$0xff]
    %v1936 = vld [vmem:[#allocation5] sm:$0xff]
    %s1937 = scalar_lea.vmem [#allocation2], 32
    %v1938 = vld [vmem:[%s1937] sm:$0xff]
    %v1939 = vld [vmem:[%s1937 + $0x8] sm:$0xff]
    %v1940 = vld [vmem:[%s1937 + $0x10] sm:$0xff]
    %v1941 = vld [vmem:[%s1937 + $0x18] sm:$0xff]
    %v1942 = vpack.c.bf16 %v1935, %v1935
    %1943 = vmatprep.subr.bf16.mxu0 %v1767
    %1944 = vmatpush1.bf16.msra.mxu0 %v1766
    %1945 = vmatprep.subr.bf16.mxu0 %v1771
    %1946 = vmatpush1.bf16.msra.mxu0 %v1770
    %1947 = vmatprep.subr.bf16.mxu0 %v1775
    %1948 = vmatpush1.bf16.msra.mxu0 %v1774
    %1949 = vmatprep.subr.bf16.mxu0 %v1779
    %1950 = vmatpush1.bf16.msra.mxu0 %v1778
    %1951 = vmatprep.subr.bf16.mxu0 %v1783
    %1952 = vmatpush1.bf16.msra.mxu0 %v1782
    %1953 = vmatprep.subr.bf16.mxu0 %v1787
    %1954 = vmatpush1.bf16.msra.mxu0 %v1786
    %1955 = vmatprep.subr.bf16.mxu0 %v1791
    %1956 = vmatpush1.bf16.msra.mxu0 %v1790
    %1957 = vmatprep.subr.bf16.mxu0 %v1795
    %1958 = vmatpush1.bf16.msra.mxu0 %v1794
    %1959 = vmatprep.subr.bf16.mxu0 0
    %1960 = vmatpush1.bf16.msra.mxu0 0
    %1961 = vmatprep.subr.bf16.mxu0 0
    %1962 = vmatpush1.bf16.msra.mxu0 0
    %1963 = vmatprep.subr.bf16.mxu0 0
    %1964 = vmatpush1.bf16.msra.mxu0 0
    %1965 = vmatprep.subr.bf16.mxu0 0
    %1966 = vmatpush1.bf16.msra.mxu0 0
    %1967 = vmatprep.subr.bf16.mxu0 0
    %1968 = vmatpush1.bf16.msra.mxu0 0
    %1969 = vmatprep.subr.bf16.mxu0 0
    %1970 = vmatpush1.bf16.msra.mxu0 0
    %1971 = vmatprep.subr.bf16.mxu0 0
    %1972 = vmatpush1.bf16.msra.mxu0 0
    %1973 = vmatprep.subr.bf16.mxu0 0
    %1974 = vmatpush1.bf16.msra.mxu0 0
    %1975 = vmatprep.mubr.bf16.mxu0 0
    %1976 = vmatmul.mubr.bf16.gmra.mrb[0].mxu0 %v1942
    %v1977 = vpop.f32.mrb[0].mxu0
    %v1978 = vadd.f32 0.0, %v1977
    %v1979 = vpop.f32.mrb[0].mxu0
    %v1980 = vadd.f32 0.0, %v1979
    %v1981 = vpop.f32.mrb[0].mxu0
    %v1982 = vpop.f32.mrb[0].mxu0
    %1983 = vdwg.mxu0
    %1984 = vmatprep.subr.bf16.mxu0 %v1769
    %1985 = vmatpush1.bf16.msra.mxu0 %v1768
    %1986 = vmatprep.subr.bf16.mxu0 %v1773
    %1987 = vmatpush1.bf16.msra.mxu0 %v1772
    %1988 = vmatprep.subr.bf16.mxu0 %v1777
    %1989 = vmatpush1.bf16.msra.mxu0 %v1776
    %1990 = vmatprep.subr.bf16.mxu0 %v1781
    %1991 = vmatpush1.bf16.msra.mxu0 %v1780
    %1992 = vmatprep.subr.bf16.mxu0 %v1785
    %1993 = vmatpush1.bf16.msra.mxu0 %v1784
    %1994 = vmatprep.subr.bf16.mxu0 %v1789
    %1995 = vmatpush1.bf16.msra.mxu0 %v1788
    %1996 = vmatprep.subr.bf16.mxu0 %v1793
    %1997 = vmatpush1.bf16.msra.mxu0 %v1792
    %1998 = vmatprep.subr.bf16.mxu0 %v1797
    %1999 = vmatpush1.bf16.msra.mxu0 %v1796
    %2000 = vmatprep.subr.bf16.mxu0 0
    %2001 = vmatpush1.bf16.msra.mxu0 0
    %2002 = vmatprep.subr.bf16.mxu0 0
    %2003 = vmatpush1.bf16.msra.mxu0 0
    %2004 = vmatprep.subr.bf16.mxu0 0
    %2005 = vmatpush1.bf16.msra.mxu0 0
    %2006 = vmatprep.subr.bf16.mxu0 0
    %2007 = vmatpush1.bf16.msra.mxu0 0
    %2008 = vmatprep.subr.bf16.mxu0 0
    %2009 = vmatpush1.bf16.msra.mxu0 0
    %2010 = vmatprep.subr.bf16.mxu0 0
    %2011 = vmatpush1.bf16.msra.mxu0 0
    %2012 = vmatprep.subr.bf16.mxu0 0
    %2013 = vmatpush1.bf16.msra.mxu0 0
    %2014 = vmatprep.subr.bf16.mxu0 0
    %2015 = vmatpush1.bf16.msra.mxu0 0
    %2016 = vmatprep.mubr.bf16.mxu0 0
    %2017 = vmatmul.mubr.bf16.gmra.mrb[0].mxu0 %v1942
    %v2018 = vpop.f32.mrb[0].mxu0
    %v2019 = vadd.f32 0.0, %v2018
    %v2020 = vpop.f32.mrb[0].mxu0
    %v2021 = vadd.f32 0.0, %v2020
    %v2022 = vpop.f32.mrb[0].mxu0
    %v2023 = vpop.f32.mrb[0].mxu0
    %2024 = vdwg.mxu0
    %v2025 = vadd.f32 %v1938, %v1978
    %v2026 = vadd.f32 %v1939, %v1980
    %v2027 = vadd.f32 %v1940, %v2019
    %v2028 = vadd.f32 %v1941, %v2021
    %v2029 = vtanh.pop %v2025
    %v2030 = vmul.f32 %v2029, 0.5
    %v2031 = vadd.f32 %v2030, 0.5
    %v2032 = vtanh.pop %v2026
    %v2033 = vmul.f32 %v2032, 0.5
    %v2034 = vadd.f32 %v2033, 0.5
    %v2035 = vtanh.pop %v2027
    %v2036 = vtanh.pop %v2028
    %v2037 = vmul.f32 %v2036, 0.5
    %v2038 = vadd.f32 %v2037, 0.5
    %v2039 = vmul.f32 %v2034, %v1936
    %v2040 = vmul.f32 %v2031, %v2035
    %v2041 = vadd.f32 %v2039, %v2040
    %v2042 = vtanh.pop %v2041
    %v2043 = vmul.f32 %v2038, %v2042
    %2044 = vst [vmem:[#allocation4] sm:$0xff] %v2043
    %2045 = vst [vmem:[#allocation5] sm:$0xff] %v2041
    %v2046 = vpack.c.bf16 %v2043, %v2043
    %2047 = vst [vmem:[%s481] sm:$0xf] %v2046
    %v2048 = vld [vmem:[#allocation4] sm:$0xff]
    %v2049 = vld [vmem:[#allocation5] sm:$0xff]
    %s2050 = scalar_lea.vmem [#allocation2], 64
    %v2051 = vld [vmem:[%s2050] sm:$0xff]
    %v2052 = vld [vmem:[%s2050 + $0x8] sm:$0xff]
    %v2053 = vld [vmem:[%s2050 + $0x10] sm:$0xff]
    %v2054 = vld [vmem:[%s2050 + $0x18] sm:$0xff]
    %v2055 = vpack.c.bf16 %v2048, %v2048
    %2056 = vmatprep.subr.bf16.mxu0 %v1767
    %2057 = vmatpush1.bf16.msra.mxu0 %v1766
    %2058 = vmatprep.subr.bf16.mxu0 %v1771
    %2059 = vmatpush1.bf16.msra.mxu0 %v1770
    %2060 = vmatprep.subr.bf16.mxu0 %v1775
    %2061 = vmatpush1.bf16.msra.mxu0 %v1774
    %2062 = vmatprep.subr.bf16.mxu0 %v1779
    %2063 = vmatpush1.bf16.msra.mxu0 %v1778
    %2064 = vmatprep.subr.bf16.mxu0 %v1783
    %2065 = vmatpush1.bf16.msra.mxu0 %v1782
    %2066 = vmatprep.subr.bf16.mxu0 %v1787
    %2067 = vmatpush1.bf16.msra.mxu0 %v1786
    %2068 = vmatprep.subr.bf16.mxu0 %v1791
    %2069 = vmatpush1.bf16.msra.mxu0 %v1790
    %2070 = vmatprep.subr.bf16.mxu0 %v1795
    %2071 = vmatpush1.bf16.msra.mxu0 %v1794
    %2072 = vmatprep.subr.bf16.mxu0 0
    %2073 = vmatpush1.bf16.msra.mxu0 0
    %2074 = vmatprep.subr.bf16.mxu0 0
    %2075 = vmatpush1.bf16.msra.mxu0 0
    %2076 = vmatprep.subr.bf16.mxu0 0
    %2077 = vmatpush1.bf16.msra.mxu0 0
    %2078 = vmatprep.subr.bf16.mxu0 0
    %2079 = vmatpush1.bf16.msra.mxu0 0
    %2080 = vmatprep.subr.bf16.mxu0 0
    %2081 = vmatpush1.bf16.msra.mxu0 0
    %2082 = vmatprep.subr.bf16.mxu0 0
    %2083 = vmatpush1.bf16.msra.mxu0 0
    %2084 = vmatprep.subr.bf16.mxu0 0
    %2085 = vmatpush1.bf16.msra.mxu0 0
    %2086 = vmatprep.subr.bf16.mxu0 0
    %2087 = vmatpush1.bf16.msra.mxu0 0
    %2088 = vmatprep.mubr.bf16.mxu0 0
    %2089 = vmatmul.mubr.bf16.gmra.mrb[0].mxu0 %v2055
    %v2090 = vpop.f32.mrb[0].mxu0
    %v2091 = vadd.f32 0.0, %v2090
    %v2092 = vpop.f32.mrb[0].mxu0
    %v2093 = vadd.f32 0.0, %v2092
    %v2094 = vpop.f32.mrb[0].mxu0
    %v2095 = vpop.f32.mrb[0].mxu0
    %2096 = vdwg.mxu0
    %2097 = vmatprep.subr.bf16.mxu0 %v1769
    %2098 = vmatpush1.bf16.msra.mxu0 %v1768
    %2099 = vmatprep.subr.bf16.mxu0 %v1773
    %2100 = vmatpush1.bf16.msra.mxu0 %v1772
    %2101 = vmatprep.subr.bf16.mxu0 %v1777
    %2102 = vmatpush1.bf16.msra.mxu0 %v1776
    %2103 = vmatprep.subr.bf16.mxu0 %v1781
    %2104 = vmatpush1.bf16.msra.mxu0 %v1780
    %2105 = vmatprep.subr.bf16.mxu0 %v1785
    %2106 = vmatpush1.bf16.msra.mxu0 %v1784
    %2107 = vmatprep.subr.bf16.mxu0 %v1789
    %2108 = vmatpush1.bf16.msra.mxu0 %v1788
    %2109 = vmatprep.subr.bf16.mxu0 %v1793
    %2110 = vmatpush1.bf16.msra.mxu0 %v1792
    %2111 = vmatprep.subr.bf16.mxu0 %v1797
    %2112 = vmatpush1.bf16.msra.mxu0 %v1796
    %2113 = vmatprep.subr.bf16.mxu0 0
    %2114 = vmatpush1.bf16.msra.mxu0 0
    %2115 = vmatprep.subr.bf16.mxu0 0
    %2116 = vmatpush1.bf16.msra.mxu0 0
    %2117 = vmatprep.subr.bf16.mxu0 0
    %2118 = vmatpush1.bf16.msra.mxu0 0
    %2119 = vmatprep.subr.bf16.mxu0 0
    %2120 = vmatpush1.bf16.msra.mxu0 0
    %2121 = vmatprep.subr.bf16.mxu0 0
    %2122 = vmatpush1.bf16.msra.mxu0 0
    %2123 = vmatprep.subr.bf16.mxu0 0
    %2124 = vmatpush1.bf16.msra.mxu0 0
    %2125 = vmatprep.subr.bf16.mxu0 0
    %2126 = vmatpush1.bf16.msra.mxu0 0
    %2127 = vmatprep.subr.bf16.mxu0 0
    %2128 = vmatpush1.bf16.msra.mxu0 0
    %2129 = vmatprep.mubr.bf16.mxu0 0
    %2130 = vmatmul.mubr.bf16.gmra.mrb[0].mxu0 %v2055
    %v2131 = vpop.f32.mrb[0].mxu0
    %v2132 = vadd.f32 0.0, %v2131
    %v2133 = vpop.f32.mrb[0].mxu0
    %v2134 = vadd.f32 0.0, %v2133
    %v2135 = vpop.f32.mrb[0].mxu0
    %v2136 = vpop.f32.mrb[0].mxu0
    %2137 = vdwg.mxu0
    %v2138 = vadd.f32 %v2051, %v2091
    %v2139 = vadd.f32 %v2052, %v2093
    %v2140 = vadd.f32 %v2053, %v2132
    %v2141 = vadd.f32 %v2054, %v2134
    %v2142 = vtanh.pop %v2138
    %v2143 = vmul.f32 %v2142, 0.5
    %v2144 = vadd.f32 %v2143, 0.5
    %v2145 = vtanh.pop %v2139
    %v2146 = vmul.f32 %v2145, 0.5
    %v2147 = vadd.f32 %v2146, 0.5
    %v2148 = vtanh.pop %v2140
    %v2149 = vtanh.pop %v2141
    %v2150 = vmul.f32 %v2149, 0.5
    %v2151 = vadd.f32 %v2150, 0.5
    %v2152 = vmul.f32 %v2147, %v2049
    %v2153 = vmul.f32 %v2144, %v2148
    %v2154 = vadd.f32 %v2152, %v2153
    %v2155 = vtanh.pop %v2154
    %v2156 = vmul.f32 %v2151, %v2155
    %2157 = vst [vmem:[#allocation4] sm:$0xff] %v2156
    %2158 = vst [vmem:[#allocation5] sm:$0xff] %v2154
    %v2159 = vpack.c.bf16 %v2156, %v2156
    %2160 = vst [vmem:[%s595] sm:$0xf] %v2159
    %v2161 = vld [vmem:[#allocation4] sm:$0xff]
    %v2162 = vld [vmem:[#allocation5] sm:$0xff]
    %s2163 = scalar_lea.vmem [#allocation2], 96
    %v2164 = vld [vmem:[%s2163] sm:$0xff]
    %v2165 = vld [vmem:[%s2163 + $0x8] sm:$0xff]
    %v2166 = vld [vmem:[%s2163 + $0x10] sm:$0xff]
    %v2167 = vld [vmem:[%s2163 + $0x18] sm:$0xff]
    %v2168 = vpack.c.bf16 %v2161, %v2161
    %2169 = vmatprep.subr.bf16.mxu0 %v1767
    %2170 = vmatpush1.bf16.msra.mxu0 %v1766
    %2171 = vmatprep.subr.bf16.mxu0 %v1771
    %2172 = vmatpush1.bf16.msra.mxu0 %v1770
    %2173 = vmatprep.subr.bf16.mxu0 %v1775
    %2174 = vmatpush1.bf16.msra.mxu0 %v1774
    %2175 = vmatprep.subr.bf16.mxu0 %v1779
    %2176 = vmatpush1.bf16.msra.mxu0 %v1778
    %2177 = vmatprep.subr.bf16.mxu0 %v1783
    %2178 = vmatpush1.bf16.msra.mxu0 %v1782
    %2179 = vmatprep.subr.bf16.mxu0 %v1787
    %2180 = vmatpush1.bf16.msra.mxu0 %v1786
    %2181 = vmatprep.subr.bf16.mxu0 %v1791
    %2182 = vmatpush1.bf16.msra.mxu0 %v1790
    %2183 = vmatprep.subr.bf16.mxu0 %v1795
    %2184 = vmatpush1.bf16.msra.mxu0 %v1794
    %2185 = vmatprep.subr.bf16.mxu0 0
    %2186 = vmatpush1.bf16.msra.mxu0 0
    %2187 = vmatprep.subr.bf16.mxu0 0
    %2188 = vmatpush1.bf16.msra.mxu0 0
    %2189 = vmatprep.subr.bf16.mxu0 0
    %2190 = vmatpush1.bf16.msra.mxu0 0
    %2191 = vmatprep.subr.bf16.mxu0 0
    %2192 = vmatpush1.bf16.msra.mxu0 0
    %2193 = vmatprep.subr.bf16.mxu0 0
    %2194 = vmatpush1.bf16.msra.mxu0 0
    %2195 = vmatprep.subr.bf16.mxu0 0
    %2196 = vmatpush1.bf16.msra.mxu0 0
    %2197 = vmatprep.subr.bf16.mxu0 0
    %2198 = vmatpush1.bf16.msra.mxu0 0
    %2199 = vmatprep.subr.bf16.mxu0 0
    %2200 = vmatpush1.bf16.msra.mxu0 0
    %2201 = vmatprep.mubr.bf16.mxu0 0
    %2202 = vmatmul.mubr.bf16.gmra.mrb[0].mxu0 %v2168
    %v2203 = vpop.f32.mrb[0].mxu0
    %v2204 = vadd.f32 0.0, %v2203
    %v2205 = vpop.f32.mrb[0].mxu0
    %v2206 = vadd.f32 0.0, %v2205
    %v2207 = vpop.f32.mrb[0].mxu0
    %v2208 = vpop.f32.mrb[0].mxu0
    %2209 = vdwg.mxu0
    %2210 = vmatprep.subr.bf16.mxu0 %v1769
    %2211 = vmatpush1.bf16.msra.mxu0 %v1768
    %2212 = vmatprep.subr.bf16.mxu0 %v1773
    %2213 = vmatpush1.bf16.msra.mxu0 %v1772
    %2214 = vmatprep.subr.bf16.mxu0 %v1777
    %2215 = vmatpush1.bf16.msra.mxu0 %v1776
    %2216 = vmatprep.subr.bf16.mxu0 %v1781
    %2217 = vmatpush1.bf16.msra.mxu0 %v1780
    %2218 = vmatprep.subr.bf16.mxu0 %v1785
    %2219 = vmatpush1.bf16.msra.mxu0 %v1784
    %2220 = vmatprep.subr.bf16.mxu0 %v1789
    %2221 = vmatpush1.bf16.msra.mxu0 %v1788
    %2222 = vmatprep.subr.bf16.mxu0 %v1793
    %2223 = vmatpush1.bf16.msra.mxu0 %v1792
    %2224 = vmatprep.subr.bf16.mxu0 %v1797
    %2225 = vmatpush1.bf16.msra.mxu0 %v1796
    %2226 = vmatprep.subr.bf16.mxu0 0
    %2227 = vmatpush1.bf16.msra.mxu0 0
    %2228 = vmatprep.subr.bf16.mxu0 0
    %2229 = vmatpush1.bf16.msra.mxu0 0
    %2230 = vmatprep.subr.bf16.mxu0 0
    %2231 = vmatpush1.bf16.msra.mxu0 0
    %2232 = vmatprep.subr.bf16.mxu0 0
    %2233 = vmatpush1.bf16.msra.mxu0 0
    %2234 = vmatprep.subr.bf16.mxu0 0
    %2235 = vmatpush1.bf16.msra.mxu0 0
    %2236 = vmatprep.subr.bf16.mxu0 0
    %2237 = vmatpush1.bf16.msra.mxu0 0
    %2238 = vmatprep.subr.bf16.mxu0 0
    %2239 = vmatpush1.bf16.msra.mxu0 0
    %2240 = vmatprep.subr.bf16.mxu0 0
    %2241 = vmatpush1.bf16.msra.mxu0 0
    %2242 = vmatprep.mubr.bf16.mxu0 0
    %2243 = vmatmul.mubr.bf16.gmra.mrb[0].mxu0 %v2168
    %v2244 = vpop.f32.mrb[0].mxu0
    %v2245 = vadd.f32 0.0, %v2244
    %v2246 = vpop.f32.mrb[0].mxu0
    %v2247 = vadd.f32 0.0, %v2246
    %v2248 = vpop.f32.mrb[0].mxu0
    %v2249 = vpop.f32.mrb[0].mxu0
    %2250 = vdwg.mxu0
    %v2251 = vadd.f32 %v2164, %v2204
    %v2252 = vadd.f32 %v2165, %v2206
    %v2253 = vadd.f32 %v2166, %v2245
    %v2254 = vadd.f32 %v2167, %v2247
    %v2255 = vtanh.pop %v2251
    %v2256 = vmul.f32 %v2255, 0.5
    %v2257 = vadd.f32 %v2256, 0.5
    %v2258 = vtanh.pop %v2252
    %v2259 = vmul.f32 %v2258, 0.5
    %v2260 = vadd.f32 %v2259, 0.5
    %v2261 = vtanh.pop %v2253
    %v2262 = vtanh.pop %v2254
    %v2263 = vmul.f32 %v2262, 0.5
    %v2264 = vadd.f32 %v2263, 0.5
    %v2265 = vmul.f32 %v2260, %v2162
    %v2266 = vmul.f32 %v2257, %v2261
    %v2267 = vadd.f32 %v2265, %v2266
    %v2268 = vtanh.pop %v2267
    %v2269 = vmul.f32 %v2264, %v2268
    %2270 = vst [vmem:[#allocation4] sm:$0xff] %v2269
    %2271 = vst [vmem:[#allocation5] sm:$0xff] %v2267
    %v2272 = vpack.c.bf16 %v2269, %v2269
    %2273 = vst [vmem:[%s709] sm:$0xf] %v2272
    %v2274 = vld [vmem:[#allocation4] sm:$0xff]
    %v2275 = vld [vmem:[#allocation5] sm:$0xff]
    %s2276 = scalar_lea.vmem [#allocation2], 128
    %v2277 = vld [vmem:[%s2276] sm:$0xff]
    %v2278 = vld [vmem:[%s2276 + $0x8] sm:$0xff]
    %v2279 = vld [vmem:[%s2276 + $0x10] sm:$0xff]
    %v2280 = vld [vmem:[%s2276 + $0x18] sm:$0xff]
    %v2281 = vpack.c.bf16 %v2274, %v2274
    %2282 = vmatprep.subr.bf16.mxu0 %v1767
    %2283 = vmatpush1.bf16.msra.mxu0 %v1766
    %2284 = vmatprep.subr.bf16.mxu0 %v1771
    %2285 = vmatpush1.bf16.msra.mxu0 %v1770
    %2286 = vmatprep.subr.bf16.mxu0 %v1775
    %2287 = vmatpush1.bf16.msra.mxu0 %v1774
    %2288 = vmatprep.subr.bf16.mxu0 %v1779
    %2289 = vmatpush1.bf16.msra.mxu0 %v1778
    %2290 = vmatprep.subr.bf16.mxu0 %v1783
    %2291 = vmatpush1.bf16.msra.mxu0 %v1782
    %2292 = vmatprep.subr.bf16.mxu0 %v1787
    %2293 = vmatpush1.bf16.msra.mxu0 %v1786
    %2294 = vmatprep.subr.bf16.mxu0 %v1791
    %2295 = vmatpush1.bf16.msra.mxu0 %v1790
    %2296 = vmatprep.subr.bf16.mxu0 %v1795
    %2297 = vmatpush1.bf16.msra.mxu0 %v1794
    %2298 = vmatprep.subr.bf16.mxu0 0
    %2299 = vmatpush1.bf16.msra.mxu0 0
    %2300 = vmatprep.subr.bf16.mxu0 0
    %2301 = vmatpush1.bf16.msra.mxu0 0
    %2302 = vmatprep.subr.bf16.mxu0 0
    %2303 = vmatpush1.bf16.msra.mxu0 0
    %2304 = vmatprep.subr.bf16.mxu0 0
    %2305 = vmatpush1.bf16.msra.mxu0 0
    %2306 = vmatprep.subr.bf16.mxu0 0
    %2307 = vmatpush1.bf16.msra.mxu0 0
    %2308 = vmatprep.subr.bf16.mxu0 0
    %2309 = vmatpush1.bf16.msra.mxu0 0
    %2310 = vmatprep.subr.bf16.mxu0 0
    %2311 = vmatpush1.bf16.msra.mxu0 0
    %2312 = vmatprep.subr.bf16.mxu0 0
    %2313 = vmatpush1.bf16.msra.mxu0 0
    %2314 = vmatprep.mubr.bf16.mxu0 0
    %2315 = vmatmul.mubr.bf16.gmra.mrb[0].mxu0 %v2281
    %v2316 = vpop.f32.mrb[0].mxu0
    %v2317 = vadd.f32 0.0, %v2316
    %v2318 = vpop.f32.mrb[0].mxu0
    %v2319 = vadd.f32 0.0, %v2318
    %v2320 = vpop.f32.mrb[0].mxu0
    %v2321 = vpop.f32.mrb[0].mxu0
    %2322 = vdwg.mxu0
    %2323 = vmatprep.subr.bf16.mxu0 %v1769
    %2324 = vmatpush1.bf16.msra.mxu0 %v1768
    %2325 = vmatprep.subr.bf16.mxu0 %v1773
    %2326 = vmatpush1.bf16.msra.mxu0 %v1772
    %2327 = vmatprep.subr.bf16.mxu0 %v1777
    %2328 = vmatpush1.bf16.msra.mxu0 %v1776
    %2329 = vmatprep.subr.bf16.mxu0 %v1781
    %2330 = vmatpush1.bf16.msra.mxu0 %v1780
    %2331 = vmatprep.subr.bf16.mxu0 %v1785
    %2332 = vmatpush1.bf16.msra.mxu0 %v1784
    %2333 = vmatprep.subr.bf16.mxu0 %v1789
    %2334 = vmatpush1.bf16.msra.mxu0 %v1788
    %2335 = vmatprep.subr.bf16.mxu0 %v1793
    %2336 = vmatpush1.bf16.msra.mxu0 %v1792
    %2337 = vmatprep.subr.bf16.mxu0 %v1797
    %2338 = vmatpush1.bf16.msra.mxu0 %v1796
    %2339 = vmatprep.subr.bf16.mxu0 0
    %2340 = vmatpush1.bf16.msra.mxu0 0
    %2341 = vmatprep.subr.bf16.mxu0 0
    %2342 = vmatpush1.bf16.msra.mxu0 0
    %2343 = vmatprep.subr.bf16.mxu0 0
    %2344 = vmatpush1.bf16.msra.mxu0 0
    %2345 = vmatprep.subr.bf16.mxu0 0
    %2346 = vmatpush1.bf16.msra.mxu0 0
    %2347 = vmatprep.subr.bf16.mxu0 0
    %2348 = vmatpush1.bf16.msra.mxu0 0
    %2349 = vmatprep.subr.bf16.mxu0 0
    %2350 = vmatpush1.bf16.msra.mxu0 0
    %2351 = vmatprep.subr.bf16.mxu0 0
    %2352 = vmatpush1.bf16.msra.mxu0 0
    %2353 = vmatprep.subr.bf16.mxu0 0
    %2354 = vmatpush1.bf16.msra.mxu0 0
    %2355 = vmatprep.mubr.bf16.mxu0 0
    %2356 = vmatmul.mubr.bf16.gmra.mrb[0].mxu0 %v2281
    %v2357 = vpop.f32.mrb[0].mxu0
    %v2358 = vadd.f32 0.0, %v2357
    %v2359 = vpop.f32.mrb[0].mxu0
    %v2360 = vadd.f32 0.0, %v2359
    %v2361 = vpop.f32.mrb[0].mxu0
    %v2362 = vpop.f32.mrb[0].mxu0
    %2363 = vdwg.mxu0
    %v2364 = vadd.f32 %v2277, %v2317
    %v2365 = vadd.f32 %v2278, %v2319
    %v2366 = vadd.f32 %v2279, %v2358
    %v2367 = vadd.f32 %v2280, %v2360
    %v2368 = vtanh.pop %v2364
    %v2369 = vmul.f32 %v2368, 0.5
    %v2370 = vadd.f32 %v2369, 0.5
    %v2371 = vtanh.pop %v2365
    %v2372 = vmul.f32 %v2371, 0.5
    %v2373 = vadd.f32 %v2372, 0.5
    %v2374 = vtanh.pop %v2366
    %v2375 = vtanh.pop %v2367
    %v2376 = vmul.f32 %v2375, 0.5
    %v2377 = vadd.f32 %v2376, 0.5
    %v2378 = vmul.f32 %v2373, %v2275
    %v2379 = vmul.f32 %v2370, %v2374
    %v2380 = vadd.f32 %v2378, %v2379
    %v2381 = vtanh.pop %v2380
    %v2382 = vmul.f32 %v2377, %v2381
    %2383 = vst [vmem:[#allocation4] sm:$0xff] %v2382
    %2384 = vst [vmem:[#allocation5] sm:$0xff] %v2380
    %v2385 = vpack.c.bf16 %v2382, %v2382
    %2386 = vst [vmem:[%s823] sm:$0xf] %v2385
    %v2387 = vld [vmem:[#allocation4] sm:$0xff]
    %v2388 = vld [vmem:[#allocation5] sm:$0xff]
    %s2389 = scalar_lea.vmem [#allocation2], 160
    %v2390 = vld [vmem:[%s2389] sm:$0xff]
    %v2391 = vld [vmem:[%s2389 + $0x8] sm:$0xff]
    %v2392 = vld [vmem:[%s2389 + $0x10] sm:$0xff]
    %v2393 = vld [vmem:[%s2389 + $0x18] sm:$0xff]
    %v2394 = vpack.c.bf16 %v2387, %v2387
    %2395 = vmatprep.subr.bf16.mxu0 %v1767
    %2396 = vmatpush1.bf16.msra.mxu0 %v1766
    %2397 = vmatprep.subr.bf16.mxu0 %v1771
    %2398 = vmatpush1.bf16.msra.mxu0 %v1770
    %2399 = vmatprep.subr.bf16.mxu0 %v1775
    %2400 = vmatpush1.bf16.msra.mxu0 %v1774
    %2401 = vmatprep.subr.bf16.mxu0 %v1779
    %2402 = vmatpush1.bf16.msra.mxu0 %v1778
    %2403 = vmatprep.subr.bf16.mxu0 %v1783
    %2404 = vmatpush1.bf16.msra.mxu0 %v1782
    %2405 = vmatprep.subr.bf16.mxu0 %v1787
    %2406 = vmatpush1.bf16.msra.mxu0 %v1786
    %2407 = vmatprep.subr.bf16.mxu0 %v1791
    %2408 = vmatpush1.bf16.msra.mxu0 %v1790
    %2409 = vmatprep.subr.bf16.mxu0 %v1795
    %2410 = vmatpush1.bf16.msra.mxu0 %v1794
    %2411 = vmatprep.subr.bf16.mxu0 0
    %2412 = vmatpush1.bf16.msra.mxu0 0
    %2413 = vmatprep.subr.bf16.mxu0 0
    %2414 = vmatpush1.bf16.msra.mxu0 0
    %2415 = vmatprep.subr.bf16.mxu0 0
    %2416 = vmatpush1.bf16.msra.mxu0 0
    %2417 = vmatprep.subr.bf16.mxu0 0
    %2418 = vmatpush1.bf16.msra.mxu0 0
    %2419 = vmatprep.subr.bf16.mxu0 0
    %2420 = vmatpush1.bf16.msra.mxu0 0
    %2421 = vmatprep.subr.bf16.mxu0 0
    %2422 = vmatpush1.bf16.msra.mxu0 0
    %2423 = vmatprep.subr.bf16.mxu0 0
    %2424 = vmatpush1.bf16.msra.mxu0 0
    %2425 = vmatprep.subr.bf16.mxu0 0
    %2426 = vmatpush1.bf16.msra.mxu0 0
    %2427 = vmatprep.mubr.bf16.mxu0 0
    %2428 = vmatmul.mubr.bf16.gmra.mrb[0].mxu0 %v2394
    %v2429 = vpop.f32.mrb[0].mxu0
    %v2430 = vadd.f32 0.0, %v2429
    %v2431 = vpop.f32.mrb[0].mxu0
    %v2432 = vadd.f32 0.0, %v2431
    %v2433 = vpop.f32.mrb[0].mxu0
    %v2434 = vpop.f32.mrb[0].mxu0
    %2435 = vdwg.mxu0
    %2436 = vmatprep.subr.bf16.mxu0 %v1769
    %2437 = vmatpush1.bf16.msra.mxu0 %v1768
    %2438 = vmatprep.subr.bf16.mxu0 %v1773
    %2439 = vmatpush1.bf16.msra.mxu0 %v1772
    %2440 = vmatprep.subr.bf16.mxu0 %v1777
    %2441 = vmatpush1.bf16.msra.mxu0 %v1776
    %2442 = vmatprep.subr.bf16.mxu0 %v1781
    %2443 = vmatpush1.bf16.msra.mxu0 %v1780
    %2444 = vmatprep.subr.bf16.mxu0 %v1785
    %2445 = vmatpush1.bf16.msra.mxu0 %v1784
    %2446 = vmatprep.subr.bf16.mxu0 %v1789
    %2447 = vmatpush1.bf16.msra.mxu0 %v1788
    %2448 = vmatprep.subr.bf16.mxu0 %v1793
    %2449 = vmatpush1.bf16.msra.mxu0 %v1792
    %2450 = vmatprep.subr.bf16.mxu0 %v1797
    %2451 = vmatpush1.bf16.msra.mxu0 %v1796
    %2452 = vmatprep.subr.bf16.mxu0 0
    %2453 = vmatpush1.bf16.msra.mxu0 0
    %2454 = vmatprep.subr.bf16.mxu0 0
    %2455 = vmatpush1.bf16.msra.mxu0 0
    %2456 = vmatprep.subr.bf16.mxu0 0
    %2457 = vmatpush1.bf16.msra.mxu0 0
    %2458 = vmatprep.subr.bf16.mxu0 0
    %2459 = vmatpush1.bf16.msra.mxu0 0
    %2460 = vmatprep.subr.bf16.mxu0 0
    %2461 = vmatpush1.bf16.msra.mxu0 0
    %2462 = vmatprep.subr.bf16.mxu0 0
    %2463 = vmatpush1.bf16.msra.mxu0 0
    %2464 = vmatprep.subr.bf16.mxu0 0
    %2465 = vmatpush1.bf16.msra.mxu0 0
    %2466 = vmatprep.subr.bf16.mxu0 0
    %2467 = vmatpush1.bf16.msra.mxu0 0
    %2468 = vmatprep.mubr.bf16.mxu0 0
    %2469 = vmatmul.mubr.bf16.gmra.mrb[0].mxu0 %v2394
    %v2470 = vpop.f32.mrb[0].mxu0
    %v2471 = vadd.f32 0.0, %v2470
    %v2472 = vpop.f32.mrb[0].mxu0
    %v2473 = vadd.f32 0.0, %v2472
    %v2474 = vpop.f32.mrb[0].mxu0
    %v2475 = vpop.f32.mrb[0].mxu0
    %2476 = vdwg.mxu0
    %v2477 = vadd.f32 %v2390, %v2430
    %v2478 = vadd.f32 %v2391, %v2432
    %v2479 = vadd.f32 %v2392, %v2471
    %v2480 = vadd.f32 %v2393, %v2473
    %v2481 = vtanh.pop %v2477
    %v2482 = vmul.f32 %v2481, 0.5
    %v2483 = vadd.f32 %v2482, 0.5
    %v2484 = vtanh.pop %v2478
    %v2485 = vmul.f32 %v2484, 0.5
    %v2486 = vadd.f32 %v2485, 0.5
    %v2487 = vtanh.pop %v2479
    %v2488 = vtanh.pop %v2480
    %v2489 = vmul.f32 %v2488, 0.5
    %v2490 = vadd.f32 %v2489, 0.5
    %v2491 = vmul.f32 %v2486, %v2388
    %v2492 = vmul.f32 %v2483, %v2487
    %v2493 = vadd.f32 %v2491, %v2492
    %v2494 = vtanh.pop %v2493
    %v2495 = vmul.f32 %v2490, %v2494
    %2496 = vst [vmem:[#allocation4] sm:$0xff] %v2495
    %2497 = vst [vmem:[#allocation5] sm:$0xff] %v2493
    %v2498 = vpack.c.bf16 %v2495, %v2495
    %2499 = vst [vmem:[%s937] sm:$0xf] %v2498
    %v2500 = vld [vmem:[#allocation4] sm:$0xff]
    %v2501 = vld [vmem:[#allocation5] sm:$0xff]
    %s2502 = scalar_lea.vmem [#allocation2], 192
    %v2503 = vld [vmem:[%s2502] sm:$0xff]
    %v2504 = vld [vmem:[%s2502 + $0x8] sm:$0xff]
    %v2505 = vld [vmem:[%s2502 + $0x10] sm:$0xff]
    %v2506 = vld [vmem:[%s2502 + $0x18] sm:$0xff]
    %v2507 = vpack.c.bf16 %v2500, %v2500
    %2508 = vmatprep.subr.bf16.mxu0 %v1767
    %2509 = vmatpush1.bf16.msra.mxu0 %v1766
    %2510 = vmatprep.subr.bf16.mxu0 %v1771
    %2511 = vmatpush1.bf16.msra.mxu0 %v1770
    %2512 = vmatprep.subr.bf16.mxu0 %v1775
    %2513 = vmatpush1.bf16.msra.mxu0 %v1774
    %2514 = vmatprep.subr.bf16.mxu0 %v1779
    %2515 = vmatpush1.bf16.msra.mxu0 %v1778
    %2516 = vmatprep.subr.bf16.mxu0 %v1783
    %2517 = vmatpush1.bf16.msra.mxu0 %v1782
    %2518 = vmatprep.subr.bf16.mxu0 %v1787
    %2519 = vmatpush1.bf16.msra.mxu0 %v1786
    %2520 = vmatprep.subr.bf16.mxu0 %v1791
    %2521 = vmatpush1.bf16.msra.mxu0 %v1790
    %2522 = vmatprep.subr.bf16.mxu0 %v1795
    %2523 = vmatpush1.bf16.msra.mxu0 %v1794
    %2524 = vmatprep.subr.bf16.mxu0 0
    %2525 = vmatpush1.bf16.msra.mxu0 0
    %2526 = vmatprep.subr.bf16.mxu0 0
    %2527 = vmatpush1.bf16.msra.mxu0 0
    %2528 = vmatprep.subr.bf16.mxu0 0
    %2529 = vmatpush1.bf16.msra.mxu0 0
    %2530 = vmatprep.subr.bf16.mxu0 0
    %2531 = vmatpush1.bf16.msra.mxu0 0
    %2532 = vmatprep.subr.bf16.mxu0 0
    %2533 = vmatpush1.bf16.msra.mxu0 0
    %2534 = vmatprep.subr.bf16.mxu0 0
    %2535 = vmatpush1.bf16.msra.mxu0 0
    %2536 = vmatprep.subr.bf16.mxu0 0
    %2537 = vmatpush1.bf16.msra.mxu0 0
    %2538 = vmatprep.subr.bf16.mxu0 0
    %2539 = vmatpush1.bf16.msra.mxu0 0
    %2540 = vmatprep.mubr.bf16.mxu0 0
    %2541 = vmatmul.mubr.bf16.gmra.mrb[0].mxu0 %v2507
    %v2542 = vpop.f32.mrb[0].mxu0
    %v2543 = vadd.f32 0.0, %v2542
    %v2544 = vpop.f32.mrb[0].mxu0
    %v2545 = vadd.f32 0.0, %v2544
    %v2546 = vpop.f32.mrb[0].mxu0
    %v2547 = vpop.f32.mrb[0].mxu0
    %2548 = vdwg.mxu0
    %2549 = vmatprep.subr.bf16.mxu0 %v1769
    %2550 = vmatpush1.bf16.msra.mxu0 %v1768
    %2551 = vmatprep.subr.bf16.mxu0 %v1773
    %2552 = vmatpush1.bf16.msra.mxu0 %v1772
    %2553 = vmatprep.subr.bf16.mxu0 %v1777
    %2554 = vmatpush1.bf16.msra.mxu0 %v1776
    %2555 = vmatprep.subr.bf16.mxu0 %v1781
    %2556 = vmatpush1.bf16.msra.mxu0 %v1780
    %2557 = vmatprep.subr.bf16.mxu0 %v1785
    %2558 = vmatpush1.bf16.msra.mxu0 %v1784
    %2559 = vmatprep.subr.bf16.mxu0 %v1789
    %2560 = vmatpush1.bf16.msra.mxu0 %v1788
    %2561 = vmatprep.subr.bf16.mxu0 %v1793
    %2562 = vmatpush1.bf16.msra.mxu0 %v1792
    %2563 = vmatprep.subr.bf16.mxu0 %v1797
    %2564 = vmatpush1.bf16.msra.mxu0 %v1796
    %2565 = vmatprep.subr.bf16.mxu0 0
    %2566 = vmatpush1.bf16.msra.mxu0 0
    %2567 = vmatprep.subr.bf16.mxu0 0
    %2568 = vmatpush1.bf16.msra.mxu0 0
    %2569 = vmatprep.subr.bf16.mxu0 0
    %2570 = vmatpush1.bf16.msra.mxu0 0
    %2571 = vmatprep.subr.bf16.mxu0 0
    %2572 = vmatpush1.bf16.msra.mxu0 0
    %2573 = vmatprep.subr.bf16.mxu0 0
    %2574 = vmatpush1.bf16.msra.mxu0 0
    %2575 = vmatprep.subr.bf16.mxu0 0
    %2576 = vmatpush1.bf16.msra.mxu0 0
    %2577 = vmatprep.subr.bf16.mxu0 0
    %2578 = vmatpush1.bf16.msra.mxu0 0
    %2579 = vmatprep.subr.bf16.mxu0 0
    %2580 = vmatpush1.bf16.msra.mxu0 0
    %2581 = vmatprep.mubr.bf16.mxu0 0
    %2582 = vmatmul.mubr.bf16.gmra.mrb[0].mxu0 %v2507
    %v2583 = vpop.f32.mrb[0].mxu0
    %v2584 = vadd.f32 0.0, %v2583
    %v2585 = vpop.f32.mrb[0].mxu0
    %v2586 = vadd.f32 0.0, %v2585
    %v2587 = vpop.f32.mrb[0].mxu0
    %v2588 = vpop.f32.mrb[0].mxu0
    %2589 = vdwg.mxu0
    %v2590 = vadd.f32 %v2503, %v2543
    %v2591 = vadd.f32 %v2504, %v2545
    %v2592 = vadd.f32 %v2505, %v2584
    %v2593 = vadd.f32 %v2506, %v2586
    %v2594 = vtanh.pop %v2590
    %v2595 = vmul.f32 %v2594, 0.5
    %v2596 = vadd.f32 %v2595, 0.5
    %v2597 = vtanh.pop %v2591
    %v2598 = vmul.f32 %v2597, 0.5
    %v2599 = vadd.f32 %v2598, 0.5
    %v2600 = vtanh.pop %v2592
    %v2601 = vtanh.pop %v2593
    %v2602 = vmul.f32 %v2601, 0.5
    %v2603 = vadd.f32 %v2602, 0.5
    %v2604 = vmul.f32 %v2599, %v2501
    %v2605 = vmul.f32 %v2596, %v2600
    %v2606 = vadd.f32 %v2604, %v2605
    %v2607 = vtanh.pop %v2606
    %v2608 = vmul.f32 %v2603, %v2607
    %2609 = vst [vmem:[#allocation4] sm:$0xff] %v2608
    %2610 = vst [vmem:[#allocation5] sm:$0xff] %v2606
    %v2611 = vpack.c.bf16 %v2608, %v2608
    %2612 = vst [vmem:[%s1051] sm:$0xf] %v2611
    %v2613 = vld [vmem:[#allocation4] sm:$0xff]
    %v2614 = vld [vmem:[#allocation5] sm:$0xff]
    %s2615 = scalar_lea.vmem [#allocation2], 224
    %v2616 = vld [vmem:[%s2615] sm:$0xff]
    %v2617 = vld [vmem:[%s2615 + $0x8] sm:$0xff]
    %v2618 = vld [vmem:[%s2615 + $0x10] sm:$0xff]
    %v2619 = vld [vmem:[%s2615 + $0x18] sm:$0xff]
    %v2620 = vpack.c.bf16 %v2613, %v2613
    %2621 = vmatprep.subr.bf16.mxu0 %v1767
    %2622 = vmatpush1.bf16.msra.mxu0 %v1766
    %2623 = vmatprep.subr.bf16.mxu0 %v1771
    %2624 = vmatpush1.bf16.msra.mxu0 %v1770
    %2625 = vmatprep.subr.bf16.mxu0 %v1775
    %2626 = vmatpush1.bf16.msra.mxu0 %v1774
    %2627 = vmatprep.subr.bf16.mxu0 %v1779
    %2628 = vmatpush1.bf16.msra.mxu0 %v1778
    %2629 = vmatprep.subr.bf16.mxu0 %v1783
    %2630 = vmatpush1.bf16.msra.mxu0 %v1782
    %2631 = vmatprep.subr.bf16.mxu0 %v1787
    %2632 = vmatpush1.bf16.msra.mxu0 %v1786
    %2633 = vmatprep.subr.bf16.mxu0 %v1791
    %2634 = vmatpush1.bf16.msra.mxu0 %v1790
    %2635 = vmatprep.subr.bf16.mxu0 %v1795
    %2636 = vmatpush1.bf16.msra.mxu0 %v1794
    %2637 = vmatprep.subr.bf16.mxu0 0
    %2638 = vmatpush1.bf16.msra.mxu0 0
    %2639 = vmatprep.subr.bf16.mxu0 0
    %2640 = vmatpush1.bf16.msra.mxu0 0
    %2641 = vmatprep.subr.bf16.mxu0 0
    %2642 = vmatpush1.bf16.msra.mxu0 0
    %2643 = vmatprep.subr.bf16.mxu0 0
    %2644 = vmatpush1.bf16.msra.mxu0 0
    %2645 = vmatprep.subr.bf16.mxu0 0
    %2646 = vmatpush1.bf16.msra.mxu0 0
    %2647 = vmatprep.subr.bf16.mxu0 0
    %2648 = vmatpush1.bf16.msra.mxu0 0
    %2649 = vmatprep.subr.bf16.mxu0 0
    %2650 = vmatpush1.bf16.msra.mxu0 0
    %2651 = vmatprep.subr.bf16.mxu0 0
    %2652 = vmatpush1.bf16.msra.mxu0 0
    %2653 = vmatprep.mubr.bf16.mxu0 0
    %2654 = vmatmul.mubr.bf16.gmra.mrb[0].mxu0 %v2620
    %v2655 = vpop.f32.mrb[0].mxu0
    %v2656 = vadd.f32 0.0, %v2655
    %v2657 = vpop.f32.mrb[0].mxu0
    %v2658 = vadd.f32 0.0, %v2657
    %v2659 = vpop.f32.mrb[0].mxu0
    %v2660 = vpop.f32.mrb[0].mxu0
    %2661 = vdwg.mxu0
    %2662 = vmatprep.subr.bf16.mxu0 %v1769
    %2663 = vmatpush1.bf16.msra.mxu0 %v1768
    %2664 = vmatprep.subr.bf16.mxu0 %v1773
    %2665 = vmatpush1.bf16.msra.mxu0 %v1772
    %2666 = vmatprep.subr.bf16.mxu0 %v1777
    %2667 = vmatpush1.bf16.msra.mxu0 %v1776
    %2668 = vmatprep.subr.bf16.mxu0 %v1781
    %2669 = vmatpush1.bf16.msra.mxu0 %v1780
    %2670 = vmatprep.subr.bf16.mxu0 %v1785
    %2671 = vmatpush1.bf16.msra.mxu0 %v1784
    %2672 = vmatprep.subr.bf16.mxu0 %v1789
    %2673 = vmatpush1.bf16.msra.mxu0 %v1788
    %2674 = vmatprep.subr.bf16.mxu0 %v1793
    %2675 = vmatpush1.bf16.msra.mxu0 %v1792
    %2676 = vmatprep.subr.bf16.mxu0 %v1797
    %2677 = vmatpush1.bf16.msra.mxu0 %v1796
    %2678 = vmatprep.subr.bf16.mxu0 0
    %2679 = vmatpush1.bf16.msra.mxu0 0
    %2680 = vmatprep.subr.bf16.mxu0 0
    %2681 = vmatpush1.bf16.msra.mxu0 0
    %2682 = vmatprep.subr.bf16.mxu0 0
    %2683 = vmatpush1.bf16.msra.mxu0 0
    %2684 = vmatprep.subr.bf16.mxu0 0
    %2685 = vmatpush1.bf16.msra.mxu0 0
    %2686 = vmatprep.subr.bf16.mxu0 0
    %2687 = vmatpush1.bf16.msra.mxu0 0
    %2688 = vmatprep.subr.bf16.mxu0 0
    %2689 = vmatpush1.bf16.msra.mxu0 0
    %2690 = vmatprep.subr.bf16.mxu0 0
    %2691 = vmatpush1.bf16.msra.mxu0 0
    %2692 = vmatprep.subr.bf16.mxu0 0
    %2693 = vmatpush1.bf16.msra.mxu0 0
    %2694 = vmatprep.mubr.bf16.mxu0 0
    %2695 = vmatmul.mubr.bf16.gmra.mrb[0].mxu0 %v2620
    %v2696 = vpop.f32.mrb[0].mxu0
    %v2697 = vadd.f32 0.0, %v2696
    %v2698 = vpop.f32.mrb[0].mxu0
    %v2699 = vadd.f32 0.0, %v2698
    %v2700 = vpop.f32.mrb[0].mxu0
    %v2701 = vpop.f32.mrb[0].mxu0
    %2702 = vdwg.mxu0
    %v2703 = vadd.f32 %v2616, %v2656
    %v2704 = vadd.f32 %v2617, %v2658
    %v2705 = vadd.f32 %v2618, %v2697
    %v2706 = vadd.f32 %v2619, %v2699
    %v2707 = vtanh.pop %v2703
    %v2708 = vmul.f32 %v2707, 0.5
    %v2709 = vadd.f32 %v2708, 0.5
    %v2710 = vtanh.pop %v2704
    %v2711 = vmul.f32 %v2710, 0.5
    %v2712 = vadd.f32 %v2711, 0.5
    %v2713 = vtanh.pop %v2705
    %v2714 = vtanh.pop %v2706
    %v2715 = vmul.f32 %v2714, 0.5
    %v2716 = vadd.f32 %v2715, 0.5
    %v2717 = vmul.f32 %v2712, %v2614
    %v2718 = vmul.f32 %v2709, %v2713
    %v2719 = vadd.f32 %v2717, %v2718
    %v2720 = vtanh.pop %v2719
    %v2721 = vmul.f32 %v2716, %v2720
    %2722 = vst [vmem:[#allocation4] sm:$0xff] %v2721
    %2723 = vst [vmem:[#allocation5] sm:$0xff] %v2719
    %v2724 = vpack.c.bf16 %v2721, %v2721
    %2725 = vst [vmem:[%s1165] sm:$0xf] %v2724
    %v2726 = vld [vmem:[#allocation4] sm:$0xff]
    %s2727 = scalar_lea.vmem [#allocation12], 8
    %2728 = vst [vmem:[%s2727] sm:$0xff] %v2726
    %v2729 = vld [vmem:[#allocation5] sm:$0xff]
    %s2730 = scalar_lea.vmem [#allocation13], 8
    %2731 = vst [vmem:[%s2730] sm:$0xff] %v2729
    // Predicated region
    $region30: #{tpu_custom_call.1} parent=1 // pred_check
      _
    $region31: #{tpu_custom_call.1} parent=1 // pred_check_branch
      %2733 = sbr.rel (0) target = $region33
    $region32: #{tpu_custom_call.1} parent=1 // pred_region
      %s2735 = ssub.s32 256, 256
      %2736 = vsyncadd [#allocation8], %s2735
      %s2737 = sshll.u32 [#allocation12], 4
      %s2738 = int_to_ptr.vmem [resolvable:$true] %s2737
      %2743 = dma.vmem_to_hbm [thread:$0]  %s2738, 256, %s4, [#allocation8], 128, 128, 8
    $region33: #{tpu_custom_call.1} parent=1 // pred_fallthru
      _
    // Predicated region
    $region34: #{tpu_custom_call.1} parent=1 // pred_check
      _
    $region35: #{tpu_custom_call.1} parent=1 // pred_check_branch
      %2745 = sbr.rel (0) target = $region37
    $region36: #{tpu_custom_call.1} parent=1 // pred_region
      %s2747 = ssub.s32 256, 256
      %2748 = vsyncadd [#allocation14], %s2747
      %s2749 = sshll.u32 [#allocation13], 4
      %s2750 = int_to_ptr.vmem [resolvable:$true] %s2749
      %2755 = dma.vmem_to_hbm [thread:$0]  %s2750, 256, %s5, [#allocation14], 128, 128, 8
    $region37: #{tpu_custom_call.1} parent=1 // pred_fallthru
      _
    // Predicated region
    $region38: #{tpu_custom_call.1} parent=1 // pred_check
      _
    $region39: #{tpu_custom_call.1} parent=1 // pred_check_branch
      %2757 = sbr.rel (0) target = $region41
    $region40: #{tpu_custom_call.1} parent=1 // pred_region
      %2758 = dma.done [#allocation8], 256
    $region41: #{tpu_custom_call.1} parent=1 // pred_fallthru
      _
    // Predicated region
    $region42: #{tpu_custom_call.1} parent=1 // pred_check
      _
    $region43: #{tpu_custom_call.1} parent=1 // pred_check_branch
      %2760 = sbr.rel (0) target = $region45
    $region44: #{tpu_custom_call.1} parent=1 // pred_region
      %2761 = dma.done [#allocation14], 256
    $region45: #{tpu_custom_call.1} parent=1 // pred_fallthru
      _
    %2762 = vsyncpa [#allocation7], 1
    %2763 = vsyncpa [#allocation10], 1
    %2764 = vsyncpa [#allocation8], 1
    %2765 = vsyncpa [#allocation14], 1

</llo_original>
